<compile_context>
chip_gen: v5e
topology: v5e:2x2
jax: 0.10.0
libtpu: 0.0.40
codegen_flags: <defaults>
</compile_context>

<pallas_src>
import functools

import jax
import jax.numpy as jnp
from jax.experimental import pallas as pl
from jax.experimental.pallas import tpu as pltpu


# ---------------------------------------------------------------------------
# Generic channels-first "flat" direct conv:
#   out[:, r] = act( W @ im2col(x)[:, r] + b )
# x is the padded activation (Cin, L) with flattened spatial on lanes; the kernel
# builds the (T*Cin, M) im2col slab in VMEM from T lane-shifted slices and issues a
# single bf16 MXU dot with a lane-dense (Cout, M) result.  `nb` images per grid step.
# ---------------------------------------------------------------------------
def _conv_cf_kernel(x_ref, w_ref, b_ref, o_ref, *, offsets, m, relu, nb):
    slabs = []
    for i in range(nb):
        xv = x_ref[i]                                              # (Cin, L) bf16
        slabs.append(jnp.concatenate([xv[:, off:off + m] for off in offsets], axis=0))
    slab = slabs[0] if nb == 1 else jnp.concatenate(slabs, axis=1)  # (T*Cin, nb*m)
    acc = jnp.dot(w_ref[...], slab, preferred_element_type=jnp.float32) + b_ref[...]
    if relu:
        acc = jnp.maximum(acc, 0.0)
    for i in range(nb):
        o_ref[i] = acc[:, i * m:(i + 1) * m].astype(o_ref.dtype)


def _flat_conv_cf(xflat, w_k, bias, *, offsets, m_cols, relu, out_dtype):
    """xflat: (N, Cin, L) bf16; w_k: (Cout, T*Cin) bf16; bias: (Cout,) f32."""
    N, Cin, L = xflat.shape
    Cout, K = w_k.shape
    nb = 2 if (N % 2 == 0 and N >= 4) else 1
    kern = functools.partial(_conv_cf_kernel, offsets=tuple(offsets), m=m_cols,
                             relu=relu, nb=nb)
    return pl.pallas_call(
        kern,
        out_shape=jax.ShapeDtypeStruct((N, Cout, m_cols), out_dtype),
        grid=(N // nb,),
        in_specs=[
            pl.BlockSpec((nb, Cin, L), lambda n: (n, 0, 0)),
            pl.BlockSpec((Cout, K), lambda n: (0, 0)),
            pl.BlockSpec((Cout, 1), lambda n: (0, 0)),
        ],
        out_specs=pl.BlockSpec((nb, Cout, m_cols), lambda n: (n, 0, 0)),
        compiler_params=pltpu.CompilerParams(dimension_semantics=("parallel",)),
    )(xflat, w_k, bias.reshape(Cout, 1).astype(jnp.float32))


def _w_to_cf(w):
    """(kh, kw, Cin, Cout) -> (Cout, kh*kw*Cin), tap-major to match the slab layout."""
    kh, kw, ci, co = w.shape
    return jnp.transpose(w.reshape(kh * kw, ci, co), (2, 0, 1)).reshape(co, kh * kw * ci)


def conv3x3_s1_cf(x, w, b, *, relu, out_dtype=None):
    """3x3 conv, stride 1, pad 1.  x: (N, Cin, H, W) channels-first; w: (3,3,Cin,Cout)."""
    N, Cin, H, W = x.shape
    Cout = w.shape[-1]
    Wp = W + 2
    xp = jnp.pad(x, ((0, 0), (0, 0), (1, 2), (1, 1)))          # extra bottom row for tap overflow
    xflat = xp.reshape(N, Cin, (H + 3) * Wp)
    offsets = [ky * Wp + kx for ky in range(3) for kx in range(3)]
    m = H * Wp                                                  # 2 garbage cols/row, sliced below
    out = _flat_conv_cf(xflat, _w_to_cf(w), b, offsets=offsets, m_cols=m,
                        relu=relu, out_dtype=out_dtype or x.dtype)
    return out.reshape(N, Cout, H, Wp)[:, :, :, :W]


def conv3x3_s2_cf(x, w, b, *, relu, out_dtype=None):
    """3x3 conv, stride 2, pad 1, via space-to-depth -> stride-1 2x2-tap conv."""
    N, Cin, H, W = x.shape
    Cout = w.shape[-1]
    Ho, Wo = H // 2, W // 2
    xp = jnp.pad(x, ((0, 0), (0, 0), (1, 1), (1, 1)))
    Hs, Ws = (H + 2) // 2, (W + 2) // 2
    phases = [(0, 0), (0, 1), (1, 0), (1, 1)]
    xs = jnp.concatenate([xp[:, :, py::2, px::2] for (py, px) in phases], axis=1)

    # Repack (3,3,Cin,Cout) weight into (Cout, 4 taps * 4*Cin) for the s2d input.
    blocks = []
    for dy in range(2):
        for dx in range(2):
            per_phase = []
            for (py, px) in phases:
                ky, kx = 2 * dy + py, 2 * dx + px
                per_phase.append(w[ky, kx] if (ky < 3 and kx < 3) else jnp.zeros_like(w[0, 0]))
            blocks.append(jnp.concatenate(per_phase, axis=0))   # (4*Cin, Cout)
    wt = jnp.stack(blocks, axis=0)                              # (4, 4*Cin, Cout)
    w_k = jnp.transpose(wt, (2, 0, 1)).reshape(Cout, 16 * Cin)

    offsets = [dy * Ws + dx for dy in range(2) for dx in range(2)]
    m = Ho * Ws                                                 # 1 garbage col/row
    lreq = max(offsets) + m
    xflat = xs.reshape(N, 4 * Cin, Hs * Ws)
    if lreq > Hs * Ws:
        xflat = jnp.pad(xflat, ((0, 0), (0, 0), (0, lreq - Hs * Ws)))
    out = _flat_conv_cf(xflat, w_k, b, offsets=offsets, m_cols=m,
                        relu=relu, out_dtype=out_dtype or x.dtype)
    return out.reshape(N, Cout, Ho, Ws)[:, :, :, :Wo]


# ---------------------------------------------------------------------------
# Fused UnetDecoder block: (nearest-2x upsample ->) [concat skip] -> conv1+BN+ReLU
# -> conv2+BN+ReLU in one pallas_call.  conv1's output stays in a bf16 VMEM scratch
# laid out directly as conv2's zero-padded flat input.
# ---------------------------------------------------------------------------
def _decoder_block_kernel(*refs, has_skip, taps, l8, m, wp, w_valid):
    if has_skip:
        xu_ref, sk_ref, w1_ref, b1_ref, w2_ref, b2_ref, o_ref, f2_ref = refs
    else:
        xu_ref, w1_ref, b1_ref, w2_ref, b2_ref, o_ref, f2_ref = refs
        sk_ref = None
    oc = o_ref.shape[1]

    # conv1 over [upsampled x | skip]: im2col slab in VMEM, ONE wide-K bf16 dot
    # (the skip-concat is fused by concatenating its taps into the same slab).
    xv = xu_ref[0]                                              # (ic, L1) bf16
    parts = [xv[:, off:off + m] for off in taps]
    if has_skip:
        sv = sk_ref[0]                                          # (sc, L1) bf16
        parts += [sv[:, off:off + m] for off in taps]
    slab1 = jnp.concatenate(parts, axis=0)                      # (9*(ic+sc), M)
    acc1 = jnp.dot(w1_ref[...], slab1, preferred_element_type=jnp.float32)

    # Zero the garbage columns (flat col >= W) so the scratch doubles as conv2's
    # horizontal zero padding.  col = lane % Wp via float ops (no int mod operand).
    lane = jax.lax.broadcasted_iota(jnp.int32, (1, m), 1).astype(jnp.float32)
    col = lane - wp * jnp.floor((lane + 0.5) * (1.0 / wp))
    keep = (col < w_valid).astype(jnp.float32)
    y1 = jnp.maximum(acc1 + b1_ref[...], 0.0) * keep

    # bf16 intermediate in VMEM scratch: only the small halo lanes conv2's taps can
    # reach are zeroed (cheap, step-local), the y1 window is fully overwritten.
    halo = jnp.zeros((oc, wp + 1), f2_ref.dtype)
    f2_ref[:, l8 - (wp + 1):l8] = halo
    f2_ref[:, l8 + m:l8 + m + wp + 1] = halo
    f2_ref[:, l8:l8 + m] = y1.astype(f2_ref.dtype)

    # conv2 straight from the scratch: second wide-K bf16 dot.
    fv = f2_ref[...]
    base = l8 - (wp + 1)
    slab2 = jnp.concatenate([fv[:, base + off:base + off + m] for off in taps], axis=0)
    acc2 = jnp.dot(w2_ref[...], slab2, preferred_element_type=jnp.float32)
    y2 = jnp.maximum(acc2 + b2_ref[...], 0.0)
    o_ref[0] = y2.astype(o_ref.dtype)


def decoder_block(x, skip, p, *, out_dtype=jnp.bfloat16):
    """x: (bs, ic, h, w) low-res channels-first; skip: (bs, sc, 2h, 2w) or None."""
    bs, ic, h, w = x.shape
    H, W = 2 * h, 2 * w
    oc = p["w1"].shape[-1]
    sc = p["w1"].shape[2] - ic
    Wp = W + 2
    M = H * Wp
    L1 = (H + 3) * Wp
    L8 = 128                                    # 128-aligned lane offset of y1 in the scratch
    sc_lanes = -(-(L8 + M + Wp + 2) // 128) * 128
    taps = tuple(ky * Wp + kx for ky in range(3) for kx in range(3))

    # TODO(synk): fold the nearest-2x upsample into the kernel's tap indexing instead
    # of materializing the upsampled tensor in HBM.
    xu = jnp.repeat(jnp.repeat(x, 2, axis=2), 2, axis=3)
    xu = jnp.pad(xu, ((0, 0), (0, 0), (1, 2), (1, 1))).reshape(bs, ic, L1)

    w1 = p["w1"].reshape(9, ic + sc, oc)
    w1a = jnp.transpose(w1[:, :ic, :], (2, 0, 1)).reshape(oc, 9 * ic)
    w2k = jnp.transpose(p["w2"].reshape(9, oc, oc), (2, 0, 1)).reshape(oc, 9 * oc)
    b1 = p["b1"].reshape(oc, 1).astype(jnp.float32)
    b2 = p["b2"].reshape(oc, 1).astype(jnp.float32)

    has_skip = sc > 0
    operands = [xu]
    in_specs = [pl.BlockSpec((1, ic, L1), lambda n: (n, 0, 0))]
    if has_skip:
        sk = jnp.pad(skip, ((0, 0), (0, 0), (1, 2), (1, 1))).reshape(bs, sc, L1)
        w1b = jnp.transpose(w1[:, ic:, :], (2, 0, 1)).reshape(oc, 9 * sc)
        w1k = jnp.concatenate([w1a, w1b], axis=1)               # (oc, 9*(ic+sc))
        operands += [sk]
        in_specs += [pl.BlockSpec((1, sc, L1), lambda n: (n, 0, 0))]
    else:
        w1k = w1a
    operands += [w1k, b1, w2k, b2]
    in_specs += [pl.BlockSpec(w1k.shape, lambda n: (0, 0)),
                 pl.BlockSpec((oc, 1), lambda n: (0, 0)),
                 pl.BlockSpec((oc, 9 * oc), lambda n: (0, 0)),
                 pl.BlockSpec((oc, 1), lambda n: (0, 0))]

    out = pl.pallas_call(
        functools.partial(_decoder_block_kernel, has_skip=has_skip, taps=taps,
                          l8=L8, m=M, wp=Wp, w_valid=W),
        out_shape=jax.ShapeDtypeStruct((bs, oc, M), out_dtype),
        grid=(bs,),
        in_specs=in_specs,
        out_specs=pl.BlockSpec((1, oc, M), lambda n: (n, 0, 0)),
        scratch_shapes=[pltpu.VMEM((oc, sc_lanes), jnp.bfloat16)],
        compiler_params=pltpu.CompilerParams(dimension_semantics=("parallel",)),
    )(*operands)
    return out.reshape(bs, oc, H, Wp)[:, :, :, :W]


# ---------------------------------------------------------------------------
# AttentionPooling (channels-first): one bf16 (C,C)@(C,V*P) dot -> LayerNorm (stats via
# (1,C) dots, so all reductions stay on the lane axis) -> GELU -> (1,C) logit dot ->
# softmax over views on lane-dense (1,P) rows -> weighted sum.  One grid step / batch.
# ---------------------------------------------------------------------------
def _attn_pool_kernel(x_ref, w1_ref, b1_ref, g_ref, be_ref, w2_ref, o_ref,
                      *, n_views, npix):
    C = o_ref.shape[1]
    xs = [x_ref[0, v] for v in range(n_views)]                  # (C, P) bf16 per view
    xall = xs[0] if n_views == 1 else jnp.concatenate(xs, axis=1)   # (C, V*P)

    h = jnp.dot(w1_ref[...], xall, preferred_element_type=jnp.float32) + b1_ref[...]
    ones_c = jnp.full((1, C), 1.0 / C, jnp.float32)
    mu = jnp.dot(ones_c, h, preferred_element_type=jnp.float32)            # (1, V*P)
    var = jnp.dot(ones_c, jnp.square(h - mu), preferred_element_type=jnp.float32)
    hn = (h - mu) * jax.lax.rsqrt(var + 1e-5) * g_ref[...] + be_ref[...]
    # TODO(synk): nn.GELU default is exact erf; tanh approximation differs ~1e-3.
    hg = 0.5 * hn * (1.0 + jnp.tanh(0.7978845608028654 * (hn + 0.044715 * hn * hn * hn)))
    # Linear(C -> 1); the +b2 is dropped since the view softmax is shift-invariant.
    logits = jnp.dot(w2_ref[...], hg, preferred_element_type=jnp.float32)  # (1, V*P)

    ls = [logits[:, v * npix:(v + 1) * npix] for v in range(n_views)]
    mx = ls[0]
    for lv in ls[1:]:
        mx = jnp.maximum(mx, lv)
    es = [jnp.exp(lv - mx) for lv in ls]
    den = es[0]
    for e in es[1:]:
        den = den + e
    inv = 1.0 / den
    acc = (es[0] * inv) * xs[0]
    for v in range(1, n_views):
        acc = acc + (es[v] * inv) * xs[v]
    o_ref[0] = acc.astype(o_ref.dtype)


def attention_pool(f, bs, p):
    """f: (bs*V, C, h, w) channels-first -> pooled (bs, C, h, w)."""
    NV, C, h, w = f.shape
    V = NV // bs
    P = h * w
    x = f.reshape(bs, V, C, P)
    out = pl.pallas_call(
        functools.partial(_attn_pool_kernel, n_views=V, npix=P),
        out_shape=jax.ShapeDtypeStruct((bs, C, P), f.dtype),
        grid=(bs,),
        in_specs=[
            pl.BlockSpec((1, V, C, P), lambda b: (b, 0, 0, 0)),
            pl.BlockSpec((C, C), lambda b: (0, 0)),
            pl.BlockSpec((C, 1), lambda b: (0, 0)),
            pl.BlockSpec((C, 1), lambda b: (0, 0)),
            pl.BlockSpec((C, 1), lambda b: (0, 0)),
            pl.BlockSpec((1, C), lambda b: (0, 0)),
        ],
        out_specs=pl.BlockSpec((1, C, P), lambda b: (b, 0, 0)),
        compiler_params=pltpu.CompilerParams(dimension_semantics=("parallel",)),
    )(x, p["w1"].astype(jnp.bfloat16), p["b1"].reshape(C, 1),
      p["ln_g"].reshape(C, 1), p["ln_b"].reshape(C, 1), p["w2"].reshape(1, C))
    return out.reshape(bs, C, h, w)


# ---------------------------------------------------------------------------
# Parameters (deterministic, synthetic).  BN affines folded into conv weights.
# ---------------------------------------------------------------------------
def init_params(key, in_ch, enc_ch, dec_ch, n_classes):
    eps = 1e-5
    ks = iter(jax.random.split(key, 128))

    def nrm(shape, s=0.1):
        return (s * jax.random.normal(next(ks), shape)).astype(jnp.float32)

    params = {"encoder": [], "attn": [], "decoder": []}

    prev = in_ch
    for c in enc_ch:
        params["encoder"].append({
            "w": nrm((3, 3, prev, c)).astype(jnp.bfloat16),
            "b": nrm((c,)),
        })
        prev = c

    for c in enc_ch:
        params["attn"].append({
            "w1": nrm((c, c)),                 # (out, in): applied as w1 @ x_cf
            "b1": nrm((c,)),
            "ln_g": 1.0 + nrm((c,)), "ln_b": nrm((c,)),
            "w2": nrm((c, 1)),
            "b2": nrm((1,)),                   # unused in-kernel (softmax shift-invariant)
        })

    # UnetDecoder channel arithmetic (segmentation_models_pytorch convention)
    encoder_channels = [in_ch] + list(enc_ch)
    ec = list(reversed(encoder_channels[1:]))  # [32, 16, 8]
    head = ec[0]
    in_channels = [head] + list(dec_ch[:-1])   # [32, 32, 16]
    skip_channels = ec[1:] + [0]               # [16, 8, 0]
    out_channels = list(dec_ch)                # [32, 16, 8]

    def bn_affine(c):
        gamma = 1.0 + nrm((c,))
        beta = nrm((c,))
        mean = nrm((c,))
        var = 1.0 + 0.1 * jnp.abs(nrm((c,)))
        scale = gamma * jax.lax.rsqrt(var + eps)
        shift = beta - mean * scale
        return scale, shift

    for ic, sc, oc in zip(in_channels, skip_channels, out_channels):
        c1_in = ic + sc
        s1, t1 = bn_affine(oc)
        s2, t2 = bn_affine(oc)
        w1 = nrm((3, 3, c1_in, oc)) * s1[None, None, None, :]   # BN folded into weight
        w2 = nrm((3, 3, oc, oc)) * s2[None, None, None, :]
        params["decoder"].append({
            "w1": w1.astype(jnp.bfloat16), "b1": t1,
            "w2": w2.astype(jnp.bfloat16), "b2": t2,
        })

    params["seg_head"] = {
        "w": nrm((3, 3, out_channels[-1], n_classes)).astype(jnp.bfloat16),
        "b": nrm((n_classes,)),
    }
    return params


# ---------------------------------------------------------------------------
# Forward pass (mirrors UnetVFLOW.forward); channels-first end to end.
# ---------------------------------------------------------------------------
def unet_vflow_forward(params, x, mask=None):
    # TODO(synk): mask handling (attn_logits[mask] = -inf) not implemented; mask=None only.
    bs, V, d, H, W = x.shape
    x = x.reshape(bs * V, d, H, W).astype(jnp.bfloat16)     # NCHW, bf16 activations

    # encoder (synthetic stand-in for the timm features_only backbone)
    feats = []
    h = x
    for st in params["encoder"]:
        h = conv3x3_s2_cf(h, st["w"], st["b"], relu=True)
        feats.append(h)

    # per-stage attention pooling over the view axis
    pooled = [attention_pool(f, bs, ap) for f, ap in zip(feats, params["attn"])]

    # UnetDecoder: deepest pooled feature is the head, rest are skips
    rev = pooled[::-1]
    xdec = rev[0]
    skips = rev[1:]
    for i, blk in enumerate(params["decoder"]):
        skip = skips[i] if i < len(skips) else None
        xdec = decoder_block(xdec, skip, blk)

    sh = params["seg_head"]
    masks = conv3x3_s1_cf(xdec, sh["w"], sh["b"], relu=False, out_dtype=jnp.float32)
    return masks                                            # already NCHW


if __name__ == "__main__":
    bs, views, in_ch, H, W = 2, 2, 4, 16, 16
    enc_ch = [8, 16, 32]
    dec_ch = [32, 16, 8]
    n_classes = 2

    key = jax.random.PRNGKey(0)
    kx, kp = jax.random.split(key)
    x = jax.random.normal(kx, (bs, views, in_ch, H, W), dtype=jnp.float32)
    params = init_params(kp, in_ch, enc_ch, dec_ch, n_classes)

    fwd = jax.jit(unet_vflow_forward)
    out = jax.block_until_ready(fwd(params, x))

    assert out.shape == (bs, n_classes, H, W), out.shape
    assert bool(jnp.all(jnp.isfinite(out))), "non-finite output"
    print("KERNEL_OK")
</pallas_src>

<mosaic_0001>
module attributes {stable_mosaic.version = 11 : i64} {
  func.func @_conv_cf_kernel(%arg0: i32, %arg1: memref<2x16x82xbf16, #tpu.memory_space<vmem>>, %arg2: memref<8x64xbf16, #tpu.memory_space<vmem>>, %arg3: memref<8x1xf32, #tpu.memory_space<vmem>>, %arg4: memref<2x8x72xbf16, #tpu.memory_space<vmem>>) attributes {dimension_semantics = [#tpu.dimension_semantics<parallel>], iteration_bounds = array<i64: 2>, scalar_prefetch = 0 : i64, scratch_operands = 0 : i64, tpu.core_type = #tpu.core_type<tc>, window_params = [{transform_indices = @transform_0, window_bounds = array<i64: 2, 16, 82>}, {pipeline_mode = #tpu.pipeline_mode<synchronous>, transform_indices = @transform_1, window_bounds = array<i64: 8, 64>}, {pipeline_mode = #tpu.pipeline_mode<synchronous>, transform_indices = @transform_2, window_bounds = array<i64: 8, 1>}, {transform_indices = @transform_3, window_bounds = array<i64: 2, 8, 72>}]} {
    %c0 = arith.constant 0 : index
    %c0_0 = arith.constant 0 : index
    %c0_1 = arith.constant 0 : index
    %0 = vector.load %arg1[%c0, %c0_0, %c0_1] : memref<2x16x82xbf16, #tpu.memory_space<vmem>>, vector<1x16x82xbf16>
    %1 = vector.shape_cast %0 : vector<1x16x82xbf16> to vector<16x82xbf16>
    %2 = vector.extract_strided_slice %1 {offsets = [0, 0], sizes = [16, 72], strides = [1, 1]} : vector<16x82xbf16> to vector<16x72xbf16>
    %3 = vector.extract_strided_slice %1 {offsets = [0, 1], sizes = [16, 72], strides = [1, 1]} : vector<16x82xbf16> to vector<16x72xbf16>
    %4 = vector.extract_strided_slice %1 {offsets = [0, 9], sizes = [16, 72], strides = [1, 1]} : vector<16x82xbf16> to vector<16x72xbf16>
    %5 = vector.extract_strided_slice %1 {offsets = [0, 10], sizes = [16, 72], strides = [1, 1]} : vector<16x82xbf16> to vector<16x72xbf16>
    %6 = tpu.concatenate %2, %3, %4, %5 in 0 : vector<16x72xbf16>, vector<16x72xbf16>, vector<16x72xbf16>, vector<16x72xbf16> -> vector<64x72xbf16>
    %c1 = arith.constant 1 : index
    %c0_2 = arith.constant 0 : index
    %c0_3 = arith.constant 0 : index
    %7 = vector.load %arg1[%c1, %c0_2, %c0_3] : memref<2x16x82xbf16, #tpu.memory_space<vmem>>, vector<1x16x82xbf16>
    %8 = vector.shape_cast %7 : vector<1x16x82xbf16> to vector<16x82xbf16>
    %9 = vector.extract_strided_slice %8 {offsets = [0, 0], sizes = [16, 72], strides = [1, 1]} : vector<16x82xbf16> to vector<16x72xbf16>
    %10 = vector.extract_strided_slice %8 {offsets = [0, 1], sizes = [16, 72], strides = [1, 1]} : vector<16x82xbf16> to vector<16x72xbf16>
    %11 = vector.extract_strided_slice %8 {offsets = [0, 9], sizes = [16, 72], strides = [1, 1]} : vector<16x82xbf16> to vector<16x72xbf16>
    %12 = vector.extract_strided_slice %8 {offsets = [0, 10], sizes = [16, 72], strides = [1, 1]} : vector<16x82xbf16> to vector<16x72xbf16>
    %13 = tpu.concatenate %9, %10, %11, %12 in 0 : vector<16x72xbf16>, vector<16x72xbf16>, vector<16x72xbf16>, vector<16x72xbf16> -> vector<64x72xbf16>
    %14 = tpu.concatenate %6, %13 in 1 : vector<64x72xbf16>, vector<64x72xbf16> -> vector<64x144xbf16>
    %c0_4 = arith.constant 0 : index
    %c0_5 = arith.constant 0 : index
    %15 = vector.load %arg2[%c0_4, %c0_5] : memref<8x64xbf16, #tpu.memory_space<vmem>>, vector<8x64xbf16>
    %cst = arith.constant dense<0.000000e+00> : vector<8x144xf32>
    %16 = tpu.matmul %15, %14, %cst {dimension_numbers = #tpu.dot_dimension_numbers<[1], [0], [0], [1], [0, 0, 1, 1], [], []>} : vector<8x64xbf16>, vector<64x144xbf16>, vector<8x144xf32> -> vector<8x144xf32>
    %c0_6 = arith.constant 0 : index
    %c0_7 = arith.constant 0 : index
    %17 = vector.load %arg3[%c0_6, %c0_7] : memref<8x1xf32, #tpu.memory_space<vmem>>, vector<8x1xf32>
    %18 = vector.broadcast %17 : vector<8x1xf32> to vector<8x144xf32>
    %19 = arith.addf %16, %18 : vector<8x144xf32>
    %cst_8 = arith.constant 0.000000e+00 : f32
    %20 = vector.broadcast %cst_8 : f32 to vector<8x144xf32>
    %21 = arith.maximumf %19, %20 : vector<8x144xf32>
    %22 = vector.extract_strided_slice %21 {offsets = [0, 0], sizes = [8, 72], strides = [1, 1]} : vector<8x144xf32> to vector<8x72xf32>
    %23 = arith.truncf %22 : vector<8x72xf32> to vector<8x72xbf16>
    %c0_9 = arith.constant 0 : index
    %c0_10 = arith.constant 0 : index
    %c0_11 = arith.constant 0 : index
    %24 = vector.load %arg4[%c0_9, %c0_10, %c0_11] : memref<2x8x72xbf16, #tpu.memory_space<vmem>>, vector<1x8x72xbf16>
    %25 = vector.shape_cast %24 : vector<1x8x72xbf16> to vector<8x72xbf16>
    %26 = vector.shape_cast %23 : vector<8x72xbf16> to vector<1x8x72xbf16>
    tpu.vector_store %arg4[%c0_9, %c0_10, %c0_11], %26 {strides = array<i32>} : memref<2x8x72xbf16, #tpu.memory_space<vmem>>, vector<1x8x72xbf16>,
    %27 = vector.extract_strided_slice %21 {offsets = [0, 72], sizes = [8, 72], strides = [1, 1]} : vector<8x144xf32> to vector<8x72xf32>
    %28 = arith.truncf %27 : vector<8x72xf32> to vector<8x72xbf16>
    %c1_12 = arith.constant 1 : index
    %c0_13 = arith.constant 0 : index
    %c0_14 = arith.constant 0 : index
    %29 = vector.load %arg4[%c1_12, %c0_13, %c0_14] : memref<2x8x72xbf16, #tpu.memory_space<vmem>>, vector<1x8x72xbf16>
    %30 = vector.shape_cast %29 : vector<1x8x72xbf16> to vector<8x72xbf16>
    %31 = vector.shape_cast %28 : vector<8x72xbf16> to vector<1x8x72xbf16>
    tpu.vector_store %arg4[%c1_12, %c0_13, %c0_14], %31 {strides = array<i32>} : memref<2x8x72xbf16, #tpu.memory_space<vmem>>, vector<1x8x72xbf16>,
    return
  }
  func.func @transform_0(%arg0: i32) -> (i32, i32, i32) {
    %c0_i32 = arith.constant 0 : i32
    %c0_i32_0 = arith.constant 0 : i32
    %c0_i32_1 = arith.constant 0 : i32
    return %arg0, %c0_i32, %c0_i32_0 : i32, i32, i32
  }
  func.func @transform_1(%arg0: i32) -> (i32, i32) {
    %c0_i32 = arith.constant 0 : i32
    %c0_i32_0 = arith.constant 0 : i32
    %c0_i32_1 = arith.constant 0 : i32
    return %c0_i32, %c0_i32_0 : i32, i32
  }
  func.func @transform_2(%arg0: i32) -> (i32, i32) {
    %c0_i32 = arith.constant 0 : i32
    %c0_i32_0 = arith.constant 0 : i32
    %c0_i32_1 = arith.constant 0 : i32
    return %c0_i32, %c0_i32_0 : i32, i32
  }
  func.func @transform_3(%arg0: i32) -> (i32, i32, i32) {
    %c0_i32 = arith.constant 0 : i32
    %c0_i32_0 = arith.constant 0 : i32
    %c0_i32_1 = arith.constant 0 : i32
    return %arg0, %c0_i32, %c0_i32_0 : i32, i32, i32
  }
}

module attributes {stable_mosaic.version = 11 : i64} {
  func.func @_conv_cf_kernel(%arg0: i32, %arg1: memref<2x32x26xbf16, #tpu.memory_space<vmem>>, %arg2: memref<16x128xbf16, #tpu.memory_space<vmem>>, %arg3: memref<16x1xf32, #tpu.memory_space<vmem>>, %arg4: memref<2x16x20xbf16, #tpu.memory_space<vmem>>) attributes {dimension_semantics = [#tpu.dimension_semantics<parallel>], iteration_bounds = array<i64: 2>, scalar_prefetch = 0 : i64, scratch_operands = 0 : i64, tpu.core_type = #tpu.core_type<tc>, window_params = [{transform_indices = @transform_0, window_bounds = array<i64: 2, 32, 26>}, {pipeline_mode = #tpu.pipeline_mode<synchronous>, transform_indices = @transform_1, window_bounds = array<i64: 16, 128>}, {pipeline_mode = #tpu.pipeline_mode<synchronous>, transform_indices = @transform_2, window_bounds = array<i64: 16, 1>}, {transform_indices = @transform_3, window_bounds = array<i64: 2, 16, 20>}]} {
    %c0 = arith.constant 0 : index
    %c0_0 = arith.constant 0 : index
    %c0_1 = arith.constant 0 : index
    %0 = vector.load %arg1[%c0, %c0_0, %c0_1] : memref<2x32x26xbf16, #tpu.memory_space<vmem>>, vector<1x32x26xbf16>
    %1 = vector.shape_cast %0 : vector<1x32x26xbf16> to vector<32x26xbf16>
    %2 = vector.extract_strided_slice %1 {offsets = [0, 0], sizes = [32, 20], strides = [1, 1]} : vector<32x26xbf16> to vector<32x20xbf16>
    %3 = vector.extract_strided_slice %1 {offsets = [0, 1], sizes = [32, 20], strides = [1, 1]} : vector<32x26xbf16> to vector<32x20xbf16>
    %4 = vector.extract_strided_slice %1 {offsets = [0, 5], sizes = [32, 20], strides = [1, 1]} : vector<32x26xbf16> to vector<32x20xbf16>
    %5 = vector.extract_strided_slice %1 {offsets = [0, 6], sizes = [32, 20], strides = [1, 1]} : vector<32x26xbf16> to vector<32x20xbf16>
    %6 = tpu.concatenate %2, %3, %4, %5 in 0 : vector<32x20xbf16>, vector<32x20xbf16>, vector<32x20xbf16>, vector<32x20xbf16> -> vector<128x20xbf16>
    %c1 = arith.constant 1 : index
    %c0_2 = arith.constant 0 : index
    %c0_3 = arith.constant 0 : index
    %7 = vector.load %arg1[%c1, %c0_2, %c0_3] : memref<2x32x26xbf16, #tpu.memory_space<vmem>>, vector<1x32x26xbf16>
    %8 = vector.shape_cast %7 : vector<1x32x26xbf16> to vector<32x26xbf16>
    %9 = vector.extract_strided_slice %8 {offsets = [0, 0], sizes = [32, 20], strides = [1, 1]} : vector<32x26xbf16> to vector<32x20xbf16>
    %10 = vector.extract_strided_slice %8 {offsets = [0, 1], sizes = [32, 20], strides = [1, 1]} : vector<32x26xbf16> to vector<32x20xbf16>
    %11 = vector.extract_strided_slice %8 {offsets = [0, 5], sizes = [32, 20], strides = [1, 1]} : vector<32x26xbf16> to vector<32x20xbf16>
    %12 = vector.extract_strided_slice %8 {offsets = [0, 6], sizes = [32, 20], strides = [1, 1]} : vector<32x26xbf16> to vector<32x20xbf16>
    %13 = tpu.concatenate %9, %10, %11, %12 in 0 : vector<32x20xbf16>, vector<32x20xbf16>, vector<32x20xbf16>, vector<32x20xbf16> -> vector<128x20xbf16>
    %14 = tpu.concatenate %6, %13 in 1 : vector<128x20xbf16>, vector<128x20xbf16> -> vector<128x40xbf16>
    %c0_4 = arith.constant 0 : index
    %c0_5 = arith.constant 0 : index
    %15 = vector.load %arg2[%c0_4, %c0_5] : memref<16x128xbf16, #tpu.memory_space<vmem>>, vector<16x128xbf16>
    %cst = arith.constant dense<0.000000e+00> : vector<16x40xf32>
    %16 = tpu.matmul %15, %14, %cst {dimension_numbers = #tpu.dot_dimension_numbers<[1], [0], [0], [1], [0, 0, 1, 1], [], []>} : vector<16x128xbf16>, vector<128x40xbf16>, vector<16x40xf32> -> vector<16x40xf32>
    %c0_6 = arith.constant 0 : index
    %c0_7 = arith.constant 0 : index
    %17 = vector.load %arg3[%c0_6, %c0_7] : memref<16x1xf32, #tpu.memory_space<vmem>>, vector<16x1xf32>
    %18 = vector.broadcast %17 : vector<16x1xf32> to vector<16x40xf32>
    %19 = arith.addf %16, %18 : vector<16x40xf32>
    %cst_8 = arith.constant 0.000000e+00 : f32
    %20 = vector.broadcast %cst_8 : f32 to vector<16x40xf32>
    %21 = arith.maximumf %19, %20 : vector<16x40xf32>
    %22 = vector.extract_strided_slice %21 {offsets = [0, 0], sizes = [16, 20], strides = [1, 1]} : vector<16x40xf32> to vector<16x20xf32>
    %23 = arith.truncf %22 : vector<16x20xf32> to vector<16x20xbf16>
    %c0_9 = arith.constant 0 : index
    %c0_10 = arith.constant 0 : index
    %c0_11 = arith.constant 0 : index
    %24 = vector.load %arg4[%c0_9, %c0_10, %c0_11] : memref<2x16x20xbf16, #tpu.memory_space<vmem>>, vector<1x16x20xbf16>
    %25 = vector.shape_cast %24 : vector<1x16x20xbf16> to vector<16x20xbf16>
    %26 = vector.shape_cast %23 : vector<16x20xbf16> to vector<1x16x20xbf16>
    tpu.vector_store %arg4[%c0_9, %c0_10, %c0_11], %26 {strides = array<i32>} : memref<2x16x20xbf16, #tpu.memory_space<vmem>>, vector<1x16x20xbf16>,
    %27 = vector.extract_strided_slice %21 {offsets = [0, 20], sizes = [16, 20], strides = [1, 1]} : vector<16x40xf32> to vector<16x20xf32>
    %28 = arith.truncf %27 : vector<16x20xf32> to vector<16x20xbf16>
    %c1_12 = arith.constant 1 : index
    %c0_13 = arith.constant 0 : index
    %c0_14 = arith.constant 0 : index
    %29 = vector.load %arg4[%c1_12, %c0_13, %c0_14] : memref<2x16x20xbf16, #tpu.memory_space<vmem>>, vector<1x16x20xbf16>
    %30 = vector.shape_cast %29 : vector<1x16x20xbf16> to vector<16x20xbf16>
    %31 = vector.shape_cast %28 : vector<16x20xbf16> to vector<1x16x20xbf16>
    tpu.vector_store %arg4[%c1_12, %c0_13, %c0_14], %31 {strides = array<i32>} : memref<2x16x20xbf16, #tpu.memory_space<vmem>>, vector<1x16x20xbf16>,
    return
  }
  func.func @transform_0(%arg0: i32) -> (i32, i32, i32) {
    %c0_i32 = arith.constant 0 : i32
    %c0_i32_0 = arith.constant 0 : i32
    %c0_i32_1 = arith.constant 0 : i32
    return %arg0, %c0_i32, %c0_i32_0 : i32, i32, i32
  }
  func.func @transform_1(%arg0: i32) -> (i32, i32) {
    %c0_i32 = arith.constant 0 : i32
    %c0_i32_0 = arith.constant 0 : i32
    %c0_i32_1 = arith.constant 0 : i32
    return %c0_i32, %c0_i32_0 : i32, i32
  }
  func.func @transform_2(%arg0: i32) -> (i32, i32) {
    %c0_i32 = arith.constant 0 : i32
    %c0_i32_0 = arith.constant 0 : i32
    %c0_i32_1 = arith.constant 0 : i32
    return %c0_i32, %c0_i32_0 : i32, i32
  }
  func.func @transform_3(%arg0: i32) -> (i32, i32, i32) {
    %c0_i32 = arith.constant 0 : i32
    %c0_i32_0 = arith.constant 0 : i32
    %c0_i32_1 = arith.constant 0 : i32
    return %arg0, %c0_i32, %c0_i32_0 : i32, i32, i32
  }
}

module attributes {stable_mosaic.version = 11 : i64} {
  func.func @_conv_cf_kernel(%arg0: i32, %arg1: memref<2x64x10xbf16, #tpu.memory_space<vmem>>, %arg2: memref<32x256xbf16, #tpu.memory_space<vmem>>, %arg3: memref<32x1xf32, #tpu.memory_space<vmem>>, %arg4: memref<2x32x6xbf16, #tpu.memory_space<vmem>>) attributes {dimension_semantics = [#tpu.dimension_semantics<parallel>], iteration_bounds = array<i64: 2>, scalar_prefetch = 0 : i64, scratch_operands = 0 : i64, tpu.core_type = #tpu.core_type<tc>, window_params = [{transform_indices = @transform_0, window_bounds = array<i64: 2, 64, 10>}, {pipeline_mode = #tpu.pipeline_mode<synchronous>, transform_indices = @transform_1, window_bounds = array<i64: 32, 256>}, {pipeline_mode = #tpu.pipeline_mode<synchronous>, transform_indices = @transform_2, window_bounds = array<i64: 32, 1>}, {transform_indices = @transform_3, window_bounds = array<i64: 2, 32, 6>}]} {
    %c0 = arith.constant 0 : index
    %c0_0 = arith.constant 0 : index
    %c0_1 = arith.constant 0 : index
    %0 = vector.load %arg1[%c0, %c0_0, %c0_1] : memref<2x64x10xbf16, #tpu.memory_space<vmem>>, vector<1x64x10xbf16>
    %1 = vector.shape_cast %0 : vector<1x64x10xbf16> to vector<64x10xbf16>
    %2 = vector.extract_strided_slice %1 {offsets = [0, 0], sizes = [64, 6], strides = [1, 1]} : vector<64x10xbf16> to vector<64x6xbf16>
    %3 = vector.extract_strided_slice %1 {offsets = [0, 1], sizes = [64, 6], strides = [1, 1]} : vector<64x10xbf16> to vector<64x6xbf16>
    %4 = vector.extract_strided_slice %1 {offsets = [0, 3], sizes = [64, 6], strides = [1, 1]} : vector<64x10xbf16> to vector<64x6xbf16>
    %5 = vector.extract_strided_slice %1 {offsets = [0, 4], sizes = [64, 6], strides = [1, 1]} : vector<64x10xbf16> to vector<64x6xbf16>
    %6 = tpu.concatenate %2, %3, %4, %5 in 0 : vector<64x6xbf16>, vector<64x6xbf16>, vector<64x6xbf16>, vector<64x6xbf16> -> vector<256x6xbf16>
    %c1 = arith.constant 1 : index
    %c0_2 = arith.constant 0 : index
    %c0_3 = arith.constant 0 : index
    %7 = vector.load %arg1[%c1, %c0_2, %c0_3] : memref<2x64x10xbf16, #tpu.memory_space<vmem>>, vector<1x64x10xbf16>
    %8 = vector.shape_cast %7 : vector<1x64x10xbf16> to vector<64x10xbf16>
    %9 = vector.extract_strided_slice %8 {offsets = [0, 0], sizes = [64, 6], strides = [1, 1]} : vector<64x10xbf16> to vector<64x6xbf16>
    %10 = vector.extract_strided_slice %8 {offsets = [0, 1], sizes = [64, 6], strides = [1, 1]} : vector<64x10xbf16> to vector<64x6xbf16>
    %11 = vector.extract_strided_slice %8 {offsets = [0, 3], sizes = [64, 6], strides = [1, 1]} : vector<64x10xbf16> to vector<64x6xbf16>
    %12 = vector.extract_strided_slice %8 {offsets = [0, 4], sizes = [64, 6], strides = [1, 1]} : vector<64x10xbf16> to vector<64x6xbf16>
    %13 = tpu.concatenate %9, %10, %11, %12 in 0 : vector<64x6xbf16>, vector<64x6xbf16>, vector<64x6xbf16>, vector<64x6xbf16> -> vector<256x6xbf16>
    %14 = tpu.concatenate %6, %13 in 1 : vector<256x6xbf16>, vector<256x6xbf16> -> vector<256x12xbf16>
    %c0_4 = arith.constant 0 : index
    %c0_5 = arith.constant 0 : index
    %15 = vector.load %arg2[%c0_4, %c0_5] : memref<32x256xbf16, #tpu.memory_space<vmem>>, vector<32x256xbf16>
    %cst = arith.constant dense<0.000000e+00> : vector<32x12xf32>
    %16 = tpu.matmul %15, %14, %cst {dimension_numbers = #tpu.dot_dimension_numbers<[1], [0], [0], [1], [0, 0, 1, 1], [], []>} : vector<32x256xbf16>, vector<256x12xbf16>, vector<32x12xf32> -> vector<32x12xf32>
    %c0_6 = arith.constant 0 : index
    %c0_7 = arith.constant 0 : index
    %17 = vector.load %arg3[%c0_6, %c0_7] : memref<32x1xf32, #tpu.memory_space<vmem>>, vector<32x1xf32>
    %18 = vector.broadcast %17 : vector<32x1xf32> to vector<32x12xf32>
    %19 = arith.addf %16, %18 : vector<32x12xf32>
    %cst_8 = arith.constant 0.000000e+00 : f32
    %20 = vector.broadcast %cst_8 : f32 to vector<32x12xf32>
    %21 = arith.maximumf %19, %20 : vector<32x12xf32>
    %22 = vector.extract_strided_slice %21 {offsets = [0, 0], sizes = [32, 6], strides = [1, 1]} : vector<32x12xf32> to vector<32x6xf32>
    %23 = arith.truncf %22 : vector<32x6xf32> to vector<32x6xbf16>
    %c0_9 = arith.constant 0 : index
    %c0_10 = arith.constant 0 : index
    %c0_11 = arith.constant 0 : index
    %24 = vector.load %arg4[%c0_9, %c0_10, %c0_11] : memref<2x32x6xbf16, #tpu.memory_space<vmem>>, vector<1x32x6xbf16>
    %25 = vector.shape_cast %24 : vector<1x32x6xbf16> to vector<32x6xbf16>
    %26 = vector.shape_cast %23 : vector<32x6xbf16> to vector<1x32x6xbf16>
    tpu.vector_store %arg4[%c0_9, %c0_10, %c0_11], %26 {strides = array<i32>} : memref<2x32x6xbf16, #tpu.memory_space<vmem>>, vector<1x32x6xbf16>,
    %27 = vector.extract_strided_slice %21 {offsets = [0, 6], sizes = [32, 6], strides = [1, 1]} : vector<32x12xf32> to vector<32x6xf32>
    %28 = arith.truncf %27 : vector<32x6xf32> to vector<32x6xbf16>
    %c1_12 = arith.constant 1 : index
    %c0_13 = arith.constant 0 : index
    %c0_14 = arith.constant 0 : index
    %29 = vector.load %arg4[%c1_12, %c0_13, %c0_14] : memref<2x32x6xbf16, #tpu.memory_space<vmem>>, vector<1x32x6xbf16>
    %30 = vector.shape_cast %29 : vector<1x32x6xbf16> to vector<32x6xbf16>
    %31 = vector.shape_cast %28 : vector<32x6xbf16> to vector<1x32x6xbf16>
    tpu.vector_store %arg4[%c1_12, %c0_13, %c0_14], %31 {strides = array<i32>} : memref<2x32x6xbf16, #tpu.memory_space<vmem>>, vector<1x32x6xbf16>,
    return
  }
  func.func @transform_0(%arg0: i32) -> (i32, i32, i32) {
    %c0_i32 = arith.constant 0 : i32
    %c0_i32_0 = arith.constant 0 : i32
    %c0_i32_1 = arith.constant 0 : i32
    return %arg0, %c0_i32, %c0_i32_0 : i32, i32, i32
  }
  func.func @transform_1(%arg0: i32) -> (i32, i32) {
    %c0_i32 = arith.constant 0 : i32
    %c0_i32_0 = arith.constant 0 : i32
    %c0_i32_1 = arith.constant 0 : i32
    return %c0_i32, %c0_i32_0 : i32, i32
  }
  func.func @transform_2(%arg0: i32) -> (i32, i32) {
    %c0_i32 = arith.constant 0 : i32
    %c0_i32_0 = arith.constant 0 : i32
    %c0_i32_1 = arith.constant 0 : i32
    return %c0_i32, %c0_i32_0 : i32, i32
  }
  func.func @transform_3(%arg0: i32) -> (i32, i32, i32) {
    %c0_i32 = arith.constant 0 : i32
    %c0_i32_0 = arith.constant 0 : i32
    %c0_i32_1 = arith.constant 0 : i32
    return %arg0, %c0_i32, %c0_i32_0 : i32, i32, i32
  }
}

module attributes {stable_mosaic.version = 11 : i64} {
  func.func @_attn_pool_kernel(%arg0: i32, %arg1: memref<1x2x32x4xbf16, #tpu.memory_space<vmem>>, %arg2: memref<32x32xbf16, #tpu.memory_space<vmem>>, %arg3: memref<32x1xf32, #tpu.memory_space<vmem>>, %arg4: memref<32x1xf32, #tpu.memory_space<vmem>>, %arg5: memref<32x1xf32, #tpu.memory_space<vmem>>, %arg6: memref<1x32xf32, #tpu.memory_space<vmem>>, %arg7: memref<1x32x4xbf16, #tpu.memory_space<vmem>>) attributes {dimension_semantics = [#tpu.dimension_semantics<parallel>], iteration_bounds = array<i64: 2>, scalar_prefetch = 0 : i64, scratch_operands = 0 : i64, tpu.core_type = #tpu.core_type<tc>, window_params = [{transform_indices = @transform_0, window_bounds = array<i64: 1, 2, 32, 4>}, {pipeline_mode = #tpu.pipeline_mode<synchronous>, transform_indices = @transform_1, window_bounds = array<i64: 32, 32>}, {pipeline_mode = #tpu.pipeline_mode<synchronous>, transform_indices = @transform_2, window_bounds = array<i64: 32, 1>}, {pipeline_mode = #tpu.pipeline_mode<synchronous>, transform_indices = @transform_3, window_bounds = array<i64: 32, 1>}, {pipeline_mode = #tpu.pipeline_mode<synchronous>, transform_indices = @transform_4, window_bounds = array<i64: 32, 1>}, {pipeline_mode = #tpu.pipeline_mode<synchronous>, transform_indices = @transform_5, window_bounds = array<i64: 1, 32>}, {transform_indices = @transform_6, window_bounds = array<i64: 1, 32, 4>}]} {
    %c0 = arith.constant 0 : index
    %c0_0 = arith.constant 0 : index
    %c0_1 = arith.constant 0 : index
    %c0_2 = arith.constant 0 : index
    %0 = vector.load %arg1[%c0, %c0_0, %c0_1, %c0_2] : memref<1x2x32x4xbf16, #tpu.memory_space<vmem>>, vector<1x1x32x4xbf16>
    %1 = vector.shape_cast %0 : vector<1x1x32x4xbf16> to vector<32x4xbf16>
    %c0_3 = arith.constant 0 : index
    %c1 = arith.constant 1 : index
    %c0_4 = arith.constant 0 : index
    %c0_5 = arith.constant 0 : index
    %2 = vector.load %arg1[%c0_3, %c1, %c0_4, %c0_5] : memref<1x2x32x4xbf16, #tpu.memory_space<vmem>>, vector<1x1x32x4xbf16>
    %3 = vector.shape_cast %2 : vector<1x1x32x4xbf16> to vector<32x4xbf16>
    %4 = tpu.concatenate %1, %3 in 1 : vector<32x4xbf16>, vector<32x4xbf16> -> vector<32x8xbf16>
    %c0_6 = arith.constant 0 : index
    %c0_7 = arith.constant 0 : index
    %5 = vector.load %arg2[%c0_6, %c0_7] : memref<32x32xbf16, #tpu.memory_space<vmem>>, vector<32x32xbf16>
    %cst = arith.constant dense<0.000000e+00> : vector<32x8xf32>
    %6 = tpu.matmul %5, %4, %cst {dimension_numbers = #tpu.dot_dimension_numbers<[1], [0], [0], [1], [0, 0, 1, 1], [], []>} : vector<32x32xbf16>, vector<32x8xbf16>, vector<32x8xf32> -> vector<32x8xf32>
    %c0_8 = arith.constant 0 : index
    %c0_9 = arith.constant 0 : index
    %7 = vector.load %arg3[%c0_8, %c0_9] : memref<32x1xf32, #tpu.memory_space<vmem>>, vector<32x1xf32>
    %8 = vector.broadcast %7 : vector<32x1xf32> to vector<32x8xf32>
    %9 = arith.addf %6, %8 : vector<32x8xf32>
    %cst_10 = arith.constant 3.125000e-02 : f32
    %10 = vector.broadcast %cst_10 : f32 to vector<1x32xf32>
    %cst_11 = arith.constant dense<0.000000e+00> : vector<1x8xf32>
    %11 = tpu.matmul %10, %9, %cst_11 {dimension_numbers = #tpu.dot_dimension_numbers<[1], [0], [0], [1], [0, 0, 1, 1], [], []>} : vector<1x32xf32>, vector<32x8xf32>, vector<1x8xf32> -> vector<1x8xf32>
    %12 = vector.broadcast %11 : vector<1x8xf32> to vector<32x8xf32>
    %13 = arith.subf %9, %12 : vector<32x8xf32>
    %14 = arith.mulf %13, %13 : vector<32x8xf32>
    %cst_12 = arith.constant dense<0.000000e+00> : vector<1x8xf32>
    %15 = tpu.matmul %10, %14, %cst_12 {dimension_numbers = #tpu.dot_dimension_numbers<[1], [0], [0], [1], [0, 0, 1, 1], [], []>} : vector<1x32xf32>, vector<32x8xf32>, vector<1x8xf32> -> vector<1x8xf32>
    %16 = vector.broadcast %11 : vector<1x8xf32> to vector<32x8xf32>
    %17 = arith.subf %9, %16 : vector<32x8xf32>
    %cst_13 = arith.constant 9.99999974E-6 : f32
    %18 = vector.broadcast %cst_13 : f32 to vector<1x8xf32>
    %19 = arith.addf %15, %18 : vector<1x8xf32>
    %20 = math.rsqrt %19 : vector<1x8xf32>
    %21 = vector.broadcast %20 : vector<1x8xf32> to vector<32x8xf32>
    %22 = arith.mulf %17, %21 : vector<32x8xf32>
    %c0_14 = arith.constant 0 : index
    %c0_15 = arith.constant 0 : index
    %23 = vector.load %arg4[%c0_14, %c0_15] : memref<32x1xf32, #tpu.memory_space<vmem>>, vector<32x1xf32>
    %24 = vector.broadcast %23 : vector<32x1xf32> to vector<32x8xf32>
    %25 = arith.mulf %22, %24 : vector<32x8xf32>
    %c0_16 = arith.constant 0 : index
    %c0_17 = arith.constant 0 : index
    %26 = vector.load %arg5[%c0_16, %c0_17] : memref<32x1xf32, #tpu.memory_space<vmem>>, vector<32x1xf32>
    %27 = vector.broadcast %26 : vector<32x1xf32> to vector<32x8xf32>
    %28 = arith.addf %25, %27 : vector<32x8xf32>
    %cst_18 = arith.constant 5.000000e-01 : f32
    %29 = vector.broadcast %cst_18 : f32 to vector<32x8xf32>
    %30 = arith.mulf %29, %28 : vector<32x8xf32>
    %cst_19 = arith.constant 4.471500e-02 : f32
    %31 = vector.broadcast %cst_19 : f32 to vector<32x8xf32>
    %32 = arith.mulf %31, %28 : vector<32x8xf32>
    %33 = arith.mulf %32, %28 : vector<32x8xf32>
    %34 = arith.mulf %33, %28 : vector<32x8xf32>
    %35 = arith.addf %28, %34 : vector<32x8xf32>
    %cst_20 = arith.constant 0.797884583 : f32
    %36 = vector.broadcast %cst_20 : f32 to vector<32x8xf32>
    %37 = arith.mulf %36, %35 : vector<32x8xf32>
    %38 = math.tanh %37 : vector<32x8xf32>
    %cst_21 = arith.constant 1.000000e+00 : f32
    %39 = vector.broadcast %cst_21 : f32 to vector<32x8xf32>
    %40 = arith.addf %39, %38 : vector<32x8xf32>
    %41 = arith.mulf %30, %40 : vector<32x8xf32>
    %c0_22 = arith.constant 0 : index
    %c0_23 = arith.constant 0 : index
    %42 = vector.load %arg6[%c0_22, %c0_23] : memref<1x32xf32, #tpu.memory_space<vmem>>, vector<1x32xf32>
    %cst_24 = arith.constant dense<0.000000e+00> : vector<1x8xf32>
    %43 = tpu.matmul %42, %41, %cst_24 {dimension_numbers = #tpu.dot_dimension_numbers<[1], [0], [0], [1], [0, 0, 1, 1], [], []>} : vector<1x32xf32>, vector<32x8xf32>, vector<1x8xf32> -> vector<1x8xf32>
    %44 = vector.extract_strided_slice %43 {offsets = [0, 0], sizes = [1, 4], strides = [1, 1]} : vector<1x8xf32> to vector<1x4xf32>
    %45 = vector.extract_strided_slice %43 {offsets = [0, 4], sizes = [1, 4], strides = [1, 1]} : vector<1x8xf32> to vector<1x4xf32>
    %46 = arith.maximumf %44, %45 : vector<1x4xf32>
    %47 = arith.subf %44, %46 : vector<1x4xf32>
    %48 = math.exp %47 : vector<1x4xf32>
    %49 = arith.subf %45, %46 : vector<1x4xf32>
    %50 = math.exp %49 : vector<1x4xf32>
    %51 = arith.addf %48, %50 : vector<1x4xf32>
    %cst_25 = arith.constant 1.000000e+00 : f32
    %52 = vector.broadcast %cst_25 : f32 to vector<1x4xf32>
    %53 = arith.divf %52, %51 : vector<1x4xf32>
    %54 = arith.mulf %48, %53 : vector<1x4xf32>
    %55 = arith.extf %1 : vector<32x4xbf16> to vector<32x4xf32>
    %56 = vector.broadcast %54 : vector<1x4xf32> to vector<32x4xf32>
    %57 = arith.mulf %56, %55 : vector<32x4xf32>
    %58 = arith.mulf %50, %53 : vector<1x4xf32>
    %59 = arith.extf %3 : vector<32x4xbf16> to vector<32x4xf32>
    %60 = vector.broadcast %58 : vector<1x4xf32> to vector<32x4xf32>
    %61 = arith.mulf %60, %59 : vector<32x4xf32>
    %62 = arith.addf %57, %61 : vector<32x4xf32>
    %63 = arith.truncf %62 : vector<32x4xf32> to vector<32x4xbf16>
    %c0_26 = arith.constant 0 : index
    %c0_27 = arith.constant 0 : index
    %c0_28 = arith.constant 0 : index
    %64 = vector.load %arg7[%c0_26, %c0_27, %c0_28] : memref<1x32x4xbf16, #tpu.memory_space<vmem>>, vector<1x32x4xbf16>
    %65 = vector.shape_cast %64 : vector<1x32x4xbf16> to vector<32x4xbf16>
    %66 = vector.shape_cast %63 : vector<32x4xbf16> to vector<1x32x4xbf16>
    tpu.vector_store %arg7[%c0_26, %c0_27, %c0_28], %66 {strides = array<i32>} : memref<1x32x4xbf16, #tpu.memory_space<vmem>>, vector<1x32x4xbf16>,
    return
  }
  func.func @transform_0(%arg0: i32) -> (i32, i32, i32, i32) {
    %c0_i32 = arith.constant 0 : i32
    %c0_i32_0 = arith.constant 0 : i32
    %c0_i32_1 = arith.constant 0 : i32
    %c0_i32_2 = arith.constant 0 : i32
    return %arg0, %c0_i32, %c0_i32_0, %c0_i32_1 : i32, i32, i32, i32
  }
  func.func @transform_1(%arg0: i32) -> (i32, i32) {
    %c0_i32 = arith.constant 0 : i32
    %c0_i32_0 = arith.constant 0 : i32
    %c0_i32_1 = arith.constant 0 : i32
    return %c0_i32, %c0_i32_0 : i32, i32
  }
  func.func @transform_2(%arg0: i32) -> (i32, i32) {
    %c0_i32 = arith.constant 0 : i32
    %c0_i32_0 = arith.constant 0 : i32
    %c0_i32_1 = arith.constant 0 : i32
    return %c0_i32, %c0_i32_0 : i32, i32
  }
  func.func @transform_3(%arg0: i32) -> (i32, i32) {
    %c0_i32 = arith.constant 0 : i32
    %c0_i32_0 = arith.constant 0 : i32
    %c0_i32_1 = arith.constant 0 : i32
    return %c0_i32, %c0_i32_0 : i32, i32
  }
  func.func @transform_4(%arg0: i32) -> (i32, i32) {
    %c0_i32 = arith.constant 0 : i32
    %c0_i32_0 = arith.constant 0 : i32
    %c0_i32_1 = arith.constant 0 : i32
    return %c0_i32, %c0_i32_0 : i32, i32
  }
  func.func @transform_5(%arg0: i32) -> (i32, i32) {
    %c0_i32 = arith.constant 0 : i32
    %c0_i32_0 = arith.constant 0 : i32
    %c0_i32_1 = arith.constant 0 : i32
    return %c0_i32, %c0_i32_0 : i32, i32
  }
  func.func @transform_6(%arg0: i32) -> (i32, i32, i32) {
    %c0_i32 = arith.constant 0 : i32
    %c0_i32_0 = arith.constant 0 : i32
    %c0_i32_1 = arith.constant 0 : i32
    return %arg0, %c0_i32, %c0_i32_0 : i32, i32, i32
  }
}

module attributes {stable_mosaic.version = 11 : i64} {
  func.func @_attn_pool_kernel(%arg0: i32, %arg1: memref<1x2x16x16xbf16, #tpu.memory_space<vmem>>, %arg2: memref<16x16xbf16, #tpu.memory_space<vmem>>, %arg3: memref<16x1xf32, #tpu.memory_space<vmem>>, %arg4: memref<16x1xf32, #tpu.memory_space<vmem>>, %arg5: memref<16x1xf32, #tpu.memory_space<vmem>>, %arg6: memref<1x16xf32, #tpu.memory_space<vmem>>, %arg7: memref<1x16x16xbf16, #tpu.memory_space<vmem>>) attributes {dimension_semantics = [#tpu.dimension_semantics<parallel>], iteration_bounds = array<i64: 2>, scalar_prefetch = 0 : i64, scratch_operands = 0 : i64, tpu.core_type = #tpu.core_type<tc>, window_params = [{transform_indices = @transform_0, window_bounds = array<i64: 1, 2, 16, 16>}, {pipeline_mode = #tpu.pipeline_mode<synchronous>, transform_indices = @transform_1, window_bounds = array<i64: 16, 16>}, {pipeline_mode = #tpu.pipeline_mode<synchronous>, transform_indices = @transform_2, window_bounds = array<i64: 16, 1>}, {pipeline_mode = #tpu.pipeline_mode<synchronous>, transform_indices = @transform_3, window_bounds = array<i64: 16, 1>}, {pipeline_mode = #tpu.pipeline_mode<synchronous>, transform_indices = @transform_4, window_bounds = array<i64: 16, 1>}, {pipeline_mode = #tpu.pipeline_mode<synchronous>, transform_indices = @transform_5, window_bounds = array<i64: 1, 16>}, {transform_indices = @transform_6, window_bounds = array<i64: 1, 16, 16>}]} {
    %c0 = arith.constant 0 : index
    %c0_0 = arith.constant 0 : index
    %c0_1 = arith.constant 0 : index
    %c0_2 = arith.constant 0 : index
    %0 = vector.load %arg1[%c0, %c0_0, %c0_1, %c0_2] : memref<1x2x16x16xbf16, #tpu.memory_space<vmem>>, vector<1x1x16x16xbf16>
    %1 = vector.shape_cast %0 : vector<1x1x16x16xbf16> to vector<16x16xbf16>
    %c0_3 = arith.constant 0 : index
    %c1 = arith.constant 1 : index
    %c0_4 = arith.constant 0 : index
    %c0_5 = arith.constant 0 : index
    %2 = vector.load %arg1[%c0_3, %c1, %c0_4, %c0_5] : memref<1x2x16x16xbf16, #tpu.memory_space<vmem>>, vector<1x1x16x16xbf16>
    %3 = vector.shape_cast %2 : vector<1x1x16x16xbf16> to vector<16x16xbf16>
    %4 = tpu.concatenate %1, %3 in 1 : vector<16x16xbf16>, vector<16x16xbf16> -> vector<16x32xbf16>
    %c0_6 = arith.constant 0 : index
    %c0_7 = arith.constant 0 : index
    %5 = vector.load %arg2[%c0_6, %c0_7] : memref<16x16xbf16, #tpu.memory_space<vmem>>, vector<16x16xbf16>
    %cst = arith.constant dense<0.000000e+00> : vector<16x32xf32>
    %6 = tpu.matmul %5, %4, %cst {dimension_numbers = #tpu.dot_dimension_numbers<[1], [0], [0], [1], [0, 0, 1, 1], [], []>} : vector<16x16xbf16>, vector<16x32xbf16>, vector<16x32xf32> -> vector<16x32xf32>
    %c0_8 = arith.constant 0 : index
    %c0_9 = arith.constant 0 : index
    %7 = vector.load %arg3[%c0_8, %c0_9] : memref<16x1xf32, #tpu.memory_space<vmem>>, vector<16x1xf32>
    %8 = vector.broadcast %7 : vector<16x1xf32> to vector<16x32xf32>
    %9 = arith.addf %6, %8 : vector<16x32xf32>
    %cst_10 = arith.constant 6.250000e-02 : f32
    %10 = vector.broadcast %cst_10 : f32 to vector<1x16xf32>
    %cst_11 = arith.constant dense<0.000000e+00> : vector<1x32xf32>
    %11 = tpu.matmul %10, %9, %cst_11 {dimension_numbers = #tpu.dot_dimension_numbers<[1], [0], [0], [1], [0, 0, 1, 1], [], []>} : vector<1x16xf32>, vector<16x32xf32>, vector<1x32xf32> -> vector<1x32xf32>
    %12 = vector.broadcast %11 : vector<1x32xf32> to vector<16x32xf32>
    %13 = arith.subf %9, %12 : vector<16x32xf32>
    %14 = arith.mulf %13, %13 : vector<16x32xf32>
    %cst_12 = arith.constant dense<0.000000e+00> : vector<1x32xf32>
    %15 = tpu.matmul %10, %14, %cst_12 {dimension_numbers = #tpu.dot_dimension_numbers<[1], [0], [0], [1], [0, 0, 1, 1], [], []>} : vector<1x16xf32>, vector<16x32xf32>, vector<1x32xf32> -> vector<1x32xf32>
    %16 = vector.broadcast %11 : vector<1x32xf32> to vector<16x32xf32>
    %17 = arith.subf %9, %16 : vector<16x32xf32>
    %cst_13 = arith.constant 9.99999974E-6 : f32
    %18 = vector.broadcast %cst_13 : f32 to vector<1x32xf32>
    %19 = arith.addf %15, %18 : vector<1x32xf32>
    %20 = math.rsqrt %19 : vector<1x32xf32>
    %21 = vector.broadcast %20 : vector<1x32xf32> to vector<16x32xf32>
    %22 = arith.mulf %17, %21 : vector<16x32xf32>
    %c0_14 = arith.constant 0 : index
    %c0_15 = arith.constant 0 : index
    %23 = vector.load %arg4[%c0_14, %c0_15] : memref<16x1xf32, #tpu.memory_space<vmem>>, vector<16x1xf32>
    %24 = vector.broadcast %23 : vector<16x1xf32> to vector<16x32xf32>
    %25 = arith.mulf %22, %24 : vector<16x32xf32>
    %c0_16 = arith.constant 0 : index
    %c0_17 = arith.constant 0 : index
    %26 = vector.load %arg5[%c0_16, %c0_17] : memref<16x1xf32, #tpu.memory_space<vmem>>, vector<16x1xf32>
    %27 = vector.broadcast %26 : vector<16x1xf32> to vector<16x32xf32>
    %28 = arith.addf %25, %27 : vector<16x32xf32>
    %cst_18 = arith.constant 5.000000e-01 : f32
    %29 = vector.broadcast %cst_18 : f32 to vector<16x32xf32>
    %30 = arith.mulf %29, %28 : vector<16x32xf32>
    %cst_19 = arith.constant 4.471500e-02 : f32
    %31 = vector.broadcast %cst_19 : f32 to vector<16x32xf32>
    %32 = arith.mulf %31, %28 : vector<16x32xf32>
    %33 = arith.mulf %32, %28 : vector<16x32xf32>
    %34 = arith.mulf %33, %28 : vector<16x32xf32>
    %35 = arith.addf %28, %34 : vector<16x32xf32>
    %cst_20 = arith.constant 0.797884583 : f32
    %36 = vector.broadcast %cst_20 : f32 to vector<16x32xf32>
    %37 = arith.mulf %36, %35 : vector<16x32xf32>
    %38 = math.tanh %37 : vector<16x32xf32>
    %cst_21 = arith.constant 1.000000e+00 : f32
    %39 = vector.broadcast %cst_21 : f32 to vector<16x32xf32>
    %40 = arith.addf %39, %38 : vector<16x32xf32>
    %41 = arith.mulf %30, %40 : vector<16x32xf32>
    %c0_22 = arith.constant 0 : index
    %c0_23 = arith.constant 0 : index
    %42 = vector.load %arg6[%c0_22, %c0_23] : memref<1x16xf32, #tpu.memory_space<vmem>>, vector<1x16xf32>
    %cst_24 = arith.constant dense<0.000000e+00> : vector<1x32xf32>
    %43 = tpu.matmul %42, %41, %cst_24 {dimension_numbers = #tpu.dot_dimension_numbers<[1], [0], [0], [1], [0, 0, 1, 1], [], []>} : vector<1x16xf32>, vector<16x32xf32>, vector<1x32xf32> -> vector<1x32xf32>
    %44 = vector.extract_strided_slice %43 {offsets = [0, 0], sizes = [1, 16], strides = [1, 1]} : vector<1x32xf32> to vector<1x16xf32>
    %45 = vector.extract_strided_slice %43 {offsets = [0, 16], sizes = [1, 16], strides = [1, 1]} : vector<1x32xf32> to vector<1x16xf32>
    %46 = arith.maximumf %44, %45 : vector<1x16xf32>
    %47 = arith.subf %44, %46 : vector<1x16xf32>
    %48 = math.exp %47 : vector<1x16xf32>
    %49 = arith.subf %45, %46 : vector<1x16xf32>
    %50 = math.exp %49 : vector<1x16xf32>
    %51 = arith.addf %48, %50 : vector<1x16xf32>
    %cst_25 = arith.constant 1.000000e+00 : f32
    %52 = vector.broadcast %cst_25 : f32 to vector<1x16xf32>
    %53 = arith.divf %52, %51 : vector<1x16xf32>
    %54 = arith.mulf %48, %53 : vector<1x16xf32>
    %55 = arith.extf %1 : vector<16x16xbf16> to vector<16x16xf32>
    %56 = vector.broadcast %54 : vector<1x16xf32> to vector<16x16xf32>
    %57 = arith.mulf %56, %55 : vector<16x16xf32>
    %58 = arith.mulf %50, %53 : vector<1x16xf32>
    %59 = arith.extf %3 : vector<16x16xbf16> to vector<16x16xf32>
    %60 = vector.broadcast %58 : vector<1x16xf32> to vector<16x16xf32>
    %61 = arith.mulf %60, %59 : vector<16x16xf32>
    %62 = arith.addf %57, %61 : vector<16x16xf32>
    %63 = arith.truncf %62 : vector<16x16xf32> to vector<16x16xbf16>
    %c0_26 = arith.constant 0 : index
    %c0_27 = arith.constant 0 : index
    %c0_28 = arith.constant 0 : index
    %64 = vector.load %arg7[%c0_26, %c0_27, %c0_28] : memref<1x16x16xbf16, #tpu.memory_space<vmem>>, vector<1x16x16xbf16>
    %65 = vector.shape_cast %64 : vector<1x16x16xbf16> to vector<16x16xbf16>
    %66 = vector.shape_cast %63 : vector<16x16xbf16> to vector<1x16x16xbf16>
    tpu.vector_store %arg7[%c0_26, %c0_27, %c0_28], %66 {strides = array<i32>} : memref<1x16x16xbf16, #tpu.memory_space<vmem>>, vector<1x16x16xbf16>,
    return
  }
  func.func @transform_0(%arg0: i32) -> (i32, i32, i32, i32) {
    %c0_i32 = arith.constant 0 : i32
    %c0_i32_0 = arith.constant 0 : i32
    %c0_i32_1 = arith.constant 0 : i32
    %c0_i32_2 = arith.constant 0 : i32
    return %arg0, %c0_i32, %c0_i32_0, %c0_i32_1 : i32, i32, i32, i32
  }
  func.func @transform_1(%arg0: i32) -> (i32, i32) {
    %c0_i32 = arith.constant 0 : i32
    %c0_i32_0 = arith.constant 0 : i32
    %c0_i32_1 = arith.constant 0 : i32
    return %c0_i32, %c0_i32_0 : i32, i32
  }
  func.func @transform_2(%arg0: i32) -> (i32, i32) {
    %c0_i32 = arith.constant 0 : i32
    %c0_i32_0 = arith.constant 0 : i32
    %c0_i32_1 = arith.constant 0 : i32
    return %c0_i32, %c0_i32_0 : i32, i32
  }
  func.func @transform_3(%arg0: i32) -> (i32, i32) {
    %c0_i32 = arith.constant 0 : i32
    %c0_i32_0 = arith.constant 0 : i32
    %c0_i32_1 = arith.constant 0 : i32
    return %c0_i32, %c0_i32_0 : i32, i32
  }
  func.func @transform_4(%arg0: i32) -> (i32, i32) {
    %c0_i32 = arith.constant 0 : i32
    %c0_i32_0 = arith.constant 0 : i32
    %c0_i32_1 = arith.constant 0 : i32
    return %c0_i32, %c0_i32_0 : i32, i32
  }
  func.func @transform_5(%arg0: i32) -> (i32, i32) {
    %c0_i32 = arith.constant 0 : i32
    %c0_i32_0 = arith.constant 0 : i32
    %c0_i32_1 = arith.constant 0 : i32
    return %c0_i32, %c0_i32_0 : i32, i32
  }
  func.func @transform_6(%arg0: i32) -> (i32, i32, i32) {
    %c0_i32 = arith.constant 0 : i32
    %c0_i32_0 = arith.constant 0 : i32
    %c0_i32_1 = arith.constant 0 : i32
    return %arg0, %c0_i32, %c0_i32_0 : i32, i32, i32
  }
}

module attributes {stable_mosaic.version = 11 : i64} {
  func.func @_decoder_block_kernel(%arg0: i32, %arg1: memref<1x32x42xbf16, #tpu.memory_space<vmem>>, %arg2: memref<1x16x42xbf16, #tpu.memory_space<vmem>>, %arg3: memref<32x432xbf16, #tpu.memory_space<vmem>>, %arg4: memref<32x1xf32, #tpu.memory_space<vmem>>, %arg5: memref<32x288xbf16, #tpu.memory_space<vmem>>, %arg6: memref<32x1xf32, #tpu.memory_space<vmem>>, %arg7: memref<1x32x24xbf16, #tpu.memory_space<vmem>>, %arg8: memref<32x256xbf16, #tpu.memory_space<vmem>>) attributes {dimension_semantics = [#tpu.dimension_semantics<parallel>], iteration_bounds = array<i64: 2>, scalar_prefetch = 0 : i64, scratch_operands = 1 : i64, tpu.core_type = #tpu.core_type<tc>, window_params = [{transform_indices = @transform_0, window_bounds = array<i64: 1, 32, 42>}, {transform_indices = @transform_1, window_bounds = array<i64: 1, 16, 42>}, {pipeline_mode = #tpu.pipeline_mode<synchronous>, transform_indices = @transform_2, window_bounds = array<i64: 32, 432>}, {pipeline_mode = #tpu.pipeline_mode<synchronous>, transform_indices = @transform_3, window_bounds = array<i64: 32, 1>}, {pipeline_mode = #tpu.pipeline_mode<synchronous>, transform_indices = @transform_4, window_bounds = array<i64: 32, 288>}, {pipeline_mode = #tpu.pipeline_mode<synchronous>, transform_indices = @transform_5, window_bounds = array<i64: 32, 1>}, {transform_indices = @transform_6, window_bounds = array<i64: 1, 32, 24>}]} {
    %c0 = arith.constant 0 : index
    %c0_0 = arith.constant 0 : index
    %c0_1 = arith.constant 0 : index
    %0 = vector.load %arg1[%c0, %c0_0, %c0_1] : memref<1x32x42xbf16, #tpu.memory_space<vmem>>, vector<1x32x42xbf16>
    %1 = vector.shape_cast %0 : vector<1x32x42xbf16> to vector<32x42xbf16>
    %2 = vector.extract_strided_slice %1 {offsets = [0, 0], sizes = [32, 24], strides = [1, 1]} : vector<32x42xbf16> to vector<32x24xbf16>
    %3 = vector.extract_strided_slice %1 {offsets = [0, 1], sizes = [32, 24], strides = [1, 1]} : vector<32x42xbf16> to vector<32x24xbf16>
    %4 = vector.extract_strided_slice %1 {offsets = [0, 2], sizes = [32, 24], strides = [1, 1]} : vector<32x42xbf16> to vector<32x24xbf16>
    %5 = vector.extract_strided_slice %1 {offsets = [0, 6], sizes = [32, 24], strides = [1, 1]} : vector<32x42xbf16> to vector<32x24xbf16>
    %6 = vector.extract_strided_slice %1 {offsets = [0, 7], sizes = [32, 24], strides = [1, 1]} : vector<32x42xbf16> to vector<32x24xbf16>
    %7 = vector.extract_strided_slice %1 {offsets = [0, 8], sizes = [32, 24], strides = [1, 1]} : vector<32x42xbf16> to vector<32x24xbf16>
    %8 = vector.extract_strided_slice %1 {offsets = [0, 12], sizes = [32, 24], strides = [1, 1]} : vector<32x42xbf16> to vector<32x24xbf16>
    %9 = vector.extract_strided_slice %1 {offsets = [0, 13], sizes = [32, 24], strides = [1, 1]} : vector<32x42xbf16> to vector<32x24xbf16>
    %10 = vector.extract_strided_slice %1 {offsets = [0, 14], sizes = [32, 24], strides = [1, 1]} : vector<32x42xbf16> to vector<32x24xbf16>
    %c0_2 = arith.constant 0 : index
    %c0_3 = arith.constant 0 : index
    %c0_4 = arith.constant 0 : index
    %11 = vector.load %arg2[%c0_2, %c0_3, %c0_4] : memref<1x16x42xbf16, #tpu.memory_space<vmem>>, vector<1x16x42xbf16>
    %12 = vector.shape_cast %11 : vector<1x16x42xbf16> to vector<16x42xbf16>
    %13 = vector.extract_strided_slice %12 {offsets = [0, 0], sizes = [16, 24], strides = [1, 1]} : vector<16x42xbf16> to vector<16x24xbf16>
    %14 = vector.extract_strided_slice %12 {offsets = [0, 1], sizes = [16, 24], strides = [1, 1]} : vector<16x42xbf16> to vector<16x24xbf16>
    %15 = vector.extract_strided_slice %12 {offsets = [0, 2], sizes = [16, 24], strides = [1, 1]} : vector<16x42xbf16> to vector<16x24xbf16>
    %16 = vector.extract_strided_slice %12 {offsets = [0, 6], sizes = [16, 24], strides = [1, 1]} : vector<16x42xbf16> to vector<16x24xbf16>
    %17 = vector.extract_strided_slice %12 {offsets = [0, 7], sizes = [16, 24], strides = [1, 1]} : vector<16x42xbf16> to vector<16x24xbf16>
    %18 = vector.extract_strided_slice %12 {offsets = [0, 8], sizes = [16, 24], strides = [1, 1]} : vector<16x42xbf16> to vector<16x24xbf16>
    %19 = vector.extract_strided_slice %12 {offsets = [0, 12], sizes = [16, 24], strides = [1, 1]} : vector<16x42xbf16> to vector<16x24xbf16>
    %20 = vector.extract_strided_slice %12 {offsets = [0, 13], sizes = [16, 24], strides = [1, 1]} : vector<16x42xbf16> to vector<16x24xbf16>
    %21 = vector.extract_strided_slice %12 {offsets = [0, 14], sizes = [16, 24], strides = [1, 1]} : vector<16x42xbf16> to vector<16x24xbf16>
    %22 = tpu.concatenate %2, %3, %4, %5, %6, %7, %8, %9, %10, %13, %14, %15, %16, %17, %18, %19 in 0 : vector<32x24xbf16>, vector<32x24xbf16>, vector<32x24xbf16>, vector<32x24xbf16>, vector<32x24xbf16>, vector<32x24xbf16>, vector<32x24xbf16>, vector<32x24xbf16>, vector<32x24xbf16>, vector<16x24xbf16>, vector<16x24xbf16>, vector<16x24xbf16>, vector<16x24xbf16>, vector<16x24xbf16>, vector<16x24xbf16>, vector<16x24xbf16> -> vector<400x24xbf16>
    %23 = tpu.concatenate %20, %21 in 0 : vector<16x24xbf16>, vector<16x24xbf16> -> vector<32x24xbf16>
    %24 = tpu.concatenate %22, %23 in 0 : vector<400x24xbf16>, vector<32x24xbf16> -> vector<432x24xbf16>
    %c0_5 = arith.constant 0 : index
    %c0_6 = arith.constant 0 : index
    %25 = vector.load %arg3[%c0_5, %c0_6] : memref<32x432xbf16, #tpu.memory_space<vmem>>, vector<32x432xbf16>
    %cst = arith.constant dense<0.000000e+00> : vector<32x24xf32>
    %26 = tpu.matmul %25, %24, %cst {dimension_numbers = #tpu.dot_dimension_numbers<[1], [0], [0], [1], [0, 0, 1, 1], [], []>} : vector<32x432xbf16>, vector<432x24xbf16>, vector<32x24xf32> -> vector<32x24xf32>
    %27 = tpu.iota {dimensions = array<i32: 1>} : vector<1x24xi32>
    %28 = arith.sitofp %27 : vector<1x24xi32> to vector<1x24xf32>
    %cst_7 = arith.constant 5.000000e-01 : f32
    %29 = vector.broadcast %cst_7 : f32 to vector<1x24xf32>
    %30 = arith.addf %28, %29 : vector<1x24xf32>
    %cst_8 = arith.constant 0.166666672 : f32
    %31 = vector.broadcast %cst_8 : f32 to vector<1x24xf32>
    %32 = arith.mulf %30, %31 : vector<1x24xf32>
    %33 = math.floor %32 : vector<1x24xf32>
    %cst_9 = arith.constant 6.000000e+00 : f32
    %34 = vector.broadcast %cst_9 : f32 to vector<1x24xf32>
    %35 = arith.mulf %34, %33 : vector<1x24xf32>
    %36 = arith.subf %28, %35 : vector<1x24xf32>
    %cst_10 = arith.constant 4.000000e+00 : f32
    %37 = vector.broadcast %cst_10 : f32 to vector<1x24xf32>
    %38 = arith.cmpf olt, %36, %37 : vector<1x24xf32>
    %39 = arith.extui %38 : vector<1x24xi1> to vector<1x24xi32>
    %40 = arith.sitofp %39 : vector<1x24xi32> to vector<1x24xf32>
    %c0_11 = arith.constant 0 : index
    %c0_12 = arith.constant 0 : index
    %41 = vector.load %arg4[%c0_11, %c0_12] : memref<32x1xf32, #tpu.memory_space<vmem>>, vector<32x1xf32>
    %42 = vector.broadcast %41 : vector<32x1xf32> to vector<32x24xf32>
    %43 = arith.addf %26, %42 : vector<32x24xf32>
    %cst_13 = arith.constant 0.000000e+00 : f32
    %44 = vector.broadcast %cst_13 : f32 to vector<32x24xf32>
    %45 = arith.maximumf %43, %44 : vector<32x24xf32>
    %46 = vector.broadcast %40 : vector<1x24xf32> to vector<32x24xf32>
    %47 = arith.mulf %45, %46 : vector<32x24xf32>
    %cst_14 = arith.constant 0.000000e+00 : bf16
    %48 = vector.broadcast %cst_14 : bf16 to vector<32x7xbf16>
    %c0_15 = arith.constant 0 : index
    %c121 = arith.constant 121 : index
    %49 = vector.load %arg8[%c0_15, %c121] : memref<32x256xbf16, #tpu.memory_space<vmem>>, vector<32x7xbf16>
    tpu.vector_store %arg8[%c0_15, %c121], %48 {strides = array<i32>} : memref<32x256xbf16, #tpu.memory_space<vmem>>, vector<32x7xbf16>,
    %c0_16 = arith.constant 0 : index
    %c152 = arith.constant 152 : index
    %50 = vector.load %arg8[%c0_16, %c152] : memref<32x256xbf16, #tpu.memory_space<vmem>>, vector<32x7xbf16>
    tpu.vector_store %arg8[%c0_16, %c152], %48 {strides = array<i32>} : memref<32x256xbf16, #tpu.memory_space<vmem>>, vector<32x7xbf16>,
    %51 = arith.truncf %47 : vector<32x24xf32> to vector<32x24xbf16>
    %c0_17 = arith.constant 0 : index
    %c128 = arith.constant 128 : index
    %52 = vector.load %arg8[%c0_17, %c128] : memref<32x256xbf16, #tpu.memory_space<vmem>>, vector<32x24xbf16>
    tpu.vector_store %arg8[%c0_17, %c128], %51 {strides = array<i32>} : memref<32x256xbf16, #tpu.memory_space<vmem>>, vector<32x24xbf16>,
    %c0_18 = arith.constant 0 : index
    %c0_19 = arith.constant 0 : index
    %53 = vector.load %arg8[%c0_18, %c0_19] : memref<32x256xbf16, #tpu.memory_space<vmem>>, vector<32x256xbf16>
    %54 = vector.extract_strided_slice %53 {offsets = [0, 121], sizes = [32, 24], strides = [1, 1]} : vector<32x256xbf16> to vector<32x24xbf16>
    %55 = vector.extract_strided_slice %53 {offsets = [0, 122], sizes = [32, 24], strides = [1, 1]} : vector<32x256xbf16> to vector<32x24xbf16>
    %56 = vector.extract_strided_slice %53 {offsets = [0, 123], sizes = [32, 24], strides = [1, 1]} : vector<32x256xbf16> to vector<32x24xbf16>
    %57 = vector.extract_strided_slice %53 {offsets = [0, 127], sizes = [32, 24], strides = [1, 1]} : vector<32x256xbf16> to vector<32x24xbf16>
    %58 = vector.extract_strided_slice %53 {offsets = [0, 128], sizes = [32, 24], strides = [1, 1]} : vector<32x256xbf16> to vector<32x24xbf16>
    %59 = vector.extract_strided_slice %53 {offsets = [0, 129], sizes = [32, 24], strides = [1, 1]} : vector<32x256xbf16> to vector<32x24xbf16>
    %60 = vector.extract_strided_slice %53 {offsets = [0, 133], sizes = [32, 24], strides = [1, 1]} : vector<32x256xbf16> to vector<32x24xbf16>
    %61 = vector.extract_strided_slice %53 {offsets = [0, 134], sizes = [32, 24], strides = [1, 1]} : vector<32x256xbf16> to vector<32x24xbf16>
    %62 = vector.extract_strided_slice %53 {offsets = [0, 135], sizes = [32, 24], strides = [1, 1]} : vector<32x256xbf16> to vector<32x24xbf16>
    %63 = tpu.concatenate %54, %55, %56, %57, %58, %59, %60, %61, %62 in 0 : vector<32x24xbf16>, vector<32x24xbf16>, vector<32x24xbf16>, vector<32x24xbf16>, vector<32x24xbf16>, vector<32x24xbf16>, vector<32x24xbf16>, vector<32x24xbf16>, vector<32x24xbf16> -> vector<288x24xbf16>
    %c0_20 = arith.constant 0 : index
    %c0_21 = arith.constant 0 : index
    %64 = vector.load %arg5[%c0_20, %c0_21] : memref<32x288xbf16, #tpu.memory_space<vmem>>, vector<32x288xbf16>
    %cst_22 = arith.constant dense<0.000000e+00> : vector<32x24xf32>
    %65 = tpu.matmul %64, %63, %cst_22 {dimension_numbers = #tpu.dot_dimension_numbers<[1], [0], [0], [1], [0, 0, 1, 1], [], []>} : vector<32x288xbf16>, vector<288x24xbf16>, vector<32x24xf32> -> vector<32x24xf32>
    %c0_23 = arith.constant 0 : index
    %c0_24 = arith.constant 0 : index
    %66 = vector.load %arg6[%c0_23, %c0_24] : memref<32x1xf32, #tpu.memory_space<vmem>>, vector<32x1xf32>
    %67 = vector.broadcast %66 : vector<32x1xf32> to vector<32x24xf32>
    %68 = arith.addf %65, %67 : vector<32x24xf32>
    %cst_25 = arith.constant 0.000000e+00 : f32
    %69 = vector.broadcast %cst_25 : f32 to vector<32x24xf32>
    %70 = arith.maximumf %68, %69 : vector<32x24xf32>
    %71 = arith.truncf %70 : vector<32x24xf32> to vector<32x24xbf16>
    %c0_26 = arith.constant 0 : index
    %c0_27 = arith.constant 0 : index
    %c0_28 = arith.constant 0 : index
    %72 = vector.load %arg7[%c0_26, %c0_27, %c0_28] : memref<1x32x24xbf16, #tpu.memory_space<vmem>>, vector<1x32x24xbf16>
    %73 = vector.shape_cast %72 : vector<1x32x24xbf16> to vector<32x24xbf16>
    %74 = vector.shape_cast %71 : vector<32x24xbf16> to vector<1x32x24xbf16>
    tpu.vector_store %arg7[%c0_26, %c0_27, %c0_28], %74 {strides = array<i32>} : memref<1x32x24xbf16, #tpu.memory_space<vmem>>, vector<1x32x24xbf16>,
    return
  }
  func.func @transform_0(%arg0: i32) -> (i32, i32, i32) {
    %c0_i32 = arith.constant 0 : i32
    %c0_i32_0 = arith.constant 0 : i32
    %c0_i32_1 = arith.constant 0 : i32
    return %arg0, %c0_i32, %c0_i32_0 : i32, i32, i32
  }
  func.func @transform_1(%arg0: i32) -> (i32, i32, i32) {
    %c0_i32 = arith.constant 0 : i32
    %c0_i32_0 = arith.constant 0 : i32
    %c0_i32_1 = arith.constant 0 : i32
    return %arg0, %c0_i32, %c0_i32_0 : i32, i32, i32
  }
  func.func @transform_2(%arg0: i32) -> (i32, i32) {
    %c0_i32 = arith.constant 0 : i32
    %c0_i32_0 = arith.constant 0 : i32
    %c0_i32_1 = arith.constant 0 : i32
    return %c0_i32, %c0_i32_0 : i32, i32
  }
  func.func @transform_3(%arg0: i32) -> (i32, i32) {
    %c0_i32 = arith.constant 0 : i32
    %c0_i32_0 = arith.constant 0 : i32
    %c0_i32_1 = arith.constant 0 : i32
    return %c0_i32, %c0_i32_0 : i32, i32
  }
  func.func @transform_4(%arg0: i32) -> (i32, i32) {
    %c0_i32 = arith.constant 0 : i32
    %c0_i32_0 = arith.constant 0 : i32
    %c0_i32_1 = arith.constant 0 : i32
    return %c0_i32, %c0_i32_0 : i32, i32
  }
  func.func @transform_5(%arg0: i32) -> (i32, i32) {
    %c0_i32 = arith.constant 0 : i32
    %c0_i32_0 = arith.constant 0 : i32
    %c0_i32_1 = arith.constant 0 : i32
    return %c0_i32, %c0_i32_0 : i32, i32
  }
  func.func @transform_6(%arg0: i32) -> (i32, i32, i32) {
    %c0_i32 = arith.constant 0 : i32
    %c0_i32_0 = arith.constant 0 : i32
    %c0_i32_1 = arith.constant 0 : i32
    return %arg0, %c0_i32, %c0_i32_0 : i32, i32, i32
  }
}

module attributes {stable_mosaic.version = 11 : i64} {
  func.func @_attn_pool_kernel(%arg0: i32, %arg1: memref<1x2x8x64xbf16, #tpu.memory_space<vmem>>, %arg2: memref<8x8xbf16, #tpu.memory_space<vmem>>, %arg3: memref<8x1xf32, #tpu.memory_space<vmem>>, %arg4: memref<8x1xf32, #tpu.memory_space<vmem>>, %arg5: memref<8x1xf32, #tpu.memory_space<vmem>>, %arg6: memref<1x8xf32, #tpu.memory_space<vmem>>, %arg7: memref<1x8x64xbf16, #tpu.memory_space<vmem>>) attributes {dimension_semantics = [#tpu.dimension_semantics<parallel>], iteration_bounds = array<i64: 2>, scalar_prefetch = 0 : i64, scratch_operands = 0 : i64, tpu.core_type = #tpu.core_type<tc>, window_params = [{transform_indices = @transform_0, window_bounds = array<i64: 1, 2, 8, 64>}, {pipeline_mode = #tpu.pipeline_mode<synchronous>, transform_indices = @transform_1, window_bounds = array<i64: 8, 8>}, {pipeline_mode = #tpu.pipeline_mode<synchronous>, transform_indices = @transform_2, window_bounds = array<i64: 8, 1>}, {pipeline_mode = #tpu.pipeline_mode<synchronous>, transform_indices = @transform_3, window_bounds = array<i64: 8, 1>}, {pipeline_mode = #tpu.pipeline_mode<synchronous>, transform_indices = @transform_4, window_bounds = array<i64: 8, 1>}, {pipeline_mode = #tpu.pipeline_mode<synchronous>, transform_indices = @transform_5, window_bounds = array<i64: 1, 8>}, {transform_indices = @transform_6, window_bounds = array<i64: 1, 8, 64>}]} {
    %c0 = arith.constant 0 : index
    %c0_0 = arith.constant 0 : index
    %c0_1 = arith.constant 0 : index
    %c0_2 = arith.constant 0 : index
    %0 = vector.load %arg1[%c0, %c0_0, %c0_1, %c0_2] : memref<1x2x8x64xbf16, #tpu.memory_space<vmem>>, vector<1x1x8x64xbf16>
    %1 = vector.shape_cast %0 : vector<1x1x8x64xbf16> to vector<8x64xbf16>
    %c0_3 = arith.constant 0 : index
    %c1 = arith.constant 1 : index
    %c0_4 = arith.constant 0 : index
    %c0_5 = arith.constant 0 : index
    %2 = vector.load %arg1[%c0_3, %c1, %c0_4, %c0_5] : memref<1x2x8x64xbf16, #tpu.memory_space<vmem>>, vector<1x1x8x64xbf16>
    %3 = vector.shape_cast %2 : vector<1x1x8x64xbf16> to vector<8x64xbf16>
    %4 = tpu.concatenate %1, %3 in 1 : vector<8x64xbf16>, vector<8x64xbf16> -> vector<8x128xbf16>
    %c0_6 = arith.constant 0 : index
    %c0_7 = arith.constant 0 : index
    %5 = vector.load %arg2[%c0_6, %c0_7] : memref<8x8xbf16, #tpu.memory_space<vmem>>, vector<8x8xbf16>
    %cst = arith.constant dense<0.000000e+00> : vector<8x128xf32>
    %6 = tpu.matmul %5, %4, %cst {dimension_numbers = #tpu.dot_dimension_numbers<[1], [0], [0], [1], [0, 0, 1, 1], [], []>} : vector<8x8xbf16>, vector<8x128xbf16>, vector<8x128xf32> -> vector<8x128xf32>
    %c0_8 = arith.constant 0 : index
    %c0_9 = arith.constant 0 : index
    %7 = vector.load %arg3[%c0_8, %c0_9] : memref<8x1xf32, #tpu.memory_space<vmem>>, vector<8x1xf32>
    %8 = vector.broadcast %7 : vector<8x1xf32> to vector<8x128xf32>
    %9 = arith.addf %6, %8 : vector<8x128xf32>
    %cst_10 = arith.constant 1.250000e-01 : f32
    %10 = vector.broadcast %cst_10 : f32 to vector<1x8xf32>
    %cst_11 = arith.constant dense<0.000000e+00> : vector<1x128xf32>
    %11 = tpu.matmul %10, %9, %cst_11 {dimension_numbers = #tpu.dot_dimension_numbers<[1], [0], [0], [1], [0, 0, 1, 1], [], []>} : vector<1x8xf32>, vector<8x128xf32>, vector<1x128xf32> -> vector<1x128xf32>
    %12 = vector.broadcast %11 : vector<1x128xf32> to vector<8x128xf32>
    %13 = arith.subf %9, %12 : vector<8x128xf32>
    %14 = arith.mulf %13, %13 : vector<8x128xf32>
    %cst_12 = arith.constant dense<0.000000e+00> : vector<1x128xf32>
    %15 = tpu.matmul %10, %14, %cst_12 {dimension_numbers = #tpu.dot_dimension_numbers<[1], [0], [0], [1], [0, 0, 1, 1], [], []>} : vector<1x8xf32>, vector<8x128xf32>, vector<1x128xf32> -> vector<1x128xf32>
    %16 = vector.broadcast %11 : vector<1x128xf32> to vector<8x128xf32>
    %17 = arith.subf %9, %16 : vector<8x128xf32>
    %cst_13 = arith.constant 9.99999974E-6 : f32
    %18 = vector.broadcast %cst_13 : f32 to vector<1x128xf32>
    %19 = arith.addf %15, %18 : vector<1x128xf32>
    %20 = math.rsqrt %19 : vector<1x128xf32>
    %21 = vector.broadcast %20 : vector<1x128xf32> to vector<8x128xf32>
    %22 = arith.mulf %17, %21 : vector<8x128xf32>
    %c0_14 = arith.constant 0 : index
    %c0_15 = arith.constant 0 : index
    %23 = vector.load %arg4[%c0_14, %c0_15] : memref<8x1xf32, #tpu.memory_space<vmem>>, vector<8x1xf32>
    %24 = vector.broadcast %23 : vector<8x1xf32> to vector<8x128xf32>
    %25 = arith.mulf %22, %24 : vector<8x128xf32>
    %c0_16 = arith.constant 0 : index
    %c0_17 = arith.constant 0 : index
    %26 = vector.load %arg5[%c0_16, %c0_17] : memref<8x1xf32, #tpu.memory_space<vmem>>, vector<8x1xf32>
    %27 = vector.broadcast %26 : vector<8x1xf32> to vector<8x128xf32>
    %28 = arith.addf %25, %27 : vector<8x128xf32>
    %cst_18 = arith.constant 5.000000e-01 : f32
    %29 = vector.broadcast %cst_18 : f32 to vector<8x128xf32>
    %30 = arith.mulf %29, %28 : vector<8x128xf32>
    %cst_19 = arith.constant 4.471500e-02 : f32
    %31 = vector.broadcast %cst_19 : f32 to vector<8x128xf32>
    %32 = arith.mulf %31, %28 : vector<8x128xf32>
    %33 = arith.mulf %32, %28 : vector<8x128xf32>
    %34 = arith.mulf %33, %28 : vector<8x128xf32>
    %35 = arith.addf %28, %34 : vector<8x128xf32>
    %cst_20 = arith.constant 0.797884583 : f32
    %36 = vector.broadcast %cst_20 : f32 to vector<8x128xf32>
    %37 = arith.mulf %36, %35 : vector<8x128xf32>
    %38 = math.tanh %37 : vector<8x128xf32>
    %cst_21 = arith.constant 1.000000e+00 : f32
    %39 = vector.broadcast %cst_21 : f32 to vector<8x128xf32>
    %40 = arith.addf %39, %38 : vector<8x128xf32>
    %41 = arith.mulf %30, %40 : vector<8x128xf32>
    %c0_22 = arith.constant 0 : index
    %c0_23 = arith.constant 0 : index
    %42 = vector.load %arg6[%c0_22, %c0_23] : memref<1x8xf32, #tpu.memory_space<vmem>>, vector<1x8xf32>
    %cst_24 = arith.constant dense<0.000000e+00> : vector<1x128xf32>
    %43 = tpu.matmul %42, %41, %cst_24 {dimension_numbers = #tpu.dot_dimension_numbers<[1], [0], [0], [1], [0, 0, 1, 1], [], []>} : vector<1x8xf32>, vector<8x128xf32>, vector<1x128xf32> -> vector<1x128xf32>
    %44 = vector.extract_strided_slice %43 {offsets = [0, 0], sizes = [1, 64], strides = [1, 1]} : vector<1x128xf32> to vector<1x64xf32>
    %45 = vector.extract_strided_slice %43 {offsets = [0, 64], sizes = [1, 64], strides = [1, 1]} : vector<1x128xf32> to vector<1x64xf32>
    %46 = arith.maximumf %44, %45 : vector<1x64xf32>
    %47 = arith.subf %44, %46 : vector<1x64xf32>
    %48 = math.exp %47 : vector<1x64xf32>
    %49 = arith.subf %45, %46 : vector<1x64xf32>
    %50 = math.exp %49 : vector<1x64xf32>
    %51 = arith.addf %48, %50 : vector<1x64xf32>
    %cst_25 = arith.constant 1.000000e+00 : f32
    %52 = vector.broadcast %cst_25 : f32 to vector<1x64xf32>
    %53 = arith.divf %52, %51 : vector<1x64xf32>
    %54 = arith.mulf %48, %53 : vector<1x64xf32>
    %55 = arith.extf %1 : vector<8x64xbf16> to vector<8x64xf32>
    %56 = vector.broadcast %54 : vector<1x64xf32> to vector<8x64xf32>
    %57 = arith.mulf %56, %55 : vector<8x64xf32>
    %58 = arith.mulf %50, %53 : vector<1x64xf32>
    %59 = arith.extf %3 : vector<8x64xbf16> to vector<8x64xf32>
    %60 = vector.broadcast %58 : vector<1x64xf32> to vector<8x64xf32>
    %61 = arith.mulf %60, %59 : vector<8x64xf32>
    %62 = arith.addf %57, %61 : vector<8x64xf32>
    %63 = arith.truncf %62 : vector<8x64xf32> to vector<8x64xbf16>
    %c0_26 = arith.constant 0 : index
    %c0_27 = arith.constant 0 : index
    %c0_28 = arith.constant 0 : index
    %64 = vector.load %arg7[%c0_26, %c0_27, %c0_28] : memref<1x8x64xbf16, #tpu.memory_space<vmem>>, vector<1x8x64xbf16>
    %65 = vector.shape_cast %64 : vector<1x8x64xbf16> to vector<8x64xbf16>
    %66 = vector.shape_cast %63 : vector<8x64xbf16> to vector<1x8x64xbf16>
    tpu.vector_store %arg7[%c0_26, %c0_27, %c0_28], %66 {strides = array<i32>} : memref<1x8x64xbf16, #tpu.memory_space<vmem>>, vector<1x8x64xbf16>,
    return
  }
  func.func @transform_0(%arg0: i32) -> (i32, i32, i32, i32) {
    %c0_i32 = arith.constant 0 : i32
    %c0_i32_0 = arith.constant 0 : i32
    %c0_i32_1 = arith.constant 0 : i32
    %c0_i32_2 = arith.constant 0 : i32
    return %arg0, %c0_i32, %c0_i32_0, %c0_i32_1 : i32, i32, i32, i32
  }
  func.func @transform_1(%arg0: i32) -> (i32, i32) {
    %c0_i32 = arith.constant 0 : i32
    %c0_i32_0 = arith.constant 0 : i32
    %c0_i32_1 = arith.constant 0 : i32
    return %c0_i32, %c0_i32_0 : i32, i32
  }
  func.func @transform_2(%arg0: i32) -> (i32, i32) {
    %c0_i32 = arith.constant 0 : i32
    %c0_i32_0 = arith.constant 0 : i32
    %c0_i32_1 = arith.constant 0 : i32
    return %c0_i32, %c0_i32_0 : i32, i32
  }
  func.func @transform_3(%arg0: i32) -> (i32, i32) {
    %c0_i32 = arith.constant 0 : i32
    %c0_i32_0 = arith.constant 0 : i32
    %c0_i32_1 = arith.constant 0 : i32
    return %c0_i32, %c0_i32_0 : i32, i32
  }
  func.func @transform_4(%arg0: i32) -> (i32, i32) {
    %c0_i32 = arith.constant 0 : i32
    %c0_i32_0 = arith.constant 0 : i32
    %c0_i32_1 = arith.constant 0 : i32
    return %c0_i32, %c0_i32_0 : i32, i32
  }
  func.func @transform_5(%arg0: i32) -> (i32, i32) {
    %c0_i32 = arith.constant 0 : i32
    %c0_i32_0 = arith.constant 0 : i32
    %c0_i32_1 = arith.constant 0 : i32
    return %c0_i32, %c0_i32_0 : i32, i32
  }
  func.func @transform_6(%arg0: i32) -> (i32, i32, i32) {
    %c0_i32 = arith.constant 0 : i32
    %c0_i32_0 = arith.constant 0 : i32
    %c0_i32_1 = arith.constant 0 : i32
    return %arg0, %c0_i32, %c0_i32_0 : i32, i32, i32
  }
}

module attributes {stable_mosaic.version = 11 : i64} {
  func.func @_decoder_block_kernel(%arg0: i32, %arg1: memref<1x32x110xbf16, #tpu.memory_space<vmem>>, %arg2: memref<1x8x110xbf16, #tpu.memory_space<vmem>>, %arg3: memref<16x360xbf16, #tpu.memory_space<vmem>>, %arg4: memref<16x1xf32, #tpu.memory_space<vmem>>, %arg5: memref<16x144xbf16, #tpu.memory_space<vmem>>, %arg6: memref<16x1xf32, #tpu.memory_space<vmem>>, %arg7: memref<1x16x80xbf16, #tpu.memory_space<vmem>>, %arg8: memref<16x256xbf16, #tpu.memory_space<vmem>>) attributes {dimension_semantics = [#tpu.dimension_semantics<parallel>], iteration_bounds = array<i64: 2>, scalar_prefetch = 0 : i64, scratch_operands = 1 : i64, tpu.core_type = #tpu.core_type<tc>, window_params = [{transform_indices = @transform_0, window_bounds = array<i64: 1, 32, 110>}, {transform_indices = @transform_1, window_bounds = array<i64: 1, 8, 110>}, {pipeline_mode = #tpu.pipeline_mode<synchronous>, transform_indices = @transform_2, window_bounds = array<i64: 16, 360>}, {pipeline_mode = #tpu.pipeline_mode<synchronous>, transform_indices = @transform_3, window_bounds = array<i64: 16, 1>}, {pipeline_mode = #tpu.pipeline_mode<synchronous>, transform_indices = @transform_4, window_bounds = array<i64: 16, 144>}, {pipeline_mode = #tpu.pipeline_mode<synchronous>, transform_indices = @transform_5, window_bounds = array<i64: 16, 1>}, {transform_indices = @transform_6, window_bounds = array<i64: 1, 16, 80>}]} {
    %c0 = arith.constant 0 : index
    %c0_0 = arith.constant 0 : index
    %c0_1 = arith.constant 0 : index
    %0 = vector.load %arg1[%c0, %c0_0, %c0_1] : memref<1x32x110xbf16, #tpu.memory_space<vmem>>, vector<1x32x110xbf16>
    %1 = vector.shape_cast %0 : vector<1x32x110xbf16> to vector<32x110xbf16>
    %2 = vector.extract_strided_slice %1 {offsets = [0, 0], sizes = [32, 80], strides = [1, 1]} : vector<32x110xbf16> to vector<32x80xbf16>
    %3 = vector.extract_strided_slice %1 {offsets = [0, 1], sizes = [32, 80], strides = [1, 1]} : vector<32x110xbf16> to vector<32x80xbf16>
    %4 = vector.extract_strided_slice %1 {offsets = [0, 2], sizes = [32, 80], strides = [1, 1]} : vector<32x110xbf16> to vector<32x80xbf16>
    %5 = vector.extract_strided_slice %1 {offsets = [0, 10], sizes = [32, 80], strides = [1, 1]} : vector<32x110xbf16> to vector<32x80xbf16>
    %6 = vector.extract_strided_slice %1 {offsets = [0, 11], sizes = [32, 80], strides = [1, 1]} : vector<32x110xbf16> to vector<32x80xbf16>
    %7 = vector.extract_strided_slice %1 {offsets = [0, 12], sizes = [32, 80], strides = [1, 1]} : vector<32x110xbf16> to vector<32x80xbf16>
    %8 = vector.extract_strided_slice %1 {offsets = [0, 20], sizes = [32, 80], strides = [1, 1]} : vector<32x110xbf16> to vector<32x80xbf16>
    %9 = vector.extract_strided_slice %1 {offsets = [0, 21], sizes = [32, 80], strides = [1, 1]} : vector<32x110xbf16> to vector<32x80xbf16>
    %10 = vector.extract_strided_slice %1 {offsets = [0, 22], sizes = [32, 80], strides = [1, 1]} : vector<32x110xbf16> to vector<32x80xbf16>
    %c0_2 = arith.constant 0 : index
    %c0_3 = arith.constant 0 : index
    %c0_4 = arith.constant 0 : index
    %11 = vector.load %arg2[%c0_2, %c0_3, %c0_4] : memref<1x8x110xbf16, #tpu.memory_space<vmem>>, vector<1x8x110xbf16>
    %12 = vector.shape_cast %11 : vector<1x8x110xbf16> to vector<8x110xbf16>
    %13 = vector.extract_strided_slice %12 {offsets = [0, 0], sizes = [8, 80], strides = [1, 1]} : vector<8x110xbf16> to vector<8x80xbf16>
    %14 = vector.extract_strided_slice %12 {offsets = [0, 1], sizes = [8, 80], strides = [1, 1]} : vector<8x110xbf16> to vector<8x80xbf16>
    %15 = vector.extract_strided_slice %12 {offsets = [0, 2], sizes = [8, 80], strides = [1, 1]} : vector<8x110xbf16> to vector<8x80xbf16>
    %16 = vector.extract_strided_slice %12 {offsets = [0, 10], sizes = [8, 80], strides = [1, 1]} : vector<8x110xbf16> to vector<8x80xbf16>
    %17 = vector.extract_strided_slice %12 {offsets = [0, 11], sizes = [8, 80], strides = [1, 1]} : vector<8x110xbf16> to vector<8x80xbf16>
    %18 = vector.extract_strided_slice %12 {offsets = [0, 12], sizes = [8, 80], strides = [1, 1]} : vector<8x110xbf16> to vector<8x80xbf16>
    %19 = vector.extract_strided_slice %12 {offsets = [0, 20], sizes = [8, 80], strides = [1, 1]} : vector<8x110xbf16> to vector<8x80xbf16>
    %20 = vector.extract_strided_slice %12 {offsets = [0, 21], sizes = [8, 80], strides = [1, 1]} : vector<8x110xbf16> to vector<8x80xbf16>
    %21 = vector.extract_strided_slice %12 {offsets = [0, 22], sizes = [8, 80], strides = [1, 1]} : vector<8x110xbf16> to vector<8x80xbf16>
    %22 = tpu.concatenate %2, %3, %4, %5, %6, %7, %8, %9, %10, %13, %14, %15, %16, %17, %18, %19 in 0 : vector<32x80xbf16>, vector<32x80xbf16>, vector<32x80xbf16>, vector<32x80xbf16>, vector<32x80xbf16>, vector<32x80xbf16>, vector<32x80xbf16>, vector<32x80xbf16>, vector<32x80xbf16>, vector<8x80xbf16>, vector<8x80xbf16>, vector<8x80xbf16>, vector<8x80xbf16>, vector<8x80xbf16>, vector<8x80xbf16>, vector<8x80xbf16> -> vector<344x80xbf16>
    %23 = tpu.concatenate %20, %21 in 0 : vector<8x80xbf16>, vector<8x80xbf16> -> vector<16x80xbf16>
    %24 = tpu.concatenate %22, %23 in 0 : vector<344x80xbf16>, vector<16x80xbf16> -> vector<360x80xbf16>
    %c0_5 = arith.constant 0 : index
    %c0_6 = arith.constant 0 : index
    %25 = vector.load %arg3[%c0_5, %c0_6] : memref<16x360xbf16, #tpu.memory_space<vmem>>, vector<16x360xbf16>
    %cst = arith.constant dense<0.000000e+00> : vector<16x80xf32>
    %26 = tpu.matmul %25, %24, %cst {dimension_numbers = #tpu.dot_dimension_numbers<[1], [0], [0], [1], [0, 0, 1, 1], [], []>} : vector<16x360xbf16>, vector<360x80xbf16>, vector<16x80xf32> -> vector<16x80xf32>
    %27 = tpu.iota {dimensions = array<i32: 1>} : vector<1x80xi32>
    %28 = arith.sitofp %27 : vector<1x80xi32> to vector<1x80xf32>
    %cst_7 = arith.constant 5.000000e-01 : f32
    %29 = vector.broadcast %cst_7 : f32 to vector<1x80xf32>
    %30 = arith.addf %28, %29 : vector<1x80xf32>
    %cst_8 = arith.constant 1.000000e-01 : f32
    %31 = vector.broadcast %cst_8 : f32 to vector<1x80xf32>
    %32 = arith.mulf %30, %31 : vector<1x80xf32>
    %33 = math.floor %32 : vector<1x80xf32>
    %cst_9 = arith.constant 1.000000e+01 : f32
    %34 = vector.broadcast %cst_9 : f32 to vector<1x80xf32>
    %35 = arith.mulf %34, %33 : vector<1x80xf32>
    %36 = arith.subf %28, %35 : vector<1x80xf32>
    %cst_10 = arith.constant 8.000000e+00 : f32
    %37 = vector.broadcast %cst_10 : f32 to vector<1x80xf32>
    %38 = arith.cmpf olt, %36, %37 : vector<1x80xf32>
    %39 = arith.extui %38 : vector<1x80xi1> to vector<1x80xi32>
    %40 = arith.sitofp %39 : vector<1x80xi32> to vector<1x80xf32>
    %c0_11 = arith.constant 0 : index
    %c0_12 = arith.constant 0 : index
    %41 = vector.load %arg4[%c0_11, %c0_12] : memref<16x1xf32, #tpu.memory_space<vmem>>, vector<16x1xf32>
    %42 = vector.broadcast %41 : vector<16x1xf32> to vector<16x80xf32>
    %43 = arith.addf %26, %42 : vector<16x80xf32>
    %cst_13 = arith.constant 0.000000e+00 : f32
    %44 = vector.broadcast %cst_13 : f32 to vector<16x80xf32>
    %45 = arith.maximumf %43, %44 : vector<16x80xf32>
    %46 = vector.broadcast %40 : vector<1x80xf32> to vector<16x80xf32>
    %47 = arith.mulf %45, %46 : vector<16x80xf32>
    %cst_14 = arith.constant 0.000000e+00 : bf16
    %48 = vector.broadcast %cst_14 : bf16 to vector<16x11xbf16>
    %c0_15 = arith.constant 0 : index
    %c117 = arith.constant 117 : index
    %49 = vector.load %arg8[%c0_15, %c117] : memref<16x256xbf16, #tpu.memory_space<vmem>>, vector<16x11xbf16>
    tpu.vector_store %arg8[%c0_15, %c117], %48 {strides = array<i32>} : memref<16x256xbf16, #tpu.memory_space<vmem>>, vector<16x11xbf16>,
    %c0_16 = arith.constant 0 : index
    %c208 = arith.constant 208 : index
    %50 = vector.load %arg8[%c0_16, %c208] : memref<16x256xbf16, #tpu.memory_space<vmem>>, vector<16x11xbf16>
    tpu.vector_store %arg8[%c0_16, %c208], %48 {strides = array<i32>} : memref<16x256xbf16, #tpu.memory_space<vmem>>, vector<16x11xbf16>,
    %51 = arith.truncf %47 : vector<16x80xf32> to vector<16x80xbf16>
    %c0_17 = arith.constant 0 : index
    %c128 = arith.constant 128 : index
    %52 = vector.load %arg8[%c0_17, %c128] : memref<16x256xbf16, #tpu.memory_space<vmem>>, vector<16x80xbf16>
    tpu.vector_store %arg8[%c0_17, %c128], %51 {strides = array<i32>} : memref<16x256xbf16, #tpu.memory_space<vmem>>, vector<16x80xbf16>,
    %c0_18 = arith.constant 0 : index
    %c0_19 = arith.constant 0 : index
    %53 = vector.load %arg8[%c0_18, %c0_19] : memref<16x256xbf16, #tpu.memory_space<vmem>>, vector<16x256xbf16>
    %54 = vector.extract_strided_slice %53 {offsets = [0, 117], sizes = [16, 80], strides = [1, 1]} : vector<16x256xbf16> to vector<16x80xbf16>
    %55 = vector.extract_strided_slice %53 {offsets = [0, 118], sizes = [16, 80], strides = [1, 1]} : vector<16x256xbf16> to vector<16x80xbf16>
    %56 = vector.extract_strided_slice %53 {offsets = [0, 119], sizes = [16, 80], strides = [1, 1]} : vector<16x256xbf16> to vector<16x80xbf16>
    %57 = vector.extract_strided_slice %53 {offsets = [0, 127], sizes = [16, 80], strides = [1, 1]} : vector<16x256xbf16> to vector<16x80xbf16>
    %58 = vector.extract_strided_slice %53 {offsets = [0, 128], sizes = [16, 80], strides = [1, 1]} : vector<16x256xbf16> to vector<16x80xbf16>
    %59 = vector.extract_strided_slice %53 {offsets = [0, 129], sizes = [16, 80], strides = [1, 1]} : vector<16x256xbf16> to vector<16x80xbf16>
    %60 = vector.extract_strided_slice %53 {offsets = [0, 137], sizes = [16, 80], strides = [1, 1]} : vector<16x256xbf16> to vector<16x80xbf16>
    %61 = vector.extract_strided_slice %53 {offsets = [0, 138], sizes = [16, 80], strides = [1, 1]} : vector<16x256xbf16> to vector<16x80xbf16>
    %62 = vector.extract_strided_slice %53 {offsets = [0, 139], sizes = [16, 80], strides = [1, 1]} : vector<16x256xbf16> to vector<16x80xbf16>
    %63 = tpu.concatenate %54, %55, %56, %57, %58, %59, %60, %61, %62 in 0 : vector<16x80xbf16>, vector<16x80xbf16>, vector<16x80xbf16>, vector<16x80xbf16>, vector<16x80xbf16>, vector<16x80xbf16>, vector<16x80xbf16>, vector<16x80xbf16>, vector<16x80xbf16> -> vector<144x80xbf16>
    %c0_20 = arith.constant 0 : index
    %c0_21 = arith.constant 0 : index
    %64 = vector.load %arg5[%c0_20, %c0_21] : memref<16x144xbf16, #tpu.memory_space<vmem>>, vector<16x144xbf16>
    %cst_22 = arith.constant dense<0.000000e+00> : vector<16x80xf32>
    %65 = tpu.matmul %64, %63, %cst_22 {dimension_numbers = #tpu.dot_dimension_numbers<[1], [0], [0], [1], [0, 0, 1, 1], [], []>} : vector<16x144xbf16>, vector<144x80xbf16>, vector<16x80xf32> -> vector<16x80xf32>
    %c0_23 = arith.constant 0 : index
    %c0_24 = arith.constant 0 : index
    %66 = vector.load %arg6[%c0_23, %c0_24] : memref<16x1xf32, #tpu.memory_space<vmem>>, vector<16x1xf32>
    %67 = vector.broadcast %66 : vector<16x1xf32> to vector<16x80xf32>
    %68 = arith.addf %65, %67 : vector<16x80xf32>
    %cst_25 = arith.constant 0.000000e+00 : f32
    %69 = vector.broadcast %cst_25 : f32 to vector<16x80xf32>
    %70 = arith.maximumf %68, %69 : vector<16x80xf32>
    %71 = arith.truncf %70 : vector<16x80xf32> to vector<16x80xbf16>
    %c0_26 = arith.constant 0 : index
    %c0_27 = arith.constant 0 : index
    %c0_28 = arith.constant 0 : index
    %72 = vector.load %arg7[%c0_26, %c0_27, %c0_28] : memref<1x16x80xbf16, #tpu.memory_space<vmem>>, vector<1x16x80xbf16>
    %73 = vector.shape_cast %72 : vector<1x16x80xbf16> to vector<16x80xbf16>
    %74 = vector.shape_cast %71 : vector<16x80xbf16> to vector<1x16x80xbf16>
    tpu.vector_store %arg7[%c0_26, %c0_27, %c0_28], %74 {strides = array<i32>} : memref<1x16x80xbf16, #tpu.memory_space<vmem>>, vector<1x16x80xbf16>,
    return
  }
  func.func @transform_0(%arg0: i32) -> (i32, i32, i32) {
    %c0_i32 = arith.constant 0 : i32
    %c0_i32_0 = arith.constant 0 : i32
    %c0_i32_1 = arith.constant 0 : i32
    return %arg0, %c0_i32, %c0_i32_0 : i32, i32, i32
  }
  func.func @transform_1(%arg0: i32) -> (i32, i32, i32) {
    %c0_i32 = arith.constant 0 : i32
    %c0_i32_0 = arith.constant 0 : i32
    %c0_i32_1 = arith.constant 0 : i32
    return %arg0, %c0_i32, %c0_i32_0 : i32, i32, i32
  }
  func.func @transform_2(%arg0: i32) -> (i32, i32) {
    %c0_i32 = arith.constant 0 : i32
    %c0_i32_0 = arith.constant 0 : i32
    %c0_i32_1 = arith.constant 0 : i32
    return %c0_i32, %c0_i32_0 : i32, i32
  }
  func.func @transform_3(%arg0: i32) -> (i32, i32) {
    %c0_i32 = arith.constant 0 : i32
    %c0_i32_0 = arith.constant 0 : i32
    %c0_i32_1 = arith.constant 0 : i32
    return %c0_i32, %c0_i32_0 : i32, i32
  }
  func.func @transform_4(%arg0: i32) -> (i32, i32) {
    %c0_i32 = arith.constant 0 : i32
    %c0_i32_0 = arith.constant 0 : i32
    %c0_i32_1 = arith.constant 0 : i32
    return %c0_i32, %c0_i32_0 : i32, i32
  }
  func.func @transform_5(%arg0: i32) -> (i32, i32) {
    %c0_i32 = arith.constant 0 : i32
    %c0_i32_0 = arith.constant 0 : i32
    %c0_i32_1 = arith.constant 0 : i32
    return %c0_i32, %c0_i32_0 : i32, i32
  }
  func.func @transform_6(%arg0: i32) -> (i32, i32, i32) {
    %c0_i32 = arith.constant 0 : i32
    %c0_i32_0 = arith.constant 0 : i32
    %c0_i32_1 = arith.constant 0 : i32
    return %arg0, %c0_i32, %c0_i32_0 : i32, i32, i32
  }
}

module attributes {stable_mosaic.version = 11 : i64} {
  func.func @_decoder_block_kernel(%arg0: i32, %arg1: memref<1x16x342xbf16, #tpu.memory_space<vmem>>, %arg2: memref<8x144xbf16, #tpu.memory_space<vmem>>, %arg3: memref<8x1xf32, #tpu.memory_space<vmem>>, %arg4: memref<8x72xbf16, #tpu.memory_space<vmem>>, %arg5: memref<8x1xf32, #tpu.memory_space<vmem>>, %arg6: memref<1x8x288xbf16, #tpu.memory_space<vmem>>, %arg7: memref<8x512xbf16, #tpu.memory_space<vmem>>) attributes {dimension_semantics = [#tpu.dimension_semantics<parallel>], iteration_bounds = array<i64: 2>, scalar_prefetch = 0 : i64, scratch_operands = 1 : i64, tpu.core_type = #tpu.core_type<tc>, window_params = [{transform_indices = @transform_0, window_bounds = array<i64: 1, 16, 342>}, {pipeline_mode = #tpu.pipeline_mode<synchronous>, transform_indices = @transform_1, window_bounds = array<i64: 8, 144>}, {pipeline_mode = #tpu.pipeline_mode<synchronous>, transform_indices = @transform_2, window_bounds = array<i64: 8, 1>}, {pipeline_mode = #tpu.pipeline_mode<synchronous>, transform_indices = @transform_3, window_bounds = array<i64: 8, 72>}, {pipeline_mode = #tpu.pipeline_mode<synchronous>, transform_indices = @transform_4, window_bounds = array<i64: 8, 1>}, {transform_indices = @transform_5, window_bounds = array<i64: 1, 8, 288>}]} {
    %c0 = arith.constant 0 : index
    %c0_0 = arith.constant 0 : index
    %c0_1 = arith.constant 0 : index
    %0 = vector.load %arg1[%c0, %c0_0, %c0_1] : memref<1x16x342xbf16, #tpu.memory_space<vmem>>, vector<1x16x342xbf16>
    %1 = vector.shape_cast %0 : vector<1x16x342xbf16> to vector<16x342xbf16>
    %2 = vector.extract_strided_slice %1 {offsets = [0, 0], sizes = [16, 288], strides = [1, 1]} : vector<16x342xbf16> to vector<16x288xbf16>
    %3 = vector.extract_strided_slice %1 {offsets = [0, 1], sizes = [16, 288], strides = [1, 1]} : vector<16x342xbf16> to vector<16x288xbf16>
    %4 = vector.extract_strided_slice %1 {offsets = [0, 2], sizes = [16, 288], strides = [1, 1]} : vector<16x342xbf16> to vector<16x288xbf16>
    %5 = vector.extract_strided_slice %1 {offsets = [0, 18], sizes = [16, 288], strides = [1, 1]} : vector<16x342xbf16> to vector<16x288xbf16>
    %6 = vector.extract_strided_slice %1 {offsets = [0, 19], sizes = [16, 288], strides = [1, 1]} : vector<16x342xbf16> to vector<16x288xbf16>
    %7 = vector.extract_strided_slice %1 {offsets = [0, 20], sizes = [16, 288], strides = [1, 1]} : vector<16x342xbf16> to vector<16x288xbf16>
    %8 = vector.extract_strided_slice %1 {offsets = [0, 36], sizes = [16, 288], strides = [1, 1]} : vector<16x342xbf16> to vector<16x288xbf16>
    %9 = vector.extract_strided_slice %1 {offsets = [0, 37], sizes = [16, 288], strides = [1, 1]} : vector<16x342xbf16> to vector<16x288xbf16>
    %10 = vector.extract_strided_slice %1 {offsets = [0, 38], sizes = [16, 288], strides = [1, 1]} : vector<16x342xbf16> to vector<16x288xbf16>
    %11 = tpu.concatenate %2, %3, %4, %5, %6, %7, %8, %9, %10 in 0 : vector<16x288xbf16>, vector<16x288xbf16>, vector<16x288xbf16>, vector<16x288xbf16>, vector<16x288xbf16>, vector<16x288xbf16>, vector<16x288xbf16>, vector<16x288xbf16>, vector<16x288xbf16> -> vector<144x288xbf16>
    %c0_2 = arith.constant 0 : index
    %c0_3 = arith.constant 0 : index
    %12 = vector.load %arg2[%c0_2, %c0_3] : memref<8x144xbf16, #tpu.memory_space<vmem>>, vector<8x144xbf16>
    %cst = arith.constant dense<0.000000e+00> : vector<8x288xf32>
    %13 = tpu.matmul %12, %11, %cst {dimension_numbers = #tpu.dot_dimension_numbers<[1], [0], [0], [1], [0, 0, 1, 1], [], []>} : vector<8x144xbf16>, vector<144x288xbf16>, vector<8x288xf32> -> vector<8x288xf32>
    %14 = tpu.iota {dimensions = array<i32: 1>} : vector<1x288xi32>
    %15 = arith.sitofp %14 : vector<1x288xi32> to vector<1x288xf32>
    %cst_4 = arith.constant 5.000000e-01 : f32
    %16 = vector.broadcast %cst_4 : f32 to vector<1x288xf32>
    %17 = arith.addf %15, %16 : vector<1x288xf32>
    %cst_5 = arith.constant 0.055555556 : f32
    %18 = vector.broadcast %cst_5 : f32 to vector<1x288xf32>
    %19 = arith.mulf %17, %18 : vector<1x288xf32>
    %20 = math.floor %19 : vector<1x288xf32>
    %cst_6 = arith.constant 1.800000e+01 : f32
    %21 = vector.broadcast %cst_6 : f32 to vector<1x288xf32>
    %22 = arith.mulf %21, %20 : vector<1x288xf32>
    %23 = arith.subf %15, %22 : vector<1x288xf32>
    %cst_7 = arith.constant 1.600000e+01 : f32
    %24 = vector.broadcast %cst_7 : f32 to vector<1x288xf32>
    %25 = arith.cmpf olt, %23, %24 : vector<1x288xf32>
    %26 = arith.extui %25 : vector<1x288xi1> to vector<1x288xi32>
    %27 = arith.sitofp %26 : vector<1x288xi32> to vector<1x288xf32>
    %c0_8 = arith.constant 0 : index
    %c0_9 = arith.constant 0 : index
    %28 = vector.load %arg3[%c0_8, %c0_9] : memref<8x1xf32, #tpu.memory_space<vmem>>, vector<8x1xf32>
    %29 = vector.broadcast %28 : vector<8x1xf32> to vector<8x288xf32>
    %30 = arith.addf %13, %29 : vector<8x288xf32>
    %cst_10 = arith.constant 0.000000e+00 : f32
    %31 = vector.broadcast %cst_10 : f32 to vector<8x288xf32>
    %32 = arith.maximumf %30, %31 : vector<8x288xf32>
    %33 = vector.broadcast %27 : vector<1x288xf32> to vector<8x288xf32>
    %34 = arith.mulf %32, %33 : vector<8x288xf32>
    %cst_11 = arith.constant 0.000000e+00 : bf16
    %35 = vector.broadcast %cst_11 : bf16 to vector<8x19xbf16>
    %c0_12 = arith.constant 0 : index
    %c109 = arith.constant 109 : index
    %36 = vector.load %arg7[%c0_12, %c109] : memref<8x512xbf16, #tpu.memory_space<vmem>>, vector<8x19xbf16>
    tpu.vector_store %arg7[%c0_12, %c109], %35 {strides = array<i32>} : memref<8x512xbf16, #tpu.memory_space<vmem>>, vector<8x19xbf16>,
    %c0_13 = arith.constant 0 : index
    %c416 = arith.constant 416 : index
    %37 = vector.load %arg7[%c0_13, %c416] : memref<8x512xbf16, #tpu.memory_space<vmem>>, vector<8x19xbf16>
    tpu.vector_store %arg7[%c0_13, %c416], %35 {strides = array<i32>} : memref<8x512xbf16, #tpu.memory_space<vmem>>, vector<8x19xbf16>,
    %38 = arith.truncf %34 : vector<8x288xf32> to vector<8x288xbf16>
    %c0_14 = arith.constant 0 : index
    %c128 = arith.constant 128 : index
    %39 = vector.load %arg7[%c0_14, %c128] : memref<8x512xbf16, #tpu.memory_space<vmem>>, vector<8x288xbf16>
    tpu.vector_store %arg7[%c0_14, %c128], %38 {strides = array<i32>} : memref<8x512xbf16, #tpu.memory_space<vmem>>, vector<8x288xbf16>,
    %c0_15 = arith.constant 0 : index
    %c0_16 = arith.constant 0 : index
    %40 = vector.load %arg7[%c0_15, %c0_16] : memref<8x512xbf16, #tpu.memory_space<vmem>>, vector<8x512xbf16>
    %41 = vector.extract_strided_slice %40 {offsets = [0, 109], sizes = [8, 288], strides = [1, 1]} : vector<8x512xbf16> to vector<8x288xbf16>
    %42 = vector.extract_strided_slice %40 {offsets = [0, 110], sizes = [8, 288], strides = [1, 1]} : vector<8x512xbf16> to vector<8x288xbf16>
    %43 = vector.extract_strided_slice %40 {offsets = [0, 111], sizes = [8, 288], strides = [1, 1]} : vector<8x512xbf16> to vector<8x288xbf16>
    %44 = vector.extract_strided_slice %40 {offsets = [0, 127], sizes = [8, 288], strides = [1, 1]} : vector<8x512xbf16> to vector<8x288xbf16>
    %45 = vector.extract_strided_slice %40 {offsets = [0, 128], sizes = [8, 288], strides = [1, 1]} : vector<8x512xbf16> to vector<8x288xbf16>
    %46 = vector.extract_strided_slice %40 {offsets = [0, 129], sizes = [8, 288], strides = [1, 1]} : vector<8x512xbf16> to vector<8x288xbf16>
    %47 = vector.extract_strided_slice %40 {offsets = [0, 145], sizes = [8, 288], strides = [1, 1]} : vector<8x512xbf16> to vector<8x288xbf16>
    %48 = vector.extract_strided_slice %40 {offsets = [0, 146], sizes = [8, 288], strides = [1, 1]} : vector<8x512xbf16> to vector<8x288xbf16>
    %49 = vector.extract_strided_slice %40 {offsets = [0, 147], sizes = [8, 288], strides = [1, 1]} : vector<8x512xbf16> to vector<8x288xbf16>
    %50 = tpu.concatenate %41, %42, %43, %44, %45, %46, %47, %48, %49 in 0 : vector<8x288xbf16>, vector<8x288xbf16>, vector<8x288xbf16>, vector<8x288xbf16>, vector<8x288xbf16>, vector<8x288xbf16>, vector<8x288xbf16>, vector<8x288xbf16>, vector<8x288xbf16> -> vector<72x288xbf16>
    %c0_17 = arith.constant 0 : index
    %c0_18 = arith.constant 0 : index
    %51 = vector.load %arg4[%c0_17, %c0_18] : memref<8x72xbf16, #tpu.memory_space<vmem>>, vector<8x72xbf16>
    %cst_19 = arith.constant dense<0.000000e+00> : vector<8x288xf32>
    %52 = tpu.matmul %51, %50, %cst_19 {dimension_numbers = #tpu.dot_dimension_numbers<[1], [0], [0], [1], [0, 0, 1, 1], [], []>} : vector<8x72xbf16>, vector<72x288xbf16>, vector<8x288xf32> -> vector<8x288xf32>
    %c0_20 = arith.constant 0 : index
    %c0_21 = arith.constant 0 : index
    %53 = vector.load %arg5[%c0_20, %c0_21] : memref<8x1xf32, #tpu.memory_space<vmem>>, vector<8x1xf32>
    %54 = vector.broadcast %53 : vector<8x1xf32> to vector<8x288xf32>
    %55 = arith.addf %52, %54 : vector<8x288xf32>
    %cst_22 = arith.constant 0.000000e+00 : f32
    %56 = vector.broadcast %cst_22 : f32 to vector<8x288xf32>
    %57 = arith.maximumf %55, %56 : vector<8x288xf32>
    %58 = arith.truncf %57 : vector<8x288xf32> to vector<8x288xbf16>
    %c0_23 = arith.constant 0 : index
    %c0_24 = arith.constant 0 : index
    %c0_25 = arith.constant 0 : index
    %59 = vector.load %arg6[%c0_23, %c0_24, %c0_25] : memref<1x8x288xbf16, #tpu.memory_space<vmem>>, vector<1x8x288xbf16>
    %60 = vector.shape_cast %59 : vector<1x8x288xbf16> to vector<8x288xbf16>
    %61 = vector.shape_cast %58 : vector<8x288xbf16> to vector<1x8x288xbf16>
    tpu.vector_store %arg6[%c0_23, %c0_24, %c0_25], %61 {strides = array<i32>} : memref<1x8x288xbf16, #tpu.memory_space<vmem>>, vector<1x8x288xbf16>,
    return
  }
  func.func @transform_0(%arg0: i32) -> (i32, i32, i32) {
    %c0_i32 = arith.constant 0 : i32
    %c0_i32_0 = arith.constant 0 : i32
    %c0_i32_1 = arith.constant 0 : i32
    return %arg0, %c0_i32, %c0_i32_0 : i32, i32, i32
  }
  func.func @transform_1(%arg0: i32) -> (i32, i32) {
    %c0_i32 = arith.constant 0 : i32
    %c0_i32_0 = arith.constant 0 : i32
    %c0_i32_1 = arith.constant 0 : i32
    return %c0_i32, %c0_i32_0 : i32, i32
  }
  func.func @transform_2(%arg0: i32) -> (i32, i32) {
    %c0_i32 = arith.constant 0 : i32
    %c0_i32_0 = arith.constant 0 : i32
    %c0_i32_1 = arith.constant 0 : i32
    return %c0_i32, %c0_i32_0 : i32, i32
  }
  func.func @transform_3(%arg0: i32) -> (i32, i32) {
    %c0_i32 = arith.constant 0 : i32
    %c0_i32_0 = arith.constant 0 : i32
    %c0_i32_1 = arith.constant 0 : i32
    return %c0_i32, %c0_i32_0 : i32, i32
  }
  func.func @transform_4(%arg0: i32) -> (i32, i32) {
    %c0_i32 = arith.constant 0 : i32
    %c0_i32_0 = arith.constant 0 : i32
    %c0_i32_1 = arith.constant 0 : i32
    return %c0_i32, %c0_i32_0 : i32, i32
  }
  func.func @transform_5(%arg0: i32) -> (i32, i32, i32) {
    %c0_i32 = arith.constant 0 : i32
    %c0_i32_0 = arith.constant 0 : i32
    %c0_i32_1 = arith.constant 0 : i32
    return %arg0, %c0_i32, %c0_i32_0 : i32, i32, i32
  }
}

module attributes {stable_mosaic.version = 11 : i64} {
  func.func @_conv_cf_kernel(%arg0: i32, %arg1: memref<1x8x342xbf16, #tpu.memory_space<vmem>>, %arg2: memref<2x72xbf16, #tpu.memory_space<vmem>>, %arg3: memref<2x1xf32, #tpu.memory_space<vmem>>, %arg4: memref<1x2x288xf32, #tpu.memory_space<vmem>>) attributes {dimension_semantics = [#tpu.dimension_semantics<parallel>], iteration_bounds = array<i64: 2>, scalar_prefetch = 0 : i64, scratch_operands = 0 : i64, tpu.core_type = #tpu.core_type<tc>, window_params = [{transform_indices = @transform_0, window_bounds = array<i64: 1, 8, 342>}, {pipeline_mode = #tpu.pipeline_mode<synchronous>, transform_indices = @transform_1, window_bounds = array<i64: 2, 72>}, {pipeline_mode = #tpu.pipeline_mode<synchronous>, transform_indices = @transform_2, window_bounds = array<i64: 2, 1>}, {transform_indices = @transform_3, window_bounds = array<i64: 1, 2, 288>}]} {
    %c0 = arith.constant 0 : index
    %c0_0 = arith.constant 0 : index
    %c0_1 = arith.constant 0 : index
    %0 = vector.load %arg1[%c0, %c0_0, %c0_1] : memref<1x8x342xbf16, #tpu.memory_space<vmem>>, vector<1x8x342xbf16>
    %1 = vector.shape_cast %0 : vector<1x8x342xbf16> to vector<8x342xbf16>
    %2 = vector.extract_strided_slice %1 {offsets = [0, 0], sizes = [8, 288], strides = [1, 1]} : vector<8x342xbf16> to vector<8x288xbf16>
    %3 = vector.extract_strided_slice %1 {offsets = [0, 1], sizes = [8, 288], strides = [1, 1]} : vector<8x342xbf16> to vector<8x288xbf16>
    %4 = vector.extract_strided_slice %1 {offsets = [0, 2], sizes = [8, 288], strides = [1, 1]} : vector<8x342xbf16> to vector<8x288xbf16>
    %5 = vector.extract_strided_slice %1 {offsets = [0, 18], sizes = [8, 288], strides = [1, 1]} : vector<8x342xbf16> to vector<8x288xbf16>
    %6 = vector.extract_strided_slice %1 {offsets = [0, 19], sizes = [8, 288], strides = [1, 1]} : vector<8x342xbf16> to vector<8x288xbf16>
    %7 = vector.extract_strided_slice %1 {offsets = [0, 20], sizes = [8, 288], strides = [1, 1]} : vector<8x342xbf16> to vector<8x288xbf16>
    %8 = vector.extract_strided_slice %1 {offsets = [0, 36], sizes = [8, 288], strides = [1, 1]} : vector<8x342xbf16> to vector<8x288xbf16>
    %9 = vector.extract_strided_slice %1 {offsets = [0, 37], sizes = [8, 288], strides = [1, 1]} : vector<8x342xbf16> to vector<8x288xbf16>
    %10 = vector.extract_strided_slice %1 {offsets = [0, 38], sizes = [8, 288], strides = [1, 1]} : vector<8x342xbf16> to vector<8x288xbf16>
    %11 = tpu.concatenate %2, %3, %4, %5, %6, %7, %8, %9, %10 in 0 : vector<8x288xbf16>, vector<8x288xbf16>, vector<8x288xbf16>, vector<8x288xbf16>, vector<8x288xbf16>, vector<8x288xbf16>, vector<8x288xbf16>, vector<8x288xbf16>, vector<8x288xbf16> -> vector<72x288xbf16>
    %c0_2 = arith.constant 0 : index
    %c0_3 = arith.constant 0 : index
    %12 = vector.load %arg2[%c0_2, %c0_3] : memref<2x72xbf16, #tpu.memory_space<vmem>>, vector<2x72xbf16>
    %cst = arith.constant dense<0.000000e+00> : vector<2x288xf32>
    %13 = tpu.matmul %12, %11, %cst {dimension_numbers = #tpu.dot_dimension_numbers<[1], [0], [0], [1], [0, 0, 1, 1], [], []>} : vector<2x72xbf16>, vector<72x288xbf16>, vector<2x288xf32> -> vector<2x288xf32>
    %c0_4 = arith.constant 0 : index
    %c0_5 = arith.constant 0 : index
    %14 = vector.load %arg3[%c0_4, %c0_5] : memref<2x1xf32, #tpu.memory_space<vmem>>, vector<2x1xf32>
    %15 = vector.broadcast %14 : vector<2x1xf32> to vector<2x288xf32>
    %16 = arith.addf %13, %15 : vector<2x288xf32>
    %c0_6 = arith.constant 0 : index
    %c0_7 = arith.constant 0 : index
    %c0_8 = arith.constant 0 : index
    %17 = vector.load %arg4[%c0_6, %c0_7, %c0_8] : memref<1x2x288xf32, #tpu.memory_space<vmem>>, vector<1x2x288xf32>
    %18 = vector.shape_cast %17 : vector<1x2x288xf32> to vector<2x288xf32>
    %19 = vector.shape_cast %16 : vector<2x288xf32> to vector<1x2x288xf32>
    tpu.vector_store %arg4[%c0_6, %c0_7, %c0_8], %19 {strides = array<i32>} : memref<1x2x288xf32, #tpu.memory_space<vmem>>, vector<1x2x288xf32>,
    return
  }
  func.func @transform_0(%arg0: i32) -> (i32, i32, i32) {
    %c0_i32 = arith.constant 0 : i32
    %c0_i32_0 = arith.constant 0 : i32
    %c0_i32_1 = arith.constant 0 : i32
    return %arg0, %c0_i32, %c0_i32_0 : i32, i32, i32
  }
  func.func @transform_1(%arg0: i32) -> (i32, i32) {
    %c0_i32 = arith.constant 0 : i32
    %c0_i32_0 = arith.constant 0 : i32
    %c0_i32_1 = arith.constant 0 : i32
    return %c0_i32, %c0_i32_0 : i32, i32
  }
  func.func @transform_2(%arg0: i32) -> (i32, i32) {
    %c0_i32 = arith.constant 0 : i32
    %c0_i32_0 = arith.constant 0 : i32
    %c0_i32_1 = arith.constant 0 : i32
    return %c0_i32, %c0_i32_0 : i32, i32
  }
  func.func @transform_3(%arg0: i32) -> (i32, i32, i32) {
    %c0_i32 = arith.constant 0 : i32
    %c0_i32_0 = arith.constant 0 : i32
    %c0_i32_1 = arith.constant 0 : i32
    return %arg0, %c0_i32, %c0_i32_0 : i32, i32, i32
  }
}

</mosaic_0001>

<llo_original>
// kernel: unet_vflow_forward.10
$region0: #{unet_vflow_forward.10}
  #allocation0 [shape = 'u32[]', space=smem, size = 0x4, offset = 0x4, fixed_abs, tag = 'smem constant byte address 0x4 - core index']
  #allocation1 [shape = 'u32[72,128]{1,0:T(1,128)}', space=vmem, size = 0x9000, scoped, tag = 'internal scratch']
  %s0 = inlined_call_operand.vmem [shape: bf16[4,16,82], index: 0, kind: input, shape index: {}]
  %s1 = inlined_call_operand.vmem [shape: bf16[8,64], index: 1, kind: input, shape index: {}]
  %s2 = inlined_call_operand.vmem [shape: f32[8,1], index: 2, kind: input, shape index: {}]
  %s3 = inlined_call_operand.vmem [shape: bf16[4,8,72], index: 3, kind: output, shape index: {}]
  %s4 = sld [smem:[#allocation0]]
  $region45: #{unet_vflow_forward.10} parent=0
    _
  %s6 = ssub.s32 1, %s4
  %s7 = scalar_select 0, %s6, %s4
  loop: start=0, step=1, limit=4
  $region2: #{unet_vflow_forward.10} parent=0 // loop_pre_header
    _
  $region3: #{unet_vflow_forward.10} parent=0 // loop_header
    %s9 = sphi 0, %s13
    %p10 = scmp.ge.s32.totalorder %s9, 4
    %s19 = sphi 0, %s21
    %s22 = sphi 0, %s19
    %s23 = sphi 0, %s22
    %s39 = sphi 0, %s23
    %s43 = sphi 0, %s43
    %s45 = sphi 0, %s43
    %s46 = sphi 0, %s45
    %s60 = sphi 0, %s46
    %s64 = sphi 0, %s64
    %s66 = sphi 0, %s64
    %s67 = sphi 0, %s66
    %s81 = sphi 0, %s67
    %s87 = sphi 0, %s89
    %s90 = sphi 0, %s87
    %s91 = sphi 0, %s90
    %s107 = sphi 0, %s91
  $region4: #{unet_vflow_forward.10} parent=0 // loop_header_branch
    %12 = sbr.rel (%p10) target = $region8
  $region5: #{unet_vflow_forward.10} parent=0 // loop_body
    %s14 = ssub.s32 %s9, 1
    %s15 = ssub.s32 %s9, 2
    %s16 = sadd.s32 %s9, 1
    %s17 = ssub.s32 %s9, %s16
    %p18 = scmp.eq.s32.totalorder %s17, 0
    %s20 = sadd.s32 %s19, 1
    %s21 = scalar_select %p18, %s19, %s20
    %p24 = pneg %p18
    %p25 = scmp.eq.s32.totalorder %s9, 1
    %p26 = por %p24, %p25
    %p27 = scmp.ne.s32.totalorder %s19, %s22
    %p28 = scmp.eq.s32.totalorder %s9, 0
    %p29 = por %p27, %p28
    %p30 = scmp.ne.s32.totalorder %s19, %s22
    %p31 = scmp.eq.s32.totalorder %s14, 1
    %p32 = por %p30, %p31
    %p33 = scmp.ne.s32.totalorder %s22, %s23
    %p34 = scmp.eq.s32.totalorder %s14, 0
    %p35 = por %p33, %p34
    %p36 = scmp.ne.s32.totalorder %s22, %s23
    %p37 = scmp.eq.s32.totalorder %s15, 1
    %p38 = por %p36, %p37
    %p40 = scmp.ne.s32.totalorder %s23, %s39
    %p41 = scmp.eq.s32.totalorder %s15, 0
    %p42 = por %p40, %p41
    %s44 = sadd.s32 %s43, 1
    %p47 = scmp.eq.s32.totalorder %s9, 1
    %p48 = scmp.ne.s32.totalorder %s43, %s45
    %p49 = scmp.eq.s32.totalorder %s9, 0
    %p50 = por %p48, %p49
    %p51 = scmp.ne.s32.totalorder %s43, %s45
    %p52 = scmp.eq.s32.totalorder %s14, 1
    %p53 = por %p51, %p52
    %p54 = scmp.ne.s32.totalorder %s45, %s46
    %p55 = scmp.eq.s32.totalorder %s14, 0
    %p56 = por %p54, %p55
    %p57 = scmp.ne.s32.totalorder %s45, %s46
    %p58 = scmp.eq.s32.totalorder %s15, 1
    %p59 = por %p57, %p58
    %p61 = scmp.ne.s32.totalorder %s46, %s60
    %p62 = scmp.eq.s32.totalorder %s15, 0
    %p63 = por %p61, %p62
    %s65 = sadd.s32 %s64, 1
    %p68 = scmp.eq.s32.totalorder %s9, 1
    %p69 = scmp.ne.s32.totalorder %s64, %s66
    %p70 = scmp.eq.s32.totalorder %s9, 0
    %p71 = por %p69, %p70
    %p72 = scmp.ne.s32.totalorder %s64, %s66
    %p73 = scmp.eq.s32.totalorder %s14, 1
    %p74 = por %p72, %p73
    %p75 = scmp.ne.s32.totalorder %s66, %s67
    %p76 = scmp.eq.s32.totalorder %s14, 0
    %p77 = por %p75, %p76
    %p78 = scmp.ne.s32.totalorder %s66, %s67
    %p79 = scmp.eq.s32.totalorder %s15, 1
    %p80 = por %p78, %p79
    %p82 = scmp.ne.s32.totalorder %s67, %s81
    %p83 = scmp.eq.s32.totalorder %s15, 0
    %p84 = por %p82, %p83
    %s85 = ssub.s32 %s9, %s16
    %p86 = scmp.eq.s32.totalorder %s85, 0
    %s88 = sadd.s32 %s87, 1
    %s89 = scalar_select %p86, %s87, %s88
    %p92 = pneg %p86
    %p93 = scmp.eq.s32.totalorder %s9, 1
    %p94 = por %p92, %p93
    %p95 = scmp.ne.s32.totalorder %s87, %s90
    %p96 = scmp.eq.s32.totalorder %s9, 0
    %p97 = por %p95, %p96
    %p98 = scmp.ne.s32.totalorder %s87, %s90
    %p99 = scmp.eq.s32.totalorder %s14, 1
    %p100 = por %p98, %p99
    %p101 = scmp.ne.s32.totalorder %s90, %s91
    %p102 = scmp.eq.s32.totalorder %s14, 0
    %p103 = por %p101, %p102
    %p104 = scmp.ne.s32.totalorder %s90, %s91
    %p105 = scmp.eq.s32.totalorder %s15, 1
    %p106 = por %p104, %p105
    %p108 = scmp.ne.s32.totalorder %s91, %s107
    %p109 = scmp.eq.s32.totalorder %s15, 0
    %p110 = por %p108, %p109
    %p111 = scmp.le.s32.totalorder 1, %s9
    %p112 = scmp.lt.s32.totalorder %s9, 3
    %p113 = pnand %p111, %p112
    %p114 = pneg %p113
    // Predicated region
    $region9: #{unet_vflow_forward.10} parent=5 // pred_check
      _
    $region10: #{unet_vflow_forward.10} parent=5 // pred_check_branch
      %116 = sbr.rel (%p113) target = $region12
    $region11: #{unet_vflow_forward.10} parent=5 // pred_region
      %s117 = ssub.s32 %s9, 1
      // Predicated region
      $region13: #{unet_vflow_forward.10} parent=11 // pred_check
        %p118 = pneg %p56
      $region14: #{unet_vflow_forward.10} parent=11 // pred_check_branch
        %120 = sbr.rel (%p118) target = $region16
      $region15: #{unet_vflow_forward.10} parent=11 // pred_region
        _
      $region16: #{unet_vflow_forward.10} parent=11 // pred_fallthru
        _
      // Predicated region
      $region17: #{unet_vflow_forward.10} parent=11 // pred_check
        %p121 = pneg %p77
      $region18: #{unet_vflow_forward.10} parent=11 // pred_check_branch
        %123 = sbr.rel (%p121) target = $region20
      $region19: #{unet_vflow_forward.10} parent=11 // pred_region
        _
      $region20: #{unet_vflow_forward.10} parent=11 // pred_fallthru
        _
    $region12: #{unet_vflow_forward.10} parent=5 // pred_fallthru
      _
    %p124 = scmp.lt.s32.totalorder %s9, 2
    // Predicated region
    $region21: #{unet_vflow_forward.10} parent=5 // pred_check
      %p125 = pneg %p124
    $region22: #{unet_vflow_forward.10} parent=5 // pred_check_branch
      %127 = sbr.rel (%p125) target = $region24
    $region23: #{unet_vflow_forward.10} parent=5 // pred_region
      // Predicated region
      $region25: #{unet_vflow_forward.10} parent=23 // pred_check
        %p128 = pneg %p29
      $region26: #{unet_vflow_forward.10} parent=23 // pred_check_branch
        %130 = sbr.rel (%p128) target = $region28
      $region27: #{unet_vflow_forward.10} parent=23 // pred_region
        %s131 = smul.u32 2, %s9
        %p132 = scmp.lt.s32.totalorder %s131, 3
        %s133 = scalar_select %p132, %s131, 3
        %s134 = smul.addr %s133, 2
        %s135 = smul.addr %s134, 4
        %s136 = scalar_lea.vmem %s0, %s135
        %s137 = smul.u32 2, %s9
      $region28: #{unet_vflow_forward.10} parent=23 // pred_fallthru
        _
    $region24: #{unet_vflow_forward.10} parent=5 // pred_fallthru
      _
    %p138 = scmp.le.s32.totalorder 1, %s9
    %p139 = scmp.lt.s32.totalorder %s9, 3
    %p140 = pnand %p138, %p139
    %p141 = pneg %p140
    // Predicated region
    $region29: #{unet_vflow_forward.10} parent=5 // pred_check
      _
    $region30: #{unet_vflow_forward.10} parent=5 // pred_check_branch
      %143 = sbr.rel (%p140) target = $region32
    $region31: #{unet_vflow_forward.10} parent=5 // pred_region
      %s144 = ssub.s32 %s9, 1
      %s145 = smul.u32 2, %s14
      %p146 = scmp.lt.s32.totalorder %s145, 3
      %s147 = scalar_select %p146, %s145, 3
      %s148 = smul.addr %s147, 2
      %s149 = smul.addr %s148, 4
      %s150 = scalar_lea.vmem %s0, %s149
      %p151 = pneg %p35
      %p152 = pneg %p32
      %p153 = pneg %p56
      %p154 = pneg %p53
      %p155 = pneg %p77
      %p156 = pneg %p74
      %p157 = pneg %p103
      %p158 = pneg %p100
      %s159 = smul.u32 2, %s14
      %p160 = scmp.lt.s32.totalorder %s159, 3
      %s161 = scalar_select %p160, %s159, 3
      %s162 = smul.addr %s161, 4
      %s163 = scalar_lea.vmem %s3, %s162
      %s164 = smul.u32 2, %s14
      %p165 = scmp.lt.s32.totalorder %s164, 3
      %s166 = scalar_select %p165, %s164, 3
      %s167 = smul.addr %s166, 2
      %s168 = smul.addr %s167, 4
      %s169 = scalar_lea.vmem %s0, %s168
      %s170 = smul.u32 2, %s14
      %s171 = smul.u32 2, %s14
      %p172 = scmp.lt.s32.totalorder %s171, 3
      %s173 = scalar_select %p172, %s171, 3
      %s174 = smul.addr %s173, 4
      %s175 = scalar_lea.vmem %s3, %s174
      %s176 = smul.u32 2, %s14
      %v178 = vld [vmem:[%s169] sm:$0xf]
      %v179 = vld [vmem:[%s169 + $0x4] sm:$0xf]
      %v182 = vunpack.c.l.b16 %v178
      %v183 = vunpack.c.l.b16 %v179
      %v184 = vpack.c.b16 %v183, %v182
      %185 = vrot.lane.b32.xlu0 %v184, 127
      %v186 = vpop.permute.xlu0 %185
      %187 = vrot.lane.b32.xlu0 %v184, 119
      %v188 = vpop.permute.xlu0 %187
      %189 = vrot.lane.b32.xlu0 %v184, 118
      %v190 = vpop.permute.xlu0 %189
      %s191 = scalar_lea.vmem %s169, 8
      %v192 = vld [vmem:[%s191] sm:$0xf]
      %v193 = vld [vmem:[%s191 + $0x4] sm:$0xf]
      %v196 = vunpack.c.l.b16 %v192
      %v197 = vunpack.c.l.b16 %v193
      %v198 = vpack.c.b16 %v197, %v196
      %199 = vrot.lane.b32.xlu0 %v198, 127
      %v200 = vpop.permute.xlu0 %199
      %201 = vrot.lane.b32.xlu0 %v198, 119
      %v202 = vpop.permute.xlu0 %201
      %203 = vrot.lane.b32.xlu0 %v198, 118
      %v204 = vpop.permute.xlu0 %203
      %205 = vrot.lane.b32.xlu0 %v198, 72
      %v206 = vpop.permute.xlu0 %205
      %207 = vrot.lane.b32.xlu0 %v200, 72
      %v208 = vpop.permute.xlu0 %207
      %209 = vrot.lane.b32.xlu0 %v202, 72
      %v210 = vpop.permute.xlu0 %209
      %211 = vrot.lane.b32.xlu0 %v204, 72
      %v212 = vpop.permute.xlu0 %211
      %vm217 = vcmask 588800
      %v220 = vsel %vm217, %v184, %v206
      %v224 = vsel %vm217, %v186, %v208
      %v228 = vsel %vm217, %v188, %v210
      %v232 = vsel %vm217, %v190, %v212
      %v234 = vld [vmem:[%s1] sm:$0xf]
      %v235 = vld [vmem:[%s2] sm:$0xff]
      %237 = vset.pattern.permute.xlu0 0
      %238 = vperm.xlu0 %237, %v235
      %v239 = vpop.permute.xlu0 %238
      %vm241 = vcmask 523264
      %v243 = vsel %vm241, %v234, 0
      %245 = vmatpush.bf16.msra.mxu0 0
      %246 = vmatpush.bf16.msra.mxu0 0
      %247 = vmatpush.bf16.msra.mxu0 0
      %248 = vmatpush.bf16.msra.mxu0 0
      %249 = vmatpush.bf16.msra.mxu0 %v232
      %250 = vmatpush.bf16.msra.mxu0 %v228
      %251 = vmatpush.bf16.msra.mxu0 %v224
      %252 = vmatpush.bf16.msra.mxu0 %v220
      %253 = vmatmul.bf16.gmra.mxu0 %v243
      %v254 = vpop.f32.mrf.mxu0
      %v255 = vadd.f32 %v239, %v254
      %v256 = vpop.f32.mrf.mxu0
      %257 = vdwg.mxu0
      %258 = vmatpush.bf16.msra.mxu0 0
      %259 = vmatpush.bf16.msra.mxu0 0
      %260 = vmatpush.bf16.msra.mxu0 0
      %261 = vmatpush.bf16.msra.mxu0 0
      %262 = vmatpush.bf16.msra.mxu0 %v212
      %263 = vmatpush.bf16.msra.mxu0 %v210
      %264 = vmatpush.bf16.msra.mxu0 %v208
      %265 = vmatpush.bf16.msra.mxu0 %v206
      %266 = vmatmul.bf16.gmra.mxu0 %v243
      %v267 = vpop.f32.mrf.mxu0
      %v268 = vadd.f32 %v239, %v267
      %v269 = vpop.f32.mrf.mxu0
      %270 = vdwg.mxu0
      %v271 = vmax.f32 %v255, 0.0
      %v272 = vmax.f32 %v268, 0.0
      %v273 = vpack.c.bf16 %v271, %v271
      %vm274 = vcmask 584704
      %275 = vst.msk [vmem:[%s175] sm:$0xf] %vm274, %v273
      %v276 = vpack.c.bf16 %v272, %v271
      %278 = vrot.lane.b32.xlu0 %v276, 56
      %v279 = vpop.permute.xlu0 %278
      %v280 = vrot.slane %v279, 4
      %vm281 = vcmask 457728
      %v282 = vsel %vm281, %v279, %v280
      %s284 = scalar_lea.vmem %s175, 4
      %285 = vst.msk [vmem:[%s284] sm:$0xf] %vm274, %v282
      %s286 = smul.u32 2, %s14
      %p287 = scmp.lt.s32.totalorder %s286, 3
      %s288 = scalar_select %p287, %s286, 3
      %s289 = smul.addr %s288, 4
      %s290 = scalar_lea.vmem %s3, %s289
      // Predicated region
      $region33: #{unet_vflow_forward.10} parent=31 // pred_check
        %p291 = pneg %p100
      $region34: #{unet_vflow_forward.10} parent=31 // pred_check_branch
        %293 = sbr.rel (%p291) target = $region36
      $region35: #{unet_vflow_forward.10} parent=31 // pred_region
        %s294 = smul.u32 2, %s14
      $region36: #{unet_vflow_forward.10} parent=31 // pred_fallthru
        _
    $region32: #{unet_vflow_forward.10} parent=5 // pred_fallthru
      _
    %p295 = scmp.le.s32.totalorder 2, %s9
    // Predicated region
    $region37: #{unet_vflow_forward.10} parent=5 // pred_check
      %p296 = pneg %p295
    $region38: #{unet_vflow_forward.10} parent=5 // pred_check_branch
      %298 = sbr.rel (%p296) target = $region40
    $region39: #{unet_vflow_forward.10} parent=5 // pred_region
      %s299 = ssub.s32 %s9, 2
      // Predicated region
      $region41: #{unet_vflow_forward.10} parent=39 // pred_check
        %p300 = pneg %p106
      $region42: #{unet_vflow_forward.10} parent=39 // pred_check_branch
        %302 = sbr.rel (%p300) target = $region44
      $region43: #{unet_vflow_forward.10} parent=39 // pred_region
        %s303 = smul.u32 2, %s15
        %p304 = scmp.lt.s32.totalorder %s303, 3
        %s305 = scalar_select %p304, %s303, 3
        %s306 = smul.addr %s305, 4
        %s307 = scalar_lea.vmem %s3, %s306
      $region44: #{unet_vflow_forward.10} parent=39 // pred_fallthru
        _
    $region40: #{unet_vflow_forward.10} parent=5 // pred_fallthru
      _
  $region6: #{unet_vflow_forward.10} parent=0 // loop_footer
    %s13 = sadd.s32 1, %s9
  $region7: #{unet_vflow_forward.10} parent=0 // loop_footer_branch
    %8 = sbr.rel target = $region3
  $region8: #{unet_vflow_forward.10} parent=0 // loop_exit
    _

// kernel: unet_vflow_forward.11
$region0: #{unet_vflow_forward.11}
  #allocation0 [shape = 'u32[]', space=smem, size = 0x4, offset = 0x4, fixed_abs, tag = 'smem constant byte address 0x4 - core index']
  #allocation1 [shape = 'u32[72,128]{1,0:T(1,128)}', space=vmem, size = 0x9000, scoped, tag = 'internal scratch']
  %s0 = inlined_call_operand.vmem [shape: bf16[4,32,26], index: 0, kind: input, shape index: {}]
  %s1 = inlined_call_operand.vmem [shape: bf16[16,128], index: 1, kind: input, shape index: {}]
  %s2 = inlined_call_operand.vmem [shape: f32[16,1], index: 2, kind: input, shape index: {}]
  %s3 = inlined_call_operand.vmem [shape: bf16[4,16,20], index: 3, kind: output, shape index: {}]
  %s4 = sld [smem:[#allocation0]]
  $region45: #{unet_vflow_forward.11} parent=0
    _
  %s6 = ssub.s32 1, %s4
  %s7 = scalar_select 0, %s6, %s4
  loop: start=0, step=1, limit=4
  $region2: #{unet_vflow_forward.11} parent=0 // loop_pre_header
    _
  $region3: #{unet_vflow_forward.11} parent=0 // loop_header
    %s9 = sphi 0, %s13
    %p10 = scmp.ge.s32.totalorder %s9, 4
    %s19 = sphi 0, %s21
    %s22 = sphi 0, %s19
    %s23 = sphi 0, %s22
    %s39 = sphi 0, %s23
    %s43 = sphi 0, %s43
    %s45 = sphi 0, %s43
    %s46 = sphi 0, %s45
    %s60 = sphi 0, %s46
    %s64 = sphi 0, %s64
    %s66 = sphi 0, %s64
    %s67 = sphi 0, %s66
    %s81 = sphi 0, %s67
    %s87 = sphi 0, %s89
    %s90 = sphi 0, %s87
    %s91 = sphi 0, %s90
    %s107 = sphi 0, %s91
  $region4: #{unet_vflow_forward.11} parent=0 // loop_header_branch
    %12 = sbr.rel (%p10) target = $region8
  $region5: #{unet_vflow_forward.11} parent=0 // loop_body
    %s14 = ssub.s32 %s9, 1
    %s15 = ssub.s32 %s9, 2
    %s16 = sadd.s32 %s9, 1
    %s17 = ssub.s32 %s9, %s16
    %p18 = scmp.eq.s32.totalorder %s17, 0
    %s20 = sadd.s32 %s19, 1
    %s21 = scalar_select %p18, %s19, %s20
    %p24 = pneg %p18
    %p25 = scmp.eq.s32.totalorder %s9, 1
    %p26 = por %p24, %p25
    %p27 = scmp.ne.s32.totalorder %s19, %s22
    %p28 = scmp.eq.s32.totalorder %s9, 0
    %p29 = por %p27, %p28
    %p30 = scmp.ne.s32.totalorder %s19, %s22
    %p31 = scmp.eq.s32.totalorder %s14, 1
    %p32 = por %p30, %p31
    %p33 = scmp.ne.s32.totalorder %s22, %s23
    %p34 = scmp.eq.s32.totalorder %s14, 0
    %p35 = por %p33, %p34
    %p36 = scmp.ne.s32.totalorder %s22, %s23
    %p37 = scmp.eq.s32.totalorder %s15, 1
    %p38 = por %p36, %p37
    %p40 = scmp.ne.s32.totalorder %s23, %s39
    %p41 = scmp.eq.s32.totalorder %s15, 0
    %p42 = por %p40, %p41
    %s44 = sadd.s32 %s43, 1
    %p47 = scmp.eq.s32.totalorder %s9, 1
    %p48 = scmp.ne.s32.totalorder %s43, %s45
    %p49 = scmp.eq.s32.totalorder %s9, 0
    %p50 = por %p48, %p49
    %p51 = scmp.ne.s32.totalorder %s43, %s45
    %p52 = scmp.eq.s32.totalorder %s14, 1
    %p53 = por %p51, %p52
    %p54 = scmp.ne.s32.totalorder %s45, %s46
    %p55 = scmp.eq.s32.totalorder %s14, 0
    %p56 = por %p54, %p55
    %p57 = scmp.ne.s32.totalorder %s45, %s46
    %p58 = scmp.eq.s32.totalorder %s15, 1
    %p59 = por %p57, %p58
    %p61 = scmp.ne.s32.totalorder %s46, %s60
    %p62 = scmp.eq.s32.totalorder %s15, 0
    %p63 = por %p61, %p62
    %s65 = sadd.s32 %s64, 1
    %p68 = scmp.eq.s32.totalorder %s9, 1
    %p69 = scmp.ne.s32.totalorder %s64, %s66
    %p70 = scmp.eq.s32.totalorder %s9, 0
    %p71 = por %p69, %p70
    %p72 = scmp.ne.s32.totalorder %s64, %s66
    %p73 = scmp.eq.s32.totalorder %s14, 1
    %p74 = por %p72, %p73
    %p75 = scmp.ne.s32.totalorder %s66, %s67
    %p76 = scmp.eq.s32.totalorder %s14, 0
    %p77 = por %p75, %p76
    %p78 = scmp.ne.s32.totalorder %s66, %s67
    %p79 = scmp.eq.s32.totalorder %s15, 1
    %p80 = por %p78, %p79
    %p82 = scmp.ne.s32.totalorder %s67, %s81
    %p83 = scmp.eq.s32.totalorder %s15, 0
    %p84 = por %p82, %p83
    %s85 = ssub.s32 %s9, %s16
    %p86 = scmp.eq.s32.totalorder %s85, 0
    %s88 = sadd.s32 %s87, 1
    %s89 = scalar_select %p86, %s87, %s88
    %p92 = pneg %p86
    %p93 = scmp.eq.s32.totalorder %s9, 1
    %p94 = por %p92, %p93
    %p95 = scmp.ne.s32.totalorder %s87, %s90
    %p96 = scmp.eq.s32.totalorder %s9, 0
    %p97 = por %p95, %p96
    %p98 = scmp.ne.s32.totalorder %s87, %s90
    %p99 = scmp.eq.s32.totalorder %s14, 1
    %p100 = por %p98, %p99
    %p101 = scmp.ne.s32.totalorder %s90, %s91
    %p102 = scmp.eq.s32.totalorder %s14, 0
    %p103 = por %p101, %p102
    %p104 = scmp.ne.s32.totalorder %s90, %s91
    %p105 = scmp.eq.s32.totalorder %s15, 1
    %p106 = por %p104, %p105
    %p108 = scmp.ne.s32.totalorder %s91, %s107
    %p109 = scmp.eq.s32.totalorder %s15, 0
    %p110 = por %p108, %p109
    %p111 = scmp.le.s32.totalorder 1, %s9
    %p112 = scmp.lt.s32.totalorder %s9, 3
    %p113 = pnand %p111, %p112
    %p114 = pneg %p113
    // Predicated region
    $region9: #{unet_vflow_forward.11} parent=5 // pred_check
      _
    $region10: #{unet_vflow_forward.11} parent=5 // pred_check_branch
      %116 = sbr.rel (%p113) target = $region12
    $region11: #{unet_vflow_forward.11} parent=5 // pred_region
      %s117 = ssub.s32 %s9, 1
      // Predicated region
      $region13: #{unet_vflow_forward.11} parent=11 // pred_check
        %p118 = pneg %p56
      $region14: #{unet_vflow_forward.11} parent=11 // pred_check_branch
        %120 = sbr.rel (%p118) target = $region16
      $region15: #{unet_vflow_forward.11} parent=11 // pred_region
        _
      $region16: #{unet_vflow_forward.11} parent=11 // pred_fallthru
        _
      // Predicated region
      $region17: #{unet_vflow_forward.11} parent=11 // pred_check
        %p121 = pneg %p77
      $region18: #{unet_vflow_forward.11} parent=11 // pred_check_branch
        %123 = sbr.rel (%p121) target = $region20
      $region19: #{unet_vflow_forward.11} parent=11 // pred_region
        _
      $region20: #{unet_vflow_forward.11} parent=11 // pred_fallthru
        _
    $region12: #{unet_vflow_forward.11} parent=5 // pred_fallthru
      _
    %p124 = scmp.lt.s32.totalorder %s9, 2
    // Predicated region
    $region21: #{unet_vflow_forward.11} parent=5 // pred_check
      %p125 = pneg %p124
    $region22: #{unet_vflow_forward.11} parent=5 // pred_check_branch
      %127 = sbr.rel (%p125) target = $region24
    $region23: #{unet_vflow_forward.11} parent=5 // pred_region
      // Predicated region
      $region25: #{unet_vflow_forward.11} parent=23 // pred_check
        %p128 = pneg %p29
      $region26: #{unet_vflow_forward.11} parent=23 // pred_check_branch
        %130 = sbr.rel (%p128) target = $region28
      $region27: #{unet_vflow_forward.11} parent=23 // pred_region
        %s131 = smul.u32 2, %s9
        %p132 = scmp.lt.s32.totalorder %s131, 3
        %s133 = scalar_select %p132, %s131, 3
        %s134 = smul.addr %s133, 4
        %s135 = smul.addr %s134, 4
        %s136 = scalar_lea.vmem %s0, %s135
        %s137 = smul.u32 2, %s9
      $region28: #{unet_vflow_forward.11} parent=23 // pred_fallthru
        _
    $region24: #{unet_vflow_forward.11} parent=5 // pred_fallthru
      _
    %p138 = scmp.le.s32.totalorder 1, %s9
    %p139 = scmp.lt.s32.totalorder %s9, 3
    %p140 = pnand %p138, %p139
    %p141 = pneg %p140
    // Predicated region
    $region29: #{unet_vflow_forward.11} parent=5 // pred_check
      _
    $region30: #{unet_vflow_forward.11} parent=5 // pred_check_branch
      %143 = sbr.rel (%p140) target = $region32
    $region31: #{unet_vflow_forward.11} parent=5 // pred_region
      %s144 = ssub.s32 %s9, 1
      %s145 = smul.u32 2, %s14
      %p146 = scmp.lt.s32.totalorder %s145, 3
      %s147 = scalar_select %p146, %s145, 3
      %s148 = smul.addr %s147, 4
      %s149 = smul.addr %s148, 4
      %s150 = scalar_lea.vmem %s0, %s149
      %p151 = pneg %p35
      %p152 = pneg %p32
      %p153 = pneg %p56
      %p154 = pneg %p53
      %p155 = pneg %p77
      %p156 = pneg %p74
      %p157 = pneg %p103
      %p158 = pneg %p100
      %s159 = smul.u32 2, %s14
      %p160 = scmp.lt.s32.totalorder %s159, 3
      %s161 = scalar_select %p160, %s159, 3
      %s162 = smul.addr %s161, 2
      %s163 = smul.addr %s162, 4
      %s164 = scalar_lea.vmem %s3, %s163
      %s165 = smul.u32 2, %s14
      %p166 = scmp.lt.s32.totalorder %s165, 3
      %s167 = scalar_select %p166, %s165, 3
      %s168 = smul.addr %s167, 4
      %s169 = smul.addr %s168, 4
      %s170 = scalar_lea.vmem %s0, %s169
      %s171 = smul.u32 2, %s14
      %s172 = smul.u32 2, %s14
      %p173 = scmp.lt.s32.totalorder %s172, 3
      %s174 = scalar_select %p173, %s172, 3
      %s175 = smul.addr %s174, 2
      %s176 = smul.addr %s175, 4
      %s177 = scalar_lea.vmem %s3, %s176
      %s178 = smul.u32 2, %s14
      %v179 = vld [vmem:[%s170] sm:$0xf]
      %v180 = vld [vmem:[%s170 + $0x4] sm:$0xf]
      %v181 = vld [vmem:[%s170 + $0x8] sm:$0xf]
      %v182 = vld [vmem:[%s170 + $0xc] sm:$0xf]
      %v187 = vunpack.c.l.b16 %v179
      %v188 = vunpack.c.l.b16 %v180
      %v189 = vunpack.c.l.b16 %v181
      %v190 = vunpack.c.l.b16 %v182
      %v191 = vpack.c.b16 %v188, %v187
      %v192 = vpack.c.b16 %v190, %v189
      %193 = vrot.lane.b32.xlu0 %v191, 127
      %v194 = vpop.permute.xlu0 %193
      %195 = vrot.lane.b32.xlu0 %v192, 127
      %v196 = vpop.permute.xlu0 %195
      %197 = vrot.lane.b32.xlu0 %v191, 123
      %v198 = vpop.permute.xlu0 %197
      %199 = vrot.lane.b32.xlu0 %v192, 123
      %v200 = vpop.permute.xlu0 %199
      %201 = vrot.lane.b32.xlu0 %v191, 122
      %v202 = vpop.permute.xlu0 %201
      %203 = vrot.lane.b32.xlu0 %v192, 122
      %v204 = vpop.permute.xlu0 %203
      %s205 = scalar_lea.vmem %s170, 16
      %v206 = vld [vmem:[%s205] sm:$0xf]
      %v207 = vld [vmem:[%s205 + $0x4] sm:$0xf]
      %v208 = vld [vmem:[%s205 + $0x8] sm:$0xf]
      %v209 = vld [vmem:[%s205 + $0xc] sm:$0xf]
      %v214 = vunpack.c.l.b16 %v206
      %v215 = vunpack.c.l.b16 %v207
      %v216 = vunpack.c.l.b16 %v208
      %v217 = vunpack.c.l.b16 %v209
      %v218 = vpack.c.b16 %v215, %v214
      %v219 = vpack.c.b16 %v217, %v216
      %220 = vrot.lane.b32.xlu0 %v218, 127
      %v221 = vpop.permute.xlu0 %220
      %222 = vrot.lane.b32.xlu0 %v219, 127
      %v223 = vpop.permute.xlu0 %222
      %224 = vrot.lane.b32.xlu0 %v218, 123
      %v225 = vpop.permute.xlu0 %224
      %226 = vrot.lane.b32.xlu0 %v219, 123
      %v227 = vpop.permute.xlu0 %226
      %228 = vrot.lane.b32.xlu0 %v218, 122
      %v229 = vpop.permute.xlu0 %228
      %230 = vrot.lane.b32.xlu0 %v219, 122
      %v231 = vpop.permute.xlu0 %230
      %232 = vrot.lane.b32.xlu0 %v218, 20
      %v233 = vpop.permute.xlu0 %232
      %234 = vrot.lane.b32.xlu0 %v219, 20
      %v235 = vpop.permute.xlu0 %234
      %236 = vrot.lane.b32.xlu0 %v221, 20
      %v237 = vpop.permute.xlu0 %236
      %238 = vrot.lane.b32.xlu0 %v223, 20
      %v239 = vpop.permute.xlu0 %238
      %240 = vrot.lane.b32.xlu0 %v225, 20
      %v241 = vpop.permute.xlu0 %240
      %242 = vrot.lane.b32.xlu0 %v227, 20
      %v243 = vpop.permute.xlu0 %242
      %244 = vrot.lane.b32.xlu0 %v229, 20
      %v245 = vpop.permute.xlu0 %244
      %246 = vrot.lane.b32.xlu0 %v231, 20
      %v247 = vpop.permute.xlu0 %246
      %vm248 = vcmask 162816
      %v251 = vsel %vm248, %v191, %v233
      %v255 = vsel %vm248, %v192, %v235
      %v259 = vsel %vm248, %v194, %v237
      %v263 = vsel %vm248, %v196, %v239
      %v267 = vsel %vm248, %v198, %v241
      %v271 = vsel %vm248, %v200, %v243
      %v275 = vsel %vm248, %v202, %v245
      %v279 = vsel %vm248, %v204, %v247
      %v281 = vld [vmem:[%s1] sm:$0xf]
      %v282 = vld [vmem:[%s1 + $0x4] sm:$0xf]
      %v283 = vld [vmem:[%s2] sm:$0xff]
      %v284 = vld [vmem:[%s2 + $0x8] sm:$0xff]
      %286 = vset.pattern.permute.xlu0 0
      %287 = vperm.xlu0 %286, %v283
      %v288 = vpop.permute.xlu0 %287
      %291 = vset.pattern.permute.xlu0 0
      %292 = vperm.xlu0 %291, %v284
      %v293 = vpop.permute.xlu0 %292
      %v297 = vunpack.c.l.b16 %v281
      %v298 = vunpack.c.l.b16 %v282
      %v299 = vpack.c.b16 %v298, %v297
      %301 = vmatpush.bf16.msra.mxu0 %v279
      %302 = vmatpush.bf16.msra.mxu0 %v275
      %303 = vmatpush.bf16.msra.mxu0 %v271
      %304 = vmatpush.bf16.msra.mxu0 %v267
      %305 = vmatpush.bf16.msra.mxu0 %v263
      %306 = vmatpush.bf16.msra.mxu0 %v259
      %307 = vmatpush.bf16.msra.mxu0 %v255
      %308 = vmatpush.bf16.msra.mxu0 %v251
      %309 = vmatmul.bf16.gmra.mxu0 %v299
      %v310 = vpop.f32.mrf.mxu0
      %v311 = vadd.f32 %v288, %v310
      %v312 = vpop.f32.mrf.mxu0
      %v313 = vadd.f32 %v293, %v312
      %314 = vdwg.mxu0
      %v315 = vmax.f32 %v311, 0.0
      %v316 = vmax.f32 %v313, 0.0
      %v317 = vpack.c.bf16 %v315, %v315
      %v318 = vpack.c.bf16 %v316, %v316
      %vm319 = vcmask 158720
      %320 = vst.msk [vmem:[%s177] sm:$0xf] %vm319, %v317
      %321 = vst.msk [vmem:[%s177 + $0x4] sm:$0xf] %vm319, %v318
      %324 = vrot.lane.b32.xlu0 %v317, 108
      %v325 = vpop.permute.xlu0 %324
      %326 = vrot.lane.b32.xlu0 %v318, 108
      %v327 = vpop.permute.xlu0 %326
      %s330 = scalar_lea.vmem %s177, 8
      %331 = vst.msk [vmem:[%s330] sm:$0xf] %vm319, %v325
      %332 = vst.msk [vmem:[%s330 + $0x4] sm:$0xf] %vm319, %v327
      %s333 = smul.u32 2, %s14
      %p334 = scmp.lt.s32.totalorder %s333, 3
      %s335 = scalar_select %p334, %s333, 3
      %s336 = smul.addr %s335, 2
      %s337 = smul.addr %s336, 4
      %s338 = scalar_lea.vmem %s3, %s337
      // Predicated region
      $region33: #{unet_vflow_forward.11} parent=31 // pred_check
        %p339 = pneg %p100
      $region34: #{unet_vflow_forward.11} parent=31 // pred_check_branch
        %341 = sbr.rel (%p339) target = $region36
      $region35: #{unet_vflow_forward.11} parent=31 // pred_region
        %s342 = smul.u32 2, %s14
      $region36: #{unet_vflow_forward.11} parent=31 // pred_fallthru
        _
    $region32: #{unet_vflow_forward.11} parent=5 // pred_fallthru
      _
    %p343 = scmp.le.s32.totalorder 2, %s9
    // Predicated region
    $region37: #{unet_vflow_forward.11} parent=5 // pred_check
      %p344 = pneg %p343
    $region38: #{unet_vflow_forward.11} parent=5 // pred_check_branch
      %346 = sbr.rel (%p344) target = $region40
    $region39: #{unet_vflow_forward.11} parent=5 // pred_region
      %s347 = ssub.s32 %s9, 2
      // Predicated region
      $region41: #{unet_vflow_forward.11} parent=39 // pred_check
        %p348 = pneg %p106
      $region42: #{unet_vflow_forward.11} parent=39 // pred_check_branch
        %350 = sbr.rel (%p348) target = $region44
      $region43: #{unet_vflow_forward.11} parent=39 // pred_region
        %s351 = smul.u32 2, %s15
        %p352 = scmp.lt.s32.totalorder %s351, 3
        %s353 = scalar_select %p352, %s351, 3
        %s354 = smul.addr %s353, 2
        %s355 = smul.addr %s354, 4
        %s356 = scalar_lea.vmem %s3, %s355
      $region44: #{unet_vflow_forward.11} parent=39 // pred_fallthru
        _
    $region40: #{unet_vflow_forward.11} parent=5 // pred_fallthru
      _
  $region6: #{unet_vflow_forward.11} parent=0 // loop_footer
    %s13 = sadd.s32 1, %s9
  $region7: #{unet_vflow_forward.11} parent=0 // loop_footer_branch
    %8 = sbr.rel target = $region3
  $region8: #{unet_vflow_forward.11} parent=0 // loop_exit
    _

// kernel: unet_vflow_forward.12
$region0: #{unet_vflow_forward.12}
  #allocation0 [shape = 'u32[]', space=smem, size = 0x4, offset = 0x4, fixed_abs, tag = 'smem constant byte address 0x4 - core index']
  #allocation1 [shape = 'u32[72,128]{1,0:T(1,128)}', space=vmem, size = 0x9000, scoped, tag = 'internal scratch']
  %s0 = inlined_call_operand.vmem [shape: bf16[4,64,10], index: 0, kind: input, shape index: {}]
  %s1 = inlined_call_operand.vmem [shape: bf16[32,256], index: 1, kind: input, shape index: {}]
  %s2 = inlined_call_operand.vmem [shape: f32[32,1], index: 2, kind: input, shape index: {}]
  %s3 = inlined_call_operand.vmem [shape: bf16[4,32,6], index: 3, kind: output, shape index: {}]
  %s4 = sld [smem:[#allocation0]]
  $region45: #{unet_vflow_forward.12} parent=0
    _
  %s6 = ssub.s32 1, %s4
  %s7 = scalar_select 0, %s6, %s4
  loop: start=0, step=1, limit=4
  $region2: #{unet_vflow_forward.12} parent=0 // loop_pre_header
    _
  $region3: #{unet_vflow_forward.12} parent=0 // loop_header
    %s9 = sphi 0, %s13
    %p10 = scmp.ge.s32.totalorder %s9, 4
    %s19 = sphi 0, %s21
    %s22 = sphi 0, %s19
    %s23 = sphi 0, %s22
    %s39 = sphi 0, %s23
    %s43 = sphi 0, %s43
    %s45 = sphi 0, %s43
    %s46 = sphi 0, %s45
    %s60 = sphi 0, %s46
    %s64 = sphi 0, %s64
    %s66 = sphi 0, %s64
    %s67 = sphi 0, %s66
    %s81 = sphi 0, %s67
    %s87 = sphi 0, %s89
    %s90 = sphi 0, %s87
    %s91 = sphi 0, %s90
    %s107 = sphi 0, %s91
  $region4: #{unet_vflow_forward.12} parent=0 // loop_header_branch
    %12 = sbr.rel (%p10) target = $region8
  $region5: #{unet_vflow_forward.12} parent=0 // loop_body
    %s14 = ssub.s32 %s9, 1
    %s15 = ssub.s32 %s9, 2
    %s16 = sadd.s32 %s9, 1
    %s17 = ssub.s32 %s9, %s16
    %p18 = scmp.eq.s32.totalorder %s17, 0
    %s20 = sadd.s32 %s19, 1
    %s21 = scalar_select %p18, %s19, %s20
    %p24 = pneg %p18
    %p25 = scmp.eq.s32.totalorder %s9, 1
    %p26 = por %p24, %p25
    %p27 = scmp.ne.s32.totalorder %s19, %s22
    %p28 = scmp.eq.s32.totalorder %s9, 0
    %p29 = por %p27, %p28
    %p30 = scmp.ne.s32.totalorder %s19, %s22
    %p31 = scmp.eq.s32.totalorder %s14, 1
    %p32 = por %p30, %p31
    %p33 = scmp.ne.s32.totalorder %s22, %s23
    %p34 = scmp.eq.s32.totalorder %s14, 0
    %p35 = por %p33, %p34
    %p36 = scmp.ne.s32.totalorder %s22, %s23
    %p37 = scmp.eq.s32.totalorder %s15, 1
    %p38 = por %p36, %p37
    %p40 = scmp.ne.s32.totalorder %s23, %s39
    %p41 = scmp.eq.s32.totalorder %s15, 0
    %p42 = por %p40, %p41
    %s44 = sadd.s32 %s43, 1
    %p47 = scmp.eq.s32.totalorder %s9, 1
    %p48 = scmp.ne.s32.totalorder %s43, %s45
    %p49 = scmp.eq.s32.totalorder %s9, 0
    %p50 = por %p48, %p49
    %p51 = scmp.ne.s32.totalorder %s43, %s45
    %p52 = scmp.eq.s32.totalorder %s14, 1
    %p53 = por %p51, %p52
    %p54 = scmp.ne.s32.totalorder %s45, %s46
    %p55 = scmp.eq.s32.totalorder %s14, 0
    %p56 = por %p54, %p55
    %p57 = scmp.ne.s32.totalorder %s45, %s46
    %p58 = scmp.eq.s32.totalorder %s15, 1
    %p59 = por %p57, %p58
    %p61 = scmp.ne.s32.totalorder %s46, %s60
    %p62 = scmp.eq.s32.totalorder %s15, 0
    %p63 = por %p61, %p62
    %s65 = sadd.s32 %s64, 1
    %p68 = scmp.eq.s32.totalorder %s9, 1
    %p69 = scmp.ne.s32.totalorder %s64, %s66
    %p70 = scmp.eq.s32.totalorder %s9, 0
    %p71 = por %p69, %p70
    %p72 = scmp.ne.s32.totalorder %s64, %s66
    %p73 = scmp.eq.s32.totalorder %s14, 1
    %p74 = por %p72, %p73
    %p75 = scmp.ne.s32.totalorder %s66, %s67
    %p76 = scmp.eq.s32.totalorder %s14, 0
    %p77 = por %p75, %p76
    %p78 = scmp.ne.s32.totalorder %s66, %s67
    %p79 = scmp.eq.s32.totalorder %s15, 1
    %p80 = por %p78, %p79
    %p82 = scmp.ne.s32.totalorder %s67, %s81
    %p83 = scmp.eq.s32.totalorder %s15, 0
    %p84 = por %p82, %p83
    %s85 = ssub.s32 %s9, %s16
    %p86 = scmp.eq.s32.totalorder %s85, 0
    %s88 = sadd.s32 %s87, 1
    %s89 = scalar_select %p86, %s87, %s88
    %p92 = pneg %p86
    %p93 = scmp.eq.s32.totalorder %s9, 1
    %p94 = por %p92, %p93
    %p95 = scmp.ne.s32.totalorder %s87, %s90
    %p96 = scmp.eq.s32.totalorder %s9, 0
    %p97 = por %p95, %p96
    %p98 = scmp.ne.s32.totalorder %s87, %s90
    %p99 = scmp.eq.s32.totalorder %s14, 1
    %p100 = por %p98, %p99
    %p101 = scmp.ne.s32.totalorder %s90, %s91
    %p102 = scmp.eq.s32.totalorder %s14, 0
    %p103 = por %p101, %p102
    %p104 = scmp.ne.s32.totalorder %s90, %s91
    %p105 = scmp.eq.s32.totalorder %s15, 1
    %p106 = por %p104, %p105
    %p108 = scmp.ne.s32.totalorder %s91, %s107
    %p109 = scmp.eq.s32.totalorder %s15, 0
    %p110 = por %p108, %p109
    %p111 = scmp.le.s32.totalorder 1, %s9
    %p112 = scmp.lt.s32.totalorder %s9, 3
    %p113 = pnand %p111, %p112
    %p114 = pneg %p113
    // Predicated region
    $region9: #{unet_vflow_forward.12} parent=5 // pred_check
      _
    $region10: #{unet_vflow_forward.12} parent=5 // pred_check_branch
      %116 = sbr.rel (%p113) target = $region12
    $region11: #{unet_vflow_forward.12} parent=5 // pred_region
      %s117 = ssub.s32 %s9, 1
      // Predicated region
      $region13: #{unet_vflow_forward.12} parent=11 // pred_check
        %p118 = pneg %p56
      $region14: #{unet_vflow_forward.12} parent=11 // pred_check_branch
        %120 = sbr.rel (%p118) target = $region16
      $region15: #{unet_vflow_forward.12} parent=11 // pred_region
        _
      $region16: #{unet_vflow_forward.12} parent=11 // pred_fallthru
        _
      // Predicated region
      $region17: #{unet_vflow_forward.12} parent=11 // pred_check
        %p121 = pneg %p77
      $region18: #{unet_vflow_forward.12} parent=11 // pred_check_branch
        %123 = sbr.rel (%p121) target = $region20
      $region19: #{unet_vflow_forward.12} parent=11 // pred_region
        _
      $region20: #{unet_vflow_forward.12} parent=11 // pred_fallthru
        _
    $region12: #{unet_vflow_forward.12} parent=5 // pred_fallthru
      _
    %p124 = scmp.lt.s32.totalorder %s9, 2
    // Predicated region
    $region21: #{unet_vflow_forward.12} parent=5 // pred_check
      %p125 = pneg %p124
    $region22: #{unet_vflow_forward.12} parent=5 // pred_check_branch
      %127 = sbr.rel (%p125) target = $region24
    $region23: #{unet_vflow_forward.12} parent=5 // pred_region
      // Predicated region
      $region25: #{unet_vflow_forward.12} parent=23 // pred_check
        %p128 = pneg %p29
      $region26: #{unet_vflow_forward.12} parent=23 // pred_check_branch
        %130 = sbr.rel (%p128) target = $region28
      $region27: #{unet_vflow_forward.12} parent=23 // pred_region
        %s131 = smul.u32 2, %s9
        %p132 = scmp.lt.s32.totalorder %s131, 3
        %s133 = scalar_select %p132, %s131, 3
        %s134 = smul.addr %s133, 8
        %s135 = smul.addr %s134, 4
        %s136 = scalar_lea.vmem %s0, %s135
        %s137 = smul.u32 2, %s9
      $region28: #{unet_vflow_forward.12} parent=23 // pred_fallthru
        _
    $region24: #{unet_vflow_forward.12} parent=5 // pred_fallthru
      _
    %p138 = scmp.le.s32.totalorder 1, %s9
    %p139 = scmp.lt.s32.totalorder %s9, 3
    %p140 = pnand %p138, %p139
    %p141 = pneg %p140
    // Predicated region
    $region29: #{unet_vflow_forward.12} parent=5 // pred_check
      _
    $region30: #{unet_vflow_forward.12} parent=5 // pred_check_branch
      %143 = sbr.rel (%p140) target = $region32
    $region31: #{unet_vflow_forward.12} parent=5 // pred_region
      %s144 = ssub.s32 %s9, 1
      %s145 = smul.u32 2, %s14
      %p146 = scmp.lt.s32.totalorder %s145, 3
      %s147 = scalar_select %p146, %s145, 3
      %s148 = smul.addr %s147, 8
      %s149 = smul.addr %s148, 4
      %s150 = scalar_lea.vmem %s0, %s149
      %p151 = pneg %p35
      %p152 = pneg %p32
      %p153 = pneg %p56
      %p154 = pneg %p53
      %p155 = pneg %p77
      %p156 = pneg %p74
      %p157 = pneg %p103
      %p158 = pneg %p100
      %s159 = smul.u32 2, %s14
      %p160 = scmp.lt.s32.totalorder %s159, 3
      %s161 = scalar_select %p160, %s159, 3
      %s162 = smul.addr %s161, 4
      %s163 = smul.addr %s162, 4
      %s164 = scalar_lea.vmem %s3, %s163
      %s165 = smul.u32 2, %s14
      %p166 = scmp.lt.s32.totalorder %s165, 3
      %s167 = scalar_select %p166, %s165, 3
      %s168 = smul.addr %s167, 8
      %s169 = smul.addr %s168, 4
      %s170 = scalar_lea.vmem %s0, %s169
      %s171 = smul.u32 2, %s14
      %s172 = smul.u32 2, %s14
      %p173 = scmp.lt.s32.totalorder %s172, 3
      %s174 = scalar_select %p173, %s172, 3
      %s175 = smul.addr %s174, 4
      %s176 = smul.addr %s175, 4
      %s177 = scalar_lea.vmem %s3, %s176
      %s178 = smul.u32 2, %s14
      %v179 = vld [vmem:[%s170] sm:$0xf]
      %v180 = vld [vmem:[%s170 + $0x4] sm:$0xf]
      %v181 = vld [vmem:[%s170 + $0x8] sm:$0xf]
      %v182 = vld [vmem:[%s170 + $0xc] sm:$0xf]
      %v183 = vld [vmem:[%s170 + $0x10] sm:$0xf]
      %v184 = vld [vmem:[%s170 + $0x14] sm:$0xf]
      %v185 = vld [vmem:[%s170 + $0x18] sm:$0xf]
      %v186 = vld [vmem:[%s170 + $0x1c] sm:$0xf]
      %v195 = vunpack.c.l.b16 %v179
      %v196 = vunpack.c.l.b16 %v180
      %v197 = vunpack.c.l.b16 %v181
      %v198 = vunpack.c.l.b16 %v182
      %v199 = vunpack.c.l.b16 %v183
      %v200 = vunpack.c.l.b16 %v184
      %v201 = vunpack.c.l.b16 %v185
      %v202 = vunpack.c.l.b16 %v186
      %v203 = vpack.c.b16 %v196, %v195
      %v204 = vpack.c.b16 %v198, %v197
      %v205 = vpack.c.b16 %v200, %v199
      %v206 = vpack.c.b16 %v202, %v201
      %207 = vrot.lane.b32.xlu0 %v203, 127
      %v208 = vpop.permute.xlu0 %207
      %209 = vrot.lane.b32.xlu0 %v204, 127
      %v210 = vpop.permute.xlu0 %209
      %211 = vrot.lane.b32.xlu0 %v205, 127
      %v212 = vpop.permute.xlu0 %211
      %213 = vrot.lane.b32.xlu0 %v206, 127
      %v214 = vpop.permute.xlu0 %213
      %215 = vrot.lane.b32.xlu0 %v203, 125
      %v216 = vpop.permute.xlu0 %215
      %217 = vrot.lane.b32.xlu0 %v204, 125
      %v218 = vpop.permute.xlu0 %217
      %219 = vrot.lane.b32.xlu0 %v205, 125
      %v220 = vpop.permute.xlu0 %219
      %221 = vrot.lane.b32.xlu0 %v206, 125
      %v222 = vpop.permute.xlu0 %221
      %223 = vrot.lane.b32.xlu0 %v203, 124
      %v224 = vpop.permute.xlu0 %223
      %225 = vrot.lane.b32.xlu0 %v204, 124
      %v226 = vpop.permute.xlu0 %225
      %227 = vrot.lane.b32.xlu0 %v205, 124
      %v228 = vpop.permute.xlu0 %227
      %229 = vrot.lane.b32.xlu0 %v206, 124
      %v230 = vpop.permute.xlu0 %229
      %s231 = scalar_lea.vmem %s170, 32
      %v232 = vld [vmem:[%s231] sm:$0xf]
      %v233 = vld [vmem:[%s231 + $0x4] sm:$0xf]
      %v234 = vld [vmem:[%s231 + $0x8] sm:$0xf]
      %v235 = vld [vmem:[%s231 + $0xc] sm:$0xf]
      %v236 = vld [vmem:[%s231 + $0x10] sm:$0xf]
      %v237 = vld [vmem:[%s231 + $0x14] sm:$0xf]
      %v238 = vld [vmem:[%s231 + $0x18] sm:$0xf]
      %v239 = vld [vmem:[%s231 + $0x1c] sm:$0xf]
      %v248 = vunpack.c.l.b16 %v232
      %v249 = vunpack.c.l.b16 %v233
      %v250 = vunpack.c.l.b16 %v234
      %v251 = vunpack.c.l.b16 %v235
      %v252 = vunpack.c.l.b16 %v236
      %v253 = vunpack.c.l.b16 %v237
      %v254 = vunpack.c.l.b16 %v238
      %v255 = vunpack.c.l.b16 %v239
      %v256 = vpack.c.b16 %v249, %v248
      %v257 = vpack.c.b16 %v251, %v250
      %v258 = vpack.c.b16 %v253, %v252
      %v259 = vpack.c.b16 %v255, %v254
      %260 = vrot.lane.b32.xlu0 %v256, 127
      %v261 = vpop.permute.xlu0 %260
      %262 = vrot.lane.b32.xlu0 %v257, 127
      %v263 = vpop.permute.xlu0 %262
      %264 = vrot.lane.b32.xlu0 %v258, 127
      %v265 = vpop.permute.xlu0 %264
      %266 = vrot.lane.b32.xlu0 %v259, 127
      %v267 = vpop.permute.xlu0 %266
      %268 = vrot.lane.b32.xlu0 %v256, 125
      %v269 = vpop.permute.xlu0 %268
      %270 = vrot.lane.b32.xlu0 %v257, 125
      %v271 = vpop.permute.xlu0 %270
      %272 = vrot.lane.b32.xlu0 %v258, 125
      %v273 = vpop.permute.xlu0 %272
      %274 = vrot.lane.b32.xlu0 %v259, 125
      %v275 = vpop.permute.xlu0 %274
      %276 = vrot.lane.b32.xlu0 %v256, 124
      %v277 = vpop.permute.xlu0 %276
      %278 = vrot.lane.b32.xlu0 %v257, 124
      %v279 = vpop.permute.xlu0 %278
      %280 = vrot.lane.b32.xlu0 %v258, 124
      %v281 = vpop.permute.xlu0 %280
      %282 = vrot.lane.b32.xlu0 %v259, 124
      %v283 = vpop.permute.xlu0 %282
      %284 = vrot.lane.b32.xlu0 %v256, 6
      %v285 = vpop.permute.xlu0 %284
      %286 = vrot.lane.b32.xlu0 %v257, 6
      %v287 = vpop.permute.xlu0 %286
      %288 = vrot.lane.b32.xlu0 %v258, 6
      %v289 = vpop.permute.xlu0 %288
      %290 = vrot.lane.b32.xlu0 %v259, 6
      %v291 = vpop.permute.xlu0 %290
      %292 = vrot.lane.b32.xlu0 %v261, 6
      %v293 = vpop.permute.xlu0 %292
      %294 = vrot.lane.b32.xlu0 %v263, 6
      %v295 = vpop.permute.xlu0 %294
      %296 = vrot.lane.b32.xlu0 %v265, 6
      %v297 = vpop.permute.xlu0 %296
      %298 = vrot.lane.b32.xlu0 %v267, 6
      %v299 = vpop.permute.xlu0 %298
      %300 = vrot.lane.b32.xlu0 %v269, 6
      %v301 = vpop.permute.xlu0 %300
      %302 = vrot.lane.b32.xlu0 %v271, 6
      %v303 = vpop.permute.xlu0 %302
      %304 = vrot.lane.b32.xlu0 %v273, 6
      %v305 = vpop.permute.xlu0 %304
      %306 = vrot.lane.b32.xlu0 %v275, 6
      %v307 = vpop.permute.xlu0 %306
      %308 = vrot.lane.b32.xlu0 %v277, 6
      %v309 = vpop.permute.xlu0 %308
      %310 = vrot.lane.b32.xlu0 %v279, 6
      %v311 = vpop.permute.xlu0 %310
      %312 = vrot.lane.b32.xlu0 %v281, 6
      %v313 = vpop.permute.xlu0 %312
      %314 = vrot.lane.b32.xlu0 %v283, 6
      %v315 = vpop.permute.xlu0 %314
      %vm316 = vcmask 48128
      %v319 = vsel %vm316, %v203, %v285
      %v323 = vsel %vm316, %v204, %v287
      %v327 = vsel %vm316, %v205, %v289
      %v331 = vsel %vm316, %v206, %v291
      %v335 = vsel %vm316, %v208, %v293
      %v339 = vsel %vm316, %v210, %v295
      %v343 = vsel %vm316, %v212, %v297
      %v347 = vsel %vm316, %v214, %v299
      %v351 = vsel %vm316, %v216, %v301
      %v355 = vsel %vm316, %v218, %v303
      %v359 = vsel %vm316, %v220, %v305
      %v363 = vsel %vm316, %v222, %v307
      %v367 = vsel %vm316, %v224, %v309
      %v371 = vsel %vm316, %v226, %v311
      %v375 = vsel %vm316, %v228, %v313
      %v379 = vsel %vm316, %v230, %v315
      %v381 = vld [vmem:[%s1] sm:$0xff]
      %v382 = vld [vmem:[%s1 + $0x8] sm:$0xff]
      %v383 = vld [vmem:[%s1 + $0x10] sm:$0xff]
      %v384 = vld [vmem:[%s1 + $0x18] sm:$0xff]
      %v385 = vld [vmem:[%s2] sm:$0xff]
      %v386 = vld [vmem:[%s2 + $0x8] sm:$0xff]
      %v387 = vld [vmem:[%s2 + $0x10] sm:$0xff]
      %v388 = vld [vmem:[%s2 + $0x18] sm:$0xff]
      %390 = vset.pattern.permute.xlu0 0
      %391 = vperm.xlu0 %390, %v385
      %v392 = vpop.permute.xlu0 %391
      %395 = vset.pattern.permute.xlu0 0
      %396 = vperm.xlu0 %395, %v386
      %v397 = vpop.permute.xlu0 %396
      %400 = vset.pattern.permute.xlu0 0
      %401 = vperm.xlu0 %400, %v387
      %v402 = vpop.permute.xlu0 %401
      %405 = vset.pattern.permute.xlu0 0
      %406 = vperm.xlu0 %405, %v388
      %v407 = vpop.permute.xlu0 %406
      %v413 = vunpack.c.l.b16 %v381
      %v414 = vunpack.c.h.b16 %v381
      %v415 = vunpack.c.l.b16 %v382
      %v416 = vunpack.c.h.b16 %v382
      %v417 = vunpack.c.l.b16 %v383
      %v418 = vunpack.c.h.b16 %v383
      %v419 = vunpack.c.l.b16 %v384
      %v420 = vunpack.c.h.b16 %v384
      %v421 = vpack.c.b16 %v415, %v413
      %v422 = vpack.c.b16 %v416, %v414
      %v423 = vpack.c.b16 %v419, %v417
      %v424 = vpack.c.b16 %v420, %v418
      %429 = vmatpush.bf16.msra.mxu0 %v347
      %430 = vmatpush.bf16.msra.mxu0 %v343
      %431 = vmatpush.bf16.msra.mxu0 %v339
      %432 = vmatpush.bf16.msra.mxu0 %v335
      %433 = vmatpush.bf16.msra.mxu0 %v331
      %434 = vmatpush.bf16.msra.mxu0 %v327
      %435 = vmatpush.bf16.msra.mxu0 %v323
      %436 = vmatpush.bf16.msra.mxu0 %v319
      %437 = vmatmul.bf16.gmra.mxu0 %v421
      %v438 = vpop.f32.mrf.mxu0
      %v439 = vadd.f32 %v392, %v438
      %v440 = vpop.f32.mrf.mxu0
      %v441 = vadd.f32 %v397, %v440
      %442 = vmatmul.bf16.gmra.mxu0 %v423
      %v443 = vpop.f32.mrf.mxu0
      %v444 = vadd.f32 %v402, %v443
      %v445 = vpop.f32.mrf.mxu0
      %v446 = vadd.f32 %v407, %v445
      %447 = vdwg.mxu0
      %448 = vmatpush.bf16.msra.mxu0 %v379
      %449 = vmatpush.bf16.msra.mxu0 %v375
      %450 = vmatpush.bf16.msra.mxu0 %v371
      %451 = vmatpush.bf16.msra.mxu0 %v367
      %452 = vmatpush.bf16.msra.mxu0 %v363
      %453 = vmatpush.bf16.msra.mxu0 %v359
      %454 = vmatpush.bf16.msra.mxu0 %v355
      %455 = vmatpush.bf16.msra.mxu0 %v351
      %456 = vmatmul.bf16.gmra.mxu0 %v422
      %v457 = vpop.f32.mrf.mxu0
      %v458 = vadd.f32 %v439, %v457
      %v459 = vpop.f32.mrf.mxu0
      %v460 = vadd.f32 %v441, %v459
      %461 = vmatmul.bf16.gmra.mxu0 %v424
      %v462 = vpop.f32.mrf.mxu0
      %v463 = vadd.f32 %v444, %v462
      %v464 = vpop.f32.mrf.mxu0
      %v465 = vadd.f32 %v446, %v464
      %466 = vdwg.mxu0
      %v467 = vmax.f32 %v458, 0.0
      %v468 = vmax.f32 %v460, 0.0
      %v469 = vmax.f32 %v463, 0.0
      %v470 = vmax.f32 %v465, 0.0
      %v471 = vpack.c.bf16 %v467, %v467
      %v472 = vpack.c.bf16 %v468, %v468
      %v473 = vpack.c.bf16 %v469, %v469
      %v474 = vpack.c.bf16 %v470, %v470
      %vm475 = vcmask 44032
      %476 = vst.msk [vmem:[%s177] sm:$0xf] %vm475, %v471
      %477 = vst.msk [vmem:[%s177 + $0x4] sm:$0xf] %vm475, %v472
      %478 = vst.msk [vmem:[%s177 + $0x8] sm:$0xf] %vm475, %v473
      %479 = vst.msk [vmem:[%s177 + $0xc] sm:$0xf] %vm475, %v474
      %484 = vrot.lane.b32.xlu0 %v471, 122
      %v485 = vpop.permute.xlu0 %484
      %486 = vrot.lane.b32.xlu0 %v472, 122
      %v487 = vpop.permute.xlu0 %486
      %488 = vrot.lane.b32.xlu0 %v473, 122
      %v489 = vpop.permute.xlu0 %488
      %490 = vrot.lane.b32.xlu0 %v474, 122
      %v491 = vpop.permute.xlu0 %490
      %s496 = scalar_lea.vmem %s177, 16
      %497 = vst.msk [vmem:[%s496] sm:$0xf] %vm475, %v485
      %498 = vst.msk [vmem:[%s496 + $0x4] sm:$0xf] %vm475, %v487
      %499 = vst.msk [vmem:[%s496 + $0x8] sm:$0xf] %vm475, %v489
      %500 = vst.msk [vmem:[%s496 + $0xc] sm:$0xf] %vm475, %v491
      %s501 = smul.u32 2, %s14
      %p502 = scmp.lt.s32.totalorder %s501, 3
      %s503 = scalar_select %p502, %s501, 3
      %s504 = smul.addr %s503, 4
      %s505 = smul.addr %s504, 4
      %s506 = scalar_lea.vmem %s3, %s505
      // Predicated region
      $region33: #{unet_vflow_forward.12} parent=31 // pred_check
        %p507 = pneg %p100
      $region34: #{unet_vflow_forward.12} parent=31 // pred_check_branch
        %509 = sbr.rel (%p507) target = $region36
      $region35: #{unet_vflow_forward.12} parent=31 // pred_region
        %s510 = smul.u32 2, %s14
      $region36: #{unet_vflow_forward.12} parent=31 // pred_fallthru
        _
    $region32: #{unet_vflow_forward.12} parent=5 // pred_fallthru
      _
    %p511 = scmp.le.s32.totalorder 2, %s9
    // Predicated region
    $region37: #{unet_vflow_forward.12} parent=5 // pred_check
      %p512 = pneg %p511
    $region38: #{unet_vflow_forward.12} parent=5 // pred_check_branch
      %514 = sbr.rel (%p512) target = $region40
    $region39: #{unet_vflow_forward.12} parent=5 // pred_region
      %s515 = ssub.s32 %s9, 2
      // Predicated region
      $region41: #{unet_vflow_forward.12} parent=39 // pred_check
        %p516 = pneg %p106
      $region42: #{unet_vflow_forward.12} parent=39 // pred_check_branch
        %518 = sbr.rel (%p516) target = $region44
      $region43: #{unet_vflow_forward.12} parent=39 // pred_region
        %s519 = smul.u32 2, %s15
        %p520 = scmp.lt.s32.totalorder %s519, 3
        %s521 = scalar_select %p520, %s519, 3
        %s522 = smul.addr %s521, 4
        %s523 = smul.addr %s522, 4
        %s524 = scalar_lea.vmem %s3, %s523
      $region44: #{unet_vflow_forward.12} parent=39 // pred_fallthru
        _
    $region40: #{unet_vflow_forward.12} parent=5 // pred_fallthru
      _
  $region6: #{unet_vflow_forward.12} parent=0 // loop_footer
    %s13 = sadd.s32 1, %s9
  $region7: #{unet_vflow_forward.12} parent=0 // loop_footer_branch
    %8 = sbr.rel target = $region3
  $region8: #{unet_vflow_forward.12} parent=0 // loop_exit
    _

// kernel: unet_vflow_forward.15
$region0: #{unet_vflow_forward.15}
  #allocation0 [shape = 'u32[]', space=smem, size = 0x4, offset = 0x4, fixed_abs, tag = 'smem constant byte address 0x4 - core index']
  #allocation1 [shape = 'u32[72,128]{1,0:T(1,128)}', space=vmem, size = 0x9000, scoped, tag = 'internal scratch']
  %s0 = inlined_call_operand.vmem [shape: bf16[2,2,32,4], index: 0, kind: input, shape index: {}]
  %s1 = inlined_call_operand.vmem [shape: bf16[32,32], index: 1, kind: input, shape index: {}]
  %s2 = inlined_call_operand.vmem [shape: f32[32,1], index: 2, kind: input, shape index: {}]
  %s3 = inlined_call_operand.vmem [shape: f32[32,1], index: 3, kind: input, shape index: {}]
  %s4 = inlined_call_operand.vmem [shape: f32[32,1], index: 4, kind: input, shape index: {}]
  %s5 = inlined_call_operand.vmem [shape: f32[1,32], index: 5, kind: input, shape index: {}]
  %s6 = inlined_call_operand.vmem [shape: bf16[2,32,4], index: 6, kind: output, shape index: {}]
  %s7 = sld [smem:[#allocation0]]
  $region57: #{unet_vflow_forward.15} parent=0
    _
  %s9 = ssub.s32 1, %s7
  %s10 = scalar_select 0, %s9, %s7
  loop: start=0, step=1, limit=4
  $region2: #{unet_vflow_forward.15} parent=0 // loop_pre_header
    _
  $region3: #{unet_vflow_forward.15} parent=0 // loop_header
    %s12 = sphi 0, %s16
    %p13 = scmp.ge.s32.totalorder %s12, 4
    %s22 = sphi 0, %s24
    %s25 = sphi 0, %s22
    %s26 = sphi 0, %s25
    %s42 = sphi 0, %s26
    %s46 = sphi 0, %s46
    %s48 = sphi 0, %s46
    %s49 = sphi 0, %s48
    %s63 = sphi 0, %s49
    %s67 = sphi 0, %s67
    %s69 = sphi 0, %s67
    %s70 = sphi 0, %s69
    %s84 = sphi 0, %s70
    %s88 = sphi 0, %s88
    %s90 = sphi 0, %s88
    %s91 = sphi 0, %s90
    %s105 = sphi 0, %s91
    %s109 = sphi 0, %s109
    %s111 = sphi 0, %s109
    %s112 = sphi 0, %s111
    %s126 = sphi 0, %s112
    %s130 = sphi 0, %s130
    %s132 = sphi 0, %s130
    %s133 = sphi 0, %s132
    %s147 = sphi 0, %s133
    %s153 = sphi 0, %s155
    %s156 = sphi 0, %s153
    %s157 = sphi 0, %s156
    %s173 = sphi 0, %s157
  $region4: #{unet_vflow_forward.15} parent=0 // loop_header_branch
    %15 = sbr.rel (%p13) target = $region8
  $region5: #{unet_vflow_forward.15} parent=0 // loop_body
    %s17 = ssub.s32 %s12, 1
    %s18 = ssub.s32 %s12, 2
    %s19 = sadd.s32 %s12, 1
    %s20 = ssub.s32 %s12, %s19
    %p21 = scmp.eq.s32.totalorder %s20, 0
    %s23 = sadd.s32 %s22, 1
    %s24 = scalar_select %p21, %s22, %s23
    %p27 = pneg %p21
    %p28 = scmp.eq.s32.totalorder %s12, 1
    %p29 = por %p27, %p28
    %p30 = scmp.ne.s32.totalorder %s22, %s25
    %p31 = scmp.eq.s32.totalorder %s12, 0
    %p32 = por %p30, %p31
    %p33 = scmp.ne.s32.totalorder %s22, %s25
    %p34 = scmp.eq.s32.totalorder %s17, 1
    %p35 = por %p33, %p34
    %p36 = scmp.ne.s32.totalorder %s25, %s26
    %p37 = scmp.eq.s32.totalorder %s17, 0
    %p38 = por %p36, %p37
    %p39 = scmp.ne.s32.totalorder %s25, %s26
    %p40 = scmp.eq.s32.totalorder %s18, 1
    %p41 = por %p39, %p40
    %p43 = scmp.ne.s32.totalorder %s26, %s42
    %p44 = scmp.eq.s32.totalorder %s18, 0
    %p45 = por %p43, %p44
    %s47 = sadd.s32 %s46, 1
    %p50 = scmp.eq.s32.totalorder %s12, 1
    %p51 = scmp.ne.s32.totalorder %s46, %s48
    %p52 = scmp.eq.s32.totalorder %s12, 0
    %p53 = por %p51, %p52
    %p54 = scmp.ne.s32.totalorder %s46, %s48
    %p55 = scmp.eq.s32.totalorder %s17, 1
    %p56 = por %p54, %p55
    %p57 = scmp.ne.s32.totalorder %s48, %s49
    %p58 = scmp.eq.s32.totalorder %s17, 0
    %p59 = por %p57, %p58
    %p60 = scmp.ne.s32.totalorder %s48, %s49
    %p61 = scmp.eq.s32.totalorder %s18, 1
    %p62 = por %p60, %p61
    %p64 = scmp.ne.s32.totalorder %s49, %s63
    %p65 = scmp.eq.s32.totalorder %s18, 0
    %p66 = por %p64, %p65
    %s68 = sadd.s32 %s67, 1
    %p71 = scmp.eq.s32.totalorder %s12, 1
    %p72 = scmp.ne.s32.totalorder %s67, %s69
    %p73 = scmp.eq.s32.totalorder %s12, 0
    %p74 = por %p72, %p73
    %p75 = scmp.ne.s32.totalorder %s67, %s69
    %p76 = scmp.eq.s32.totalorder %s17, 1
    %p77 = por %p75, %p76
    %p78 = scmp.ne.s32.totalorder %s69, %s70
    %p79 = scmp.eq.s32.totalorder %s17, 0
    %p80 = por %p78, %p79
    %p81 = scmp.ne.s32.totalorder %s69, %s70
    %p82 = scmp.eq.s32.totalorder %s18, 1
    %p83 = por %p81, %p82
    %p85 = scmp.ne.s32.totalorder %s70, %s84
    %p86 = scmp.eq.s32.totalorder %s18, 0
    %p87 = por %p85, %p86
    %s89 = sadd.s32 %s88, 1
    %p92 = scmp.eq.s32.totalorder %s12, 1
    %p93 = scmp.ne.s32.totalorder %s88, %s90
    %p94 = scmp.eq.s32.totalorder %s12, 0
    %p95 = por %p93, %p94
    %p96 = scmp.ne.s32.totalorder %s88, %s90
    %p97 = scmp.eq.s32.totalorder %s17, 1
    %p98 = por %p96, %p97
    %p99 = scmp.ne.s32.totalorder %s90, %s91
    %p100 = scmp.eq.s32.totalorder %s17, 0
    %p101 = por %p99, %p100
    %p102 = scmp.ne.s32.totalorder %s90, %s91
    %p103 = scmp.eq.s32.totalorder %s18, 1
    %p104 = por %p102, %p103
    %p106 = scmp.ne.s32.totalorder %s91, %s105
    %p107 = scmp.eq.s32.totalorder %s18, 0
    %p108 = por %p106, %p107
    %s110 = sadd.s32 %s109, 1
    %p113 = scmp.eq.s32.totalorder %s12, 1
    %p114 = scmp.ne.s32.totalorder %s109, %s111
    %p115 = scmp.eq.s32.totalorder %s12, 0
    %p116 = por %p114, %p115
    %p117 = scmp.ne.s32.totalorder %s109, %s111
    %p118 = scmp.eq.s32.totalorder %s17, 1
    %p119 = por %p117, %p118
    %p120 = scmp.ne.s32.totalorder %s111, %s112
    %p121 = scmp.eq.s32.totalorder %s17, 0
    %p122 = por %p120, %p121
    %p123 = scmp.ne.s32.totalorder %s111, %s112
    %p124 = scmp.eq.s32.totalorder %s18, 1
    %p125 = por %p123, %p124
    %p127 = scmp.ne.s32.totalorder %s112, %s126
    %p128 = scmp.eq.s32.totalorder %s18, 0
    %p129 = por %p127, %p128
    %s131 = sadd.s32 %s130, 1
    %p134 = scmp.eq.s32.totalorder %s12, 1
    %p135 = scmp.ne.s32.totalorder %s130, %s132
    %p136 = scmp.eq.s32.totalorder %s12, 0
    %p137 = por %p135, %p136
    %p138 = scmp.ne.s32.totalorder %s130, %s132
    %p139 = scmp.eq.s32.totalorder %s17, 1
    %p140 = por %p138, %p139
    %p141 = scmp.ne.s32.totalorder %s132, %s133
    %p142 = scmp.eq.s32.totalorder %s17, 0
    %p143 = por %p141, %p142
    %p144 = scmp.ne.s32.totalorder %s132, %s133
    %p145 = scmp.eq.s32.totalorder %s18, 1
    %p146 = por %p144, %p145
    %p148 = scmp.ne.s32.totalorder %s133, %s147
    %p149 = scmp.eq.s32.totalorder %s18, 0
    %p150 = por %p148, %p149
    %s151 = ssub.s32 %s12, %s19
    %p152 = scmp.eq.s32.totalorder %s151, 0
    %s154 = sadd.s32 %s153, 1
    %s155 = scalar_select %p152, %s153, %s154
    %p158 = pneg %p152
    %p159 = scmp.eq.s32.totalorder %s12, 1
    %p160 = por %p158, %p159
    %p161 = scmp.ne.s32.totalorder %s153, %s156
    %p162 = scmp.eq.s32.totalorder %s12, 0
    %p163 = por %p161, %p162
    %p164 = scmp.ne.s32.totalorder %s153, %s156
    %p165 = scmp.eq.s32.totalorder %s17, 1
    %p166 = por %p164, %p165
    %p167 = scmp.ne.s32.totalorder %s156, %s157
    %p168 = scmp.eq.s32.totalorder %s17, 0
    %p169 = por %p167, %p168
    %p170 = scmp.ne.s32.totalorder %s156, %s157
    %p171 = scmp.eq.s32.totalorder %s18, 1
    %p172 = por %p170, %p171
    %p174 = scmp.ne.s32.totalorder %s157, %s173
    %p175 = scmp.eq.s32.totalorder %s18, 0
    %p176 = por %p174, %p175
    %p177 = scmp.le.s32.totalorder 1, %s12
    %p178 = scmp.lt.s32.totalorder %s12, 3
    %p179 = pnand %p177, %p178
    %p180 = pneg %p179
    // Predicated region
    $region9: #{unet_vflow_forward.15} parent=5 // pred_check
      _
    $region10: #{unet_vflow_forward.15} parent=5 // pred_check_branch
      %182 = sbr.rel (%p179) target = $region12
    $region11: #{unet_vflow_forward.15} parent=5 // pred_region
      %s183 = ssub.s32 %s12, 1
      // Predicated region
      $region13: #{unet_vflow_forward.15} parent=11 // pred_check
        %p184 = pneg %p59
      $region14: #{unet_vflow_forward.15} parent=11 // pred_check_branch
        %186 = sbr.rel (%p184) target = $region16
      $region15: #{unet_vflow_forward.15} parent=11 // pred_region
        _
      $region16: #{unet_vflow_forward.15} parent=11 // pred_fallthru
        _
      // Predicated region
      $region17: #{unet_vflow_forward.15} parent=11 // pred_check
        %p187 = pneg %p80
      $region18: #{unet_vflow_forward.15} parent=11 // pred_check_branch
        %189 = sbr.rel (%p187) target = $region20
      $region19: #{unet_vflow_forward.15} parent=11 // pred_region
        _
      $region20: #{unet_vflow_forward.15} parent=11 // pred_fallthru
        _
      // Predicated region
      $region21: #{unet_vflow_forward.15} parent=11 // pred_check
        %p190 = pneg %p101
      $region22: #{unet_vflow_forward.15} parent=11 // pred_check_branch
        %192 = sbr.rel (%p190) target = $region24
      $region23: #{unet_vflow_forward.15} parent=11 // pred_region
        _
      $region24: #{unet_vflow_forward.15} parent=11 // pred_fallthru
        _
      // Predicated region
      $region25: #{unet_vflow_forward.15} parent=11 // pred_check
        %p193 = pneg %p122
      $region26: #{unet_vflow_forward.15} parent=11 // pred_check_branch
        %195 = sbr.rel (%p193) target = $region28
      $region27: #{unet_vflow_forward.15} parent=11 // pred_region
        _
      $region28: #{unet_vflow_forward.15} parent=11 // pred_fallthru
        _
      // Predicated region
      $region29: #{unet_vflow_forward.15} parent=11 // pred_check
        %p196 = pneg %p143
      $region30: #{unet_vflow_forward.15} parent=11 // pred_check_branch
        %198 = sbr.rel (%p196) target = $region32
      $region31: #{unet_vflow_forward.15} parent=11 // pred_region
        _
      $region32: #{unet_vflow_forward.15} parent=11 // pred_fallthru
        _
    $region12: #{unet_vflow_forward.15} parent=5 // pred_fallthru
      _
    %p199 = scmp.lt.s32.totalorder %s12, 2
    // Predicated region
    $region33: #{unet_vflow_forward.15} parent=5 // pred_check
      %p200 = pneg %p199
    $region34: #{unet_vflow_forward.15} parent=5 // pred_check_branch
      %202 = sbr.rel (%p200) target = $region36
    $region35: #{unet_vflow_forward.15} parent=5 // pred_region
      // Predicated region
      $region37: #{unet_vflow_forward.15} parent=35 // pred_check
        %p203 = pneg %p32
      $region38: #{unet_vflow_forward.15} parent=35 // pred_check_branch
        %205 = sbr.rel (%p203) target = $region40
      $region39: #{unet_vflow_forward.15} parent=35 // pred_region
        %p206 = scmp.lt.s32.totalorder %s12, 1
        %s207 = scalar_select %p206, %s12, 1
        %s208 = smul.addr %s207, 8
        %s209 = smul.addr %s208, 4
        %s210 = scalar_lea.vmem %s0, %s209
      $region40: #{unet_vflow_forward.15} parent=35 // pred_fallthru
        _
    $region36: #{unet_vflow_forward.15} parent=5 // pred_fallthru
      _
    %p211 = scmp.le.s32.totalorder 1, %s12
    %p212 = scmp.lt.s32.totalorder %s12, 3
    %p213 = pnand %p211, %p212
    %p214 = pneg %p213
    // Predicated region
    $region41: #{unet_vflow_forward.15} parent=5 // pred_check
      _
    $region42: #{unet_vflow_forward.15} parent=5 // pred_check_branch
      %216 = sbr.rel (%p213) target = $region44
    $region43: #{unet_vflow_forward.15} parent=5 // pred_region
      %s217 = ssub.s32 %s12, 1
      %p218 = scmp.lt.s32.totalorder %s17, 1
      %s219 = scalar_select %p218, %s17, 1
      %s220 = smul.addr %s219, 8
      %s221 = smul.addr %s220, 4
      %s222 = scalar_lea.vmem %s0, %s221
      %p223 = pneg %p38
      %p224 = pneg %p35
      %p225 = pneg %p59
      %p226 = pneg %p56
      %p227 = pneg %p80
      %p228 = pneg %p77
      %p229 = pneg %p101
      %p230 = pneg %p98
      %p231 = pneg %p122
      %p232 = pneg %p119
      %p233 = pneg %p143
      %p234 = pneg %p140
      %p235 = pneg %p169
      %p236 = pneg %p166
      %p237 = scmp.lt.s32.totalorder %s17, 1
      %s238 = scalar_select %p237, %s17, 1
      %s239 = smul.addr %s238, 4
      %s240 = smul.addr %s239, 4
      %s241 = scalar_lea.vmem %s6, %s240
      %p242 = scmp.lt.s32.totalorder %s17, 1
      %s243 = scalar_select %p242, %s17, 1
      %s244 = smul.addr %s243, 8
      %s245 = smul.addr %s244, 4
      %s246 = scalar_lea.vmem %s0, %s245
      %p247 = scmp.lt.s32.totalorder %s17, 1
      %s248 = scalar_select %p247, %s17, 1
      %s249 = smul.addr %s248, 4
      %s250 = smul.addr %s249, 4
      %s251 = scalar_lea.vmem %s6, %s250
      %v253 = vld [vmem:[%s246] sm:$0xf]
      %v254 = vld [vmem:[%s246 + $0x4] sm:$0xf]
      %v255 = vld [vmem:[%s246 + $0x8] sm:$0xf]
      %v256 = vld [vmem:[%s246 + $0xc] sm:$0xf]
      %s257 = scalar_lea.vmem %s246, 16
      %v258 = vld [vmem:[%s257] sm:$0xf]
      %v259 = vld [vmem:[%s257 + $0x4] sm:$0xf]
      %v260 = vld [vmem:[%s257 + $0x8] sm:$0xf]
      %v261 = vld [vmem:[%s257 + $0xc] sm:$0xf]
      %v266 = vunpack.c.l.b16 %v253
      %v267 = vunpack.c.l.b16 %v254
      %v268 = vunpack.c.l.b16 %v255
      %v269 = vunpack.c.l.b16 %v256
      %v270 = vpack.c.b16 %v267, %v266
      %v271 = vpack.c.b16 %v269, %v268
      %v276 = vunpack.c.l.b16 %v258
      %v277 = vunpack.c.l.b16 %v259
      %v278 = vunpack.c.l.b16 %v260
      %v279 = vunpack.c.l.b16 %v261
      %v280 = vpack.c.b16 %v277, %v276
      %v281 = vpack.c.b16 %v279, %v278
      %282 = vrot.lane.b32.xlu0 %v280, 4
      %v283 = vpop.permute.xlu0 %282
      %284 = vrot.lane.b32.xlu0 %v281, 4
      %v285 = vpop.permute.xlu0 %284
      %vm286 = vcmask 31744
      %v289 = vsel %vm286, %v270, %v283
      %v293 = vsel %vm286, %v271, %v285
      %v295 = vld [vmem:[%s1] sm:$0xf]
      %v296 = vld [vmem:[%s1 + $0x4] sm:$0xf]
      %v297 = vld [vmem:[%s1 + $0x8] sm:$0xf]
      %v298 = vld [vmem:[%s1 + $0xc] sm:$0xf]
      %v299 = vld [vmem:[%s2] sm:$0xff]
      %v300 = vld [vmem:[%s2 + $0x8] sm:$0xff]
      %v301 = vld [vmem:[%s2 + $0x10] sm:$0xff]
      %v302 = vld [vmem:[%s2 + $0x18] sm:$0xff]
      %304 = vset.pattern.permute.xlu0 0
      %305 = vperm.xlu0 %304, %v299
      %v306 = vpop.permute.xlu0 %305
      %309 = vset.pattern.permute.xlu0 0
      %310 = vperm.xlu0 %309, %v300
      %v311 = vpop.permute.xlu0 %310
      %314 = vset.pattern.permute.xlu0 0
      %315 = vperm.xlu0 %314, %v301
      %v316 = vpop.permute.xlu0 %315
      %319 = vset.pattern.permute.xlu0 0
      %320 = vperm.xlu0 %319, %v302
      %v321 = vpop.permute.xlu0 %320
      %v327 = vunpack.c.l.b16 %v295
      %v328 = vunpack.c.l.b16 %v296
      %v329 = vunpack.c.l.b16 %v297
      %v330 = vunpack.c.l.b16 %v298
      %v331 = vpack.c.b16 %v328, %v327
      %v332 = vpack.c.b16 %v330, %v329
      %vm333 = vcmask 261120
      %v335 = vsel %vm333, %v331, 0
      %v338 = vsel %vm333, %v332, 0
      %340 = vmatpush.bf16.msra.mxu0 0
      %341 = vmatpush.bf16.msra.mxu0 0
      %342 = vmatpush.bf16.msra.mxu0 0
      %343 = vmatpush.bf16.msra.mxu0 0
      %344 = vmatpush.bf16.msra.mxu0 0
      %345 = vmatpush.bf16.msra.mxu0 0
      %346 = vmatpush.bf16.msra.mxu0 %v293
      %347 = vmatpush.bf16.msra.mxu0 %v289
      %348 = vmatmul.bf16.gmra.mxu0 %v335
      %v349 = vpop.f32.mrf.mxu0
      %v350 = vadd.f32 %v306, %v349
      %v351 = vpop.f32.mrf.mxu0
      %v352 = vadd.f32 %v311, %v351
      %353 = vmatmul.bf16.gmra.mxu0 %v338
      %v354 = vpop.f32.mrf.mxu0
      %v355 = vadd.f32 %v316, %v354
      %v356 = vpop.f32.mrf.mxu0
      %v357 = vadd.f32 %v321, %v356
      %358 = vdwg.mxu0
      %v360 = vsel %vm333, 0.03125, 0
      %362 = vmatpush.msra.mxu0 0.0
      %363 = vmatpush.msra.mxu0 0.0
      %364 = vmatpush.msra.mxu0 0.0
      %365 = vmatpush.msra.mxu0 0.0
      %366 = vmatpush.msra.mxu0 0.0
      %367 = vmatpush.msra.mxu0 0.0
      %368 = vmatpush.msra.mxu0 0.0
      %369 = vmatpush.msra.mxu0 0.0
      %370 = vmatpush.msra.mxu0 0.0
      %371 = vmatpush.msra.mxu0 0.0
      %372 = vmatpush.msra.mxu0 0.0
      %373 = vmatpush.msra.mxu0 0.0
      %374 = vmatpush.msra.mxu0 %v357
      %375 = vmatpush.msra.mxu0 %v355
      %376 = vmatpush.msra.mxu0 %v352
      %377 = vmatpush.msra.mxu0 %v350
      %378 = vmatmul.f32.gmra.mxu0 %v360
      %v379 = vpop.f32.mrf.mxu0
      %v380 = vadd.f32 0.0, %v379
      %381 = vdwg.mxu0
      %v382 = vperm.slane %v380, 0
      %v383 = vsub.f32 %v350, %v382
      %v384 = vsub.f32 %v352, %v382
      %v385 = vsub.f32 %v355, %v382
      %v386 = vsub.f32 %v357, %v382
      %v387 = vmul.f32 %v383, %v383
      %v388 = vmul.f32 %v384, %v384
      %v389 = vmul.f32 %v385, %v385
      %v390 = vmul.f32 %v386, %v386
      %391 = vmatpush.msra.mxu0 0.0
      %392 = vmatpush.msra.mxu0 0.0
      %393 = vmatpush.msra.mxu0 0.0
      %394 = vmatpush.msra.mxu0 0.0
      %395 = vmatpush.msra.mxu0 0.0
      %396 = vmatpush.msra.mxu0 0.0
      %397 = vmatpush.msra.mxu0 0.0
      %398 = vmatpush.msra.mxu0 0.0
      %399 = vmatpush.msra.mxu0 0.0
      %400 = vmatpush.msra.mxu0 0.0
      %401 = vmatpush.msra.mxu0 0.0
      %402 = vmatpush.msra.mxu0 0.0
      %403 = vmatpush.msra.mxu0 %v390
      %404 = vmatpush.msra.mxu0 %v389
      %405 = vmatpush.msra.mxu0 %v388
      %406 = vmatpush.msra.mxu0 %v387
      %407 = vmatmul.f32.gmra.mxu0 %v360
      %v408 = vpop.f32.mrf.mxu0
      %v409 = vadd.f32 1e-05, %v408
      %410 = vdwg.mxu0
      %v411 = vrsqrt.pop %v409
      %v412 = vmul.f32 %v411, %v409
      %v413 = vmul.f32 %v412, %v411
      %v414 = vmul.f32 0.5, %v413
      %v415 = vsub.f32 1.5, %v414
      %v416 = vmul.f32 %v411, %v415
      %vm417 = vweird.f32 %v409
      %vm418 = vweird.f32 %v411
      %vm419 = vmor %vm417, %vm418
      %v420 = vsel %vm419, %v411, %v416
      %v421 = vperm.slane %v420, 0
      %v422 = vmul.f32 %v383, %v421
      %v423 = vmul.f32 %v384, %v421
      %v424 = vmul.f32 %v385, %v421
      %v425 = vmul.f32 %v386, %v421
      %v426 = vld [vmem:[%s3] sm:$0xff]
      %v427 = vld [vmem:[%s3 + $0x8] sm:$0xff]
      %v428 = vld [vmem:[%s3 + $0x10] sm:$0xff]
      %v429 = vld [vmem:[%s3 + $0x18] sm:$0xff]
      %431 = vset.pattern.permute.xlu0 0
      %432 = vperm.xlu0 %431, %v426
      %v433 = vpop.permute.xlu0 %432
      %436 = vset.pattern.permute.xlu0 0
      %437 = vperm.xlu0 %436, %v427
      %v438 = vpop.permute.xlu0 %437
      %441 = vset.pattern.permute.xlu0 0
      %442 = vperm.xlu0 %441, %v428
      %v443 = vpop.permute.xlu0 %442
      %446 = vset.pattern.permute.xlu0 0
      %447 = vperm.xlu0 %446, %v429
      %v448 = vpop.permute.xlu0 %447
      %v450 = vmul.f32 %v422, %v433
      %v451 = vmul.f32 %v423, %v438
      %v452 = vmul.f32 %v424, %v443
      %v453 = vmul.f32 %v425, %v448
      %v454 = vld [vmem:[%s4] sm:$0xff]
      %v455 = vld [vmem:[%s4 + $0x8] sm:$0xff]
      %v456 = vld [vmem:[%s4 + $0x10] sm:$0xff]
      %v457 = vld [vmem:[%s4 + $0x18] sm:$0xff]
      %459 = vset.pattern.permute.xlu0 0
      %460 = vperm.xlu0 %459, %v454
      %v461 = vpop.permute.xlu0 %460
      %464 = vset.pattern.permute.xlu0 0
      %465 = vperm.xlu0 %464, %v455
      %v466 = vpop.permute.xlu0 %465
      %469 = vset.pattern.permute.xlu0 0
      %470 = vperm.xlu0 %469, %v456
      %v471 = vpop.permute.xlu0 %470
      %474 = vset.pattern.permute.xlu0 0
      %475 = vperm.xlu0 %474, %v457
      %v476 = vpop.permute.xlu0 %475
      %v478 = vadd.f32 %v450, %v461
      %v479 = vadd.f32 %v451, %v466
      %v480 = vadd.f32 %v452, %v471
      %v481 = vadd.f32 %v453, %v476
      %v482 = vmul.f32 %v478, 0.5
      %v483 = vmul.f32 %v479, 0.5
      %v484 = vmul.f32 %v480, 0.5
      %v485 = vmul.f32 %v481, 0.5
      %v486 = vmul.f32 %v478, 0.044715
      %v487 = vmul.f32 %v479, 0.044715
      %v488 = vmul.f32 %v480, 0.044715
      %v489 = vmul.f32 %v481, 0.044715
      %v490 = vmul.f32 %v486, %v478
      %v491 = vmul.f32 %v487, %v479
      %v492 = vmul.f32 %v488, %v480
      %v493 = vmul.f32 %v489, %v481
      %v494 = vmul.f32 %v490, %v478
      %v495 = vmul.f32 %v491, %v479
      %v496 = vmul.f32 %v492, %v480
      %v497 = vmul.f32 %v493, %v481
      %v498 = vadd.f32 %v478, %v494
      %v499 = vadd.f32 %v479, %v495
      %v500 = vadd.f32 %v480, %v496
      %v501 = vadd.f32 %v481, %v497
      %v502 = vmul.f32 %v498, 0.7978846
      %v503 = vmul.f32 %v499, 0.7978846
      %v504 = vmul.f32 %v500, 0.7978846
      %v505 = vmul.f32 %v501, 0.7978846
      %v506 = vtanh.pop %v502
      %v507 = vtanh.pop %v503
      %v508 = vtanh.pop %v504
      %v509 = vtanh.pop %v505
      %v510 = vadd.f32 %v506, 1.0
      %v511 = vadd.f32 %v507, 1.0
      %v512 = vadd.f32 %v508, 1.0
      %v513 = vadd.f32 %v509, 1.0
      %v514 = vmul.f32 %v482, %v510
      %v515 = vmul.f32 %v483, %v511
      %v516 = vmul.f32 %v484, %v512
      %v517 = vmul.f32 %v485, %v513
      %v518 = vld [vmem:[%s5] sm:$0x1]
      %v520 = vsel %vm333, %v518, 0
      %522 = vmatpush.msra.mxu0 0.0
      %523 = vmatpush.msra.mxu0 0.0
      %524 = vmatpush.msra.mxu0 0.0
      %525 = vmatpush.msra.mxu0 0.0
      %526 = vmatpush.msra.mxu0 0.0
      %527 = vmatpush.msra.mxu0 0.0
      %528 = vmatpush.msra.mxu0 0.0
      %529 = vmatpush.msra.mxu0 0.0
      %530 = vmatpush.msra.mxu0 0.0
      %531 = vmatpush.msra.mxu0 0.0
      %532 = vmatpush.msra.mxu0 0.0
      %533 = vmatpush.msra.mxu0 0.0
      %534 = vmatpush.msra.mxu0 %v517
      %535 = vmatpush.msra.mxu0 %v516
      %536 = vmatpush.msra.mxu0 %v515
      %537 = vmatpush.msra.mxu0 %v514
      %538 = vmatmul.f32.gmra.mxu0 %v520
      %v539 = vpop.f32.mrf.mxu0
      %v540 = vadd.f32 0.0, %v539
      %541 = vdwg.mxu0
      %543 = vrot.lane.b32.xlu0 %v540, 124
      %v544 = vpop.permute.xlu0 %543
      %v546 = vmax.f32 %v540, %v544
      %v547 = vsub.f32 %v540, %v546
      %v548 = vmul.f32 %v547, 1.442695
      %v549 = vpow.pop %v548
      %551 = vrot.lane.b32.xlu0 %v546, 4
      %v552 = vpop.permute.xlu0 %551
      %v554 = vsub.f32 %v540, %v552
      %v555 = vmul.f32 %v554, 1.442695
      %v556 = vpow.pop %v555
      %558 = vrot.lane.b32.xlu0 %v556, 124
      %v559 = vpop.permute.xlu0 %558
      %v561 = vadd.f32 %v549, %v559
      %v562 = vrcp.pop %v561
      %v563 = vmul.f32 %v561, %v562
      %v564 = vsub.f32 1.0, %v563
      %v565 = vmul.f32 %v562, %v564
      %v566 = vadd.f32 %v562, %v565
      %vm567 = vweird.f32 %v561
      %vm568 = vweird.f32 %v562
      %vm569 = vmor %vm567, %vm568
      %v570 = vsel %vm569, %v562, %v566
      %v571 = vand.u32 2147483647, %v561
      %vm572 = vcmp.eq.f32.partialorder %v571, 8.507059e+37
      %v573 = vand.u32 %v561, 2147483648
      %v574 = vor.u32 1.1754944e-38, %v573
      %v575 = vsel %vm572, %v574, %v570
      %v576 = vmul.f32 1.0, %v575
      %v577 = vmul.f32 %v549, %v576
      %v578 = vunpack.c.l.bf16 %v253
      %v579 = vunpack.c.l.bf16 %v254
      %v580 = vunpack.c.l.bf16 %v255
      %v581 = vunpack.c.l.bf16 %v256
      %v582 = vperm.slane %v577, 0
      %v583 = vmul.f32 %v582, %v578
      %v584 = vmul.f32 %v582, %v579
      %v585 = vmul.f32 %v582, %v580
      %v586 = vmul.f32 %v582, %v581
      %588 = vrot.lane.b32.xlu0 %v576, 4
      %v589 = vpop.permute.xlu0 %588
      %v591 = vmul.f32 %v556, %v589
      %v592 = vunpack.c.l.bf16 %v258
      %v593 = vunpack.c.l.bf16 %v259
      %v594 = vunpack.c.l.bf16 %v260
      %v595 = vunpack.c.l.bf16 %v261
      %v596 = vperm.slane %v591, 0
      %601 = vrot.lane.b32.xlu0 %v592, 4
      %v602 = vpop.permute.xlu0 %601
      %603 = vrot.lane.b32.xlu0 %v593, 4
      %v604 = vpop.permute.xlu0 %603
      %605 = vrot.lane.b32.xlu0 %v594, 4
      %v606 = vpop.permute.xlu0 %605
      %607 = vrot.lane.b32.xlu0 %v595, 4
      %v608 = vpop.permute.xlu0 %607
      %v613 = vmul.f32 %v596, %v602
      %v614 = vmul.f32 %v596, %v604
      %v615 = vmul.f32 %v596, %v606
      %v616 = vmul.f32 %v596, %v608
      %621 = vrot.lane.b32.xlu0 %v613, 124
      %v622 = vpop.permute.xlu0 %621
      %623 = vrot.lane.b32.xlu0 %v614, 124
      %v624 = vpop.permute.xlu0 %623
      %625 = vrot.lane.b32.xlu0 %v615, 124
      %v626 = vpop.permute.xlu0 %625
      %627 = vrot.lane.b32.xlu0 %v616, 124
      %v628 = vpop.permute.xlu0 %627
      %v633 = vadd.f32 %v583, %v622
      %v634 = vadd.f32 %v584, %v624
      %v635 = vadd.f32 %v585, %v626
      %v636 = vadd.f32 %v586, %v628
      %v637 = vpack.c.bf16 %v633, %v633
      %v638 = vpack.c.bf16 %v634, %v634
      %v639 = vpack.c.bf16 %v635, %v635
      %v640 = vpack.c.bf16 %v636, %v636
      %vm641 = vcmask 27648
      %642 = vst.msk [vmem:[%s251] sm:$0xf] %vm641, %v637
      %643 = vst.msk [vmem:[%s251 + $0x4] sm:$0xf] %vm641, %v638
      %644 = vst.msk [vmem:[%s251 + $0x8] sm:$0xf] %vm641, %v639
      %645 = vst.msk [vmem:[%s251 + $0xc] sm:$0xf] %vm641, %v640
      %p646 = scmp.lt.s32.totalorder %s17, 1
      %s647 = scalar_select %p646, %s17, 1
      %s648 = smul.addr %s647, 4
      %s649 = smul.addr %s648, 4
      %s650 = scalar_lea.vmem %s6, %s649
      // Predicated region
      $region45: #{unet_vflow_forward.15} parent=43 // pred_check
        %p651 = pneg %p166
      $region46: #{unet_vflow_forward.15} parent=43 // pred_check_branch
        %653 = sbr.rel (%p651) target = $region48
      $region47: #{unet_vflow_forward.15} parent=43 // pred_region
        _
      $region48: #{unet_vflow_forward.15} parent=43 // pred_fallthru
        _
    $region44: #{unet_vflow_forward.15} parent=5 // pred_fallthru
      _
    %p654 = scmp.le.s32.totalorder 2, %s12
    // Predicated region
    $region49: #{unet_vflow_forward.15} parent=5 // pred_check
      %p655 = pneg %p654
    $region50: #{unet_vflow_forward.15} parent=5 // pred_check_branch
      %657 = sbr.rel (%p655) target = $region52
    $region51: #{unet_vflow_forward.15} parent=5 // pred_region
      %s658 = ssub.s32 %s12, 2
      // Predicated region
      $region53: #{unet_vflow_forward.15} parent=51 // pred_check
        %p659 = pneg %p172
      $region54: #{unet_vflow_forward.15} parent=51 // pred_check_branch
        %661 = sbr.rel (%p659) target = $region56
      $region55: #{unet_vflow_forward.15} parent=51 // pred_region
        %p662 = scmp.lt.s32.totalorder %s18, 1
        %s663 = scalar_select %p662, %s18, 1
        %s664 = smul.addr %s663, 4
        %s665 = smul.addr %s664, 4
        %s666 = scalar_lea.vmem %s6, %s665
      $region56: #{unet_vflow_forward.15} parent=51 // pred_fallthru
        _
    $region52: #{unet_vflow_forward.15} parent=5 // pred_fallthru
      _
  $region6: #{unet_vflow_forward.15} parent=0 // loop_footer
    %s16 = sadd.s32 1, %s12
  $region7: #{unet_vflow_forward.15} parent=0 // loop_footer_branch
    %11 = sbr.rel target = $region3
  $region8: #{unet_vflow_forward.15} parent=0 // loop_exit
    _

// kernel: unet_vflow_forward.14
$region0: #{unet_vflow_forward.14}
  #allocation0 [shape = 'u32[]', space=smem, size = 0x4, offset = 0x4, fixed_abs, tag = 'smem constant byte address 0x4 - core index']
  #allocation1 [shape = 'u32[72,128]{1,0:T(1,128)}', space=vmem, size = 0x9000, scoped, tag = 'internal scratch']
  %s0 = inlined_call_operand.vmem [shape: bf16[2,2,16,16], index: 0, kind: input, shape index: {}]
  %s1 = inlined_call_operand.vmem [shape: bf16[16,16], index: 1, kind: input, shape index: {}]
  %s2 = inlined_call_operand.vmem [shape: f32[16,1], index: 2, kind: input, shape index: {}]
  %s3 = inlined_call_operand.vmem [shape: f32[16,1], index: 3, kind: input, shape index: {}]
  %s4 = inlined_call_operand.vmem [shape: f32[16,1], index: 4, kind: input, shape index: {}]
  %s5 = inlined_call_operand.vmem [shape: f32[1,16], index: 5, kind: input, shape index: {}]
  %s6 = inlined_call_operand.vmem [shape: bf16[2,16,16], index: 6, kind: output, shape index: {}]
  %s7 = sld [smem:[#allocation0]]
  $region57: #{unet_vflow_forward.14} parent=0
    _
  %s9 = ssub.s32 1, %s7
  %s10 = scalar_select 0, %s9, %s7
  loop: start=0, step=1, limit=4
  $region2: #{unet_vflow_forward.14} parent=0 // loop_pre_header
    _
  $region3: #{unet_vflow_forward.14} parent=0 // loop_header
    %s12 = sphi 0, %s16
    %p13 = scmp.ge.s32.totalorder %s12, 4
    %s22 = sphi 0, %s24
    %s25 = sphi 0, %s22
    %s26 = sphi 0, %s25
    %s42 = sphi 0, %s26
    %s46 = sphi 0, %s46
    %s48 = sphi 0, %s46
    %s49 = sphi 0, %s48
    %s63 = sphi 0, %s49
    %s67 = sphi 0, %s67
    %s69 = sphi 0, %s67
    %s70 = sphi 0, %s69
    %s84 = sphi 0, %s70
    %s88 = sphi 0, %s88
    %s90 = sphi 0, %s88
    %s91 = sphi 0, %s90
    %s105 = sphi 0, %s91
    %s109 = sphi 0, %s109
    %s111 = sphi 0, %s109
    %s112 = sphi 0, %s111
    %s126 = sphi 0, %s112
    %s130 = sphi 0, %s130
    %s132 = sphi 0, %s130
    %s133 = sphi 0, %s132
    %s147 = sphi 0, %s133
    %s153 = sphi 0, %s155
    %s156 = sphi 0, %s153
    %s157 = sphi 0, %s156
    %s173 = sphi 0, %s157
  $region4: #{unet_vflow_forward.14} parent=0 // loop_header_branch
    %15 = sbr.rel (%p13) target = $region8
  $region5: #{unet_vflow_forward.14} parent=0 // loop_body
    %s17 = ssub.s32 %s12, 1
    %s18 = ssub.s32 %s12, 2
    %s19 = sadd.s32 %s12, 1
    %s20 = ssub.s32 %s12, %s19
    %p21 = scmp.eq.s32.totalorder %s20, 0
    %s23 = sadd.s32 %s22, 1
    %s24 = scalar_select %p21, %s22, %s23
    %p27 = pneg %p21
    %p28 = scmp.eq.s32.totalorder %s12, 1
    %p29 = por %p27, %p28
    %p30 = scmp.ne.s32.totalorder %s22, %s25
    %p31 = scmp.eq.s32.totalorder %s12, 0
    %p32 = por %p30, %p31
    %p33 = scmp.ne.s32.totalorder %s22, %s25
    %p34 = scmp.eq.s32.totalorder %s17, 1
    %p35 = por %p33, %p34
    %p36 = scmp.ne.s32.totalorder %s25, %s26
    %p37 = scmp.eq.s32.totalorder %s17, 0
    %p38 = por %p36, %p37
    %p39 = scmp.ne.s32.totalorder %s25, %s26
    %p40 = scmp.eq.s32.totalorder %s18, 1
    %p41 = por %p39, %p40
    %p43 = scmp.ne.s32.totalorder %s26, %s42
    %p44 = scmp.eq.s32.totalorder %s18, 0
    %p45 = por %p43, %p44
    %s47 = sadd.s32 %s46, 1
    %p50 = scmp.eq.s32.totalorder %s12, 1
    %p51 = scmp.ne.s32.totalorder %s46, %s48
    %p52 = scmp.eq.s32.totalorder %s12, 0
    %p53 = por %p51, %p52
    %p54 = scmp.ne.s32.totalorder %s46, %s48
    %p55 = scmp.eq.s32.totalorder %s17, 1
    %p56 = por %p54, %p55
    %p57 = scmp.ne.s32.totalorder %s48, %s49
    %p58 = scmp.eq.s32.totalorder %s17, 0
    %p59 = por %p57, %p58
    %p60 = scmp.ne.s32.totalorder %s48, %s49
    %p61 = scmp.eq.s32.totalorder %s18, 1
    %p62 = por %p60, %p61
    %p64 = scmp.ne.s32.totalorder %s49, %s63
    %p65 = scmp.eq.s32.totalorder %s18, 0
    %p66 = por %p64, %p65
    %s68 = sadd.s32 %s67, 1
    %p71 = scmp.eq.s32.totalorder %s12, 1
    %p72 = scmp.ne.s32.totalorder %s67, %s69
    %p73 = scmp.eq.s32.totalorder %s12, 0
    %p74 = por %p72, %p73
    %p75 = scmp.ne.s32.totalorder %s67, %s69
    %p76 = scmp.eq.s32.totalorder %s17, 1
    %p77 = por %p75, %p76
    %p78 = scmp.ne.s32.totalorder %s69, %s70
    %p79 = scmp.eq.s32.totalorder %s17, 0
    %p80 = por %p78, %p79
    %p81 = scmp.ne.s32.totalorder %s69, %s70
    %p82 = scmp.eq.s32.totalorder %s18, 1
    %p83 = por %p81, %p82
    %p85 = scmp.ne.s32.totalorder %s70, %s84
    %p86 = scmp.eq.s32.totalorder %s18, 0
    %p87 = por %p85, %p86
    %s89 = sadd.s32 %s88, 1
    %p92 = scmp.eq.s32.totalorder %s12, 1
    %p93 = scmp.ne.s32.totalorder %s88, %s90
    %p94 = scmp.eq.s32.totalorder %s12, 0
    %p95 = por %p93, %p94
    %p96 = scmp.ne.s32.totalorder %s88, %s90
    %p97 = scmp.eq.s32.totalorder %s17, 1
    %p98 = por %p96, %p97
    %p99 = scmp.ne.s32.totalorder %s90, %s91
    %p100 = scmp.eq.s32.totalorder %s17, 0
    %p101 = por %p99, %p100
    %p102 = scmp.ne.s32.totalorder %s90, %s91
    %p103 = scmp.eq.s32.totalorder %s18, 1
    %p104 = por %p102, %p103
    %p106 = scmp.ne.s32.totalorder %s91, %s105
    %p107 = scmp.eq.s32.totalorder %s18, 0
    %p108 = por %p106, %p107
    %s110 = sadd.s32 %s109, 1
    %p113 = scmp.eq.s32.totalorder %s12, 1
    %p114 = scmp.ne.s32.totalorder %s109, %s111
    %p115 = scmp.eq.s32.totalorder %s12, 0
    %p116 = por %p114, %p115
    %p117 = scmp.ne.s32.totalorder %s109, %s111
    %p118 = scmp.eq.s32.totalorder %s17, 1
    %p119 = por %p117, %p118
    %p120 = scmp.ne.s32.totalorder %s111, %s112
    %p121 = scmp.eq.s32.totalorder %s17, 0
    %p122 = por %p120, %p121
    %p123 = scmp.ne.s32.totalorder %s111, %s112
    %p124 = scmp.eq.s32.totalorder %s18, 1
    %p125 = por %p123, %p124
    %p127 = scmp.ne.s32.totalorder %s112, %s126
    %p128 = scmp.eq.s32.totalorder %s18, 0
    %p129 = por %p127, %p128
    %s131 = sadd.s32 %s130, 1
    %p134 = scmp.eq.s32.totalorder %s12, 1
    %p135 = scmp.ne.s32.totalorder %s130, %s132
    %p136 = scmp.eq.s32.totalorder %s12, 0
    %p137 = por %p135, %p136
    %p138 = scmp.ne.s32.totalorder %s130, %s132
    %p139 = scmp.eq.s32.totalorder %s17, 1
    %p140 = por %p138, %p139
    %p141 = scmp.ne.s32.totalorder %s132, %s133
    %p142 = scmp.eq.s32.totalorder %s17, 0
    %p143 = por %p141, %p142
    %p144 = scmp.ne.s32.totalorder %s132, %s133
    %p145 = scmp.eq.s32.totalorder %s18, 1
    %p146 = por %p144, %p145
    %p148 = scmp.ne.s32.totalorder %s133, %s147
    %p149 = scmp.eq.s32.totalorder %s18, 0
    %p150 = por %p148, %p149
    %s151 = ssub.s32 %s12, %s19
    %p152 = scmp.eq.s32.totalorder %s151, 0
    %s154 = sadd.s32 %s153, 1
    %s155 = scalar_select %p152, %s153, %s154
    %p158 = pneg %p152
    %p159 = scmp.eq.s32.totalorder %s12, 1
    %p160 = por %p158, %p159
    %p161 = scmp.ne.s32.totalorder %s153, %s156
    %p162 = scmp.eq.s32.totalorder %s12, 0
    %p163 = por %p161, %p162
    %p164 = scmp.ne.s32.totalorder %s153, %s156
    %p165 = scmp.eq.s32.totalorder %s17, 1
    %p166 = por %p164, %p165
    %p167 = scmp.ne.s32.totalorder %s156, %s157
    %p168 = scmp.eq.s32.totalorder %s17, 0
    %p169 = por %p167, %p168
    %p170 = scmp.ne.s32.totalorder %s156, %s157
    %p171 = scmp.eq.s32.totalorder %s18, 1
    %p172 = por %p170, %p171
    %p174 = scmp.ne.s32.totalorder %s157, %s173
    %p175 = scmp.eq.s32.totalorder %s18, 0
    %p176 = por %p174, %p175
    %p177 = scmp.le.s32.totalorder 1, %s12
    %p178 = scmp.lt.s32.totalorder %s12, 3
    %p179 = pnand %p177, %p178
    %p180 = pneg %p179
    // Predicated region
    $region9: #{unet_vflow_forward.14} parent=5 // pred_check
      _
    $region10: #{unet_vflow_forward.14} parent=5 // pred_check_branch
      %182 = sbr.rel (%p179) target = $region12
    $region11: #{unet_vflow_forward.14} parent=5 // pred_region
      %s183 = ssub.s32 %s12, 1
      // Predicated region
      $region13: #{unet_vflow_forward.14} parent=11 // pred_check
        %p184 = pneg %p59
      $region14: #{unet_vflow_forward.14} parent=11 // pred_check_branch
        %186 = sbr.rel (%p184) target = $region16
      $region15: #{unet_vflow_forward.14} parent=11 // pred_region
        _
      $region16: #{unet_vflow_forward.14} parent=11 // pred_fallthru
        _
      // Predicated region
      $region17: #{unet_vflow_forward.14} parent=11 // pred_check
        %p187 = pneg %p80
      $region18: #{unet_vflow_forward.14} parent=11 // pred_check_branch
        %189 = sbr.rel (%p187) target = $region20
      $region19: #{unet_vflow_forward.14} parent=11 // pred_region
        _
      $region20: #{unet_vflow_forward.14} parent=11 // pred_fallthru
        _
      // Predicated region
      $region21: #{unet_vflow_forward.14} parent=11 // pred_check
        %p190 = pneg %p101
      $region22: #{unet_vflow_forward.14} parent=11 // pred_check_branch
        %192 = sbr.rel (%p190) target = $region24
      $region23: #{unet_vflow_forward.14} parent=11 // pred_region
        _
      $region24: #{unet_vflow_forward.14} parent=11 // pred_fallthru
        _
      // Predicated region
      $region25: #{unet_vflow_forward.14} parent=11 // pred_check
        %p193 = pneg %p122
      $region26: #{unet_vflow_forward.14} parent=11 // pred_check_branch
        %195 = sbr.rel (%p193) target = $region28
      $region27: #{unet_vflow_forward.14} parent=11 // pred_region
        _
      $region28: #{unet_vflow_forward.14} parent=11 // pred_fallthru
        _
      // Predicated region
      $region29: #{unet_vflow_forward.14} parent=11 // pred_check
        %p196 = pneg %p143
      $region30: #{unet_vflow_forward.14} parent=11 // pred_check_branch
        %198 = sbr.rel (%p196) target = $region32
      $region31: #{unet_vflow_forward.14} parent=11 // pred_region
        _
      $region32: #{unet_vflow_forward.14} parent=11 // pred_fallthru
        _
    $region12: #{unet_vflow_forward.14} parent=5 // pred_fallthru
      _
    %p199 = scmp.lt.s32.totalorder %s12, 2
    // Predicated region
    $region33: #{unet_vflow_forward.14} parent=5 // pred_check
      %p200 = pneg %p199
    $region34: #{unet_vflow_forward.14} parent=5 // pred_check_branch
      %202 = sbr.rel (%p200) target = $region36
    $region35: #{unet_vflow_forward.14} parent=5 // pred_region
      // Predicated region
      $region37: #{unet_vflow_forward.14} parent=35 // pred_check
        %p203 = pneg %p32
      $region38: #{unet_vflow_forward.14} parent=35 // pred_check_branch
        %205 = sbr.rel (%p203) target = $region40
      $region39: #{unet_vflow_forward.14} parent=35 // pred_region
        %p206 = scmp.lt.s32.totalorder %s12, 1
        %s207 = scalar_select %p206, %s12, 1
        %s208 = smul.addr %s207, 4
        %s209 = smul.addr %s208, 4
        %s210 = scalar_lea.vmem %s0, %s209
      $region40: #{unet_vflow_forward.14} parent=35 // pred_fallthru
        _
    $region36: #{unet_vflow_forward.14} parent=5 // pred_fallthru
      _
    %p211 = scmp.le.s32.totalorder 1, %s12
    %p212 = scmp.lt.s32.totalorder %s12, 3
    %p213 = pnand %p211, %p212
    %p214 = pneg %p213
    // Predicated region
    $region41: #{unet_vflow_forward.14} parent=5 // pred_check
      _
    $region42: #{unet_vflow_forward.14} parent=5 // pred_check_branch
      %216 = sbr.rel (%p213) target = $region44
    $region43: #{unet_vflow_forward.14} parent=5 // pred_region
      %s217 = ssub.s32 %s12, 1
      %p218 = scmp.lt.s32.totalorder %s17, 1
      %s219 = scalar_select %p218, %s17, 1
      %s220 = smul.addr %s219, 4
      %s221 = smul.addr %s220, 4
      %s222 = scalar_lea.vmem %s0, %s221
      %p223 = pneg %p38
      %p224 = pneg %p35
      %p225 = pneg %p59
      %p226 = pneg %p56
      %p227 = pneg %p80
      %p228 = pneg %p77
      %p229 = pneg %p101
      %p230 = pneg %p98
      %p231 = pneg %p122
      %p232 = pneg %p119
      %p233 = pneg %p143
      %p234 = pneg %p140
      %p235 = pneg %p169
      %p236 = pneg %p166
      %p237 = scmp.lt.s32.totalorder %s17, 1
      %s238 = scalar_select %p237, %s17, 1
      %s239 = smul.addr %s238, 2
      %s240 = smul.addr %s239, 4
      %s241 = scalar_lea.vmem %s6, %s240
      %p242 = scmp.lt.s32.totalorder %s17, 1
      %s243 = scalar_select %p242, %s17, 1
      %s244 = smul.addr %s243, 4
      %s245 = smul.addr %s244, 4
      %s246 = scalar_lea.vmem %s0, %s245
      %p247 = scmp.lt.s32.totalorder %s17, 1
      %s248 = scalar_select %p247, %s17, 1
      %s249 = smul.addr %s248, 2
      %s250 = smul.addr %s249, 4
      %s251 = scalar_lea.vmem %s6, %s250
      %v253 = vld [vmem:[%s246] sm:$0xf]
      %v254 = vld [vmem:[%s246 + $0x4] sm:$0xf]
      %s255 = scalar_lea.vmem %s246, 8
      %v256 = vld [vmem:[%s255] sm:$0xf]
      %v257 = vld [vmem:[%s255 + $0x4] sm:$0xf]
      %v260 = vunpack.c.l.b16 %v253
      %v261 = vunpack.c.l.b16 %v254
      %v262 = vpack.c.b16 %v261, %v260
      %v265 = vunpack.c.l.b16 %v256
      %v266 = vunpack.c.l.b16 %v257
      %v267 = vpack.c.b16 %v266, %v265
      %268 = vrot.lane.b32.xlu0 %v267, 16
      %v269 = vpop.permute.xlu0 %268
      %vm270 = vcmask 130048
      %v273 = vsel %vm270, %v262, %v269
      %v275 = vld [vmem:[%s1] sm:$0xf]
      %v276 = vld [vmem:[%s1 + $0x4] sm:$0xf]
      %v277 = vld [vmem:[%s2] sm:$0xff]
      %v278 = vld [vmem:[%s2 + $0x8] sm:$0xff]
      %280 = vset.pattern.permute.xlu0 0
      %281 = vperm.xlu0 %280, %v277
      %v282 = vpop.permute.xlu0 %281
      %285 = vset.pattern.permute.xlu0 0
      %286 = vperm.xlu0 %285, %v278
      %v287 = vpop.permute.xlu0 %286
      %v291 = vunpack.c.l.b16 %v275
      %v292 = vunpack.c.l.b16 %v276
      %v293 = vpack.c.b16 %v292, %v291
      %v295 = vsel %vm270, %v293, 0
      %297 = vmatpush.bf16.msra.mxu0 0
      %298 = vmatpush.bf16.msra.mxu0 0
      %299 = vmatpush.bf16.msra.mxu0 0
      %300 = vmatpush.bf16.msra.mxu0 0
      %301 = vmatpush.bf16.msra.mxu0 0
      %302 = vmatpush.bf16.msra.mxu0 0
      %303 = vmatpush.bf16.msra.mxu0 0
      %304 = vmatpush.bf16.msra.mxu0 %v273
      %305 = vmatmul.bf16.gmra.mxu0 %v295
      %v306 = vpop.f32.mrf.mxu0
      %v307 = vadd.f32 %v282, %v306
      %v308 = vpop.f32.mrf.mxu0
      %v309 = vadd.f32 %v287, %v308
      %310 = vdwg.mxu0
      %v312 = vsel %vm270, 0.0625, 0
      %314 = vmatpush.msra.mxu0 0.0
      %315 = vmatpush.msra.mxu0 0.0
      %316 = vmatpush.msra.mxu0 0.0
      %317 = vmatpush.msra.mxu0 0.0
      %318 = vmatpush.msra.mxu0 0.0
      %319 = vmatpush.msra.mxu0 0.0
      %320 = vmatpush.msra.mxu0 0.0
      %321 = vmatpush.msra.mxu0 0.0
      %322 = vmatpush.msra.mxu0 0.0
      %323 = vmatpush.msra.mxu0 0.0
      %324 = vmatpush.msra.mxu0 0.0
      %325 = vmatpush.msra.mxu0 0.0
      %326 = vmatpush.msra.mxu0 0.0
      %327 = vmatpush.msra.mxu0 0.0
      %328 = vmatpush.msra.mxu0 %v309
      %329 = vmatpush.msra.mxu0 %v307
      %330 = vmatmul.f32.gmra.mxu0 %v312
      %v331 = vpop.f32.mrf.mxu0
      %v332 = vadd.f32 0.0, %v331
      %333 = vdwg.mxu0
      %v334 = vperm.slane %v332, 0
      %v335 = vsub.f32 %v307, %v334
      %v336 = vsub.f32 %v309, %v334
      %v337 = vmul.f32 %v335, %v335
      %v338 = vmul.f32 %v336, %v336
      %339 = vmatpush.msra.mxu0 0.0
      %340 = vmatpush.msra.mxu0 0.0
      %341 = vmatpush.msra.mxu0 0.0
      %342 = vmatpush.msra.mxu0 0.0
      %343 = vmatpush.msra.mxu0 0.0
      %344 = vmatpush.msra.mxu0 0.0
      %345 = vmatpush.msra.mxu0 0.0
      %346 = vmatpush.msra.mxu0 0.0
      %347 = vmatpush.msra.mxu0 0.0
      %348 = vmatpush.msra.mxu0 0.0
      %349 = vmatpush.msra.mxu0 0.0
      %350 = vmatpush.msra.mxu0 0.0
      %351 = vmatpush.msra.mxu0 0.0
      %352 = vmatpush.msra.mxu0 0.0
      %353 = vmatpush.msra.mxu0 %v338
      %354 = vmatpush.msra.mxu0 %v337
      %355 = vmatmul.f32.gmra.mxu0 %v312
      %v356 = vpop.f32.mrf.mxu0
      %v357 = vadd.f32 1e-05, %v356
      %358 = vdwg.mxu0
      %v359 = vrsqrt.pop %v357
      %v360 = vmul.f32 %v359, %v357
      %v361 = vmul.f32 %v360, %v359
      %v362 = vmul.f32 0.5, %v361
      %v363 = vsub.f32 1.5, %v362
      %v364 = vmul.f32 %v359, %v363
      %vm365 = vweird.f32 %v357
      %vm366 = vweird.f32 %v359
      %vm367 = vmor %vm365, %vm366
      %v368 = vsel %vm367, %v359, %v364
      %v369 = vperm.slane %v368, 0
      %v370 = vmul.f32 %v335, %v369
      %v371 = vmul.f32 %v336, %v369
      %v372 = vld [vmem:[%s3] sm:$0xff]
      %v373 = vld [vmem:[%s3 + $0x8] sm:$0xff]
      %375 = vset.pattern.permute.xlu0 0
      %376 = vperm.xlu0 %375, %v372
      %v377 = vpop.permute.xlu0 %376
      %380 = vset.pattern.permute.xlu0 0
      %381 = vperm.xlu0 %380, %v373
      %v382 = vpop.permute.xlu0 %381
      %v384 = vmul.f32 %v370, %v377
      %v385 = vmul.f32 %v371, %v382
      %v386 = vld [vmem:[%s4] sm:$0xff]
      %v387 = vld [vmem:[%s4 + $0x8] sm:$0xff]
      %389 = vset.pattern.permute.xlu0 0
      %390 = vperm.xlu0 %389, %v386
      %v391 = vpop.permute.xlu0 %390
      %394 = vset.pattern.permute.xlu0 0
      %395 = vperm.xlu0 %394, %v387
      %v396 = vpop.permute.xlu0 %395
      %v398 = vadd.f32 %v384, %v391
      %v399 = vadd.f32 %v385, %v396
      %v400 = vmul.f32 %v398, 0.5
      %v401 = vmul.f32 %v399, 0.5
      %v402 = vmul.f32 %v398, 0.044715
      %v403 = vmul.f32 %v399, 0.044715
      %v404 = vmul.f32 %v402, %v398
      %v405 = vmul.f32 %v403, %v399
      %v406 = vmul.f32 %v404, %v398
      %v407 = vmul.f32 %v405, %v399
      %v408 = vadd.f32 %v398, %v406
      %v409 = vadd.f32 %v399, %v407
      %v410 = vmul.f32 %v408, 0.7978846
      %v411 = vmul.f32 %v409, 0.7978846
      %v412 = vtanh.pop %v410
      %v413 = vtanh.pop %v411
      %v414 = vadd.f32 %v412, 1.0
      %v415 = vadd.f32 %v413, 1.0
      %v416 = vmul.f32 %v400, %v414
      %v417 = vmul.f32 %v401, %v415
      %v418 = vld [vmem:[%s5] sm:$0x1]
      %v420 = vsel %vm270, %v418, 0
      %422 = vmatpush.msra.mxu0 0.0
      %423 = vmatpush.msra.mxu0 0.0
      %424 = vmatpush.msra.mxu0 0.0
      %425 = vmatpush.msra.mxu0 0.0
      %426 = vmatpush.msra.mxu0 0.0
      %427 = vmatpush.msra.mxu0 0.0
      %428 = vmatpush.msra.mxu0 0.0
      %429 = vmatpush.msra.mxu0 0.0
      %430 = vmatpush.msra.mxu0 0.0
      %431 = vmatpush.msra.mxu0 0.0
      %432 = vmatpush.msra.mxu0 0.0
      %433 = vmatpush.msra.mxu0 0.0
      %434 = vmatpush.msra.mxu0 0.0
      %435 = vmatpush.msra.mxu0 0.0
      %436 = vmatpush.msra.mxu0 %v417
      %437 = vmatpush.msra.mxu0 %v416
      %438 = vmatmul.f32.gmra.mxu0 %v420
      %v439 = vpop.f32.mrf.mxu0
      %v440 = vadd.f32 0.0, %v439
      %441 = vdwg.mxu0
      %443 = vrot.lane.b32.xlu0 %v440, 112
      %v444 = vpop.permute.xlu0 %443
      %v446 = vmax.f32 %v440, %v444
      %v447 = vsub.f32 %v440, %v446
      %v448 = vmul.f32 %v447, 1.442695
      %v449 = vpow.pop %v448
      %451 = vrot.lane.b32.xlu0 %v446, 16
      %v452 = vpop.permute.xlu0 %451
      %v454 = vsub.f32 %v440, %v452
      %v455 = vmul.f32 %v454, 1.442695
      %v456 = vpow.pop %v455
      %458 = vrot.lane.b32.xlu0 %v456, 112
      %v459 = vpop.permute.xlu0 %458
      %v461 = vadd.f32 %v449, %v459
      %v462 = vrcp.pop %v461
      %v463 = vmul.f32 %v461, %v462
      %v464 = vsub.f32 1.0, %v463
      %v465 = vmul.f32 %v462, %v464
      %v466 = vadd.f32 %v462, %v465
      %vm467 = vweird.f32 %v461
      %vm468 = vweird.f32 %v462
      %vm469 = vmor %vm467, %vm468
      %v470 = vsel %vm469, %v462, %v466
      %v471 = vand.u32 2147483647, %v461
      %vm472 = vcmp.eq.f32.partialorder %v471, 8.507059e+37
      %v473 = vand.u32 %v461, 2147483648
      %v474 = vor.u32 1.1754944e-38, %v473
      %v475 = vsel %vm472, %v474, %v470
      %v476 = vmul.f32 1.0, %v475
      %v477 = vmul.f32 %v449, %v476
      %v478 = vunpack.c.l.bf16 %v253
      %v479 = vunpack.c.l.bf16 %v254
      %v480 = vperm.slane %v477, 0
      %v481 = vmul.f32 %v480, %v478
      %v482 = vmul.f32 %v480, %v479
      %484 = vrot.lane.b32.xlu0 %v476, 16
      %v485 = vpop.permute.xlu0 %484
      %v487 = vmul.f32 %v456, %v485
      %v488 = vunpack.c.l.bf16 %v256
      %v489 = vunpack.c.l.bf16 %v257
      %v490 = vperm.slane %v487, 0
      %493 = vrot.lane.b32.xlu0 %v488, 16
      %v494 = vpop.permute.xlu0 %493
      %495 = vrot.lane.b32.xlu0 %v489, 16
      %v496 = vpop.permute.xlu0 %495
      %v499 = vmul.f32 %v490, %v494
      %v500 = vmul.f32 %v490, %v496
      %503 = vrot.lane.b32.xlu0 %v499, 112
      %v504 = vpop.permute.xlu0 %503
      %505 = vrot.lane.b32.xlu0 %v500, 112
      %v506 = vpop.permute.xlu0 %505
      %v509 = vadd.f32 %v481, %v504
      %v510 = vadd.f32 %v482, %v506
      %v511 = vpack.c.bf16 %v509, %v509
      %v512 = vpack.c.bf16 %v510, %v510
      %vm513 = vcmask 125952
      %514 = vst.msk [vmem:[%s251] sm:$0xf] %vm513, %v511
      %515 = vst.msk [vmem:[%s251 + $0x4] sm:$0xf] %vm513, %v512
      %p516 = scmp.lt.s32.totalorder %s17, 1
      %s517 = scalar_select %p516, %s17, 1
      %s518 = smul.addr %s517, 2
      %s519 = smul.addr %s518, 4
      %s520 = scalar_lea.vmem %s6, %s519
      // Predicated region
      $region45: #{unet_vflow_forward.14} parent=43 // pred_check
        %p521 = pneg %p166
      $region46: #{unet_vflow_forward.14} parent=43 // pred_check_branch
        %523 = sbr.rel (%p521) target = $region48
      $region47: #{unet_vflow_forward.14} parent=43 // pred_region
        _
      $region48: #{unet_vflow_forward.14} parent=43 // pred_fallthru
        _
    $region44: #{unet_vflow_forward.14} parent=5 // pred_fallthru
      _
    %p524 = scmp.le.s32.totalorder 2, %s12
    // Predicated region
    $region49: #{unet_vflow_forward.14} parent=5 // pred_check
      %p525 = pneg %p524
    $region50: #{unet_vflow_forward.14} parent=5 // pred_check_branch
      %527 = sbr.rel (%p525) target = $region52
    $region51: #{unet_vflow_forward.14} parent=5 // pred_region
      %s528 = ssub.s32 %s12, 2
      // Predicated region
      $region53: #{unet_vflow_forward.14} parent=51 // pred_check
        %p529 = pneg %p172
      $region54: #{unet_vflow_forward.14} parent=51 // pred_check_branch
        %531 = sbr.rel (%p529) target = $region56
      $region55: #{unet_vflow_forward.14} parent=51 // pred_region
        %p532 = scmp.lt.s32.totalorder %s18, 1
        %s533 = scalar_select %p532, %s18, 1
        %s534 = smul.addr %s533, 2
        %s535 = smul.addr %s534, 4
        %s536 = scalar_lea.vmem %s6, %s535
      $region56: #{unet_vflow_forward.14} parent=51 // pred_fallthru
        _
    $region52: #{unet_vflow_forward.14} parent=5 // pred_fallthru
      _
  $region6: #{unet_vflow_forward.14} parent=0 // loop_footer
    %s16 = sadd.s32 1, %s12
  $region7: #{unet_vflow_forward.14} parent=0 // loop_footer_branch
    %11 = sbr.rel target = $region3
  $region8: #{unet_vflow_forward.14} parent=0 // loop_exit
    _

// kernel: unet_vflow_forward.16
$region0: #{unet_vflow_forward.16}
  #allocation0 [shape = 'u32[]', space=smem, size = 0x4, offset = 0x4, fixed_abs, tag = 'smem constant byte address 0x4 - core index']
  #allocation1 [shape = 'u32[72,128]{1,0:T(1,128)}', space=vmem, size = 0x9000, scoped, tag = 'internal scratch']
  #allocation2 [shape = 'bf16[32,256]{1,0:T(8,128)(2,1)}', space=vmem, size = 0x4000, scoped, tag = 'scratch operand']
  %s0 = inlined_call_operand.vmem [shape: bf16[2,32,42], index: 0, kind: input, shape index: {}]
  %s1 = inlined_call_operand.vmem [shape: bf16[2,16,42], index: 1, kind: input, shape index: {}]
  %s2 = inlined_call_operand.vmem [shape: bf16[32,432], index: 2, kind: input, shape index: {}]
  %s3 = inlined_call_operand.vmem [shape: f32[32,1], index: 3, kind: input, shape index: {}]
  %s4 = inlined_call_operand.vmem [shape: bf16[32,288], index: 4, kind: input, shape index: {}]
  %s5 = inlined_call_operand.vmem [shape: f32[32,1], index: 5, kind: input, shape index: {}]
  %s6 = inlined_call_operand.vmem [shape: bf16[2,32,24], index: 6, kind: output, shape index: {}]
  %s7 = sld [smem:[#allocation0]]
  $region57: #{unet_vflow_forward.16} parent=0
    _
  %s9 = ssub.s32 1, %s7
  %s10 = scalar_select 0, %s9, %s7
  loop: start=0, step=1, limit=4
  $region2: #{unet_vflow_forward.16} parent=0 // loop_pre_header
    _
  $region3: #{unet_vflow_forward.16} parent=0 // loop_header
    %s12 = sphi 0, %s16
    %p13 = scmp.ge.s32.totalorder %s12, 4
    %s22 = sphi 0, %s24
    %s25 = sphi 0, %s22
    %s26 = sphi 0, %s25
    %s42 = sphi 0, %s26
    %s48 = sphi 0, %s50
    %s51 = sphi 0, %s48
    %s52 = sphi 0, %s51
    %s68 = sphi 0, %s52
    %s72 = sphi 0, %s72
    %s74 = sphi 0, %s72
    %s75 = sphi 0, %s74
    %s89 = sphi 0, %s75
    %s93 = sphi 0, %s93
    %s95 = sphi 0, %s93
    %s96 = sphi 0, %s95
    %s110 = sphi 0, %s96
    %s114 = sphi 0, %s114
    %s116 = sphi 0, %s114
    %s117 = sphi 0, %s116
    %s131 = sphi 0, %s117
    %s135 = sphi 0, %s135
    %s137 = sphi 0, %s135
    %s138 = sphi 0, %s137
    %s152 = sphi 0, %s138
    %s158 = sphi 0, %s160
    %s161 = sphi 0, %s158
    %s162 = sphi 0, %s161
    %s178 = sphi 0, %s162
  $region4: #{unet_vflow_forward.16} parent=0 // loop_header_branch
    %15 = sbr.rel (%p13) target = $region8
  $region5: #{unet_vflow_forward.16} parent=0 // loop_body
    %s17 = ssub.s32 %s12, 1
    %s18 = ssub.s32 %s12, 2
    %s19 = sadd.s32 %s12, 1
    %s20 = ssub.s32 %s12, %s19
    %p21 = scmp.eq.s32.totalorder %s20, 0
    %s23 = sadd.s32 %s22, 1
    %s24 = scalar_select %p21, %s22, %s23
    %p27 = pneg %p21
    %p28 = scmp.eq.s32.totalorder %s12, 1
    %p29 = por %p27, %p28
    %p30 = scmp.ne.s32.totalorder %s22, %s25
    %p31 = scmp.eq.s32.totalorder %s12, 0
    %p32 = por %p30, %p31
    %p33 = scmp.ne.s32.totalorder %s22, %s25
    %p34 = scmp.eq.s32.totalorder %s17, 1
    %p35 = por %p33, %p34
    %p36 = scmp.ne.s32.totalorder %s25, %s26
    %p37 = scmp.eq.s32.totalorder %s17, 0
    %p38 = por %p36, %p37
    %p39 = scmp.ne.s32.totalorder %s25, %s26
    %p40 = scmp.eq.s32.totalorder %s18, 1
    %p41 = por %p39, %p40
    %p43 = scmp.ne.s32.totalorder %s26, %s42
    %p44 = scmp.eq.s32.totalorder %s18, 0
    %p45 = por %p43, %p44
    %s46 = ssub.s32 %s12, %s19
    %p47 = scmp.eq.s32.totalorder %s46, 0
    %s49 = sadd.s32 %s48, 1
    %s50 = scalar_select %p47, %s48, %s49
    %p53 = pneg %p47
    %p54 = scmp.eq.s32.totalorder %s12, 1
    %p55 = por %p53, %p54
    %p56 = scmp.ne.s32.totalorder %s48, %s51
    %p57 = scmp.eq.s32.totalorder %s12, 0
    %p58 = por %p56, %p57
    %p59 = scmp.ne.s32.totalorder %s48, %s51
    %p60 = scmp.eq.s32.totalorder %s17, 1
    %p61 = por %p59, %p60
    %p62 = scmp.ne.s32.totalorder %s51, %s52
    %p63 = scmp.eq.s32.totalorder %s17, 0
    %p64 = por %p62, %p63
    %p65 = scmp.ne.s32.totalorder %s51, %s52
    %p66 = scmp.eq.s32.totalorder %s18, 1
    %p67 = por %p65, %p66
    %p69 = scmp.ne.s32.totalorder %s52, %s68
    %p70 = scmp.eq.s32.totalorder %s18, 0
    %p71 = por %p69, %p70
    %s73 = sadd.s32 %s72, 1
    %p76 = scmp.eq.s32.totalorder %s12, 1
    %p77 = scmp.ne.s32.totalorder %s72, %s74
    %p78 = scmp.eq.s32.totalorder %s12, 0
    %p79 = por %p77, %p78
    %p80 = scmp.ne.s32.totalorder %s72, %s74
    %p81 = scmp.eq.s32.totalorder %s17, 1
    %p82 = por %p80, %p81
    %p83 = scmp.ne.s32.totalorder %s74, %s75
    %p84 = scmp.eq.s32.totalorder %s17, 0
    %p85 = por %p83, %p84
    %p86 = scmp.ne.s32.totalorder %s74, %s75
    %p87 = scmp.eq.s32.totalorder %s18, 1
    %p88 = por %p86, %p87
    %p90 = scmp.ne.s32.totalorder %s75, %s89
    %p91 = scmp.eq.s32.totalorder %s18, 0
    %p92 = por %p90, %p91
    %s94 = sadd.s32 %s93, 1
    %p97 = scmp.eq.s32.totalorder %s12, 1
    %p98 = scmp.ne.s32.totalorder %s93, %s95
    %p99 = scmp.eq.s32.totalorder %s12, 0
    %p100 = por %p98, %p99
    %p101 = scmp.ne.s32.totalorder %s93, %s95
    %p102 = scmp.eq.s32.totalorder %s17, 1
    %p103 = por %p101, %p102
    %p104 = scmp.ne.s32.totalorder %s95, %s96
    %p105 = scmp.eq.s32.totalorder %s17, 0
    %p106 = por %p104, %p105
    %p107 = scmp.ne.s32.totalorder %s95, %s96
    %p108 = scmp.eq.s32.totalorder %s18, 1
    %p109 = por %p107, %p108
    %p111 = scmp.ne.s32.totalorder %s96, %s110
    %p112 = scmp.eq.s32.totalorder %s18, 0
    %p113 = por %p111, %p112
    %s115 = sadd.s32 %s114, 1
    %p118 = scmp.eq.s32.totalorder %s12, 1
    %p119 = scmp.ne.s32.totalorder %s114, %s116
    %p120 = scmp.eq.s32.totalorder %s12, 0
    %p121 = por %p119, %p120
    %p122 = scmp.ne.s32.totalorder %s114, %s116
    %p123 = scmp.eq.s32.totalorder %s17, 1
    %p124 = por %p122, %p123
    %p125 = scmp.ne.s32.totalorder %s116, %s117
    %p126 = scmp.eq.s32.totalorder %s17, 0
    %p127 = por %p125, %p126
    %p128 = scmp.ne.s32.totalorder %s116, %s117
    %p129 = scmp.eq.s32.totalorder %s18, 1
    %p130 = por %p128, %p129
    %p132 = scmp.ne.s32.totalorder %s117, %s131
    %p133 = scmp.eq.s32.totalorder %s18, 0
    %p134 = por %p132, %p133
    %s136 = sadd.s32 %s135, 1
    %p139 = scmp.eq.s32.totalorder %s12, 1
    %p140 = scmp.ne.s32.totalorder %s135, %s137
    %p141 = scmp.eq.s32.totalorder %s12, 0
    %p142 = por %p140, %p141
    %p143 = scmp.ne.s32.totalorder %s135, %s137
    %p144 = scmp.eq.s32.totalorder %s17, 1
    %p145 = por %p143, %p144
    %p146 = scmp.ne.s32.totalorder %s137, %s138
    %p147 = scmp.eq.s32.totalorder %s17, 0
    %p148 = por %p146, %p147
    %p149 = scmp.ne.s32.totalorder %s137, %s138
    %p150 = scmp.eq.s32.totalorder %s18, 1
    %p151 = por %p149, %p150
    %p153 = scmp.ne.s32.totalorder %s138, %s152
    %p154 = scmp.eq.s32.totalorder %s18, 0
    %p155 = por %p153, %p154
    %s156 = ssub.s32 %s12, %s19
    %p157 = scmp.eq.s32.totalorder %s156, 0
    %s159 = sadd.s32 %s158, 1
    %s160 = scalar_select %p157, %s158, %s159
    %p163 = pneg %p157
    %p164 = scmp.eq.s32.totalorder %s12, 1
    %p165 = por %p163, %p164
    %p166 = scmp.ne.s32.totalorder %s158, %s161
    %p167 = scmp.eq.s32.totalorder %s12, 0
    %p168 = por %p166, %p167
    %p169 = scmp.ne.s32.totalorder %s158, %s161
    %p170 = scmp.eq.s32.totalorder %s17, 1
    %p171 = por %p169, %p170
    %p172 = scmp.ne.s32.totalorder %s161, %s162
    %p173 = scmp.eq.s32.totalorder %s17, 0
    %p174 = por %p172, %p173
    %p175 = scmp.ne.s32.totalorder %s161, %s162
    %p176 = scmp.eq.s32.totalorder %s18, 1
    %p177 = por %p175, %p176
    %p179 = scmp.ne.s32.totalorder %s162, %s178
    %p180 = scmp.eq.s32.totalorder %s18, 0
    %p181 = por %p179, %p180
    %p182 = scmp.le.s32.totalorder 1, %s12
    %p183 = scmp.lt.s32.totalorder %s12, 3
    %p184 = pnand %p182, %p183
    %p185 = pneg %p184
    // Predicated region
    $region9: #{unet_vflow_forward.16} parent=5 // pred_check
      _
    $region10: #{unet_vflow_forward.16} parent=5 // pred_check_branch
      %187 = sbr.rel (%p184) target = $region12
    $region11: #{unet_vflow_forward.16} parent=5 // pred_region
      %s188 = ssub.s32 %s12, 1
      // Predicated region
      $region13: #{unet_vflow_forward.16} parent=11 // pred_check
        %p189 = pneg %p85
      $region14: #{unet_vflow_forward.16} parent=11 // pred_check_branch
        %191 = sbr.rel (%p189) target = $region16
      $region15: #{unet_vflow_forward.16} parent=11 // pred_region
        _
      $region16: #{unet_vflow_forward.16} parent=11 // pred_fallthru
        _
      // Predicated region
      $region17: #{unet_vflow_forward.16} parent=11 // pred_check
        %p192 = pneg %p106
      $region18: #{unet_vflow_forward.16} parent=11 // pred_check_branch
        %194 = sbr.rel (%p192) target = $region20
      $region19: #{unet_vflow_forward.16} parent=11 // pred_region
        _
      $region20: #{unet_vflow_forward.16} parent=11 // pred_fallthru
        _
      // Predicated region
      $region21: #{unet_vflow_forward.16} parent=11 // pred_check
        %p195 = pneg %p127
      $region22: #{unet_vflow_forward.16} parent=11 // pred_check_branch
        %197 = sbr.rel (%p195) target = $region24
      $region23: #{unet_vflow_forward.16} parent=11 // pred_region
        _
      $region24: #{unet_vflow_forward.16} parent=11 // pred_fallthru
        _
      // Predicated region
      $region25: #{unet_vflow_forward.16} parent=11 // pred_check
        %p198 = pneg %p148
      $region26: #{unet_vflow_forward.16} parent=11 // pred_check_branch
        %200 = sbr.rel (%p198) target = $region28
      $region27: #{unet_vflow_forward.16} parent=11 // pred_region
        _
      $region28: #{unet_vflow_forward.16} parent=11 // pred_fallthru
        _
    $region12: #{unet_vflow_forward.16} parent=5 // pred_fallthru
      _
    %p201 = scmp.lt.s32.totalorder %s12, 2
    // Predicated region
    $region29: #{unet_vflow_forward.16} parent=5 // pred_check
      %p202 = pneg %p201
    $region30: #{unet_vflow_forward.16} parent=5 // pred_check_branch
      %204 = sbr.rel (%p202) target = $region32
    $region31: #{unet_vflow_forward.16} parent=5 // pred_region
      // Predicated region
      $region33: #{unet_vflow_forward.16} parent=31 // pred_check
        %p205 = pneg %p32
      $region34: #{unet_vflow_forward.16} parent=31 // pred_check_branch
        %207 = sbr.rel (%p205) target = $region36
      $region35: #{unet_vflow_forward.16} parent=31 // pred_region
        %p208 = scmp.lt.s32.totalorder %s12, 1
        %s209 = scalar_select %p208, %s12, 1
        %s210 = smul.addr %s209, 4
        %s211 = smul.addr %s210, 4
        %s212 = scalar_lea.vmem %s0, %s211
      $region36: #{unet_vflow_forward.16} parent=31 // pred_fallthru
        _
      // Predicated region
      $region37: #{unet_vflow_forward.16} parent=31 // pred_check
        %p213 = pneg %p58
      $region38: #{unet_vflow_forward.16} parent=31 // pred_check_branch
        %215 = sbr.rel (%p213) target = $region40
      $region39: #{unet_vflow_forward.16} parent=31 // pred_region
        %p216 = scmp.lt.s32.totalorder %s12, 1
        %s217 = scalar_select %p216, %s12, 1
        %s218 = smul.addr %s217, 2
        %s219 = smul.addr %s218, 4
        %s220 = scalar_lea.vmem %s1, %s219
      $region40: #{unet_vflow_forward.16} parent=31 // pred_fallthru
        _
    $region32: #{unet_vflow_forward.16} parent=5 // pred_fallthru
      _
    %p221 = scmp.le.s32.totalorder 1, %s12
    %p222 = scmp.lt.s32.totalorder %s12, 3
    %p223 = pnand %p221, %p222
    %p224 = pneg %p223
    // Predicated region
    $region41: #{unet_vflow_forward.16} parent=5 // pred_check
      _
    $region42: #{unet_vflow_forward.16} parent=5 // pred_check_branch
      %226 = sbr.rel (%p223) target = $region44
    $region43: #{unet_vflow_forward.16} parent=5 // pred_region
      %s227 = ssub.s32 %s12, 1
      %p228 = scmp.lt.s32.totalorder %s17, 1
      %s229 = scalar_select %p228, %s17, 1
      %s230 = smul.addr %s229, 4
      %s231 = smul.addr %s230, 4
      %s232 = scalar_lea.vmem %s0, %s231
      %p233 = pneg %p38
      %p234 = pneg %p35
      %p235 = scmp.lt.s32.totalorder %s17, 1
      %s236 = scalar_select %p235, %s17, 1
      %s237 = smul.addr %s236, 2
      %s238 = smul.addr %s237, 4
      %s239 = scalar_lea.vmem %s1, %s238
      %p240 = pneg %p64
      %p241 = pneg %p61
      %p242 = pneg %p85
      %p243 = pneg %p82
      %p244 = pneg %p106
      %p245 = pneg %p103
      %p246 = pneg %p127
      %p247 = pneg %p124
      %p248 = pneg %p148
      %p249 = pneg %p145
      %p250 = pneg %p174
      %p251 = pneg %p171
      %p252 = scmp.lt.s32.totalorder %s17, 1
      %s253 = scalar_select %p252, %s17, 1
      %s254 = smul.addr %s253, 4
      %s255 = smul.addr %s254, 4
      %s256 = scalar_lea.vmem %s6, %s255
      %p257 = scmp.lt.s32.totalorder %s17, 1
      %s258 = scalar_select %p257, %s17, 1
      %s259 = smul.addr %s258, 4
      %s260 = smul.addr %s259, 4
      %s261 = scalar_lea.vmem %s0, %s260
      %p262 = scmp.lt.s32.totalorder %s17, 1
      %s263 = scalar_select %p262, %s17, 1
      %s264 = smul.addr %s263, 2
      %s265 = smul.addr %s264, 4
      %s266 = scalar_lea.vmem %s1, %s265
      %p267 = scmp.lt.s32.totalorder %s17, 1
      %s268 = scalar_select %p267, %s17, 1
      %s269 = smul.addr %s268, 4
      %s270 = smul.addr %s269, 4
      %s271 = scalar_lea.vmem %s6, %s270
      %v273 = vld [vmem:[%s261] sm:$0xf]
      %v274 = vld [vmem:[%s261 + $0x4] sm:$0xf]
      %v275 = vld [vmem:[%s261 + $0x8] sm:$0xf]
      %v276 = vld [vmem:[%s261 + $0xc] sm:$0xf]
      %v277 = vld [vmem:[%s266] sm:$0xf]
      %v278 = vld [vmem:[%s266 + $0x4] sm:$0xf]
      %v283 = vunpack.c.l.b16 %v273
      %v284 = vunpack.c.l.b16 %v274
      %v285 = vunpack.c.l.b16 %v275
      %v286 = vunpack.c.l.b16 %v276
      %v287 = vpack.c.b16 %v284, %v283
      %v288 = vpack.c.b16 %v286, %v285
      %291 = vrot.lane.b32.xlu0 %v287, 127
      %v292 = vpop.permute.xlu0 %291
      %293 = vrot.lane.b32.xlu0 %v288, 127
      %v294 = vpop.permute.xlu0 %293
      %297 = vrot.lane.b32.xlu0 %v287, 126
      %v298 = vpop.permute.xlu0 %297
      %299 = vrot.lane.b32.xlu0 %v288, 126
      %v300 = vpop.permute.xlu0 %299
      %303 = vrot.lane.b32.xlu0 %v287, 122
      %v304 = vpop.permute.xlu0 %303
      %305 = vrot.lane.b32.xlu0 %v288, 122
      %v306 = vpop.permute.xlu0 %305
      %309 = vrot.lane.b32.xlu0 %v287, 121
      %v310 = vpop.permute.xlu0 %309
      %311 = vrot.lane.b32.xlu0 %v288, 121
      %v312 = vpop.permute.xlu0 %311
      %315 = vrot.lane.b32.xlu0 %v287, 120
      %v316 = vpop.permute.xlu0 %315
      %317 = vrot.lane.b32.xlu0 %v288, 120
      %v318 = vpop.permute.xlu0 %317
      %321 = vrot.lane.b32.xlu0 %v287, 116
      %v322 = vpop.permute.xlu0 %321
      %323 = vrot.lane.b32.xlu0 %v288, 116
      %v324 = vpop.permute.xlu0 %323
      %327 = vrot.lane.b32.xlu0 %v287, 115
      %v328 = vpop.permute.xlu0 %327
      %329 = vrot.lane.b32.xlu0 %v288, 115
      %v330 = vpop.permute.xlu0 %329
      %333 = vrot.lane.b32.xlu0 %v287, 114
      %v334 = vpop.permute.xlu0 %333
      %335 = vrot.lane.b32.xlu0 %v288, 114
      %v336 = vpop.permute.xlu0 %335
      %v341 = vunpack.c.l.b16 %v277
      %v342 = vunpack.c.l.b16 %v278
      %v343 = vpack.c.b16 %v342, %v341
      %345 = vrot.lane.b32.xlu0 %v343, 127
      %v346 = vpop.permute.xlu0 %345
      %348 = vrot.lane.b32.xlu0 %v343, 126
      %v349 = vpop.permute.xlu0 %348
      %351 = vrot.lane.b32.xlu0 %v343, 122
      %v352 = vpop.permute.xlu0 %351
      %354 = vrot.lane.b32.xlu0 %v343, 121
      %v355 = vpop.permute.xlu0 %354
      %357 = vrot.lane.b32.xlu0 %v343, 120
      %v358 = vpop.permute.xlu0 %357
      %360 = vrot.lane.b32.xlu0 %v343, 116
      %v361 = vpop.permute.xlu0 %360
      %363 = vrot.lane.b32.xlu0 %v343, 115
      %v364 = vpop.permute.xlu0 %363
      %365 = vrot.lane.b32.xlu0 %v346, 115
      %v366 = vpop.permute.xlu0 %365
      %v369 = vld [vmem:[%s2] sm:$0xff]
      %v370 = vld [vmem:[%s2 + $0x8] sm:$0xff]
      %v371 = vld [vmem:[%s2 + $0x10] sm:$0xff]
      %v372 = vld [vmem:[%s2 + $0x18] sm:$0xff]
      %v373 = vld [vmem:[%s2 + $0x20] sm:$0xff]
      %v374 = vld [vmem:[%s2 + $0x28] sm:$0xff]
      %v375 = vld [vmem:[%s2 + $0x30] sm:$0xff]
      %v376 = vld [vmem:[%s2 + $0x38] sm:$0xff]
      %v377 = vlaneseq
      %v378 = vand.u32 %v377, 127
      %v379 = vcvt.s32.f32 %v378
      %v380 = vadd.f32 %v379, 0.5
      %v381 = vmul.f32 %v380, 0.16666667
      %v382 = vfloor.f32 %v381
      %v383 = vmul.f32 %v382, 6.0
      %v384 = vsub.f32 %v379, %v383
      %vm385 = vcmp.lt.f32.partialorder %v384, 4.0
      %v386 = vsel %vm385, 1, 0
      %v387 = vcvt.s32.f32 %v386
      %v388 = vld [vmem:[%s3] sm:$0xff]
      %v389 = vld [vmem:[%s3 + $0x8] sm:$0xff]
      %v390 = vld [vmem:[%s3 + $0x10] sm:$0xff]
      %v391 = vld [vmem:[%s3 + $0x18] sm:$0xff]
      %393 = vset.pattern.permute.xlu0 0
      %394 = vperm.xlu0 %393, %v388
      %v395 = vpop.permute.xlu0 %394
      %398 = vset.pattern.permute.xlu0 0
      %399 = vperm.xlu0 %398, %v389
      %v400 = vpop.permute.xlu0 %399
      %403 = vset.pattern.permute.xlu0 0
      %404 = vperm.xlu0 %403, %v390
      %v405 = vpop.permute.xlu0 %404
      %408 = vset.pattern.permute.xlu0 0
      %409 = vperm.xlu0 %408, %v391
      %v410 = vpop.permute.xlu0 %409
      %v420 = vunpack.c.l.b16 %v369
      %v421 = vunpack.c.h.b16 %v369
      %v422 = vunpack.c.l.b16 %v370
      %v423 = vunpack.c.h.b16 %v370
      %v424 = vunpack.c.l.b16 %v371
      %v425 = vunpack.c.h.b16 %v371
      %v426 = vunpack.c.l.b16 %v372
      %v427 = vunpack.c.h.b16 %v372
      %v428 = vunpack.c.l.b16 %v373
      %v429 = vunpack.c.h.b16 %v373
      %v430 = vunpack.c.l.b16 %v374
      %v431 = vunpack.c.h.b16 %v374
      %v432 = vunpack.c.l.b16 %v375
      %v433 = vunpack.c.h.b16 %v375
      %v434 = vunpack.c.l.b16 %v376
      %v435 = vunpack.c.h.b16 %v376
      %v436 = vpack.c.b16 %v424, %v420
      %v437 = vpack.c.b16 %v425, %v421
      %v438 = vpack.c.b16 %v426, %v422
      %v439 = vpack.c.b16 %v427, %v423
      %v440 = vpack.c.b16 %v432, %v428
      %v441 = vpack.c.b16 %v433, %v429
      %v442 = vpack.c.b16 %v434, %v430
      %v443 = vpack.c.b16 %v435, %v431
      %vm450 = vcmask 392192
      %v452 = vsel %vm450, %v439, 0
      %v455 = vsel %vm450, %v443, 0
      %457 = vmatpush.bf16.msra.mxu0 %v306
      %458 = vmatpush.bf16.msra.mxu0 %v304
      %459 = vmatpush.bf16.msra.mxu0 %v300
      %460 = vmatpush.bf16.msra.mxu0 %v298
      %461 = vmatpush.bf16.msra.mxu0 %v294
      %462 = vmatpush.bf16.msra.mxu0 %v292
      %463 = vmatpush.bf16.msra.mxu0 %v288
      %464 = vmatpush.bf16.msra.mxu0 %v287
      %465 = vmatmul.bf16.gmra.mxu0 %v436
      %v466 = vpop.f32.mrf.mxu0
      %v467 = vadd.f32 %v395, %v466
      %v468 = vpop.f32.mrf.mxu0
      %v469 = vadd.f32 %v400, %v468
      %470 = vmatmul.bf16.gmra.mxu0 %v440
      %v471 = vpop.f32.mrf.mxu0
      %v472 = vadd.f32 %v405, %v471
      %v473 = vpop.f32.mrf.mxu0
      %v474 = vadd.f32 %v410, %v473
      %475 = vdwg.mxu0
      %476 = vmatpush.bf16.msra.mxu0 %v330
      %477 = vmatpush.bf16.msra.mxu0 %v328
      %478 = vmatpush.bf16.msra.mxu0 %v324
      %479 = vmatpush.bf16.msra.mxu0 %v322
      %480 = vmatpush.bf16.msra.mxu0 %v318
      %481 = vmatpush.bf16.msra.mxu0 %v316
      %482 = vmatpush.bf16.msra.mxu0 %v312
      %483 = vmatpush.bf16.msra.mxu0 %v310
      %484 = vmatmul.bf16.gmra.mxu0 %v437
      %v485 = vpop.f32.mrf.mxu0
      %v486 = vadd.f32 %v467, %v485
      %v487 = vpop.f32.mrf.mxu0
      %v488 = vadd.f32 %v469, %v487
      %489 = vmatmul.bf16.gmra.mxu0 %v441
      %v490 = vpop.f32.mrf.mxu0
      %v491 = vadd.f32 %v472, %v490
      %v492 = vpop.f32.mrf.mxu0
      %v493 = vadd.f32 %v474, %v492
      %494 = vdwg.mxu0
      %495 = vmatpush.bf16.msra.mxu0 %v358
      %496 = vmatpush.bf16.msra.mxu0 %v355
      %497 = vmatpush.bf16.msra.mxu0 %v352
      %498 = vmatpush.bf16.msra.mxu0 %v349
      %499 = vmatpush.bf16.msra.mxu0 %v346
      %500 = vmatpush.bf16.msra.mxu0 %v343
      %501 = vmatpush.bf16.msra.mxu0 %v336
      %502 = vmatpush.bf16.msra.mxu0 %v334
      %503 = vmatmul.bf16.gmra.mxu0 %v438
      %v504 = vpop.f32.mrf.mxu0
      %v505 = vadd.f32 %v486, %v504
      %v506 = vpop.f32.mrf.mxu0
      %v507 = vadd.f32 %v488, %v506
      %508 = vmatmul.bf16.gmra.mxu0 %v442
      %v509 = vpop.f32.mrf.mxu0
      %v510 = vadd.f32 %v491, %v509
      %v511 = vpop.f32.mrf.mxu0
      %v512 = vadd.f32 %v493, %v511
      %513 = vdwg.mxu0
      %514 = vmatpush.bf16.msra.mxu0 0
      %515 = vmatpush.bf16.msra.mxu0 0
      %516 = vmatpush.bf16.msra.mxu0 0
      %517 = vmatpush.bf16.msra.mxu0 0
      %518 = vmatpush.bf16.msra.mxu0 0
      %519 = vmatpush.bf16.msra.mxu0 %v366
      %520 = vmatpush.bf16.msra.mxu0 %v364
      %521 = vmatpush.bf16.msra.mxu0 %v361
      %522 = vmatmul.bf16.gmra.mxu0 %v452
      %v523 = vpop.f32.mrf.mxu0
      %v524 = vadd.f32 %v505, %v523
      %v525 = vpop.f32.mrf.mxu0
      %v526 = vadd.f32 %v507, %v525
      %527 = vmatmul.bf16.gmra.mxu0 %v455
      %v528 = vpop.f32.mrf.mxu0
      %v529 = vadd.f32 %v510, %v528
      %v530 = vpop.f32.mrf.mxu0
      %v531 = vadd.f32 %v512, %v530
      %532 = vdwg.mxu0
      %v533 = vmax.f32 %v524, 0.0
      %v534 = vmax.f32 %v526, 0.0
      %v535 = vmax.f32 %v529, 0.0
      %v536 = vmax.f32 %v531, 0.0
      %v537 = vmul.f32 %v533, %v387
      %v538 = vmul.f32 %v534, %v387
      %v539 = vmul.f32 %v535, %v387
      %v540 = vmul.f32 %v536, %v387
      %vm541 = vcmask 1044424
      %542 = vst.msk [vmem:[#allocation2] sm:$0xf] %vm541, 0
      %543 = vst.msk [vmem:[#allocation2 + $0x8] sm:$0xf] %vm541, 0
      %544 = vst.msk [vmem:[#allocation2 + $0x10] sm:$0xf] %vm541, 0
      %545 = vst.msk [vmem:[#allocation2 + $0x18] sm:$0xf] %vm541, 0
      %vm546 = vcmask 249024
      %547 = vst.msk [vmem:[#allocation2 + $0x4] sm:$0xf] %vm546, 0
      %548 = vst.msk [vmem:[#allocation2 + $0xc] sm:$0xf] %vm546, 0
      %549 = vst.msk [vmem:[#allocation2 + $0x14] sm:$0xf] %vm546, 0
      %550 = vst.msk [vmem:[#allocation2 + $0x1c] sm:$0xf] %vm546, 0
      %v551 = vpack.c.bf16 %v537, %v537
      %v552 = vpack.c.bf16 %v538, %v538
      %v553 = vpack.c.bf16 %v539, %v539
      %v554 = vpack.c.bf16 %v540, %v540
      %vm555 = vcmask 191488
      %556 = vst.msk [vmem:[#allocation2 + $0x4] sm:$0xf] %vm555, %v551
      %557 = vst.msk [vmem:[#allocation2 + $0xc] sm:$0xf] %vm555, %v552
      %558 = vst.msk [vmem:[#allocation2 + $0x14] sm:$0xf] %vm555, %v553
      %559 = vst.msk [vmem:[#allocation2 + $0x1c] sm:$0xf] %vm555, %v554
      %v560 = vld [vmem:[#allocation2] sm:$0xff]
      %v561 = vld [vmem:[#allocation2 + $0x8] sm:$0xff]
      %v562 = vld [vmem:[#allocation2 + $0x10] sm:$0xff]
      %v563 = vld [vmem:[#allocation2 + $0x18] sm:$0xff]
      %v568 = vunpack.c.l.b16 %v560
      %v569 = vunpack.c.h.b16 %v560
      %v570 = vunpack.c.l.b16 %v561
      %v571 = vunpack.c.h.b16 %v561
      %v572 = vunpack.c.l.b16 %v562
      %v573 = vunpack.c.h.b16 %v562
      %v574 = vunpack.c.l.b16 %v563
      %v575 = vunpack.c.h.b16 %v563
      %v576 = vpack.c.b16 %v570, %v568
      %v577 = vpack.c.b16 %v571, %v569
      %v578 = vpack.c.b16 %v574, %v572
      %v579 = vpack.c.b16 %v575, %v573
      %580 = vrot.lane.b32.xlu0 %v576, 127
      %v581 = vpop.permute.xlu0 %580
      %582 = vrot.lane.b32.xlu0 %v577, 127
      %v583 = vpop.permute.xlu0 %582
      %584 = vrot.lane.b32.xlu0 %v578, 127
      %v585 = vpop.permute.xlu0 %584
      %586 = vrot.lane.b32.xlu0 %v579, 127
      %v587 = vpop.permute.xlu0 %586
      %vm588 = vcmask 1039360
      %v589 = vsel %vm588, %v581, %v583
      %v590 = vsel %vm588, %v585, %v587
      %591 = vrot.lane.b32.xlu0 %v576, 126
      %v592 = vpop.permute.xlu0 %591
      %593 = vrot.lane.b32.xlu0 %v577, 126
      %v594 = vpop.permute.xlu0 %593
      %595 = vrot.lane.b32.xlu0 %v578, 126
      %v596 = vpop.permute.xlu0 %595
      %597 = vrot.lane.b32.xlu0 %v579, 126
      %v598 = vpop.permute.xlu0 %597
      %vm599 = vcmask 1031168
      %v600 = vsel %vm599, %v592, %v594
      %v601 = vsel %vm599, %v596, %v598
      %602 = vrot.lane.b32.xlu0 %v576, 122
      %v603 = vpop.permute.xlu0 %602
      %604 = vrot.lane.b32.xlu0 %v577, 122
      %v605 = vpop.permute.xlu0 %604
      %606 = vrot.lane.b32.xlu0 %v578, 122
      %v607 = vpop.permute.xlu0 %606
      %608 = vrot.lane.b32.xlu0 %v579, 122
      %v609 = vpop.permute.xlu0 %608
      %vm610 = vcmask 998400
      %v611 = vsel %vm610, %v603, %v605
      %v612 = vsel %vm610, %v607, %v609
      %613 = vrot.lane.b32.xlu0 %v577, 121
      %v614 = vpop.permute.xlu0 %613
      %615 = vrot.lane.b32.xlu0 %v579, 121
      %v616 = vpop.permute.xlu0 %615
      %617 = vrot.lane.b32.xlu0 %v577, 120
      %v618 = vpop.permute.xlu0 %617
      %619 = vrot.lane.b32.xlu0 %v579, 120
      %v620 = vpop.permute.xlu0 %619
      %621 = vrot.lane.b32.xlu0 %v577, 116
      %v622 = vpop.permute.xlu0 %621
      %623 = vrot.lane.b32.xlu0 %v579, 116
      %v624 = vpop.permute.xlu0 %623
      %625 = vrot.lane.b32.xlu0 %v577, 115
      %v626 = vpop.permute.xlu0 %625
      %627 = vrot.lane.b32.xlu0 %v579, 115
      %v628 = vpop.permute.xlu0 %627
      %629 = vrot.lane.b32.xlu0 %v577, 114
      %v630 = vpop.permute.xlu0 %629
      %631 = vrot.lane.b32.xlu0 %v579, 114
      %v632 = vpop.permute.xlu0 %631
      %v633 = vld [vmem:[%s4] sm:$0xff]
      %v634 = vld [vmem:[%s4 + $0x8] sm:$0xf]
      %v635 = vld [vmem:[%s4 + $0xc] sm:$0xff]
      %v636 = vld [vmem:[%s4 + $0x14] sm:$0xf]
      %v637 = vld [vmem:[%s4 + $0x18] sm:$0xff]
      %v638 = vld [vmem:[%s4 + $0x20] sm:$0xf]
      %v639 = vld [vmem:[%s4 + $0x24] sm:$0xff]
      %v640 = vld [vmem:[%s4 + $0x2c] sm:$0xf]
      %v641 = vld [vmem:[%s5] sm:$0xff]
      %v642 = vld [vmem:[%s5 + $0x8] sm:$0xff]
      %v643 = vld [vmem:[%s5 + $0x10] sm:$0xff]
      %v644 = vld [vmem:[%s5 + $0x18] sm:$0xff]
      %646 = vset.pattern.permute.xlu0 0
      %647 = vperm.xlu0 %646, %v641
      %v648 = vpop.permute.xlu0 %647
      %651 = vset.pattern.permute.xlu0 0
      %652 = vperm.xlu0 %651, %v642
      %v653 = vpop.permute.xlu0 %652
      %656 = vset.pattern.permute.xlu0 0
      %657 = vperm.xlu0 %656, %v643
      %v658 = vpop.permute.xlu0 %657
      %661 = vset.pattern.permute.xlu0 0
      %662 = vperm.xlu0 %661, %v644
      %v663 = vpop.permute.xlu0 %662
      %v673 = vunpack.c.l.b16 %v633
      %v674 = vunpack.c.h.b16 %v633
      %v675 = vunpack.c.l.b16 %v634
      %v676 = vunpack.c.l.b16 %v635
      %v677 = vunpack.c.h.b16 %v635
      %v678 = vunpack.c.l.b16 %v636
      %v679 = vunpack.c.l.b16 %v637
      %v680 = vunpack.c.h.b16 %v637
      %v681 = vunpack.c.l.b16 %v638
      %v682 = vunpack.c.l.b16 %v639
      %v683 = vunpack.c.h.b16 %v639
      %v684 = vunpack.c.l.b16 %v640
      %v685 = vpack.c.b16 %v676, %v673
      %v686 = vpack.c.b16 %v677, %v674
      %v687 = vpack.c.b16 %v678, %v675
      %v688 = vpack.c.b16 %v682, %v679
      %v689 = vpack.c.b16 %v683, %v680
      %v690 = vpack.c.b16 %v684, %v681
      %695 = vrot.lane.b32.xlu0 %v576, 7
      %v696 = vpop.permute.xlu0 %695
      %697 = vrot.lane.b32.xlu0 %v577, 7
      %v698 = vpop.permute.xlu0 %697
      %699 = vrot.lane.b32.xlu0 %v578, 7
      %v700 = vpop.permute.xlu0 %699
      %701 = vrot.lane.b32.xlu0 %v579, 7
      %v702 = vpop.permute.xlu0 %701
      %703 = vrot.lane.b32.xlu0 %v589, 7
      %v704 = vpop.permute.xlu0 %703
      %705 = vrot.lane.b32.xlu0 %v583, 7
      %v706 = vpop.permute.xlu0 %705
      %707 = vrot.lane.b32.xlu0 %v590, 7
      %v708 = vpop.permute.xlu0 %707
      %709 = vrot.lane.b32.xlu0 %v587, 7
      %v710 = vpop.permute.xlu0 %709
      %711 = vrot.lane.b32.xlu0 %v600, 7
      %v712 = vpop.permute.xlu0 %711
      %713 = vrot.lane.b32.xlu0 %v594, 7
      %v714 = vpop.permute.xlu0 %713
      %715 = vrot.lane.b32.xlu0 %v601, 7
      %v716 = vpop.permute.xlu0 %715
      %717 = vrot.lane.b32.xlu0 %v598, 7
      %v718 = vpop.permute.xlu0 %717
      %719 = vrot.lane.b32.xlu0 %v611, 7
      %v720 = vpop.permute.xlu0 %719
      %721 = vrot.lane.b32.xlu0 %v605, 7
      %v722 = vpop.permute.xlu0 %721
      %723 = vrot.lane.b32.xlu0 %v612, 7
      %v724 = vpop.permute.xlu0 %723
      %725 = vrot.lane.b32.xlu0 %v609, 7
      %v726 = vpop.permute.xlu0 %725
      %727 = vrot.lane.b32.xlu0 %v614, 7
      %v728 = vpop.permute.xlu0 %727
      %729 = vrot.lane.b32.xlu0 %v616, 7
      %v730 = vpop.permute.xlu0 %729
      %731 = vrot.lane.b32.xlu0 %v618, 7
      %v732 = vpop.permute.xlu0 %731
      %733 = vrot.lane.b32.xlu0 %v620, 7
      %v734 = vpop.permute.xlu0 %733
      %735 = vrot.lane.b32.xlu0 %v622, 7
      %v736 = vpop.permute.xlu0 %735
      %737 = vrot.lane.b32.xlu0 %v624, 7
      %v738 = vpop.permute.xlu0 %737
      %739 = vrot.lane.b32.xlu0 %v626, 7
      %v740 = vpop.permute.xlu0 %739
      %741 = vrot.lane.b32.xlu0 %v628, 7
      %v742 = vpop.permute.xlu0 %741
      %743 = vrot.lane.b32.xlu0 %v630, 7
      %v744 = vpop.permute.xlu0 %743
      %745 = vrot.lane.b32.xlu0 %v632, 7
      %v746 = vpop.permute.xlu0 %745
      %vm747 = vcmask 56320
      %v748 = vsel %vm747, %v696, %v698
      %v749 = vsel %vm747, %v700, %v702
      %v750 = vsel %vm747, %v704, %v706
      %v751 = vsel %vm747, %v708, %v710
      %v752 = vsel %vm747, %v712, %v714
      %v753 = vsel %vm747, %v716, %v718
      %v754 = vsel %vm747, %v720, %v722
      %v755 = vsel %vm747, %v724, %v726
      %vm774 = vcmask 261120
      %v776 = vsel %vm774, %v687, 0
      %v779 = vsel %vm774, %v690, 0
      %781 = vmatpush.bf16.msra.mxu0 %v755
      %782 = vmatpush.bf16.msra.mxu0 %v754
      %783 = vmatpush.bf16.msra.mxu0 %v753
      %784 = vmatpush.bf16.msra.mxu0 %v752
      %785 = vmatpush.bf16.msra.mxu0 %v751
      %786 = vmatpush.bf16.msra.mxu0 %v750
      %787 = vmatpush.bf16.msra.mxu0 %v749
      %788 = vmatpush.bf16.msra.mxu0 %v748
      %789 = vmatmul.bf16.gmra.mxu0 %v685
      %v790 = vpop.f32.mrf.mxu0
      %v791 = vadd.f32 %v648, %v790
      %v792 = vpop.f32.mrf.mxu0
      %v793 = vadd.f32 %v653, %v792
      %794 = vmatmul.bf16.gmra.mxu0 %v688
      %v795 = vpop.f32.mrf.mxu0
      %v796 = vadd.f32 %v658, %v795
      %v797 = vpop.f32.mrf.mxu0
      %v798 = vadd.f32 %v663, %v797
      %799 = vdwg.mxu0
      %800 = vmatpush.bf16.msra.mxu0 %v742
      %801 = vmatpush.bf16.msra.mxu0 %v740
      %802 = vmatpush.bf16.msra.mxu0 %v738
      %803 = vmatpush.bf16.msra.mxu0 %v736
      %804 = vmatpush.bf16.msra.mxu0 %v734
      %805 = vmatpush.bf16.msra.mxu0 %v732
      %806 = vmatpush.bf16.msra.mxu0 %v730
      %807 = vmatpush.bf16.msra.mxu0 %v728
      %808 = vmatmul.bf16.gmra.mxu0 %v686
      %v809 = vpop.f32.mrf.mxu0
      %v810 = vadd.f32 %v791, %v809
      %v811 = vpop.f32.mrf.mxu0
      %v812 = vadd.f32 %v793, %v811
      %813 = vmatmul.bf16.gmra.mxu0 %v689
      %v814 = vpop.f32.mrf.mxu0
      %v815 = vadd.f32 %v796, %v814
      %v816 = vpop.f32.mrf.mxu0
      %v817 = vadd.f32 %v798, %v816
      %818 = vdwg.mxu0
      %819 = vmatpush.bf16.msra.mxu0 0
      %820 = vmatpush.bf16.msra.mxu0 0
      %821 = vmatpush.bf16.msra.mxu0 0
      %822 = vmatpush.bf16.msra.mxu0 0
      %823 = vmatpush.bf16.msra.mxu0 0
      %824 = vmatpush.bf16.msra.mxu0 0
      %825 = vmatpush.bf16.msra.mxu0 %v746
      %826 = vmatpush.bf16.msra.mxu0 %v744
      %827 = vmatmul.bf16.gmra.mxu0 %v776
      %v828 = vpop.f32.mrf.mxu0
      %v829 = vadd.f32 %v810, %v828
      %v830 = vpop.f32.mrf.mxu0
      %v831 = vadd.f32 %v812, %v830
      %832 = vmatmul.bf16.gmra.mxu0 %v779
      %v833 = vpop.f32.mrf.mxu0
      %v834 = vadd.f32 %v815, %v833
      %v835 = vpop.f32.mrf.mxu0
      %v836 = vadd.f32 %v817, %v835
      %837 = vdwg.mxu0
      %v838 = vmax.f32 %v829, 0.0
      %v839 = vmax.f32 %v831, 0.0
      %v840 = vmax.f32 %v834, 0.0
      %v841 = vmax.f32 %v836, 0.0
      %v842 = vpack.c.bf16 %v838, %v838
      %v843 = vpack.c.bf16 %v839, %v839
      %v844 = vpack.c.bf16 %v840, %v840
      %v845 = vpack.c.bf16 %v841, %v841
      %846 = vst.msk [vmem:[%s271] sm:$0xf] %vm555, %v842
      %847 = vst.msk [vmem:[%s271 + $0x4] sm:$0xf] %vm555, %v843
      %848 = vst.msk [vmem:[%s271 + $0x8] sm:$0xf] %vm555, %v844
      %849 = vst.msk [vmem:[%s271 + $0xc] sm:$0xf] %vm555, %v845
      %p850 = scmp.lt.s32.totalorder %s17, 1
      %s851 = scalar_select %p850, %s17, 1
      %s852 = smul.addr %s851, 4
      %s853 = smul.addr %s852, 4
      %s854 = scalar_lea.vmem %s6, %s853
      // Predicated region
      $region45: #{unet_vflow_forward.16} parent=43 // pred_check
        %p855 = pneg %p171
      $region46: #{unet_vflow_forward.16} parent=43 // pred_check_branch
        %857 = sbr.rel (%p855) target = $region48
      $region47: #{unet_vflow_forward.16} parent=43 // pred_region
        _
      $region48: #{unet_vflow_forward.16} parent=43 // pred_fallthru
        _
    $region44: #{unet_vflow_forward.16} parent=5 // pred_fallthru
      _
    %p858 = scmp.le.s32.totalorder 2, %s12
    // Predicated region
    $region49: #{unet_vflow_forward.16} parent=5 // pred_check
      %p859 = pneg %p858
    $region50: #{unet_vflow_forward.16} parent=5 // pred_check_branch
      %861 = sbr.rel (%p859) target = $region52
    $region51: #{unet_vflow_forward.16} parent=5 // pred_region
      %s862 = ssub.s32 %s12, 2
      // Predicated region
      $region53: #{unet_vflow_forward.16} parent=51 // pred_check
        %p863 = pneg %p177
      $region54: #{unet_vflow_forward.16} parent=51 // pred_check_branch
        %865 = sbr.rel (%p863) target = $region56
      $region55: #{unet_vflow_forward.16} parent=51 // pred_region
        %p866 = scmp.lt.s32.totalorder %s18, 1
        %s867 = scalar_select %p866, %s18, 1
        %s868 = smul.addr %s867, 4
        %s869 = smul.addr %s868, 4
        %s870 = scalar_lea.vmem %s6, %s869
      $region56: #{unet_vflow_forward.16} parent=51 // pred_fallthru
        _
    $region52: #{unet_vflow_forward.16} parent=5 // pred_fallthru
      _
  $region6: #{unet_vflow_forward.16} parent=0 // loop_footer
    %s16 = sadd.s32 1, %s12
  $region7: #{unet_vflow_forward.16} parent=0 // loop_footer_branch
    %11 = sbr.rel target = $region3
  $region8: #{unet_vflow_forward.16} parent=0 // loop_exit
    _

// kernel: unet_vflow_forward.13
$region0: #{unet_vflow_forward.13}
  #allocation0 [shape = 'u32[]', space=smem, size = 0x4, offset = 0x4, fixed_abs, tag = 'smem constant byte address 0x4 - core index']
  #allocation1 [shape = 'u32[72,128]{1,0:T(1,128)}', space=vmem, size = 0x9000, scoped, tag = 'internal scratch']
  %s0 = inlined_call_operand.vmem [shape: bf16[2,2,8,64], index: 0, kind: input, shape index: {}]
  %s1 = inlined_call_operand.vmem [shape: bf16[8,8], index: 1, kind: input, shape index: {}]
  %s2 = inlined_call_operand.vmem [shape: f32[8,1], index: 2, kind: input, shape index: {}]
  %s3 = inlined_call_operand.vmem [shape: f32[8,1], index: 3, kind: input, shape index: {}]
  %s4 = inlined_call_operand.vmem [shape: f32[8,1], index: 4, kind: input, shape index: {}]
  %s5 = inlined_call_operand.vmem [shape: f32[1,8], index: 5, kind: input, shape index: {}]
  %s6 = inlined_call_operand.vmem [shape: bf16[2,8,64], index: 6, kind: output, shape index: {}]
  %s7 = sld [smem:[#allocation0]]
  $region57: #{unet_vflow_forward.13} parent=0
    _
  %s9 = ssub.s32 1, %s7
  %s10 = scalar_select 0, %s9, %s7
  loop: start=0, step=1, limit=4
  $region2: #{unet_vflow_forward.13} parent=0 // loop_pre_header
    _
  $region3: #{unet_vflow_forward.13} parent=0 // loop_header
    %s12 = sphi 0, %s16
    %p13 = scmp.ge.s32.totalorder %s12, 4
    %s22 = sphi 0, %s24
    %s25 = sphi 0, %s22
    %s26 = sphi 0, %s25
    %s42 = sphi 0, %s26
    %s46 = sphi 0, %s46
    %s48 = sphi 0, %s46
    %s49 = sphi 0, %s48
    %s63 = sphi 0, %s49
    %s67 = sphi 0, %s67
    %s69 = sphi 0, %s67
    %s70 = sphi 0, %s69
    %s84 = sphi 0, %s70
    %s88 = sphi 0, %s88
    %s90 = sphi 0, %s88
    %s91 = sphi 0, %s90
    %s105 = sphi 0, %s91
    %s109 = sphi 0, %s109
    %s111 = sphi 0, %s109
    %s112 = sphi 0, %s111
    %s126 = sphi 0, %s112
    %s130 = sphi 0, %s130
    %s132 = sphi 0, %s130
    %s133 = sphi 0, %s132
    %s147 = sphi 0, %s133
    %s153 = sphi 0, %s155
    %s156 = sphi 0, %s153
    %s157 = sphi 0, %s156
    %s173 = sphi 0, %s157
  $region4: #{unet_vflow_forward.13} parent=0 // loop_header_branch
    %15 = sbr.rel (%p13) target = $region8
  $region5: #{unet_vflow_forward.13} parent=0 // loop_body
    %s17 = ssub.s32 %s12, 1
    %s18 = ssub.s32 %s12, 2
    %s19 = sadd.s32 %s12, 1
    %s20 = ssub.s32 %s12, %s19
    %p21 = scmp.eq.s32.totalorder %s20, 0
    %s23 = sadd.s32 %s22, 1
    %s24 = scalar_select %p21, %s22, %s23
    %p27 = pneg %p21
    %p28 = scmp.eq.s32.totalorder %s12, 1
    %p29 = por %p27, %p28
    %p30 = scmp.ne.s32.totalorder %s22, %s25
    %p31 = scmp.eq.s32.totalorder %s12, 0
    %p32 = por %p30, %p31
    %p33 = scmp.ne.s32.totalorder %s22, %s25
    %p34 = scmp.eq.s32.totalorder %s17, 1
    %p35 = por %p33, %p34
    %p36 = scmp.ne.s32.totalorder %s25, %s26
    %p37 = scmp.eq.s32.totalorder %s17, 0
    %p38 = por %p36, %p37
    %p39 = scmp.ne.s32.totalorder %s25, %s26
    %p40 = scmp.eq.s32.totalorder %s18, 1
    %p41 = por %p39, %p40
    %p43 = scmp.ne.s32.totalorder %s26, %s42
    %p44 = scmp.eq.s32.totalorder %s18, 0
    %p45 = por %p43, %p44
    %s47 = sadd.s32 %s46, 1
    %p50 = scmp.eq.s32.totalorder %s12, 1
    %p51 = scmp.ne.s32.totalorder %s46, %s48
    %p52 = scmp.eq.s32.totalorder %s12, 0
    %p53 = por %p51, %p52
    %p54 = scmp.ne.s32.totalorder %s46, %s48
    %p55 = scmp.eq.s32.totalorder %s17, 1
    %p56 = por %p54, %p55
    %p57 = scmp.ne.s32.totalorder %s48, %s49
    %p58 = scmp.eq.s32.totalorder %s17, 0
    %p59 = por %p57, %p58
    %p60 = scmp.ne.s32.totalorder %s48, %s49
    %p61 = scmp.eq.s32.totalorder %s18, 1
    %p62 = por %p60, %p61
    %p64 = scmp.ne.s32.totalorder %s49, %s63
    %p65 = scmp.eq.s32.totalorder %s18, 0
    %p66 = por %p64, %p65
    %s68 = sadd.s32 %s67, 1
    %p71 = scmp.eq.s32.totalorder %s12, 1
    %p72 = scmp.ne.s32.totalorder %s67, %s69
    %p73 = scmp.eq.s32.totalorder %s12, 0
    %p74 = por %p72, %p73
    %p75 = scmp.ne.s32.totalorder %s67, %s69
    %p76 = scmp.eq.s32.totalorder %s17, 1
    %p77 = por %p75, %p76
    %p78 = scmp.ne.s32.totalorder %s69, %s70
    %p79 = scmp.eq.s32.totalorder %s17, 0
    %p80 = por %p78, %p79
    %p81 = scmp.ne.s32.totalorder %s69, %s70
    %p82 = scmp.eq.s32.totalorder %s18, 1
    %p83 = por %p81, %p82
    %p85 = scmp.ne.s32.totalorder %s70, %s84
    %p86 = scmp.eq.s32.totalorder %s18, 0
    %p87 = por %p85, %p86
    %s89 = sadd.s32 %s88, 1
    %p92 = scmp.eq.s32.totalorder %s12, 1
    %p93 = scmp.ne.s32.totalorder %s88, %s90
    %p94 = scmp.eq.s32.totalorder %s12, 0
    %p95 = por %p93, %p94
    %p96 = scmp.ne.s32.totalorder %s88, %s90
    %p97 = scmp.eq.s32.totalorder %s17, 1
    %p98 = por %p96, %p97
    %p99 = scmp.ne.s32.totalorder %s90, %s91
    %p100 = scmp.eq.s32.totalorder %s17, 0
    %p101 = por %p99, %p100
    %p102 = scmp.ne.s32.totalorder %s90, %s91
    %p103 = scmp.eq.s32.totalorder %s18, 1
    %p104 = por %p102, %p103
    %p106 = scmp.ne.s32.totalorder %s91, %s105
    %p107 = scmp.eq.s32.totalorder %s18, 0
    %p108 = por %p106, %p107
    %s110 = sadd.s32 %s109, 1
    %p113 = scmp.eq.s32.totalorder %s12, 1
    %p114 = scmp.ne.s32.totalorder %s109, %s111
    %p115 = scmp.eq.s32.totalorder %s12, 0
    %p116 = por %p114, %p115
    %p117 = scmp.ne.s32.totalorder %s109, %s111
    %p118 = scmp.eq.s32.totalorder %s17, 1
    %p119 = por %p117, %p118
    %p120 = scmp.ne.s32.totalorder %s111, %s112
    %p121 = scmp.eq.s32.totalorder %s17, 0
    %p122 = por %p120, %p121
    %p123 = scmp.ne.s32.totalorder %s111, %s112
    %p124 = scmp.eq.s32.totalorder %s18, 1
    %p125 = por %p123, %p124
    %p127 = scmp.ne.s32.totalorder %s112, %s126
    %p128 = scmp.eq.s32.totalorder %s18, 0
    %p129 = por %p127, %p128
    %s131 = sadd.s32 %s130, 1
    %p134 = scmp.eq.s32.totalorder %s12, 1
    %p135 = scmp.ne.s32.totalorder %s130, %s132
    %p136 = scmp.eq.s32.totalorder %s12, 0
    %p137 = por %p135, %p136
    %p138 = scmp.ne.s32.totalorder %s130, %s132
    %p139 = scmp.eq.s32.totalorder %s17, 1
    %p140 = por %p138, %p139
    %p141 = scmp.ne.s32.totalorder %s132, %s133
    %p142 = scmp.eq.s32.totalorder %s17, 0
    %p143 = por %p141, %p142
    %p144 = scmp.ne.s32.totalorder %s132, %s133
    %p145 = scmp.eq.s32.totalorder %s18, 1
    %p146 = por %p144, %p145
    %p148 = scmp.ne.s32.totalorder %s133, %s147
    %p149 = scmp.eq.s32.totalorder %s18, 0
    %p150 = por %p148, %p149
    %s151 = ssub.s32 %s12, %s19
    %p152 = scmp.eq.s32.totalorder %s151, 0
    %s154 = sadd.s32 %s153, 1
    %s155 = scalar_select %p152, %s153, %s154
    %p158 = pneg %p152
    %p159 = scmp.eq.s32.totalorder %s12, 1
    %p160 = por %p158, %p159
    %p161 = scmp.ne.s32.totalorder %s153, %s156
    %p162 = scmp.eq.s32.totalorder %s12, 0
    %p163 = por %p161, %p162
    %p164 = scmp.ne.s32.totalorder %s153, %s156
    %p165 = scmp.eq.s32.totalorder %s17, 1
    %p166 = por %p164, %p165
    %p167 = scmp.ne.s32.totalorder %s156, %s157
    %p168 = scmp.eq.s32.totalorder %s17, 0
    %p169 = por %p167, %p168
    %p170 = scmp.ne.s32.totalorder %s156, %s157
    %p171 = scmp.eq.s32.totalorder %s18, 1
    %p172 = por %p170, %p171
    %p174 = scmp.ne.s32.totalorder %s157, %s173
    %p175 = scmp.eq.s32.totalorder %s18, 0
    %p176 = por %p174, %p175
    %p177 = scmp.le.s32.totalorder 1, %s12
    %p178 = scmp.lt.s32.totalorder %s12, 3
    %p179 = pnand %p177, %p178
    %p180 = pneg %p179
    // Predicated region
    $region9: #{unet_vflow_forward.13} parent=5 // pred_check
      _
    $region10: #{unet_vflow_forward.13} parent=5 // pred_check_branch
      %182 = sbr.rel (%p179) target = $region12
    $region11: #{unet_vflow_forward.13} parent=5 // pred_region
      %s183 = ssub.s32 %s12, 1
      // Predicated region
      $region13: #{unet_vflow_forward.13} parent=11 // pred_check
        %p184 = pneg %p59
      $region14: #{unet_vflow_forward.13} parent=11 // pred_check_branch
        %186 = sbr.rel (%p184) target = $region16
      $region15: #{unet_vflow_forward.13} parent=11 // pred_region
        _
      $region16: #{unet_vflow_forward.13} parent=11 // pred_fallthru
        _
      // Predicated region
      $region17: #{unet_vflow_forward.13} parent=11 // pred_check
        %p187 = pneg %p80
      $region18: #{unet_vflow_forward.13} parent=11 // pred_check_branch
        %189 = sbr.rel (%p187) target = $region20
      $region19: #{unet_vflow_forward.13} parent=11 // pred_region
        _
      $region20: #{unet_vflow_forward.13} parent=11 // pred_fallthru
        _
      // Predicated region
      $region21: #{unet_vflow_forward.13} parent=11 // pred_check
        %p190 = pneg %p101
      $region22: #{unet_vflow_forward.13} parent=11 // pred_check_branch
        %192 = sbr.rel (%p190) target = $region24
      $region23: #{unet_vflow_forward.13} parent=11 // pred_region
        _
      $region24: #{unet_vflow_forward.13} parent=11 // pred_fallthru
        _
      // Predicated region
      $region25: #{unet_vflow_forward.13} parent=11 // pred_check
        %p193 = pneg %p122
      $region26: #{unet_vflow_forward.13} parent=11 // pred_check_branch
        %195 = sbr.rel (%p193) target = $region28
      $region27: #{unet_vflow_forward.13} parent=11 // pred_region
        _
      $region28: #{unet_vflow_forward.13} parent=11 // pred_fallthru
        _
      // Predicated region
      $region29: #{unet_vflow_forward.13} parent=11 // pred_check
        %p196 = pneg %p143
      $region30: #{unet_vflow_forward.13} parent=11 // pred_check_branch
        %198 = sbr.rel (%p196) target = $region32
      $region31: #{unet_vflow_forward.13} parent=11 // pred_region
        _
      $region32: #{unet_vflow_forward.13} parent=11 // pred_fallthru
        _
    $region12: #{unet_vflow_forward.13} parent=5 // pred_fallthru
      _
    %p199 = scmp.lt.s32.totalorder %s12, 2
    // Predicated region
    $region33: #{unet_vflow_forward.13} parent=5 // pred_check
      %p200 = pneg %p199
    $region34: #{unet_vflow_forward.13} parent=5 // pred_check_branch
      %202 = sbr.rel (%p200) target = $region36
    $region35: #{unet_vflow_forward.13} parent=5 // pred_region
      // Predicated region
      $region37: #{unet_vflow_forward.13} parent=35 // pred_check
        %p203 = pneg %p32
      $region38: #{unet_vflow_forward.13} parent=35 // pred_check_branch
        %205 = sbr.rel (%p203) target = $region40
      $region39: #{unet_vflow_forward.13} parent=35 // pred_region
        %p206 = scmp.lt.s32.totalorder %s12, 1
        %s207 = scalar_select %p206, %s12, 1
        %s208 = smul.addr %s207, 2
        %s209 = smul.addr %s208, 4
        %s210 = scalar_lea.vmem %s0, %s209
      $region40: #{unet_vflow_forward.13} parent=35 // pred_fallthru
        _
    $region36: #{unet_vflow_forward.13} parent=5 // pred_fallthru
      _
    %p211 = scmp.le.s32.totalorder 1, %s12
    %p212 = scmp.lt.s32.totalorder %s12, 3
    %p213 = pnand %p211, %p212
    %p214 = pneg %p213
    // Predicated region
    $region41: #{unet_vflow_forward.13} parent=5 // pred_check
      _
    $region42: #{unet_vflow_forward.13} parent=5 // pred_check_branch
      %216 = sbr.rel (%p213) target = $region44
    $region43: #{unet_vflow_forward.13} parent=5 // pred_region
      %s217 = ssub.s32 %s12, 1
      %p218 = scmp.lt.s32.totalorder %s17, 1
      %s219 = scalar_select %p218, %s17, 1
      %s220 = smul.addr %s219, 2
      %s221 = smul.addr %s220, 4
      %s222 = scalar_lea.vmem %s0, %s221
      %p223 = pneg %p38
      %p224 = pneg %p35
      %p225 = pneg %p59
      %p226 = pneg %p56
      %p227 = pneg %p80
      %p228 = pneg %p77
      %p229 = pneg %p101
      %p230 = pneg %p98
      %p231 = pneg %p122
      %p232 = pneg %p119
      %p233 = pneg %p143
      %p234 = pneg %p140
      %p235 = pneg %p169
      %p236 = pneg %p166
      %p237 = scmp.lt.s32.totalorder %s17, 1
      %s238 = scalar_select %p237, %s17, 1
      %s239 = smul.addr %s238, 4
      %s240 = scalar_lea.vmem %s6, %s239
      %p241 = scmp.lt.s32.totalorder %s17, 1
      %s242 = scalar_select %p241, %s17, 1
      %s243 = smul.addr %s242, 2
      %s244 = smul.addr %s243, 4
      %s245 = scalar_lea.vmem %s0, %s244
      %p246 = scmp.lt.s32.totalorder %s17, 1
      %s247 = scalar_select %p246, %s17, 1
      %s248 = smul.addr %s247, 4
      %s249 = scalar_lea.vmem %s6, %s248
      %v251 = vld [vmem:[%s245] sm:$0xf]
      %s252 = scalar_lea.vmem %s245, 4
      %v253 = vld [vmem:[%s252] sm:$0xf]
      %v255 = vunpack.c.l.b16 %v253
      %v256 = vpack.c.b16 %v255, %v255
      %257 = vrot.lane.b32.xlu0 %v256, 64
      %v258 = vpop.permute.xlu0 %257
      %vm259 = vcmask 523264
      %v262 = vsel %vm259, %v251, %v258
      %v263 = vld [vmem:[%s1] sm:$0xf]
      %v264 = vld [vmem:[%s2] sm:$0xff]
      %266 = vset.pattern.permute.xlu0 0
      %267 = vperm.xlu0 %266, %v264
      %v268 = vpop.permute.xlu0 %267
      %vm270 = vcmask 64512
      %v272 = vsel %vm270, %v263, 0
      %vm274 = vcmask 1043456
      %v275 = vsel %vm274, %v262, 0
      %277 = vmatpush.bf16.msra.mxu0 0
      %278 = vmatpush.bf16.msra.mxu0 0
      %279 = vmatpush.bf16.msra.mxu0 0
      %280 = vmatpush.bf16.msra.mxu0 0
      %281 = vmatpush.bf16.msra.mxu0 0
      %282 = vmatpush.bf16.msra.mxu0 0
      %283 = vmatpush.bf16.msra.mxu0 0
      %284 = vmatpush.bf16.msra.mxu0 %v275
      %285 = vmatmul.bf16.gmra.mxu0 %v272
      %v286 = vpop.f32.mrf.mxu0
      %v287 = vadd.f32 %v268, %v286
      %v288 = vpop.f32.mrf.mxu0
      %289 = vdwg.mxu0
      %v291 = vsel %vm270, 0.125, 0
      %293 = vmatpush.msra.mxu0 0.0
      %294 = vmatpush.msra.mxu0 0.0
      %295 = vmatpush.msra.mxu0 0.0
      %296 = vmatpush.msra.mxu0 0.0
      %297 = vmatpush.msra.mxu0 0.0
      %298 = vmatpush.msra.mxu0 0.0
      %299 = vmatpush.msra.mxu0 0.0
      %300 = vmatpush.msra.mxu0 0.0
      %301 = vmatpush.msra.mxu0 0.0
      %302 = vmatpush.msra.mxu0 0.0
      %303 = vmatpush.msra.mxu0 0.0
      %304 = vmatpush.msra.mxu0 0.0
      %305 = vmatpush.msra.mxu0 0.0
      %306 = vmatpush.msra.mxu0 0.0
      %307 = vmatpush.msra.mxu0 0.0
      %308 = vmatpush.msra.mxu0 %v287
      %309 = vmatmul.f32.gmra.mxu0 %v291
      %v310 = vpop.f32.mrf.mxu0
      %v311 = vadd.f32 0.0, %v310
      %312 = vdwg.mxu0
      %v313 = vperm.slane %v311, 0
      %v314 = vsub.f32 %v287, %v313
      %v315 = vmul.f32 %v314, %v314
      %316 = vmatpush.msra.mxu0 0.0
      %317 = vmatpush.msra.mxu0 0.0
      %318 = vmatpush.msra.mxu0 0.0
      %319 = vmatpush.msra.mxu0 0.0
      %320 = vmatpush.msra.mxu0 0.0
      %321 = vmatpush.msra.mxu0 0.0
      %322 = vmatpush.msra.mxu0 0.0
      %323 = vmatpush.msra.mxu0 0.0
      %324 = vmatpush.msra.mxu0 0.0
      %325 = vmatpush.msra.mxu0 0.0
      %326 = vmatpush.msra.mxu0 0.0
      %327 = vmatpush.msra.mxu0 0.0
      %328 = vmatpush.msra.mxu0 0.0
      %329 = vmatpush.msra.mxu0 0.0
      %330 = vmatpush.msra.mxu0 0.0
      %331 = vmatpush.msra.mxu0 %v315
      %332 = vmatmul.f32.gmra.mxu0 %v291
      %v333 = vpop.f32.mrf.mxu0
      %v334 = vadd.f32 1e-05, %v333
      %335 = vdwg.mxu0
      %v336 = vrsqrt.pop %v334
      %v337 = vmul.f32 %v336, %v334
      %v338 = vmul.f32 %v337, %v336
      %v339 = vmul.f32 0.5, %v338
      %v340 = vsub.f32 1.5, %v339
      %v341 = vmul.f32 %v336, %v340
      %vm342 = vweird.f32 %v334
      %vm343 = vweird.f32 %v336
      %vm344 = vmor %vm342, %vm343
      %v345 = vsel %vm344, %v336, %v341
      %v346 = vperm.slane %v345, 0
      %v347 = vmul.f32 %v314, %v346
      %v348 = vld [vmem:[%s3] sm:$0xff]
      %350 = vset.pattern.permute.xlu0 0
      %351 = vperm.xlu0 %350, %v348
      %v352 = vpop.permute.xlu0 %351
      %v354 = vmul.f32 %v347, %v352
      %v355 = vld [vmem:[%s4] sm:$0xff]
      %357 = vset.pattern.permute.xlu0 0
      %358 = vperm.xlu0 %357, %v355
      %v359 = vpop.permute.xlu0 %358
      %v361 = vadd.f32 %v354, %v359
      %v362 = vmul.f32 %v361, 0.5
      %v363 = vmul.f32 %v361, 0.044715
      %v364 = vmul.f32 %v363, %v361
      %v365 = vmul.f32 %v364, %v361
      %v366 = vadd.f32 %v361, %v365
      %v367 = vmul.f32 %v366, 0.7978846
      %v368 = vtanh.pop %v367
      %v369 = vadd.f32 %v368, 1.0
      %v370 = vmul.f32 %v362, %v369
      %v371 = vld [vmem:[%s5] sm:$0x1]
      %v373 = vsel %vm270, %v371, 0
      %375 = vmatpush.msra.mxu0 0.0
      %376 = vmatpush.msra.mxu0 0.0
      %377 = vmatpush.msra.mxu0 0.0
      %378 = vmatpush.msra.mxu0 0.0
      %379 = vmatpush.msra.mxu0 0.0
      %380 = vmatpush.msra.mxu0 0.0
      %381 = vmatpush.msra.mxu0 0.0
      %382 = vmatpush.msra.mxu0 0.0
      %383 = vmatpush.msra.mxu0 0.0
      %384 = vmatpush.msra.mxu0 0.0
      %385 = vmatpush.msra.mxu0 0.0
      %386 = vmatpush.msra.mxu0 0.0
      %387 = vmatpush.msra.mxu0 0.0
      %388 = vmatpush.msra.mxu0 0.0
      %389 = vmatpush.msra.mxu0 0.0
      %390 = vmatpush.msra.mxu0 %v370
      %391 = vmatmul.f32.gmra.mxu0 %v373
      %v392 = vpop.f32.mrf.mxu0
      %v393 = vadd.f32 0.0, %v392
      %394 = vdwg.mxu0
      %396 = vrot.lane.b32.xlu0 %v393, 64
      %v397 = vpop.permute.xlu0 %396
      %v399 = vmax.f32 %v393, %v397
      %v400 = vsub.f32 %v393, %v399
      %v401 = vmul.f32 %v400, 1.442695
      %v402 = vpow.pop %v401
      %404 = vrot.lane.b32.xlu0 %v399, 64
      %v405 = vpop.permute.xlu0 %404
      %v407 = vsub.f32 %v393, %v405
      %v408 = vmul.f32 %v407, 1.442695
      %v409 = vpow.pop %v408
      %411 = vrot.lane.b32.xlu0 %v409, 64
      %v412 = vpop.permute.xlu0 %411
      %v414 = vadd.f32 %v402, %v412
      %v415 = vrcp.pop %v414
      %v416 = vmul.f32 %v414, %v415
      %v417 = vsub.f32 1.0, %v416
      %v418 = vmul.f32 %v415, %v417
      %v419 = vadd.f32 %v415, %v418
      %vm420 = vweird.f32 %v414
      %vm421 = vweird.f32 %v415
      %vm422 = vmor %vm420, %vm421
      %v423 = vsel %vm422, %v415, %v419
      %v424 = vand.u32 2147483647, %v414
      %vm425 = vcmp.eq.f32.partialorder %v424, 8.507059e+37
      %v426 = vand.u32 %v414, 2147483648
      %v427 = vor.u32 1.1754944e-38, %v426
      %v428 = vsel %vm425, %v427, %v423
      %v429 = vmul.f32 1.0, %v428
      %v430 = vmul.f32 %v402, %v429
      %v431 = vunpack.c.l.bf16 %v251
      %v432 = vperm.slane %v430, 0
      %v433 = vmul.f32 %v432, %v431
      %435 = vrot.lane.b32.xlu0 %v429, 64
      %v436 = vpop.permute.xlu0 %435
      %v438 = vmul.f32 %v409, %v436
      %v439 = vunpack.c.l.bf16 %v253
      %v440 = vperm.slane %v438, 0
      %442 = vrot.lane.b32.xlu0 %v439, 64
      %v443 = vpop.permute.xlu0 %442
      %v445 = vmul.f32 %v440, %v443
      %447 = vrot.lane.b32.xlu0 %v445, 64
      %v448 = vpop.permute.xlu0 %447
      %v450 = vadd.f32 %v433, %v448
      %v451 = vpack.c.bf16 %v450, %v450
      %vm452 = vcmask 519168
      %453 = vst.msk [vmem:[%s249] sm:$0xf] %vm452, %v451
      %p454 = scmp.lt.s32.totalorder %s17, 1
      %s455 = scalar_select %p454, %s17, 1
      %s456 = smul.addr %s455, 4
      %s457 = scalar_lea.vmem %s6, %s456
      // Predicated region
      $region45: #{unet_vflow_forward.13} parent=43 // pred_check
        %p458 = pneg %p166
      $region46: #{unet_vflow_forward.13} parent=43 // pred_check_branch
        %460 = sbr.rel (%p458) target = $region48
      $region47: #{unet_vflow_forward.13} parent=43 // pred_region
        _
      $region48: #{unet_vflow_forward.13} parent=43 // pred_fallthru
        _
    $region44: #{unet_vflow_forward.13} parent=5 // pred_fallthru
      _
    %p461 = scmp.le.s32.totalorder 2, %s12
    // Predicated region
    $region49: #{unet_vflow_forward.13} parent=5 // pred_check
      %p462 = pneg %p461
    $region50: #{unet_vflow_forward.13} parent=5 // pred_check_branch
      %464 = sbr.rel (%p462) target = $region52
    $region51: #{unet_vflow_forward.13} parent=5 // pred_region
      %s465 = ssub.s32 %s12, 2
      // Predicated region
      $region53: #{unet_vflow_forward.13} parent=51 // pred_check
        %p466 = pneg %p172
      $region54: #{unet_vflow_forward.13} parent=51 // pred_check_branch
        %468 = sbr.rel (%p466) target = $region56
      $region55: #{unet_vflow_forward.13} parent=51 // pred_region
        %p469 = scmp.lt.s32.totalorder %s18, 1
        %s470 = scalar_select %p469, %s18, 1
        %s471 = smul.addr %s470, 4
        %s472 = scalar_lea.vmem %s6, %s471
      $region56: #{unet_vflow_forward.13} parent=51 // pred_fallthru
        _
    $region52: #{unet_vflow_forward.13} parent=5 // pred_fallthru
      _
  $region6: #{unet_vflow_forward.13} parent=0 // loop_footer
    %s16 = sadd.s32 1, %s12
  $region7: #{unet_vflow_forward.13} parent=0 // loop_footer_branch
    %11 = sbr.rel target = $region3
  $region8: #{unet_vflow_forward.13} parent=0 // loop_exit
    _

// kernel: unet_vflow_forward.17
$region0: #{unet_vflow_forward.17}
  #allocation0 [shape = 'u32[]', space=smem, size = 0x4, offset = 0x4, fixed_abs, tag = 'smem constant byte address 0x4 - core index']
  #allocation1 [shape = 'u32[72,128]{1,0:T(1,128)}', space=vmem, size = 0x9000, scoped, tag = 'internal scratch']
  #allocation2 [shape = 'bf16[16,256]{1,0:T(8,128)(2,1)}', space=vmem, size = 0x2000, scoped, tag = 'scratch operand']
  %s0 = inlined_call_operand.vmem [shape: bf16[2,32,110], index: 0, kind: input, shape index: {}]
  %s1 = inlined_call_operand.vmem [shape: bf16[2,8,110], index: 1, kind: input, shape index: {}]
  %s2 = inlined_call_operand.vmem [shape: bf16[16,360], index: 2, kind: input, shape index: {}]
  %s3 = inlined_call_operand.vmem [shape: f32[16,1], index: 3, kind: input, shape index: {}]
  %s4 = inlined_call_operand.vmem [shape: bf16[16,144], index: 4, kind: input, shape index: {}]
  %s5 = inlined_call_operand.vmem [shape: f32[16,1], index: 5, kind: input, shape index: {}]
  %s6 = inlined_call_operand.vmem [shape: bf16[2,16,80], index: 6, kind: output, shape index: {}]
  %s7 = sld [smem:[#allocation0]]
  $region57: #{unet_vflow_forward.17} parent=0
    _
  %s9 = ssub.s32 1, %s7
  %s10 = scalar_select 0, %s9, %s7
  loop: start=0, step=1, limit=4
  $region2: #{unet_vflow_forward.17} parent=0 // loop_pre_header
    _
  $region3: #{unet_vflow_forward.17} parent=0 // loop_header
    %s12 = sphi 0, %s16
    %p13 = scmp.ge.s32.totalorder %s12, 4
    %s22 = sphi 0, %s24
    %s25 = sphi 0, %s22
    %s26 = sphi 0, %s25
    %s42 = sphi 0, %s26
    %s48 = sphi 0, %s50
    %s51 = sphi 0, %s48
    %s52 = sphi 0, %s51
    %s68 = sphi 0, %s52
    %s72 = sphi 0, %s72
    %s74 = sphi 0, %s72
    %s75 = sphi 0, %s74
    %s89 = sphi 0, %s75
    %s93 = sphi 0, %s93
    %s95 = sphi 0, %s93
    %s96 = sphi 0, %s95
    %s110 = sphi 0, %s96
    %s114 = sphi 0, %s114
    %s116 = sphi 0, %s114
    %s117 = sphi 0, %s116
    %s131 = sphi 0, %s117
    %s135 = sphi 0, %s135
    %s137 = sphi 0, %s135
    %s138 = sphi 0, %s137
    %s152 = sphi 0, %s138
    %s158 = sphi 0, %s160
    %s161 = sphi 0, %s158
    %s162 = sphi 0, %s161
    %s178 = sphi 0, %s162
  $region4: #{unet_vflow_forward.17} parent=0 // loop_header_branch
    %15 = sbr.rel (%p13) target = $region8
  $region5: #{unet_vflow_forward.17} parent=0 // loop_body
    %s17 = ssub.s32 %s12, 1
    %s18 = ssub.s32 %s12, 2
    %s19 = sadd.s32 %s12, 1
    %s20 = ssub.s32 %s12, %s19
    %p21 = scmp.eq.s32.totalorder %s20, 0
    %s23 = sadd.s32 %s22, 1
    %s24 = scalar_select %p21, %s22, %s23
    %p27 = pneg %p21
    %p28 = scmp.eq.s32.totalorder %s12, 1
    %p29 = por %p27, %p28
    %p30 = scmp.ne.s32.totalorder %s22, %s25
    %p31 = scmp.eq.s32.totalorder %s12, 0
    %p32 = por %p30, %p31
    %p33 = scmp.ne.s32.totalorder %s22, %s25
    %p34 = scmp.eq.s32.totalorder %s17, 1
    %p35 = por %p33, %p34
    %p36 = scmp.ne.s32.totalorder %s25, %s26
    %p37 = scmp.eq.s32.totalorder %s17, 0
    %p38 = por %p36, %p37
    %p39 = scmp.ne.s32.totalorder %s25, %s26
    %p40 = scmp.eq.s32.totalorder %s18, 1
    %p41 = por %p39, %p40
    %p43 = scmp.ne.s32.totalorder %s26, %s42
    %p44 = scmp.eq.s32.totalorder %s18, 0
    %p45 = por %p43, %p44
    %s46 = ssub.s32 %s12, %s19
    %p47 = scmp.eq.s32.totalorder %s46, 0
    %s49 = sadd.s32 %s48, 1
    %s50 = scalar_select %p47, %s48, %s49
    %p53 = pneg %p47
    %p54 = scmp.eq.s32.totalorder %s12, 1
    %p55 = por %p53, %p54
    %p56 = scmp.ne.s32.totalorder %s48, %s51
    %p57 = scmp.eq.s32.totalorder %s12, 0
    %p58 = por %p56, %p57
    %p59 = scmp.ne.s32.totalorder %s48, %s51
    %p60 = scmp.eq.s32.totalorder %s17, 1
    %p61 = por %p59, %p60
    %p62 = scmp.ne.s32.totalorder %s51, %s52
    %p63 = scmp.eq.s32.totalorder %s17, 0
    %p64 = por %p62, %p63
    %p65 = scmp.ne.s32.totalorder %s51, %s52
    %p66 = scmp.eq.s32.totalorder %s18, 1
    %p67 = por %p65, %p66
    %p69 = scmp.ne.s32.totalorder %s52, %s68
    %p70 = scmp.eq.s32.totalorder %s18, 0
    %p71 = por %p69, %p70
    %s73 = sadd.s32 %s72, 1
    %p76 = scmp.eq.s32.totalorder %s12, 1
    %p77 = scmp.ne.s32.totalorder %s72, %s74
    %p78 = scmp.eq.s32.totalorder %s12, 0
    %p79 = por %p77, %p78
    %p80 = scmp.ne.s32.totalorder %s72, %s74
    %p81 = scmp.eq.s32.totalorder %s17, 1
    %p82 = por %p80, %p81
    %p83 = scmp.ne.s32.totalorder %s74, %s75
    %p84 = scmp.eq.s32.totalorder %s17, 0
    %p85 = por %p83, %p84
    %p86 = scmp.ne.s32.totalorder %s74, %s75
    %p87 = scmp.eq.s32.totalorder %s18, 1
    %p88 = por %p86, %p87
    %p90 = scmp.ne.s32.totalorder %s75, %s89
    %p91 = scmp.eq.s32.totalorder %s18, 0
    %p92 = por %p90, %p91
    %s94 = sadd.s32 %s93, 1
    %p97 = scmp.eq.s32.totalorder %s12, 1
    %p98 = scmp.ne.s32.totalorder %s93, %s95
    %p99 = scmp.eq.s32.totalorder %s12, 0
    %p100 = por %p98, %p99
    %p101 = scmp.ne.s32.totalorder %s93, %s95
    %p102 = scmp.eq.s32.totalorder %s17, 1
    %p103 = por %p101, %p102
    %p104 = scmp.ne.s32.totalorder %s95, %s96
    %p105 = scmp.eq.s32.totalorder %s17, 0
    %p106 = por %p104, %p105
    %p107 = scmp.ne.s32.totalorder %s95, %s96
    %p108 = scmp.eq.s32.totalorder %s18, 1
    %p109 = por %p107, %p108
    %p111 = scmp.ne.s32.totalorder %s96, %s110
    %p112 = scmp.eq.s32.totalorder %s18, 0
    %p113 = por %p111, %p112
    %s115 = sadd.s32 %s114, 1
    %p118 = scmp.eq.s32.totalorder %s12, 1
    %p119 = scmp.ne.s32.totalorder %s114, %s116
    %p120 = scmp.eq.s32.totalorder %s12, 0
    %p121 = por %p119, %p120
    %p122 = scmp.ne.s32.totalorder %s114, %s116
    %p123 = scmp.eq.s32.totalorder %s17, 1
    %p124 = por %p122, %p123
    %p125 = scmp.ne.s32.totalorder %s116, %s117
    %p126 = scmp.eq.s32.totalorder %s17, 0
    %p127 = por %p125, %p126
    %p128 = scmp.ne.s32.totalorder %s116, %s117
    %p129 = scmp.eq.s32.totalorder %s18, 1
    %p130 = por %p128, %p129
    %p132 = scmp.ne.s32.totalorder %s117, %s131
    %p133 = scmp.eq.s32.totalorder %s18, 0
    %p134 = por %p132, %p133
    %s136 = sadd.s32 %s135, 1
    %p139 = scmp.eq.s32.totalorder %s12, 1
    %p140 = scmp.ne.s32.totalorder %s135, %s137
    %p141 = scmp.eq.s32.totalorder %s12, 0
    %p142 = por %p140, %p141
    %p143 = scmp.ne.s32.totalorder %s135, %s137
    %p144 = scmp.eq.s32.totalorder %s17, 1
    %p145 = por %p143, %p144
    %p146 = scmp.ne.s32.totalorder %s137, %s138
    %p147 = scmp.eq.s32.totalorder %s17, 0
    %p148 = por %p146, %p147
    %p149 = scmp.ne.s32.totalorder %s137, %s138
    %p150 = scmp.eq.s32.totalorder %s18, 1
    %p151 = por %p149, %p150
    %p153 = scmp.ne.s32.totalorder %s138, %s152
    %p154 = scmp.eq.s32.totalorder %s18, 0
    %p155 = por %p153, %p154
    %s156 = ssub.s32 %s12, %s19
    %p157 = scmp.eq.s32.totalorder %s156, 0
    %s159 = sadd.s32 %s158, 1
    %s160 = scalar_select %p157, %s158, %s159
    %p163 = pneg %p157
    %p164 = scmp.eq.s32.totalorder %s12, 1
    %p165 = por %p163, %p164
    %p166 = scmp.ne.s32.totalorder %s158, %s161
    %p167 = scmp.eq.s32.totalorder %s12, 0
    %p168 = por %p166, %p167
    %p169 = scmp.ne.s32.totalorder %s158, %s161
    %p170 = scmp.eq.s32.totalorder %s17, 1
    %p171 = por %p169, %p170
    %p172 = scmp.ne.s32.totalorder %s161, %s162
    %p173 = scmp.eq.s32.totalorder %s17, 0
    %p174 = por %p172, %p173
    %p175 = scmp.ne.s32.totalorder %s161, %s162
    %p176 = scmp.eq.s32.totalorder %s18, 1
    %p177 = por %p175, %p176
    %p179 = scmp.ne.s32.totalorder %s162, %s178
    %p180 = scmp.eq.s32.totalorder %s18, 0
    %p181 = por %p179, %p180
    %p182 = scmp.le.s32.totalorder 1, %s12
    %p183 = scmp.lt.s32.totalorder %s12, 3
    %p184 = pnand %p182, %p183
    %p185 = pneg %p184
    // Predicated region
    $region9: #{unet_vflow_forward.17} parent=5 // pred_check
      _
    $region10: #{unet_vflow_forward.17} parent=5 // pred_check_branch
      %187 = sbr.rel (%p184) target = $region12
    $region11: #{unet_vflow_forward.17} parent=5 // pred_region
      %s188 = ssub.s32 %s12, 1
      // Predicated region
      $region13: #{unet_vflow_forward.17} parent=11 // pred_check
        %p189 = pneg %p85
      $region14: #{unet_vflow_forward.17} parent=11 // pred_check_branch
        %191 = sbr.rel (%p189) target = $region16
      $region15: #{unet_vflow_forward.17} parent=11 // pred_region
        _
      $region16: #{unet_vflow_forward.17} parent=11 // pred_fallthru
        _
      // Predicated region
      $region17: #{unet_vflow_forward.17} parent=11 // pred_check
        %p192 = pneg %p106
      $region18: #{unet_vflow_forward.17} parent=11 // pred_check_branch
        %194 = sbr.rel (%p192) target = $region20
      $region19: #{unet_vflow_forward.17} parent=11 // pred_region
        _
      $region20: #{unet_vflow_forward.17} parent=11 // pred_fallthru
        _
      // Predicated region
      $region21: #{unet_vflow_forward.17} parent=11 // pred_check
        %p195 = pneg %p127
      $region22: #{unet_vflow_forward.17} parent=11 // pred_check_branch
        %197 = sbr.rel (%p195) target = $region24
      $region23: #{unet_vflow_forward.17} parent=11 // pred_region
        _
      $region24: #{unet_vflow_forward.17} parent=11 // pred_fallthru
        _
      // Predicated region
      $region25: #{unet_vflow_forward.17} parent=11 // pred_check
        %p198 = pneg %p148
      $region26: #{unet_vflow_forward.17} parent=11 // pred_check_branch
        %200 = sbr.rel (%p198) target = $region28
      $region27: #{unet_vflow_forward.17} parent=11 // pred_region
        _
      $region28: #{unet_vflow_forward.17} parent=11 // pred_fallthru
        _
    $region12: #{unet_vflow_forward.17} parent=5 // pred_fallthru
      _
    %p201 = scmp.lt.s32.totalorder %s12, 2
    // Predicated region
    $region29: #{unet_vflow_forward.17} parent=5 // pred_check
      %p202 = pneg %p201
    $region30: #{unet_vflow_forward.17} parent=5 // pred_check_branch
      %204 = sbr.rel (%p202) target = $region32
    $region31: #{unet_vflow_forward.17} parent=5 // pred_region
      // Predicated region
      $region33: #{unet_vflow_forward.17} parent=31 // pred_check
        %p205 = pneg %p32
      $region34: #{unet_vflow_forward.17} parent=31 // pred_check_branch
        %207 = sbr.rel (%p205) target = $region36
      $region35: #{unet_vflow_forward.17} parent=31 // pred_region
        %p208 = scmp.lt.s32.totalorder %s12, 1
        %s209 = scalar_select %p208, %s12, 1
        %s210 = smul.addr %s209, 4
        %s211 = smul.addr %s210, 4
        %s212 = scalar_lea.vmem %s0, %s211
      $region36: #{unet_vflow_forward.17} parent=31 // pred_fallthru
        _
      // Predicated region
      $region37: #{unet_vflow_forward.17} parent=31 // pred_check
        %p213 = pneg %p58
      $region38: #{unet_vflow_forward.17} parent=31 // pred_check_branch
        %215 = sbr.rel (%p213) target = $region40
      $region39: #{unet_vflow_forward.17} parent=31 // pred_region
        %p216 = scmp.lt.s32.totalorder %s12, 1
        %s217 = scalar_select %p216, %s12, 1
        %s218 = smul.addr %s217, 4
        %s219 = scalar_lea.vmem %s1, %s218
      $region40: #{unet_vflow_forward.17} parent=31 // pred_fallthru
        _
    $region32: #{unet_vflow_forward.17} parent=5 // pred_fallthru
      _
    %p220 = scmp.le.s32.totalorder 1, %s12
    %p221 = scmp.lt.s32.totalorder %s12, 3
    %p222 = pnand %p220, %p221
    %p223 = pneg %p222
    // Predicated region
    $region41: #{unet_vflow_forward.17} parent=5 // pred_check
      _
    $region42: #{unet_vflow_forward.17} parent=5 // pred_check_branch
      %225 = sbr.rel (%p222) target = $region44
    $region43: #{unet_vflow_forward.17} parent=5 // pred_region
      %s226 = ssub.s32 %s12, 1
      %p227 = scmp.lt.s32.totalorder %s17, 1
      %s228 = scalar_select %p227, %s17, 1
      %s229 = smul.addr %s228, 4
      %s230 = smul.addr %s229, 4
      %s231 = scalar_lea.vmem %s0, %s230
      %p232 = pneg %p38
      %p233 = pneg %p35
      %p234 = scmp.lt.s32.totalorder %s17, 1
      %s235 = scalar_select %p234, %s17, 1
      %s236 = smul.addr %s235, 4
      %s237 = scalar_lea.vmem %s1, %s236
      %p238 = pneg %p64
      %p239 = pneg %p61
      %p240 = pneg %p85
      %p241 = pneg %p82
      %p242 = pneg %p106
      %p243 = pneg %p103
      %p244 = pneg %p127
      %p245 = pneg %p124
      %p246 = pneg %p148
      %p247 = pneg %p145
      %p248 = pneg %p174
      %p249 = pneg %p171
      %p250 = scmp.lt.s32.totalorder %s17, 1
      %s251 = scalar_select %p250, %s17, 1
      %s252 = smul.addr %s251, 2
      %s253 = smul.addr %s252, 4
      %s254 = scalar_lea.vmem %s6, %s253
      %p255 = scmp.lt.s32.totalorder %s17, 1
      %s256 = scalar_select %p255, %s17, 1
      %s257 = smul.addr %s256, 4
      %s258 = smul.addr %s257, 4
      %s259 = scalar_lea.vmem %s0, %s258
      %p260 = scmp.lt.s32.totalorder %s17, 1
      %s261 = scalar_select %p260, %s17, 1
      %s262 = smul.addr %s261, 4
      %s263 = scalar_lea.vmem %s1, %s262
      %p264 = scmp.lt.s32.totalorder %s17, 1
      %s265 = scalar_select %p264, %s17, 1
      %s266 = smul.addr %s265, 2
      %s267 = smul.addr %s266, 4
      %s268 = scalar_lea.vmem %s6, %s267
      %v270 = vld [vmem:[%s259] sm:$0xf]
      %v271 = vld [vmem:[%s259 + $0x4] sm:$0xf]
      %v272 = vld [vmem:[%s259 + $0x8] sm:$0xf]
      %v273 = vld [vmem:[%s259 + $0xc] sm:$0xf]
      %v274 = vld [vmem:[%s263] sm:$0xf]
      %v279 = vunpack.c.l.b16 %v270
      %v280 = vunpack.c.l.b16 %v271
      %v281 = vunpack.c.l.b16 %v272
      %v282 = vunpack.c.l.b16 %v273
      %v283 = vpack.c.b16 %v280, %v279
      %v284 = vpack.c.b16 %v282, %v281
      %287 = vrot.lane.b32.xlu0 %v283, 127
      %v288 = vpop.permute.xlu0 %287
      %289 = vrot.lane.b32.xlu0 %v284, 127
      %v290 = vpop.permute.xlu0 %289
      %293 = vrot.lane.b32.xlu0 %v283, 126
      %v294 = vpop.permute.xlu0 %293
      %295 = vrot.lane.b32.xlu0 %v284, 126
      %v296 = vpop.permute.xlu0 %295
      %299 = vrot.lane.b32.xlu0 %v283, 118
      %v300 = vpop.permute.xlu0 %299
      %301 = vrot.lane.b32.xlu0 %v284, 118
      %v302 = vpop.permute.xlu0 %301
      %305 = vrot.lane.b32.xlu0 %v283, 117
      %v306 = vpop.permute.xlu0 %305
      %307 = vrot.lane.b32.xlu0 %v284, 117
      %v308 = vpop.permute.xlu0 %307
      %311 = vrot.lane.b32.xlu0 %v283, 116
      %v312 = vpop.permute.xlu0 %311
      %313 = vrot.lane.b32.xlu0 %v284, 116
      %v314 = vpop.permute.xlu0 %313
      %317 = vrot.lane.b32.xlu0 %v283, 108
      %v318 = vpop.permute.xlu0 %317
      %319 = vrot.lane.b32.xlu0 %v284, 108
      %v320 = vpop.permute.xlu0 %319
      %323 = vrot.lane.b32.xlu0 %v283, 107
      %v324 = vpop.permute.xlu0 %323
      %325 = vrot.lane.b32.xlu0 %v284, 107
      %v326 = vpop.permute.xlu0 %325
      %329 = vrot.lane.b32.xlu0 %v283, 106
      %v330 = vpop.permute.xlu0 %329
      %331 = vrot.lane.b32.xlu0 %v284, 106
      %v332 = vpop.permute.xlu0 %331
      %v336 = vunpack.c.l.b16 %v274
      %v337 = vpack.c.b16 %v336, %v336
      %338 = vrot.lane.b32.xlu0 %v337, 127
      %v339 = vpop.permute.xlu0 %338
      %340 = vrot.lane.b32.xlu0 %v337, 126
      %v341 = vpop.permute.xlu0 %340
      %342 = vrot.lane.b32.xlu0 %v337, 118
      %v343 = vpop.permute.xlu0 %342
      %344 = vrot.lane.b32.xlu0 %v337, 117
      %v345 = vpop.permute.xlu0 %344
      %346 = vrot.lane.b32.xlu0 %v337, 116
      %v347 = vpop.permute.xlu0 %346
      %348 = vrot.lane.b32.xlu0 %v337, 108
      %v349 = vpop.permute.xlu0 %348
      %vm350 = vcmask 1043456
      %v353 = vsel %vm350, %v274, %v339
      %v357 = vsel %vm350, %v341, %v343
      %v361 = vsel %vm350, %v345, %v347
      %v364 = vrot.slane %v353, 4
      %365 = vrot.lane.b32.xlu0 %v364, 107
      %v366 = vpop.permute.xlu0 %365
      %v369 = vsel %vm350, %v349, %v366
      %v371 = vld [vmem:[%s2] sm:$0xff]
      %v372 = vld [vmem:[%s2 + $0x8] sm:$0xf]
      %v373 = vld [vmem:[%s2 + $0xc] sm:$0xff]
      %v374 = vld [vmem:[%s2 + $0x14] sm:$0xf]
      %v375 = vlaneseq
      %v376 = vand.u32 %v375, 127
      %v377 = vcvt.s32.f32 %v376
      %v378 = vadd.f32 %v377, 0.5
      %v379 = vmul.f32 %v378, 0.1
      %v380 = vfloor.f32 %v379
      %v381 = vmul.f32 %v380, 10.0
      %v382 = vsub.f32 %v377, %v381
      %vm383 = vcmp.lt.f32.partialorder %v382, 8.0
      %v384 = vsel %vm383, 1, 0
      %v385 = vcvt.s32.f32 %v384
      %v386 = vld [vmem:[%s3] sm:$0xff]
      %v387 = vld [vmem:[%s3 + $0x8] sm:$0xff]
      %389 = vset.pattern.permute.xlu0 0
      %390 = vperm.xlu0 %389, %v386
      %v391 = vpop.permute.xlu0 %390
      %394 = vset.pattern.permute.xlu0 0
      %395 = vperm.xlu0 %394, %v387
      %v396 = vpop.permute.xlu0 %395
      %v402 = vunpack.c.l.b16 %v371
      %v403 = vunpack.c.h.b16 %v371
      %v404 = vunpack.c.l.b16 %v372
      %v405 = vunpack.c.l.b16 %v373
      %v406 = vunpack.c.h.b16 %v373
      %v407 = vunpack.c.l.b16 %v374
      %v408 = vpack.c.b16 %v405, %v402
      %v409 = vpack.c.b16 %v406, %v403
      %v410 = vpack.c.b16 %v407, %v404
      %vm413 = vcmask 850944
      %v415 = vsel %vm413, %v410, 0
      %v417 = vsel %vm350, %v366, 0
      %419 = vmatpush.bf16.msra.mxu0 %v302
      %420 = vmatpush.bf16.msra.mxu0 %v300
      %421 = vmatpush.bf16.msra.mxu0 %v296
      %422 = vmatpush.bf16.msra.mxu0 %v294
      %423 = vmatpush.bf16.msra.mxu0 %v290
      %424 = vmatpush.bf16.msra.mxu0 %v288
      %425 = vmatpush.bf16.msra.mxu0 %v284
      %426 = vmatpush.bf16.msra.mxu0 %v283
      %427 = vmatmul.bf16.gmra.mxu0 %v408
      %v428 = vpop.f32.mrf.mxu0
      %v429 = vadd.f32 %v391, %v428
      %v430 = vpop.f32.mrf.mxu0
      %v431 = vadd.f32 %v396, %v430
      %432 = vdwg.mxu0
      %433 = vmatpush.bf16.msra.mxu0 %v326
      %434 = vmatpush.bf16.msra.mxu0 %v324
      %435 = vmatpush.bf16.msra.mxu0 %v320
      %436 = vmatpush.bf16.msra.mxu0 %v318
      %437 = vmatpush.bf16.msra.mxu0 %v314
      %438 = vmatpush.bf16.msra.mxu0 %v312
      %439 = vmatpush.bf16.msra.mxu0 %v308
      %440 = vmatpush.bf16.msra.mxu0 %v306
      %441 = vmatmul.bf16.gmra.mxu0 %v409
      %v442 = vpop.f32.mrf.mxu0
      %v443 = vadd.f32 %v429, %v442
      %v444 = vpop.f32.mrf.mxu0
      %v445 = vadd.f32 %v431, %v444
      %446 = vdwg.mxu0
      %447 = vmatpush.bf16.msra.mxu0 0
      %448 = vmatpush.bf16.msra.mxu0 %v417
      %449 = vmatpush.bf16.msra.mxu0 %v369
      %450 = vmatpush.bf16.msra.mxu0 %v361
      %451 = vmatpush.bf16.msra.mxu0 %v357
      %452 = vmatpush.bf16.msra.mxu0 %v353
      %453 = vmatpush.bf16.msra.mxu0 %v332
      %454 = vmatpush.bf16.msra.mxu0 %v330
      %455 = vmatmul.bf16.gmra.mxu0 %v415
      %v456 = vpop.f32.mrf.mxu0
      %v457 = vadd.f32 %v443, %v456
      %v458 = vpop.f32.mrf.mxu0
      %v459 = vadd.f32 %v445, %v458
      %460 = vdwg.mxu0
      %v461 = vmax.f32 %v457, 0.0
      %v462 = vmax.f32 %v459, 0.0
      %v463 = vmul.f32 %v461, %v385
      %v464 = vmul.f32 %v462, %v385
      %vm465 = vcmask 1044392
      %466 = vst.msk [vmem:[#allocation2] sm:$0xf] %vm465, 0
      %467 = vst.msk [vmem:[#allocation2 + $0x8] sm:$0xf] %vm465, 0
      %vm468 = vcmask 740992
      %469 = vst.msk [vmem:[#allocation2 + $0x4] sm:$0xf] %vm468, 0
      %470 = vst.msk [vmem:[#allocation2 + $0xc] sm:$0xf] %vm468, 0
      %v471 = vpack.c.bf16 %v463, %v463
      %v472 = vpack.c.bf16 %v464, %v464
      %vm473 = vcmask 650240
      %474 = vst.msk [vmem:[#allocation2 + $0x4] sm:$0xf] %vm473, %v471
      %475 = vst.msk [vmem:[#allocation2 + $0xc] sm:$0xf] %vm473, %v472
      %v476 = vld [vmem:[#allocation2] sm:$0xff]
      %v477 = vld [vmem:[#allocation2 + $0x8] sm:$0xff]
      %v480 = vunpack.c.l.b16 %v476
      %v481 = vunpack.c.h.b16 %v476
      %v482 = vunpack.c.l.b16 %v477
      %v483 = vunpack.c.h.b16 %v477
      %v484 = vpack.c.b16 %v482, %v480
      %v485 = vpack.c.b16 %v483, %v481
      %486 = vrot.lane.b32.xlu0 %v484, 127
      %v487 = vpop.permute.xlu0 %486
      %488 = vrot.lane.b32.xlu0 %v485, 127
      %v489 = vpop.permute.xlu0 %488
      %vm490 = vcmask 1039360
      %v491 = vsel %vm490, %v487, %v489
      %492 = vrot.lane.b32.xlu0 %v484, 126
      %v493 = vpop.permute.xlu0 %492
      %494 = vrot.lane.b32.xlu0 %v485, 126
      %v495 = vpop.permute.xlu0 %494
      %vm496 = vcmask 1031168
      %v497 = vsel %vm496, %v493, %v495
      %498 = vrot.lane.b32.xlu0 %v484, 118
      %v499 = vpop.permute.xlu0 %498
      %500 = vrot.lane.b32.xlu0 %v485, 118
      %v501 = vpop.permute.xlu0 %500
      %vm502 = vcmask 965632
      %v503 = vsel %vm502, %v499, %v501
      %504 = vrot.lane.b32.xlu0 %v485, 117
      %v505 = vpop.permute.xlu0 %504
      %506 = vrot.lane.b32.xlu0 %v485, 116
      %v507 = vpop.permute.xlu0 %506
      %508 = vrot.lane.b32.xlu0 %v485, 108
      %v509 = vpop.permute.xlu0 %508
      %510 = vrot.lane.b32.xlu0 %v485, 107
      %v511 = vpop.permute.xlu0 %510
      %512 = vrot.lane.b32.xlu0 %v485, 106
      %v513 = vpop.permute.xlu0 %512
      %v514 = vld [vmem:[%s4] sm:$0xff]
      %v515 = vld [vmem:[%s4 + $0x8] sm:$0xff]
      %v516 = vld [vmem:[%s5] sm:$0xff]
      %v517 = vld [vmem:[%s5 + $0x8] sm:$0xff]
      %519 = vset.pattern.permute.xlu0 0
      %520 = vperm.xlu0 %519, %v516
      %v521 = vpop.permute.xlu0 %520
      %524 = vset.pattern.permute.xlu0 0
      %525 = vperm.xlu0 %524, %v517
      %v526 = vpop.permute.xlu0 %525
      %v530 = vunpack.c.l.b16 %v514
      %v531 = vunpack.c.h.b16 %v514
      %v532 = vunpack.c.l.b16 %v515
      %v533 = vunpack.c.h.b16 %v515
      %v534 = vpack.c.b16 %v532, %v530
      %v535 = vpack.c.b16 %v533, %v531
      %537 = vrot.lane.b32.xlu0 %v484, 11
      %v538 = vpop.permute.xlu0 %537
      %539 = vrot.lane.b32.xlu0 %v485, 11
      %v540 = vpop.permute.xlu0 %539
      %541 = vrot.lane.b32.xlu0 %v491, 11
      %v542 = vpop.permute.xlu0 %541
      %543 = vrot.lane.b32.xlu0 %v489, 11
      %v544 = vpop.permute.xlu0 %543
      %545 = vrot.lane.b32.xlu0 %v497, 11
      %v546 = vpop.permute.xlu0 %545
      %547 = vrot.lane.b32.xlu0 %v495, 11
      %v548 = vpop.permute.xlu0 %547
      %549 = vrot.lane.b32.xlu0 %v503, 11
      %v550 = vpop.permute.xlu0 %549
      %551 = vrot.lane.b32.xlu0 %v501, 11
      %v552 = vpop.permute.xlu0 %551
      %553 = vrot.lane.b32.xlu0 %v505, 11
      %v554 = vpop.permute.xlu0 %553
      %555 = vrot.lane.b32.xlu0 %v507, 11
      %v556 = vpop.permute.xlu0 %555
      %557 = vrot.lane.b32.xlu0 %v509, 11
      %v558 = vpop.permute.xlu0 %557
      %559 = vrot.lane.b32.xlu0 %v511, 11
      %v560 = vpop.permute.xlu0 %559
      %561 = vrot.lane.b32.xlu0 %v513, 11
      %v562 = vpop.permute.xlu0 %561
      %vm563 = vcmask 89088
      %v564 = vsel %vm563, %v538, %v540
      %v565 = vsel %vm563, %v542, %v544
      %v566 = vsel %vm563, %v546, %v548
      %v567 = vsel %vm563, %v550, %v552
      %vm577 = vcmask 130048
      %v579 = vsel %vm577, %v535, 0
      %581 = vmatpush.bf16.msra.mxu0 %v560
      %582 = vmatpush.bf16.msra.mxu0 %v558
      %583 = vmatpush.bf16.msra.mxu0 %v556
      %584 = vmatpush.bf16.msra.mxu0 %v554
      %585 = vmatpush.bf16.msra.mxu0 %v567
      %586 = vmatpush.bf16.msra.mxu0 %v566
      %587 = vmatpush.bf16.msra.mxu0 %v565
      %588 = vmatpush.bf16.msra.mxu0 %v564
      %589 = vmatmul.bf16.gmra.mxu0 %v534
      %v590 = vpop.f32.mrf.mxu0
      %v591 = vadd.f32 %v521, %v590
      %v592 = vpop.f32.mrf.mxu0
      %v593 = vadd.f32 %v526, %v592
      %594 = vdwg.mxu0
      %595 = vmatpush.bf16.msra.mxu0 0
      %596 = vmatpush.bf16.msra.mxu0 0
      %597 = vmatpush.bf16.msra.mxu0 0
      %598 = vmatpush.bf16.msra.mxu0 0
      %599 = vmatpush.bf16.msra.mxu0 0
      %600 = vmatpush.bf16.msra.mxu0 0
      %601 = vmatpush.bf16.msra.mxu0 0
      %602 = vmatpush.bf16.msra.mxu0 %v562
      %603 = vmatmul.bf16.gmra.mxu0 %v579
      %v604 = vpop.f32.mrf.mxu0
      %v605 = vadd.f32 %v591, %v604
      %v606 = vpop.f32.mrf.mxu0
      %v607 = vadd.f32 %v593, %v606
      %608 = vdwg.mxu0
      %v609 = vmax.f32 %v605, 0.0
      %v610 = vmax.f32 %v607, 0.0
      %v611 = vpack.c.bf16 %v609, %v609
      %v612 = vpack.c.bf16 %v610, %v610
      %613 = vst.msk [vmem:[%s268] sm:$0xf] %vm473, %v611
      %614 = vst.msk [vmem:[%s268 + $0x4] sm:$0xf] %vm473, %v612
      %p615 = scmp.lt.s32.totalorder %s17, 1
      %s616 = scalar_select %p615, %s17, 1
      %s617 = smul.addr %s616, 2
      %s618 = smul.addr %s617, 4
      %s619 = scalar_lea.vmem %s6, %s618
      // Predicated region
      $region45: #{unet_vflow_forward.17} parent=43 // pred_check
        %p620 = pneg %p171
      $region46: #{unet_vflow_forward.17} parent=43 // pred_check_branch
        %622 = sbr.rel (%p620) target = $region48
      $region47: #{unet_vflow_forward.17} parent=43 // pred_region
        _
      $region48: #{unet_vflow_forward.17} parent=43 // pred_fallthru
        _
    $region44: #{unet_vflow_forward.17} parent=5 // pred_fallthru
      _
    %p623 = scmp.le.s32.totalorder 2, %s12
    // Predicated region
    $region49: #{unet_vflow_forward.17} parent=5 // pred_check
      %p624 = pneg %p623
    $region50: #{unet_vflow_forward.17} parent=5 // pred_check_branch
      %626 = sbr.rel (%p624) target = $region52
    $region51: #{unet_vflow_forward.17} parent=5 // pred_region
      %s627 = ssub.s32 %s12, 2
      // Predicated region
      $region53: #{unet_vflow_forward.17} parent=51 // pred_check
        %p628 = pneg %p177
      $region54: #{unet_vflow_forward.17} parent=51 // pred_check_branch
        %630 = sbr.rel (%p628) target = $region56
      $region55: #{unet_vflow_forward.17} parent=51 // pred_region
        %p631 = scmp.lt.s32.totalorder %s18, 1
        %s632 = scalar_select %p631, %s18, 1
        %s633 = smul.addr %s632, 2
        %s634 = smul.addr %s633, 4
        %s635 = scalar_lea.vmem %s6, %s634
      $region56: #{unet_vflow_forward.17} parent=51 // pred_fallthru
        _
    $region52: #{unet_vflow_forward.17} parent=5 // pred_fallthru
      _
  $region6: #{unet_vflow_forward.17} parent=0 // loop_footer
    %s16 = sadd.s32 1, %s12
  $region7: #{unet_vflow_forward.17} parent=0 // loop_footer_branch
    %11 = sbr.rel target = $region3
  $region8: #{unet_vflow_forward.17} parent=0 // loop_exit
    _

// kernel: unet_vflow_forward.18
$region0: #{unet_vflow_forward.18}
  #allocation0 [shape = 'u32[]', space=smem, size = 0x4, offset = 0x4, fixed_abs, tag = 'smem constant byte address 0x4 - core index']
  #allocation1 [shape = 'u32[72,128]{1,0:T(1,128)}', space=vmem, size = 0x9000, scoped, tag = 'internal scratch']
  #allocation2 [shape = 'bf16[8,512]{1,0:T(8,128)(2,1)}', space=vmem, size = 0x2000, scoped, tag = 'scratch operand']
  %s0 = inlined_call_operand.vmem [shape: bf16[2,16,342], index: 0, kind: input, shape index: {}]
  %s1 = inlined_call_operand.vmem [shape: bf16[8,144], index: 1, kind: input, shape index: {}]
  %s2 = inlined_call_operand.vmem [shape: f32[8,1], index: 2, kind: input, shape index: {}]
  %s3 = inlined_call_operand.vmem [shape: bf16[8,72], index: 3, kind: input, shape index: {}]
  %s4 = inlined_call_operand.vmem [shape: f32[8,1], index: 4, kind: input, shape index: {}]
  %s5 = inlined_call_operand.vmem [shape: bf16[2,8,288], index: 5, kind: output, shape index: {}]
  %s6 = sld [smem:[#allocation0]]
  $region53: #{unet_vflow_forward.18} parent=0
    _
  %s8 = ssub.s32 1, %s6
  %s9 = scalar_select 0, %s8, %s6
  loop: start=0, step=1, limit=4
  $region2: #{unet_vflow_forward.18} parent=0 // loop_pre_header
    _
  $region3: #{unet_vflow_forward.18} parent=0 // loop_header
    %s11 = sphi 0, %s15
    %p12 = scmp.ge.s32.totalorder %s11, 4
    %s21 = sphi 0, %s23
    %s24 = sphi 0, %s21
    %s25 = sphi 0, %s24
    %s41 = sphi 0, %s25
    %s45 = sphi 0, %s45
    %s47 = sphi 0, %s45
    %s48 = sphi 0, %s47
    %s62 = sphi 0, %s48
    %s66 = sphi 0, %s66
    %s68 = sphi 0, %s66
    %s69 = sphi 0, %s68
    %s83 = sphi 0, %s69
    %s87 = sphi 0, %s87
    %s89 = sphi 0, %s87
    %s90 = sphi 0, %s89
    %s104 = sphi 0, %s90
    %s108 = sphi 0, %s108
    %s110 = sphi 0, %s108
    %s111 = sphi 0, %s110
    %s125 = sphi 0, %s111
    %s131 = sphi 0, %s133
    %s134 = sphi 0, %s131
    %s135 = sphi 0, %s134
    %s151 = sphi 0, %s135
  $region4: #{unet_vflow_forward.18} parent=0 // loop_header_branch
    %14 = sbr.rel (%p12) target = $region8
  $region5: #{unet_vflow_forward.18} parent=0 // loop_body
    %s16 = ssub.s32 %s11, 1
    %s17 = ssub.s32 %s11, 2
    %s18 = sadd.s32 %s11, 1
    %s19 = ssub.s32 %s11, %s18
    %p20 = scmp.eq.s32.totalorder %s19, 0
    %s22 = sadd.s32 %s21, 1
    %s23 = scalar_select %p20, %s21, %s22
    %p26 = pneg %p20
    %p27 = scmp.eq.s32.totalorder %s11, 1
    %p28 = por %p26, %p27
    %p29 = scmp.ne.s32.totalorder %s21, %s24
    %p30 = scmp.eq.s32.totalorder %s11, 0
    %p31 = por %p29, %p30
    %p32 = scmp.ne.s32.totalorder %s21, %s24
    %p33 = scmp.eq.s32.totalorder %s16, 1
    %p34 = por %p32, %p33
    %p35 = scmp.ne.s32.totalorder %s24, %s25
    %p36 = scmp.eq.s32.totalorder %s16, 0
    %p37 = por %p35, %p36
    %p38 = scmp.ne.s32.totalorder %s24, %s25
    %p39 = scmp.eq.s32.totalorder %s17, 1
    %p40 = por %p38, %p39
    %p42 = scmp.ne.s32.totalorder %s25, %s41
    %p43 = scmp.eq.s32.totalorder %s17, 0
    %p44 = por %p42, %p43
    %s46 = sadd.s32 %s45, 1
    %p49 = scmp.eq.s32.totalorder %s11, 1
    %p50 = scmp.ne.s32.totalorder %s45, %s47
    %p51 = scmp.eq.s32.totalorder %s11, 0
    %p52 = por %p50, %p51
    %p53 = scmp.ne.s32.totalorder %s45, %s47
    %p54 = scmp.eq.s32.totalorder %s16, 1
    %p55 = por %p53, %p54
    %p56 = scmp.ne.s32.totalorder %s47, %s48
    %p57 = scmp.eq.s32.totalorder %s16, 0
    %p58 = por %p56, %p57
    %p59 = scmp.ne.s32.totalorder %s47, %s48
    %p60 = scmp.eq.s32.totalorder %s17, 1
    %p61 = por %p59, %p60
    %p63 = scmp.ne.s32.totalorder %s48, %s62
    %p64 = scmp.eq.s32.totalorder %s17, 0
    %p65 = por %p63, %p64
    %s67 = sadd.s32 %s66, 1
    %p70 = scmp.eq.s32.totalorder %s11, 1
    %p71 = scmp.ne.s32.totalorder %s66, %s68
    %p72 = scmp.eq.s32.totalorder %s11, 0
    %p73 = por %p71, %p72
    %p74 = scmp.ne.s32.totalorder %s66, %s68
    %p75 = scmp.eq.s32.totalorder %s16, 1
    %p76 = por %p74, %p75
    %p77 = scmp.ne.s32.totalorder %s68, %s69
    %p78 = scmp.eq.s32.totalorder %s16, 0
    %p79 = por %p77, %p78
    %p80 = scmp.ne.s32.totalorder %s68, %s69
    %p81 = scmp.eq.s32.totalorder %s17, 1
    %p82 = por %p80, %p81
    %p84 = scmp.ne.s32.totalorder %s69, %s83
    %p85 = scmp.eq.s32.totalorder %s17, 0
    %p86 = por %p84, %p85
    %s88 = sadd.s32 %s87, 1
    %p91 = scmp.eq.s32.totalorder %s11, 1
    %p92 = scmp.ne.s32.totalorder %s87, %s89
    %p93 = scmp.eq.s32.totalorder %s11, 0
    %p94 = por %p92, %p93
    %p95 = scmp.ne.s32.totalorder %s87, %s89
    %p96 = scmp.eq.s32.totalorder %s16, 1
    %p97 = por %p95, %p96
    %p98 = scmp.ne.s32.totalorder %s89, %s90
    %p99 = scmp.eq.s32.totalorder %s16, 0
    %p100 = por %p98, %p99
    %p101 = scmp.ne.s32.totalorder %s89, %s90
    %p102 = scmp.eq.s32.totalorder %s17, 1
    %p103 = por %p101, %p102
    %p105 = scmp.ne.s32.totalorder %s90, %s104
    %p106 = scmp.eq.s32.totalorder %s17, 0
    %p107 = por %p105, %p106
    %s109 = sadd.s32 %s108, 1
    %p112 = scmp.eq.s32.totalorder %s11, 1
    %p113 = scmp.ne.s32.totalorder %s108, %s110
    %p114 = scmp.eq.s32.totalorder %s11, 0
    %p115 = por %p113, %p114
    %p116 = scmp.ne.s32.totalorder %s108, %s110
    %p117 = scmp.eq.s32.totalorder %s16, 1
    %p118 = por %p116, %p117
    %p119 = scmp.ne.s32.totalorder %s110, %s111
    %p120 = scmp.eq.s32.totalorder %s16, 0
    %p121 = por %p119, %p120
    %p122 = scmp.ne.s32.totalorder %s110, %s111
    %p123 = scmp.eq.s32.totalorder %s17, 1
    %p124 = por %p122, %p123
    %p126 = scmp.ne.s32.totalorder %s111, %s125
    %p127 = scmp.eq.s32.totalorder %s17, 0
    %p128 = por %p126, %p127
    %s129 = ssub.s32 %s11, %s18
    %p130 = scmp.eq.s32.totalorder %s129, 0
    %s132 = sadd.s32 %s131, 1
    %s133 = scalar_select %p130, %s131, %s132
    %p136 = pneg %p130
    %p137 = scmp.eq.s32.totalorder %s11, 1
    %p138 = por %p136, %p137
    %p139 = scmp.ne.s32.totalorder %s131, %s134
    %p140 = scmp.eq.s32.totalorder %s11, 0
    %p141 = por %p139, %p140
    %p142 = scmp.ne.s32.totalorder %s131, %s134
    %p143 = scmp.eq.s32.totalorder %s16, 1
    %p144 = por %p142, %p143
    %p145 = scmp.ne.s32.totalorder %s134, %s135
    %p146 = scmp.eq.s32.totalorder %s16, 0
    %p147 = por %p145, %p146
    %p148 = scmp.ne.s32.totalorder %s134, %s135
    %p149 = scmp.eq.s32.totalorder %s17, 1
    %p150 = por %p148, %p149
    %p152 = scmp.ne.s32.totalorder %s135, %s151
    %p153 = scmp.eq.s32.totalorder %s17, 0
    %p154 = por %p152, %p153
    %p155 = scmp.le.s32.totalorder 1, %s11
    %p156 = scmp.lt.s32.totalorder %s11, 3
    %p157 = pnand %p155, %p156
    %p158 = pneg %p157
    // Predicated region
    $region9: #{unet_vflow_forward.18} parent=5 // pred_check
      _
    $region10: #{unet_vflow_forward.18} parent=5 // pred_check_branch
      %160 = sbr.rel (%p157) target = $region12
    $region11: #{unet_vflow_forward.18} parent=5 // pred_region
      %s161 = ssub.s32 %s11, 1
      // Predicated region
      $region13: #{unet_vflow_forward.18} parent=11 // pred_check
        %p162 = pneg %p58
      $region14: #{unet_vflow_forward.18} parent=11 // pred_check_branch
        %164 = sbr.rel (%p162) target = $region16
      $region15: #{unet_vflow_forward.18} parent=11 // pred_region
        _
      $region16: #{unet_vflow_forward.18} parent=11 // pred_fallthru
        _
      // Predicated region
      $region17: #{unet_vflow_forward.18} parent=11 // pred_check
        %p165 = pneg %p79
      $region18: #{unet_vflow_forward.18} parent=11 // pred_check_branch
        %167 = sbr.rel (%p165) target = $region20
      $region19: #{unet_vflow_forward.18} parent=11 // pred_region
        _
      $region20: #{unet_vflow_forward.18} parent=11 // pred_fallthru
        _
      // Predicated region
      $region21: #{unet_vflow_forward.18} parent=11 // pred_check
        %p168 = pneg %p100
      $region22: #{unet_vflow_forward.18} parent=11 // pred_check_branch
        %170 = sbr.rel (%p168) target = $region24
      $region23: #{unet_vflow_forward.18} parent=11 // pred_region
        _
      $region24: #{unet_vflow_forward.18} parent=11 // pred_fallthru
        _
      // Predicated region
      $region25: #{unet_vflow_forward.18} parent=11 // pred_check
        %p171 = pneg %p121
      $region26: #{unet_vflow_forward.18} parent=11 // pred_check_branch
        %173 = sbr.rel (%p171) target = $region28
      $region27: #{unet_vflow_forward.18} parent=11 // pred_region
        _
      $region28: #{unet_vflow_forward.18} parent=11 // pred_fallthru
        _
    $region12: #{unet_vflow_forward.18} parent=5 // pred_fallthru
      _
    %p174 = scmp.lt.s32.totalorder %s11, 2
    // Predicated region
    $region29: #{unet_vflow_forward.18} parent=5 // pred_check
      %p175 = pneg %p174
    $region30: #{unet_vflow_forward.18} parent=5 // pred_check_branch
      %177 = sbr.rel (%p175) target = $region32
    $region31: #{unet_vflow_forward.18} parent=5 // pred_region
      // Predicated region
      $region33: #{unet_vflow_forward.18} parent=31 // pred_check
        %p178 = pneg %p31
      $region34: #{unet_vflow_forward.18} parent=31 // pred_check_branch
        %180 = sbr.rel (%p178) target = $region36
      $region35: #{unet_vflow_forward.18} parent=31 // pred_region
        %p181 = scmp.lt.s32.totalorder %s11, 1
        %s182 = scalar_select %p181, %s11, 1
        %s183 = smul.addr %s182, 6
        %s184 = smul.addr %s183, 4
        %s185 = scalar_lea.vmem %s0, %s184
      $region36: #{unet_vflow_forward.18} parent=31 // pred_fallthru
        _
    $region32: #{unet_vflow_forward.18} parent=5 // pred_fallthru
      _
    %p186 = scmp.le.s32.totalorder 1, %s11
    %p187 = scmp.lt.s32.totalorder %s11, 3
    %p188 = pnand %p186, %p187
    %p189 = pneg %p188
    // Predicated region
    $region37: #{unet_vflow_forward.18} parent=5 // pred_check
      _
    $region38: #{unet_vflow_forward.18} parent=5 // pred_check_branch
      %191 = sbr.rel (%p188) target = $region40
    $region39: #{unet_vflow_forward.18} parent=5 // pred_region
      %s192 = ssub.s32 %s11, 1
      %p193 = scmp.lt.s32.totalorder %s16, 1
      %s194 = scalar_select %p193, %s16, 1
      %s195 = smul.addr %s194, 6
      %s196 = smul.addr %s195, 4
      %s197 = scalar_lea.vmem %s0, %s196
      %p198 = pneg %p37
      %p199 = pneg %p34
      %p200 = pneg %p58
      %p201 = pneg %p55
      %p202 = pneg %p79
      %p203 = pneg %p76
      %p204 = pneg %p100
      %p205 = pneg %p97
      %p206 = pneg %p121
      %p207 = pneg %p118
      %p208 = pneg %p147
      %p209 = pneg %p144
      %p210 = scmp.lt.s32.totalorder %s16, 1
      %s211 = scalar_select %p210, %s16, 1
      %s212 = smul.addr %s211, 3
      %s213 = smul.addr %s212, 4
      %s214 = scalar_lea.vmem %s5, %s213
      %p215 = scmp.lt.s32.totalorder %s16, 1
      %s216 = scalar_select %p215, %s16, 1
      %s217 = smul.addr %s216, 6
      %s218 = smul.addr %s217, 4
      %s219 = scalar_lea.vmem %s0, %s218
      %p220 = scmp.lt.s32.totalorder %s16, 1
      %s221 = scalar_select %p220, %s16, 1
      %s222 = smul.addr %s221, 3
      %s223 = smul.addr %s222, 4
      %s224 = scalar_lea.vmem %s5, %s223
      %v226 = vld [vmem:[%s219] sm:$0xff]
      %v227 = vld [vmem:[%s219 + $0x8] sm:$0xf]
      %v228 = vld [vmem:[%s219 + $0xc] sm:$0xff]
      %v229 = vld [vmem:[%s219 + $0x14] sm:$0xf]
      %v234 = vunpack.c.l.b16 %v226
      %v235 = vunpack.c.h.b16 %v226
      %v236 = vunpack.c.l.b16 %v227
      %v237 = vunpack.c.l.b16 %v228
      %v238 = vunpack.c.h.b16 %v228
      %v239 = vunpack.c.l.b16 %v229
      %v240 = vpack.c.b16 %v237, %v234
      %v241 = vpack.c.b16 %v238, %v235
      %v242 = vpack.c.b16 %v239, %v236
      %246 = vrot.lane.b32.xlu0 %v240, 127
      %v247 = vpop.permute.xlu0 %246
      %248 = vrot.lane.b32.xlu0 %v241, 127
      %v249 = vpop.permute.xlu0 %248
      %250 = vrot.lane.b32.xlu0 %v242, 127
      %v251 = vpop.permute.xlu0 %250
      %vm252 = vcmask 1039360
      %v253 = vsel %vm252, %v247, %v249
      %v254 = vsel %vm252, %v249, %v251
      %258 = vrot.lane.b32.xlu0 %v240, 126
      %v259 = vpop.permute.xlu0 %258
      %260 = vrot.lane.b32.xlu0 %v241, 126
      %v261 = vpop.permute.xlu0 %260
      %262 = vrot.lane.b32.xlu0 %v242, 126
      %v263 = vpop.permute.xlu0 %262
      %vm264 = vcmask 1031168
      %v265 = vsel %vm264, %v259, %v261
      %v266 = vsel %vm264, %v261, %v263
      %270 = vrot.lane.b32.xlu0 %v240, 110
      %v271 = vpop.permute.xlu0 %270
      %272 = vrot.lane.b32.xlu0 %v241, 110
      %v273 = vpop.permute.xlu0 %272
      %274 = vrot.lane.b32.xlu0 %v242, 110
      %v275 = vpop.permute.xlu0 %274
      %vm276 = vcmask 900096
      %v277 = vsel %vm276, %v271, %v273
      %v278 = vsel %vm276, %v273, %v275
      %282 = vrot.lane.b32.xlu0 %v240, 109
      %v283 = vpop.permute.xlu0 %282
      %284 = vrot.lane.b32.xlu0 %v241, 109
      %v285 = vpop.permute.xlu0 %284
      %286 = vrot.lane.b32.xlu0 %v242, 109
      %v287 = vpop.permute.xlu0 %286
      %vm288 = vcmask 891904
      %v289 = vsel %vm288, %v283, %v285
      %v290 = vsel %vm288, %v285, %v287
      %294 = vrot.lane.b32.xlu0 %v240, 108
      %v295 = vpop.permute.xlu0 %294
      %296 = vrot.lane.b32.xlu0 %v241, 108
      %v297 = vpop.permute.xlu0 %296
      %298 = vrot.lane.b32.xlu0 %v242, 108
      %v299 = vpop.permute.xlu0 %298
      %vm300 = vcmask 883712
      %v301 = vsel %vm300, %v295, %v297
      %v302 = vsel %vm300, %v297, %v299
      %306 = vrot.lane.b32.xlu0 %v240, 92
      %v307 = vpop.permute.xlu0 %306
      %308 = vrot.lane.b32.xlu0 %v241, 92
      %v309 = vpop.permute.xlu0 %308
      %310 = vrot.lane.b32.xlu0 %v242, 92
      %v311 = vpop.permute.xlu0 %310
      %vm312 = vcmask 752640
      %v313 = vsel %vm312, %v307, %v309
      %v314 = vsel %vm312, %v309, %v311
      %318 = vrot.lane.b32.xlu0 %v240, 91
      %v319 = vpop.permute.xlu0 %318
      %320 = vrot.lane.b32.xlu0 %v241, 91
      %v321 = vpop.permute.xlu0 %320
      %322 = vrot.lane.b32.xlu0 %v242, 91
      %v323 = vpop.permute.xlu0 %322
      %vm324 = vcmask 744448
      %v325 = vsel %vm324, %v319, %v321
      %v326 = vsel %vm324, %v321, %v323
      %330 = vrot.lane.b32.xlu0 %v240, 90
      %v331 = vpop.permute.xlu0 %330
      %332 = vrot.lane.b32.xlu0 %v241, 90
      %v333 = vpop.permute.xlu0 %332
      %334 = vrot.lane.b32.xlu0 %v242, 90
      %v335 = vpop.permute.xlu0 %334
      %vm336 = vcmask 736256
      %v337 = vsel %vm336, %v331, %v333
      %v338 = vsel %vm336, %v333, %v335
      %v342 = vld [vmem:[%s1] sm:$0xff]
      %v343 = vlaneseq
      %v344 = vand.u32 %v343, 127
      %v345 = vadd.s32 %v344, 128
      %v346 = vadd.s32 %v344, 256
      %v347 = vcvt.s32.f32 %v344
      %v348 = vcvt.s32.f32 %v345
      %v349 = vcvt.s32.f32 %v346
      %v350 = vadd.f32 %v347, 0.5
      %v351 = vadd.f32 %v348, 0.5
      %v352 = vadd.f32 %v349, 0.5
      %v353 = vmul.f32 %v350, 0.055555556
      %v354 = vmul.f32 %v351, 0.055555556
      %v355 = vmul.f32 %v352, 0.055555556
      %v356 = vfloor.f32 %v353
      %v357 = vfloor.f32 %v354
      %v358 = vfloor.f32 %v355
      %v359 = vmul.f32 %v356, 18.0
      %v360 = vmul.f32 %v357, 18.0
      %v361 = vmul.f32 %v358, 18.0
      %v362 = vsub.f32 %v347, %v359
      %v363 = vsub.f32 %v348, %v360
      %v364 = vsub.f32 %v349, %v361
      %vm365 = vcmp.lt.f32.partialorder %v362, 16.0
      %vm366 = vcmp.lt.f32.partialorder %v363, 16.0
      %vm367 = vcmp.lt.f32.partialorder %v364, 16.0
      %v368 = vsel %vm365, 1, 0
      %v369 = vsel %vm366, 1, 0
      %v370 = vsel %vm367, 1, 0
      %v371 = vcvt.s32.f32 %v368
      %v372 = vcvt.s32.f32 %v369
      %v373 = vcvt.s32.f32 %v370
      %v374 = vld [vmem:[%s2] sm:$0xff]
      %376 = vset.pattern.permute.xlu0 0
      %377 = vperm.xlu0 %376, %v374
      %v378 = vpop.permute.xlu0 %377
      %v381 = vunpack.c.l.b16 %v342
      %v382 = vunpack.c.h.b16 %v342
      %v383 = vpack.c.b16 %v381, %v381
      %v384 = vpack.c.b16 %v382, %v382
      %vm386 = vcmask 130048
      %v388 = vsel %vm386, %v384, 0
      %390 = vmatpush.bf16.msra.mxu0 %v325
      %391 = vmatpush.bf16.msra.mxu0 %v313
      %392 = vmatpush.bf16.msra.mxu0 %v301
      %393 = vmatpush.bf16.msra.mxu0 %v289
      %394 = vmatpush.bf16.msra.mxu0 %v277
      %395 = vmatpush.bf16.msra.mxu0 %v265
      %396 = vmatpush.bf16.msra.mxu0 %v253
      %397 = vmatpush.bf16.msra.mxu0 %v240
      %398 = vmatmul.bf16.gmra.mxu0 %v383
      %v399 = vpop.f32.mrf.mxu0
      %v400 = vadd.f32 %v378, %v399
      %v401 = vpop.f32.mrf.mxu0
      %402 = vdwg.mxu0
      %403 = vmatpush.bf16.msra.mxu0 0
      %404 = vmatpush.bf16.msra.mxu0 0
      %405 = vmatpush.bf16.msra.mxu0 0
      %406 = vmatpush.bf16.msra.mxu0 0
      %407 = vmatpush.bf16.msra.mxu0 0
      %408 = vmatpush.bf16.msra.mxu0 0
      %409 = vmatpush.bf16.msra.mxu0 0
      %410 = vmatpush.bf16.msra.mxu0 %v337
      %411 = vmatmul.bf16.gmra.mxu0 %v388
      %v412 = vpop.f32.mrf.mxu0
      %v413 = vadd.f32 %v400, %v412
      %v414 = vpop.f32.mrf.mxu0
      %415 = vdwg.mxu0
      %416 = vmatpush.bf16.msra.mxu0 %v326
      %417 = vmatpush.bf16.msra.mxu0 %v314
      %418 = vmatpush.bf16.msra.mxu0 %v302
      %419 = vmatpush.bf16.msra.mxu0 %v290
      %420 = vmatpush.bf16.msra.mxu0 %v278
      %421 = vmatpush.bf16.msra.mxu0 %v266
      %422 = vmatpush.bf16.msra.mxu0 %v254
      %423 = vmatpush.bf16.msra.mxu0 %v241
      %424 = vmatmul.bf16.gmra.mxu0 %v383
      %v425 = vpop.f32.mrf.mxu0
      %v426 = vadd.f32 %v378, %v425
      %v427 = vpop.f32.mrf.mxu0
      %428 = vdwg.mxu0
      %429 = vmatpush.bf16.msra.mxu0 0
      %430 = vmatpush.bf16.msra.mxu0 0
      %431 = vmatpush.bf16.msra.mxu0 0
      %432 = vmatpush.bf16.msra.mxu0 0
      %433 = vmatpush.bf16.msra.mxu0 0
      %434 = vmatpush.bf16.msra.mxu0 0
      %435 = vmatpush.bf16.msra.mxu0 0
      %436 = vmatpush.bf16.msra.mxu0 %v338
      %437 = vmatmul.bf16.gmra.mxu0 %v388
      %v438 = vpop.f32.mrf.mxu0
      %v439 = vadd.f32 %v426, %v438
      %v440 = vpop.f32.mrf.mxu0
      %441 = vdwg.mxu0
      %442 = vmatpush.bf16.msra.mxu0 %v323
      %443 = vmatpush.bf16.msra.mxu0 %v311
      %444 = vmatpush.bf16.msra.mxu0 %v299
      %445 = vmatpush.bf16.msra.mxu0 %v287
      %446 = vmatpush.bf16.msra.mxu0 %v275
      %447 = vmatpush.bf16.msra.mxu0 %v263
      %448 = vmatpush.bf16.msra.mxu0 %v251
      %449 = vmatpush.bf16.msra.mxu0 %v242
      %450 = vmatmul.bf16.gmra.mxu0 %v383
      %v451 = vpop.f32.mrf.mxu0
      %v452 = vadd.f32 %v378, %v451
      %v453 = vpop.f32.mrf.mxu0
      %454 = vdwg.mxu0
      %455 = vmatpush.bf16.msra.mxu0 0
      %456 = vmatpush.bf16.msra.mxu0 0
      %457 = vmatpush.bf16.msra.mxu0 0
      %458 = vmatpush.bf16.msra.mxu0 0
      %459 = vmatpush.bf16.msra.mxu0 0
      %460 = vmatpush.bf16.msra.mxu0 0
      %461 = vmatpush.bf16.msra.mxu0 0
      %462 = vmatpush.bf16.msra.mxu0 %v335
      %463 = vmatmul.bf16.gmra.mxu0 %v388
      %v464 = vpop.f32.mrf.mxu0
      %v465 = vadd.f32 %v452, %v464
      %v466 = vpop.f32.mrf.mxu0
      %467 = vdwg.mxu0
      %v468 = vmax.f32 %v413, 0.0
      %v469 = vmax.f32 %v439, 0.0
      %v470 = vmax.f32 %v465, 0.0
      %v471 = vmul.f32 %v468, %v371
      %v472 = vmul.f32 %v469, %v372
      %v473 = vmul.f32 %v470, %v373
      %vm474 = vcmask 1044328
      %475 = vst.msk [vmem:[#allocation2] sm:$0xf] %vm474, 0
      %vm476 = vcmask 412928
      %477 = vst.msk [vmem:[#allocation2 + $0xc] sm:$0xf] %vm476, 0
      %v478 = vpack.c.bf16 %v472, %v471
      %v479 = vpack.c.bf16 %v473, %v473
      %480 = vst [vmem:[#allocation2 + $0x4] sm:$0xff] %v478
      %vm481 = vcmask 257024
      %482 = vst.msk [vmem:[#allocation2 + $0xc] sm:$0xf] %vm481, %v479
      %v483 = vld [vmem:[#allocation2] sm:$0xff]
      %v484 = vld [vmem:[#allocation2 + $0x8] sm:$0xff]
      %v487 = vunpack.c.l.b16 %v483
      %v488 = vunpack.c.h.b16 %v483
      %v489 = vunpack.c.l.b16 %v484
      %v490 = vunpack.c.h.b16 %v484
      %v491 = vpack.c.b16 %v487, %v487
      %v492 = vpack.c.b16 %v488, %v488
      %v493 = vpack.c.b16 %v489, %v489
      %v494 = vpack.c.b16 %v490, %v490
      %495 = vrot.lane.b32.xlu0 %v491, 127
      %v496 = vpop.permute.xlu0 %495
      %497 = vrot.lane.b32.xlu0 %v492, 127
      %v498 = vpop.permute.xlu0 %497
      %499 = vrot.lane.b32.xlu0 %v493, 127
      %v500 = vpop.permute.xlu0 %499
      %501 = vrot.lane.b32.xlu0 %v494, 127
      %v502 = vpop.permute.xlu0 %501
      %v503 = vsel %vm252, %v496, %v498
      %v504 = vsel %vm252, %v498, %v500
      %v505 = vsel %vm252, %v500, %v502
      %506 = vrot.lane.b32.xlu0 %v491, 126
      %v507 = vpop.permute.xlu0 %506
      %508 = vrot.lane.b32.xlu0 %v492, 126
      %v509 = vpop.permute.xlu0 %508
      %510 = vrot.lane.b32.xlu0 %v493, 126
      %v511 = vpop.permute.xlu0 %510
      %512 = vrot.lane.b32.xlu0 %v494, 126
      %v513 = vpop.permute.xlu0 %512
      %v514 = vsel %vm264, %v507, %v509
      %v515 = vsel %vm264, %v509, %v511
      %v516 = vsel %vm264, %v511, %v513
      %517 = vrot.lane.b32.xlu0 %v491, 110
      %v518 = vpop.permute.xlu0 %517
      %519 = vrot.lane.b32.xlu0 %v492, 110
      %v520 = vpop.permute.xlu0 %519
      %521 = vrot.lane.b32.xlu0 %v493, 110
      %v522 = vpop.permute.xlu0 %521
      %523 = vrot.lane.b32.xlu0 %v494, 110
      %v524 = vpop.permute.xlu0 %523
      %v525 = vsel %vm276, %v518, %v520
      %v526 = vsel %vm276, %v520, %v522
      %v527 = vsel %vm276, %v522, %v524
      %528 = vrot.lane.b32.xlu0 %v492, 109
      %v529 = vpop.permute.xlu0 %528
      %530 = vrot.lane.b32.xlu0 %v493, 109
      %v531 = vpop.permute.xlu0 %530
      %532 = vrot.lane.b32.xlu0 %v494, 109
      %v533 = vpop.permute.xlu0 %532
      %v534 = vsel %vm288, %v529, %v531
      %v535 = vsel %vm288, %v531, %v533
      %536 = vrot.lane.b32.xlu0 %v492, 108
      %v537 = vpop.permute.xlu0 %536
      %538 = vrot.lane.b32.xlu0 %v493, 108
      %v539 = vpop.permute.xlu0 %538
      %540 = vrot.lane.b32.xlu0 %v494, 108
      %v541 = vpop.permute.xlu0 %540
      %v542 = vsel %vm300, %v537, %v539
      %v543 = vsel %vm300, %v539, %v541
      %544 = vrot.lane.b32.xlu0 %v492, 92
      %v545 = vpop.permute.xlu0 %544
      %546 = vrot.lane.b32.xlu0 %v493, 92
      %v547 = vpop.permute.xlu0 %546
      %548 = vrot.lane.b32.xlu0 %v494, 92
      %v549 = vpop.permute.xlu0 %548
      %v550 = vsel %vm312, %v545, %v547
      %v551 = vsel %vm312, %v547, %v549
      %552 = vrot.lane.b32.xlu0 %v492, 91
      %v553 = vpop.permute.xlu0 %552
      %554 = vrot.lane.b32.xlu0 %v493, 91
      %v555 = vpop.permute.xlu0 %554
      %556 = vrot.lane.b32.xlu0 %v494, 91
      %v557 = vpop.permute.xlu0 %556
      %v558 = vsel %vm324, %v553, %v555
      %v559 = vsel %vm324, %v555, %v557
      %560 = vrot.lane.b32.xlu0 %v492, 90
      %v561 = vpop.permute.xlu0 %560
      %562 = vrot.lane.b32.xlu0 %v493, 90
      %v563 = vpop.permute.xlu0 %562
      %564 = vrot.lane.b32.xlu0 %v494, 90
      %v565 = vpop.permute.xlu0 %564
      %v566 = vsel %vm336, %v561, %v563
      %v567 = vsel %vm336, %v563, %v565
      %vm568 = vcmask 1043456
      %v571 = vsel %vm568, %v491, %v503
      %v574 = vsel %vm568, %v492, %v504
      %v577 = vsel %vm568, %v493, %v505
      %v580 = vsel %vm568, %v494, %v502
      %v583 = vsel %vm568, %v514, %v525
      %v586 = vsel %vm568, %v515, %v526
      %v589 = vsel %vm568, %v516, %v527
      %v592 = vsel %vm568, %v513, %v524
      %v595 = vsel %vm568, %v529, %v537
      %v598 = vsel %vm568, %v534, %v542
      %v601 = vsel %vm568, %v535, %v543
      %v604 = vsel %vm568, %v533, %v541
      %v607 = vsel %vm568, %v545, %v553
      %v610 = vsel %vm568, %v550, %v558
      %v613 = vsel %vm568, %v551, %v559
      %v616 = vsel %vm568, %v549, %v557
      %v617 = vld [vmem:[%s3] sm:$0xf]
      %v618 = vld [vmem:[%s4] sm:$0xff]
      %620 = vset.pattern.permute.xlu0 0
      %621 = vperm.xlu0 %620, %v618
      %v622 = vpop.permute.xlu0 %621
      %640 = vrot.lane.b32.xlu0 %v571, 19
      %v641 = vpop.permute.xlu0 %640
      %642 = vrot.lane.b32.xlu0 %v574, 19
      %v643 = vpop.permute.xlu0 %642
      %644 = vrot.lane.b32.xlu0 %v577, 19
      %v645 = vpop.permute.xlu0 %644
      %646 = vrot.lane.b32.xlu0 %v580, 19
      %v647 = vpop.permute.xlu0 %646
      %648 = vrot.lane.b32.xlu0 %v583, 19
      %v649 = vpop.permute.xlu0 %648
      %650 = vrot.lane.b32.xlu0 %v586, 19
      %v651 = vpop.permute.xlu0 %650
      %652 = vrot.lane.b32.xlu0 %v589, 19
      %v653 = vpop.permute.xlu0 %652
      %654 = vrot.lane.b32.xlu0 %v592, 19
      %v655 = vpop.permute.xlu0 %654
      %656 = vrot.lane.b32.xlu0 %v595, 19
      %v657 = vpop.permute.xlu0 %656
      %658 = vrot.lane.b32.xlu0 %v598, 19
      %v659 = vpop.permute.xlu0 %658
      %660 = vrot.lane.b32.xlu0 %v601, 19
      %v661 = vpop.permute.xlu0 %660
      %662 = vrot.lane.b32.xlu0 %v604, 19
      %v663 = vpop.permute.xlu0 %662
      %664 = vrot.lane.b32.xlu0 %v607, 19
      %v665 = vpop.permute.xlu0 %664
      %666 = vrot.lane.b32.xlu0 %v610, 19
      %v667 = vpop.permute.xlu0 %666
      %668 = vrot.lane.b32.xlu0 %v613, 19
      %v669 = vpop.permute.xlu0 %668
      %670 = vrot.lane.b32.xlu0 %v616, 19
      %v671 = vpop.permute.xlu0 %670
      %672 = vrot.lane.b32.xlu0 %v561, 19
      %v673 = vpop.permute.xlu0 %672
      %674 = vrot.lane.b32.xlu0 %v566, 19
      %v675 = vpop.permute.xlu0 %674
      %676 = vrot.lane.b32.xlu0 %v567, 19
      %v677 = vpop.permute.xlu0 %676
      %678 = vrot.lane.b32.xlu0 %v565, 19
      %v679 = vpop.permute.xlu0 %678
      %vm680 = vcmask 154624
      %v681 = vsel %vm680, %v641, %v643
      %v682 = vsel %vm680, %v643, %v645
      %v683 = vsel %vm680, %v645, %v647
      %v684 = vsel %vm680, %v649, %v651
      %v685 = vsel %vm680, %v651, %v653
      %v686 = vsel %vm680, %v653, %v655
      %v687 = vsel %vm680, %v657, %v659
      %v688 = vsel %vm680, %v659, %v661
      %v689 = vsel %vm680, %v661, %v663
      %v690 = vsel %vm680, %v665, %v667
      %v691 = vsel %vm680, %v667, %v669
      %v692 = vsel %vm680, %v669, %v671
      %v693 = vsel %vm680, %v673, %v675
      %v694 = vsel %vm680, %v675, %v677
      %v695 = vsel %vm680, %v677, %v679
      %vm708 = vcmask 588800
      %v710 = vsel %vm708, %v617, 0
      %v713 = vsel %vm568, %v693, 0
      %v716 = vsel %vm568, %v694, 0
      %v719 = vsel %vm568, %v695, 0
      %721 = vmatpush.bf16.msra.mxu0 0
      %722 = vmatpush.bf16.msra.mxu0 0
      %723 = vmatpush.bf16.msra.mxu0 0
      %724 = vmatpush.bf16.msra.mxu0 %v713
      %725 = vmatpush.bf16.msra.mxu0 %v690
      %726 = vmatpush.bf16.msra.mxu0 %v687
      %727 = vmatpush.bf16.msra.mxu0 %v684
      %728 = vmatpush.bf16.msra.mxu0 %v681
      %729 = vmatmul.bf16.gmra.mxu0 %v710
      %v730 = vpop.f32.mrf.mxu0
      %v731 = vadd.f32 %v622, %v730
      %v732 = vpop.f32.mrf.mxu0
      %733 = vdwg.mxu0
      %734 = vmatpush.bf16.msra.mxu0 0
      %735 = vmatpush.bf16.msra.mxu0 0
      %736 = vmatpush.bf16.msra.mxu0 0
      %737 = vmatpush.bf16.msra.mxu0 %v716
      %738 = vmatpush.bf16.msra.mxu0 %v691
      %739 = vmatpush.bf16.msra.mxu0 %v688
      %740 = vmatpush.bf16.msra.mxu0 %v685
      %741 = vmatpush.bf16.msra.mxu0 %v682
      %742 = vmatmul.bf16.gmra.mxu0 %v710
      %v743 = vpop.f32.mrf.mxu0
      %v744 = vadd.f32 %v622, %v743
      %v745 = vpop.f32.mrf.mxu0
      %746 = vdwg.mxu0
      %747 = vmatpush.bf16.msra.mxu0 0
      %748 = vmatpush.bf16.msra.mxu0 0
      %749 = vmatpush.bf16.msra.mxu0 0
      %750 = vmatpush.bf16.msra.mxu0 %v719
      %751 = vmatpush.bf16.msra.mxu0 %v692
      %752 = vmatpush.bf16.msra.mxu0 %v689
      %753 = vmatpush.bf16.msra.mxu0 %v686
      %754 = vmatpush.bf16.msra.mxu0 %v683
      %755 = vmatmul.bf16.gmra.mxu0 %v710
      %v756 = vpop.f32.mrf.mxu0
      %v757 = vadd.f32 %v622, %v756
      %v758 = vpop.f32.mrf.mxu0
      %759 = vdwg.mxu0
      %v760 = vmax.f32 %v731, 0.0
      %v761 = vmax.f32 %v744, 0.0
      %v762 = vmax.f32 %v757, 0.0
      %v763 = vpack.c.bf16 %v761, %v760
      %v764 = vpack.c.bf16 %v762, %v762
      %765 = vst [vmem:[%s224] sm:$0xff] %v763
      %766 = vst.msk [vmem:[%s224 + $0x8] sm:$0xf] %vm481, %v764
      %p767 = scmp.lt.s32.totalorder %s16, 1
      %s768 = scalar_select %p767, %s16, 1
      %s769 = smul.addr %s768, 3
      %s770 = smul.addr %s769, 4
      %s771 = scalar_lea.vmem %s5, %s770
      // Predicated region
      $region41: #{unet_vflow_forward.18} parent=39 // pred_check
        %p772 = pneg %p144
      $region42: #{unet_vflow_forward.18} parent=39 // pred_check_branch
        %774 = sbr.rel (%p772) target = $region44
      $region43: #{unet_vflow_forward.18} parent=39 // pred_region
        _
      $region44: #{unet_vflow_forward.18} parent=39 // pred_fallthru
        _
    $region40: #{unet_vflow_forward.18} parent=5 // pred_fallthru
      _
    %p775 = scmp.le.s32.totalorder 2, %s11
    // Predicated region
    $region45: #{unet_vflow_forward.18} parent=5 // pred_check
      %p776 = pneg %p775
    $region46: #{unet_vflow_forward.18} parent=5 // pred_check_branch
      %778 = sbr.rel (%p776) target = $region48
    $region47: #{unet_vflow_forward.18} parent=5 // pred_region
      %s779 = ssub.s32 %s11, 2
      // Predicated region
      $region49: #{unet_vflow_forward.18} parent=47 // pred_check
        %p780 = pneg %p150
      $region50: #{unet_vflow_forward.18} parent=47 // pred_check_branch
        %782 = sbr.rel (%p780) target = $region52
      $region51: #{unet_vflow_forward.18} parent=47 // pred_region
        %p783 = scmp.lt.s32.totalorder %s17, 1
        %s784 = scalar_select %p783, %s17, 1
        %s785 = smul.addr %s784, 3
        %s786 = smul.addr %s785, 4
        %s787 = scalar_lea.vmem %s5, %s786
      $region52: #{unet_vflow_forward.18} parent=47 // pred_fallthru
        _
    $region48: #{unet_vflow_forward.18} parent=5 // pred_fallthru
      _
  $region6: #{unet_vflow_forward.18} parent=0 // loop_footer
    %s15 = sadd.s32 1, %s11
  $region7: #{unet_vflow_forward.18} parent=0 // loop_footer_branch
    %10 = sbr.rel target = $region3
  $region8: #{unet_vflow_forward.18} parent=0 // loop_exit
    _

// kernel: unet_vflow_forward.19
$region0: #{unet_vflow_forward.19}
  #allocation0 [shape = 'u32[]', space=smem, size = 0x4, offset = 0x4, fixed_abs, tag = 'smem constant byte address 0x4 - core index']
  #allocation1 [shape = 'u32[72,128]{1,0:T(1,128)}', space=vmem, size = 0x9000, scoped, tag = 'internal scratch']
  %s0 = inlined_call_operand.vmem [shape: bf16[2,8,342], index: 0, kind: input, shape index: {}]
  %s1 = inlined_call_operand.vmem [shape: bf16[2,72], index: 1, kind: input, shape index: {}]
  %s2 = inlined_call_operand.vmem [shape: f32[2,1], index: 2, kind: input, shape index: {}]
  %s3 = inlined_call_operand.vmem [shape: f32[2,2,288], index: 3, kind: output, shape index: {}]
  %s4 = sld [smem:[#allocation0]]
  $region45: #{unet_vflow_forward.19} parent=0
    _
  %s6 = ssub.s32 1, %s4
  %s7 = scalar_select 0, %s6, %s4
  loop: start=0, step=1, limit=4
  $region2: #{unet_vflow_forward.19} parent=0 // loop_pre_header
    _
  $region3: #{unet_vflow_forward.19} parent=0 // loop_header
    %s9 = sphi 0, %s13
    %p10 = scmp.ge.s32.totalorder %s9, 4
    %s19 = sphi 0, %s21
    %s22 = sphi 0, %s19
    %s23 = sphi 0, %s22
    %s39 = sphi 0, %s23
    %s43 = sphi 0, %s43
    %s45 = sphi 0, %s43
    %s46 = sphi 0, %s45
    %s60 = sphi 0, %s46
    %s64 = sphi 0, %s64
    %s66 = sphi 0, %s64
    %s67 = sphi 0, %s66
    %s81 = sphi 0, %s67
    %s87 = sphi 0, %s89
    %s90 = sphi 0, %s87
    %s91 = sphi 0, %s90
    %s107 = sphi 0, %s91
  $region4: #{unet_vflow_forward.19} parent=0 // loop_header_branch
    %12 = sbr.rel (%p10) target = $region8
  $region5: #{unet_vflow_forward.19} parent=0 // loop_body
    %s14 = ssub.s32 %s9, 1
    %s15 = ssub.s32 %s9, 2
    %s16 = sadd.s32 %s9, 1
    %s17 = ssub.s32 %s9, %s16
    %p18 = scmp.eq.s32.totalorder %s17, 0
    %s20 = sadd.s32 %s19, 1
    %s21 = scalar_select %p18, %s19, %s20
    %p24 = pneg %p18
    %p25 = scmp.eq.s32.totalorder %s9, 1
    %p26 = por %p24, %p25
    %p27 = scmp.ne.s32.totalorder %s19, %s22
    %p28 = scmp.eq.s32.totalorder %s9, 0
    %p29 = por %p27, %p28
    %p30 = scmp.ne.s32.totalorder %s19, %s22
    %p31 = scmp.eq.s32.totalorder %s14, 1
    %p32 = por %p30, %p31
    %p33 = scmp.ne.s32.totalorder %s22, %s23
    %p34 = scmp.eq.s32.totalorder %s14, 0
    %p35 = por %p33, %p34
    %p36 = scmp.ne.s32.totalorder %s22, %s23
    %p37 = scmp.eq.s32.totalorder %s15, 1
    %p38 = por %p36, %p37
    %p40 = scmp.ne.s32.totalorder %s23, %s39
    %p41 = scmp.eq.s32.totalorder %s15, 0
    %p42 = por %p40, %p41
    %s44 = sadd.s32 %s43, 1
    %p47 = scmp.eq.s32.totalorder %s9, 1
    %p48 = scmp.ne.s32.totalorder %s43, %s45
    %p49 = scmp.eq.s32.totalorder %s9, 0
    %p50 = por %p48, %p49
    %p51 = scmp.ne.s32.totalorder %s43, %s45
    %p52 = scmp.eq.s32.totalorder %s14, 1
    %p53 = por %p51, %p52
    %p54 = scmp.ne.s32.totalorder %s45, %s46
    %p55 = scmp.eq.s32.totalorder %s14, 0
    %p56 = por %p54, %p55
    %p57 = scmp.ne.s32.totalorder %s45, %s46
    %p58 = scmp.eq.s32.totalorder %s15, 1
    %p59 = por %p57, %p58
    %p61 = scmp.ne.s32.totalorder %s46, %s60
    %p62 = scmp.eq.s32.totalorder %s15, 0
    %p63 = por %p61, %p62
    %s65 = sadd.s32 %s64, 1
    %p68 = scmp.eq.s32.totalorder %s9, 1
    %p69 = scmp.ne.s32.totalorder %s64, %s66
    %p70 = scmp.eq.s32.totalorder %s9, 0
    %p71 = por %p69, %p70
    %p72 = scmp.ne.s32.totalorder %s64, %s66
    %p73 = scmp.eq.s32.totalorder %s14, 1
    %p74 = por %p72, %p73
    %p75 = scmp.ne.s32.totalorder %s66, %s67
    %p76 = scmp.eq.s32.totalorder %s14, 0
    %p77 = por %p75, %p76
    %p78 = scmp.ne.s32.totalorder %s66, %s67
    %p79 = scmp.eq.s32.totalorder %s15, 1
    %p80 = por %p78, %p79
    %p82 = scmp.ne.s32.totalorder %s67, %s81
    %p83 = scmp.eq.s32.totalorder %s15, 0
    %p84 = por %p82, %p83
    %s85 = ssub.s32 %s9, %s16
    %p86 = scmp.eq.s32.totalorder %s85, 0
    %s88 = sadd.s32 %s87, 1
    %s89 = scalar_select %p86, %s87, %s88
    %p92 = pneg %p86
    %p93 = scmp.eq.s32.totalorder %s9, 1
    %p94 = por %p92, %p93
    %p95 = scmp.ne.s32.totalorder %s87, %s90
    %p96 = scmp.eq.s32.totalorder %s9, 0
    %p97 = por %p95, %p96
    %p98 = scmp.ne.s32.totalorder %s87, %s90
    %p99 = scmp.eq.s32.totalorder %s14, 1
    %p100 = por %p98, %p99
    %p101 = scmp.ne.s32.totalorder %s90, %s91
    %p102 = scmp.eq.s32.totalorder %s14, 0
    %p103 = por %p101, %p102
    %p104 = scmp.ne.s32.totalorder %s90, %s91
    %p105 = scmp.eq.s32.totalorder %s15, 1
    %p106 = por %p104, %p105
    %p108 = scmp.ne.s32.totalorder %s91, %s107
    %p109 = scmp.eq.s32.totalorder %s15, 0
    %p110 = por %p108, %p109
    %p111 = scmp.le.s32.totalorder 1, %s9
    %p112 = scmp.lt.s32.totalorder %s9, 3
    %p113 = pnand %p111, %p112
    %p114 = pneg %p113
    // Predicated region
    $region9: #{unet_vflow_forward.19} parent=5 // pred_check
      _
    $region10: #{unet_vflow_forward.19} parent=5 // pred_check_branch
      %116 = sbr.rel (%p113) target = $region12
    $region11: #{unet_vflow_forward.19} parent=5 // pred_region
      %s117 = ssub.s32 %s9, 1
      // Predicated region
      $region13: #{unet_vflow_forward.19} parent=11 // pred_check
        %p118 = pneg %p56
      $region14: #{unet_vflow_forward.19} parent=11 // pred_check_branch
        %120 = sbr.rel (%p118) target = $region16
      $region15: #{unet_vflow_forward.19} parent=11 // pred_region
        _
      $region16: #{unet_vflow_forward.19} parent=11 // pred_fallthru
        _
      // Predicated region
      $region17: #{unet_vflow_forward.19} parent=11 // pred_check
        %p121 = pneg %p77
      $region18: #{unet_vflow_forward.19} parent=11 // pred_check_branch
        %123 = sbr.rel (%p121) target = $region20
      $region19: #{unet_vflow_forward.19} parent=11 // pred_region
        _
      $region20: #{unet_vflow_forward.19} parent=11 // pred_fallthru
        _
    $region12: #{unet_vflow_forward.19} parent=5 // pred_fallthru
      _
    %p124 = scmp.lt.s32.totalorder %s9, 2
    // Predicated region
    $region21: #{unet_vflow_forward.19} parent=5 // pred_check
      %p125 = pneg %p124
    $region22: #{unet_vflow_forward.19} parent=5 // pred_check_branch
      %127 = sbr.rel (%p125) target = $region24
    $region23: #{unet_vflow_forward.19} parent=5 // pred_region
      // Predicated region
      $region25: #{unet_vflow_forward.19} parent=23 // pred_check
        %p128 = pneg %p29
      $region26: #{unet_vflow_forward.19} parent=23 // pred_check_branch
        %130 = sbr.rel (%p128) target = $region28
      $region27: #{unet_vflow_forward.19} parent=23 // pred_region
        %p131 = scmp.lt.s32.totalorder %s9, 1
        %s132 = scalar_select %p131, %s9, 1
        %s133 = smul.addr %s132, 3
        %s134 = smul.addr %s133, 4
        %s135 = scalar_lea.vmem %s0, %s134
      $region28: #{unet_vflow_forward.19} parent=23 // pred_fallthru
        _
    $region24: #{unet_vflow_forward.19} parent=5 // pred_fallthru
      _
    %p136 = scmp.le.s32.totalorder 1, %s9
    %p137 = scmp.lt.s32.totalorder %s9, 3
    %p138 = pnand %p136, %p137
    %p139 = pneg %p138
    // Predicated region
    $region29: #{unet_vflow_forward.19} parent=5 // pred_check
      _
    $region30: #{unet_vflow_forward.19} parent=5 // pred_check_branch
      %141 = sbr.rel (%p138) target = $region32
    $region31: #{unet_vflow_forward.19} parent=5 // pred_region
      %s142 = ssub.s32 %s9, 1
      %p143 = scmp.lt.s32.totalorder %s14, 1
      %s144 = scalar_select %p143, %s14, 1
      %s145 = smul.addr %s144, 3
      %s146 = smul.addr %s145, 4
      %s147 = scalar_lea.vmem %s0, %s146
      %p148 = pneg %p35
      %p149 = pneg %p32
      %p150 = pneg %p56
      %p151 = pneg %p53
      %p152 = pneg %p77
      %p153 = pneg %p74
      %p154 = pneg %p103
      %p155 = pneg %p100
      %p156 = scmp.lt.s32.totalorder %s14, 1
      %s157 = scalar_select %p156, %s14, 1
      %s158 = smul.addr %s157, 3
      %s159 = smul.addr %s158, 2
      %s160 = scalar_lea.vmem %s3, %s159
      %p161 = scmp.lt.s32.totalorder %s14, 1
      %s162 = scalar_select %p161, %s14, 1
      %s163 = smul.addr %s162, 3
      %s164 = smul.addr %s163, 4
      %s165 = scalar_lea.vmem %s0, %s164
      %p166 = scmp.lt.s32.totalorder %s14, 1
      %s167 = scalar_select %p166, %s14, 1
      %s168 = smul.addr %s167, 3
      %s169 = smul.addr %s168, 2
      %s170 = scalar_lea.vmem %s3, %s169
      %v172 = vld [vmem:[%s165] sm:$0xff]
      %v173 = vld [vmem:[%s165 + $0x8] sm:$0xf]
      %v176 = vunpack.c.l.b16 %v172
      %v177 = vunpack.c.h.b16 %v172
      %v178 = vunpack.c.l.b16 %v173
      %v179 = vpack.c.b16 %v176, %v176
      %v180 = vpack.c.b16 %v177, %v177
      %v181 = vpack.c.b16 %v178, %v178
      %182 = vrot.lane.b32.xlu0 %v179, 127
      %v183 = vpop.permute.xlu0 %182
      %184 = vrot.lane.b32.xlu0 %v180, 127
      %v185 = vpop.permute.xlu0 %184
      %186 = vrot.lane.b32.xlu0 %v181, 127
      %v187 = vpop.permute.xlu0 %186
      %vm188 = vcmask 1039360
      %v189 = vsel %vm188, %v183, %v185
      %v190 = vsel %vm188, %v185, %v187
      %191 = vrot.lane.b32.xlu0 %v179, 126
      %v192 = vpop.permute.xlu0 %191
      %193 = vrot.lane.b32.xlu0 %v180, 126
      %v194 = vpop.permute.xlu0 %193
      %195 = vrot.lane.b32.xlu0 %v181, 126
      %v196 = vpop.permute.xlu0 %195
      %vm197 = vcmask 1031168
      %v198 = vsel %vm197, %v192, %v194
      %v199 = vsel %vm197, %v194, %v196
      %200 = vrot.lane.b32.xlu0 %v179, 110
      %v201 = vpop.permute.xlu0 %200
      %202 = vrot.lane.b32.xlu0 %v180, 110
      %v203 = vpop.permute.xlu0 %202
      %204 = vrot.lane.b32.xlu0 %v181, 110
      %v205 = vpop.permute.xlu0 %204
      %vm206 = vcmask 900096
      %v207 = vsel %vm206, %v201, %v203
      %v208 = vsel %vm206, %v203, %v205
      %209 = vrot.lane.b32.xlu0 %v179, 109
      %v210 = vpop.permute.xlu0 %209
      %211 = vrot.lane.b32.xlu0 %v180, 109
      %v212 = vpop.permute.xlu0 %211
      %213 = vrot.lane.b32.xlu0 %v181, 109
      %v214 = vpop.permute.xlu0 %213
      %vm215 = vcmask 891904
      %v216 = vsel %vm215, %v210, %v212
      %v217 = vsel %vm215, %v212, %v214
      %218 = vrot.lane.b32.xlu0 %v179, 108
      %v219 = vpop.permute.xlu0 %218
      %220 = vrot.lane.b32.xlu0 %v180, 108
      %v221 = vpop.permute.xlu0 %220
      %222 = vrot.lane.b32.xlu0 %v181, 108
      %v223 = vpop.permute.xlu0 %222
      %vm224 = vcmask 883712
      %v225 = vsel %vm224, %v219, %v221
      %v226 = vsel %vm224, %v221, %v223
      %227 = vrot.lane.b32.xlu0 %v179, 92
      %v228 = vpop.permute.xlu0 %227
      %229 = vrot.lane.b32.xlu0 %v180, 92
      %v230 = vpop.permute.xlu0 %229
      %231 = vrot.lane.b32.xlu0 %v181, 92
      %v232 = vpop.permute.xlu0 %231
      %vm233 = vcmask 752640
      %v234 = vsel %vm233, %v228, %v230
      %v235 = vsel %vm233, %v230, %v232
      %236 = vrot.lane.b32.xlu0 %v179, 91
      %v237 = vpop.permute.xlu0 %236
      %238 = vrot.lane.b32.xlu0 %v180, 91
      %v239 = vpop.permute.xlu0 %238
      %240 = vrot.lane.b32.xlu0 %v181, 91
      %v241 = vpop.permute.xlu0 %240
      %vm242 = vcmask 744448
      %v243 = vsel %vm242, %v237, %v239
      %v244 = vsel %vm242, %v239, %v241
      %245 = vrot.lane.b32.xlu0 %v179, 90
      %v246 = vpop.permute.xlu0 %245
      %247 = vrot.lane.b32.xlu0 %v180, 90
      %v248 = vpop.permute.xlu0 %247
      %249 = vrot.lane.b32.xlu0 %v181, 90
      %v250 = vpop.permute.xlu0 %249
      %vm251 = vcmask 736256
      %v252 = vsel %vm251, %v246, %v248
      %v253 = vsel %vm251, %v248, %v250
      %vm254 = vcmask 1043456
      %v257 = vsel %vm254, %v179, %v189
      %v261 = vsel %vm254, %v180, %v190
      %v265 = vsel %vm254, %v181, %v187
      %v269 = vsel %vm254, %v198, %v207
      %v273 = vsel %vm254, %v199, %v208
      %v277 = vsel %vm254, %v196, %v205
      %v281 = vsel %vm254, %v216, %v225
      %v285 = vsel %vm254, %v217, %v226
      %v289 = vsel %vm254, %v214, %v223
      %v293 = vsel %vm254, %v234, %v243
      %v297 = vsel %vm254, %v235, %v244
      %v301 = vsel %vm254, %v232, %v241
      %v303 = vld [vmem:[%s1] sm:$0x1]
      %v304 = vld [vmem:[%s2] sm:$0x3]
      %306 = vset.pattern.permute.xlu0 0
      %307 = vperm.xlu0 %306, %v304
      %v308 = vpop.permute.xlu0 %307
      %vm310 = vcmask 588800
      %v312 = vsel %vm310, %v303, 0
      %v315 = vsel %vm254, %v252, 0
      %v318 = vsel %vm254, %v253, 0
      %v321 = vsel %vm254, %v250, 0
      %323 = vmatpush.bf16.msra.mxu0 0
      %324 = vmatpush.bf16.msra.mxu0 0
      %325 = vmatpush.bf16.msra.mxu0 0
      %326 = vmatpush.bf16.msra.mxu0 %v315
      %327 = vmatpush.bf16.msra.mxu0 %v293
      %328 = vmatpush.bf16.msra.mxu0 %v281
      %329 = vmatpush.bf16.msra.mxu0 %v269
      %330 = vmatpush.bf16.msra.mxu0 %v257
      %331 = vmatmul.bf16.gmra.mxu0 %v312
      %v332 = vpop.f32.mrf.mxu0
      %v333 = vadd.f32 %v308, %v332
      %v334 = vpop.f32.mrf.mxu0
      %335 = vdwg.mxu0
      %336 = vmatpush.bf16.msra.mxu0 0
      %337 = vmatpush.bf16.msra.mxu0 0
      %338 = vmatpush.bf16.msra.mxu0 0
      %339 = vmatpush.bf16.msra.mxu0 %v318
      %340 = vmatpush.bf16.msra.mxu0 %v297
      %341 = vmatpush.bf16.msra.mxu0 %v285
      %342 = vmatpush.bf16.msra.mxu0 %v273
      %343 = vmatpush.bf16.msra.mxu0 %v261
      %344 = vmatmul.bf16.gmra.mxu0 %v312
      %v345 = vpop.f32.mrf.mxu0
      %v346 = vadd.f32 %v308, %v345
      %v347 = vpop.f32.mrf.mxu0
      %348 = vdwg.mxu0
      %349 = vmatpush.bf16.msra.mxu0 0
      %350 = vmatpush.bf16.msra.mxu0 0
      %351 = vmatpush.bf16.msra.mxu0 0
      %352 = vmatpush.bf16.msra.mxu0 %v321
      %353 = vmatpush.bf16.msra.mxu0 %v301
      %354 = vmatpush.bf16.msra.mxu0 %v289
      %355 = vmatpush.bf16.msra.mxu0 %v277
      %356 = vmatpush.bf16.msra.mxu0 %v265
      %357 = vmatmul.bf16.gmra.mxu0 %v312
      %v358 = vpop.f32.mrf.mxu0
      %v359 = vadd.f32 %v308, %v358
      %v360 = vpop.f32.mrf.mxu0
      %361 = vdwg.mxu0
      %v365 = vrot.slane %v346, 6
      %v366 = vrot.slane %v359, 4
      %vm367 = vcmask 1041408
      %v368 = vsel %vm367, %v333, %v365
      %v369 = vsel %vm254, %v368, %v366
      %vm371 = vcmask 1043458
      %vm372 = vmor %vm371, %vm367
      %vm373 = vcmask 259076
      %vm374 = vmor %vm373, %vm372
      %375 = vst.msk [vmem:[%s170] sm:$0x3f] %vm374, %v369
      %p376 = scmp.lt.s32.totalorder %s14, 1
      %s377 = scalar_select %p376, %s14, 1
      %s378 = smul.addr %s377, 3
      %s379 = smul.addr %s378, 2
      %s380 = scalar_lea.vmem %s3, %s379
      // Predicated region
      $region33: #{unet_vflow_forward.19} parent=31 // pred_check
        %p381 = pneg %p100
      $region34: #{unet_vflow_forward.19} parent=31 // pred_check_branch
        %383 = sbr.rel (%p381) target = $region36
      $region35: #{unet_vflow_forward.19} parent=31 // pred_region
        _
      $region36: #{unet_vflow_forward.19} parent=31 // pred_fallthru
        _
    $region32: #{unet_vflow_forward.19} parent=5 // pred_fallthru
      _
    %p384 = scmp.le.s32.totalorder 2, %s9
    // Predicated region
    $region37: #{unet_vflow_forward.19} parent=5 // pred_check
      %p385 = pneg %p384
    $region38: #{unet_vflow_forward.19} parent=5 // pred_check_branch
      %387 = sbr.rel (%p385) target = $region40
    $region39: #{unet_vflow_forward.19} parent=5 // pred_region
      %s388 = ssub.s32 %s9, 2
      // Predicated region
      $region41: #{unet_vflow_forward.19} parent=39 // pred_check
        %p389 = pneg %p106
      $region42: #{unet_vflow_forward.19} parent=39 // pred_check_branch
        %391 = sbr.rel (%p389) target = $region44
      $region43: #{unet_vflow_forward.19} parent=39 // pred_region
        %p392 = scmp.lt.s32.totalorder %s15, 1
        %s393 = scalar_select %p392, %s15, 1
        %s394 = smul.addr %s393, 3
        %s395 = smul.addr %s394, 2
        %s396 = scalar_lea.vmem %s3, %s395
      $region44: #{unet_vflow_forward.19} parent=39 // pred_fallthru
        _
    $region40: #{unet_vflow_forward.19} parent=5 // pred_fallthru
      _
  $region6: #{unet_vflow_forward.19} parent=0 // loop_footer
    %s13 = sadd.s32 1, %s9
  $region7: #{unet_vflow_forward.19} parent=0 // loop_footer_branch
    %8 = sbr.rel target = $region3
  $region8: #{unet_vflow_forward.19} parent=0 // loop_exit
    _

</llo_original>
